<compile_context>
chip_gen: v7x
topology: tpu7x:2x2x1
jax: 0.10.0
libtpu: 0.0.40
codegen_flags: <defaults>
</compile_context>

<pallas_src>
import functools
import math

import jax
import jax.numpy as jnp
import numpy as np
from jax.experimental import pallas as pl
from jax.experimental.pallas import tpu as pltpu

LN_EPS = 1e-5


def _layernorm(h, gamma, beta):
    mu = jnp.mean(h, axis=-1, keepdims=True)
    var = jnp.mean((h - mu) ** 2, axis=-1, keepdims=True)
    return (h - mu) * jax.lax.rsqrt(var + LN_EPS) * gamma + beta


# ---------------------------------------------------------------------------
# Kernel 1: per-(batch, head) causal self-attention.
# ---------------------------------------------------------------------------
def _attention_head_kernel(x_ref, wq_ref, bq_ref, wk_ref, bk_ref, wv_ref, bv_ref,
                           ctx_ref, *attn_refs, scale):
    x = x_ref[0]                                   # (S, D), bf16

    # one head's Q/K/V projection: (S, D) @ (D, d_head), bf16 in / f32 accumulate
    q = jnp.dot(x, wq_ref[...], preferred_element_type=jnp.float32) + bq_ref[...]
    k = jnp.dot(x, wk_ref[...], preferred_element_type=jnp.float32) + bk_ref[...]
    v = jnp.dot(x, wv_ref[...], preferred_element_type=jnp.float32) + bv_ref[...]

    S = x.shape[0]
    row = jax.lax.broadcasted_iota(jnp.int32, (S, S), 0)
    col = jax.lax.broadcasted_iota(jnp.int32, (S, S), 1)
    keep = row >= col                              # causal mask (keep where row >= col)

    # scores = (q @ k^T) / sqrt(d_head)
    scores = jax.lax.dot_general(
        q.astype(jnp.bfloat16), k.astype(jnp.bfloat16),
        dimension_numbers=(((1,), (1,)), ((), ())),
        preferred_element_type=jnp.float32) * scale
    scores = jnp.where(keep, scores, jnp.float32(-1e9))

    # numerically-stable softmax (f32); reciprocal on the EUP slot
    scores = scores - jnp.max(scores, axis=-1, keepdims=True)
    e = jnp.exp(scores)
    attn = e * pl.reciprocal(jnp.sum(e, axis=-1, keepdims=True), approx=True)

    ctx = jnp.dot(attn.astype(jnp.bfloat16), v.astype(jnp.bfloat16),
                  preferred_element_type=jnp.float32)
    ctx_ref[0] = ctx.astype(ctx_ref.dtype)         # lane-dense (S, d_head) store
    if attn_refs:                                  # attention-weights output is optional
        attn_refs[0][0, 0] = attn

    # TODO(synk): for long S, replace the full (S, S) block with a KV-tiled online-softmax
    # (flash) loop and skip fully-masked upper-triangular tiles.


# ---------------------------------------------------------------------------
# Kernel 2: per-batch output projection + LayerNorm1 + FFN + LayerNorm3.
# ---------------------------------------------------------------------------
def _out_ffn_kernel(x_ref, ctx_ref, wo_ref, bo_ref, g1_ref, be1_ref,
                    w1_ref, b1_ref, w2_ref, b2_ref, g3_ref, be3_ref, out_ref):
    x = x_ref[0]                                   # (S, D), f32
    ctx = ctx_ref[0]                               # (S, D), bf16

    attn_out = jnp.dot(ctx, wo_ref[...], preferred_element_type=jnp.float32) + bo_ref[...]

    # residual + LayerNorm1 (dropout = identity in eval)
    h1 = _layernorm(x + attn_out, g1_ref[...], be1_ref[...])

    # feed-forward: Linear -> ReLU -> Linear (bf16 MXU inputs, f32 accumulation)
    ff = jnp.dot(h1.astype(jnp.bfloat16), w1_ref[...],
                 preferred_element_type=jnp.float32) + b1_ref[...]
    ff = jnp.maximum(ff, 0.0)
    ff = jnp.dot(ff.astype(jnp.bfloat16), w2_ref[...],
                 preferred_element_type=jnp.float32) + b2_ref[...]

    # residual + LayerNorm3
    out_ref[0] = _layernorm(h1 + ff, g3_ref[...], be3_ref[...])

    # TODO(synk): for large d_model, K-tile the FFN matmuls (reduction grid axis +
    # accumulator scratch) so w1/w2 need not be fully VMEM-resident (v7x: 64 MiB VMEM).


# ---------------------------------------------------------------------------
# Wrapper
# ---------------------------------------------------------------------------
def transformer_decoder_block(x, params, num_heads, *, return_attn_weights=True):
    """Forward pass. Returns (out, self_attn_weights | None, None)."""
    B, S, D = x.shape
    H = num_heads
    assert D % H == 0, "d_model must be divisible by num_heads"
    dh = D // H
    f32, bf16 = jnp.float32, jnp.bfloat16

    # bf16 copies of MXU operands (halves weight HBM/VMEM footprint);
    # biases and LayerNorm params stay f32, accumulation is always f32.
    xb = x.astype(bf16)
    wq, wk, wv = (params[n].astype(bf16) for n in ("wq", "wk", "wv"))
    wo, w1, w2 = (params[n].astype(bf16) for n in ("wo", "w1", "w2"))

    vmem_limit = 32 * 1024 * 1024

    # ---- attention: grid over (batch, head); both axes parallel -------------
    head_w_spec = pl.BlockSpec((D, dh), lambda b, h: (0, h))
    head_b_spec = pl.BlockSpec((1, dh), lambda b, h: (0, h))
    in_specs = [pl.BlockSpec((1, S, D), lambda b, h: (b, 0, 0)),
                head_w_spec, head_b_spec,
                head_w_spec, head_b_spec,
                head_w_spec, head_b_spec]

    out_shape = [jax.ShapeDtypeStruct((B, S, D), bf16)]
    out_specs = [pl.BlockSpec((1, S, dh), lambda b, h: (b, 0, h))]
    if return_attn_weights:
        out_shape.append(jax.ShapeDtypeStruct((B, H, S, S), f32))
        out_specs.append(pl.BlockSpec((1, 1, S, S), lambda b, h: (b, h, 0, 0)))

    attn_results = pl.pallas_call(
        functools.partial(_attention_head_kernel, scale=1.0 / math.sqrt(dh)),
        out_shape=tuple(out_shape),
        grid=(B, H),
        in_specs=in_specs,
        out_specs=tuple(out_specs),
        compiler_params=pltpu.CompilerParams(
            dimension_semantics=("parallel", "parallel"),
            vmem_limit_bytes=vmem_limit),
    )(xb, wq, params["bq"], wk, params["bk"], wv, params["bv"])

    if return_attn_weights:
        ctx, attn_w = attn_results
    else:
        (ctx,) = attn_results
        attn_w = None

    # ---- output projection + LayerNorms + FFN: grid over batch --------------
    def batch_spec():
        return pl.BlockSpec((1, S, D), lambda b: (b, 0, 0))

    def weight_spec(a):
        # constant across the grid -> single buffer (halves weight VMEM residency)
        return pl.BlockSpec(a.shape, lambda b: (0,) * a.ndim,
                            pipeline_mode=pl.Buffered(1))

    out = pl.pallas_call(
        _out_ffn_kernel,
        out_shape=jax.ShapeDtypeStruct((B, S, D), f32),
        grid=(B,),
        in_specs=[batch_spec(), batch_spec(),
                  weight_spec(wo), weight_spec(params["bo"]),
                  weight_spec(params["g1"]), weight_spec(params["be1"]),
                  weight_spec(w1), weight_spec(params["b1"]),
                  weight_spec(w2), weight_spec(params["b2"]),
                  weight_spec(params["g3"]), weight_spec(params["be3"])],
        out_specs=batch_spec(),
        compiler_params=pltpu.CompilerParams(
            dimension_semantics=("parallel",),
            vmem_limit_bytes=vmem_limit),
    )(x, ctx, wo, params["bo"], params["g1"], params["be1"],
      w1, params["b1"], w2, params["b2"], params["g3"], params["be3"])

    return out, attn_w, None


# ---------------- pure-JAX f32 reference (for correctness check) ----------------
def reference_block(x, params, num_heads):
    B, S, D = x.shape
    H = num_heads
    dh = D // H

    def ln(h, g, b):
        mu = jnp.mean(h, axis=-1, keepdims=True)
        var = jnp.mean((h - mu) ** 2, axis=-1, keepdims=True)
        return (h - mu) / jnp.sqrt(var + LN_EPS) * g + b

    q = x @ params["wq"] + params["bq"]
    k = x @ params["wk"] + params["bk"]
    v = x @ params["wv"] + params["bv"]
    qh = q.reshape(B, S, H, dh).transpose(0, 2, 1, 3)
    kh = k.reshape(B, S, H, dh).transpose(0, 2, 1, 3)
    vh = v.reshape(B, S, H, dh).transpose(0, 2, 1, 3)
    scores = jnp.einsum("bhsd,bhtd->bhst", qh, kh) / jnp.sqrt(jnp.float32(dh))
    keep = jnp.tril(jnp.ones((S, S), dtype=bool))
    scores = jnp.where(keep[None, None], scores, -1e9)
    attn = jax.nn.softmax(scores, axis=-1)
    ctx = jnp.einsum("bhst,bhtd->bhsd", attn, vh).transpose(0, 2, 1, 3).reshape(B, S, D)
    attn_out = ctx @ params["wo"] + params["bo"]
    h1 = ln(x + attn_out, params["g1"], params["be1"])
    ff = jnp.maximum(h1 @ params["w1"] + params["b1"], 0.0) @ params["w2"] + params["b2"]
    return ln(h1 + ff, params["g3"], params["be3"]), attn


def init_params(key, d_model, d_ff):
    ks = jax.random.split(key, 8)
    f32 = jnp.float32
    return {
        "wq": jax.random.normal(ks[0], (d_model, d_model), f32) * 0.02,
        "bq": jnp.zeros((1, d_model), f32),
        "wk": jax.random.normal(ks[1], (d_model, d_model), f32) * 0.02,
        "bk": jnp.zeros((1, d_model), f32),
        "wv": jax.random.normal(ks[2], (d_model, d_model), f32) * 0.02,
        "bv": jnp.zeros((1, d_model), f32),
        "wo": jax.random.normal(ks[3], (d_model, d_model), f32) * 0.02,
        "bo": jax.random.normal(ks[4], (1, d_model), f32) * 0.02,
        "g1": jnp.ones((1, d_model), f32),
        "be1": jnp.zeros((1, d_model), f32),
        "w1": jax.random.normal(ks[5], (d_model, d_ff), f32) * 0.02,
        "b1": jax.random.normal(ks[6], (1, d_ff), f32) * 0.02,
        "w2": jax.random.normal(ks[7], (d_ff, d_model), f32) * 0.02,
        "b2": jnp.zeros((1, d_model), f32),
        "g3": jnp.ones((1, d_model), f32),
        "be3": jnp.zeros((1, d_model), f32),
    }


if __name__ == "__main__":
    # Shapes chosen so d_head = S = 128 and d_model is a multiple of 128:
    # every matmul is MXU-friendly and every store is unmasked / lane-dense.
    B, S, D, H = 2, 128, 256, 2
    d_ff = 4 * D  # FeedForward default

    key = jax.random.PRNGKey(0)
    kx, kp = jax.random.split(key)
    x = jax.random.normal(kx, (B, S, D), jnp.float32)
    params = init_params(kp, D, d_ff)

    run = jax.jit(functools.partial(transformer_decoder_block, num_heads=H))
    out, attn_w, cross_w = run(x, params)
    out = jax.block_until_ready(out)
    attn_w = jax.block_until_ready(attn_w)

    # variant without the O(S^2) attention-weights writeback (feedback item)
    run_na = jax.jit(functools.partial(transformer_decoder_block, num_heads=H,
                                       return_attn_weights=False))
    out_na, attn_none, _ = run_na(x, params)
    out_na = jax.block_until_ready(out_na)

    ref_out, ref_attn = reference_block(x, params, H)
    # bf16 MXU inputs (f32 accumulation) vs an all-f32 reference -> loosened tolerance.
    np.testing.assert_allclose(np.asarray(out), np.asarray(ref_out), rtol=2e-2, atol=2e-2)
    np.testing.assert_allclose(np.asarray(attn_w), np.asarray(ref_attn), rtol=2e-2, atol=2e-2)
    np.testing.assert_allclose(np.asarray(out_na), np.asarray(out), rtol=1e-5, atol=1e-5)
    assert cross_w is None and attn_none is None

    print("KERNEL_OK")
</pallas_src>

<mosaic_0001>
module attributes {stable_mosaic.version = 11 : i64} {
  func.func @_attention_head_kernel(%arg0: i32, %arg1: i32, %arg2: memref<1x128x256xbf16, #tpu.memory_space<vmem>>, %arg3: memref<256x128xbf16, #tpu.memory_space<vmem>>, %arg4: memref<1x128xf32, #tpu.memory_space<vmem>>, %arg5: memref<256x128xbf16, #tpu.memory_space<vmem>>, %arg6: memref<1x128xf32, #tpu.memory_space<vmem>>, %arg7: memref<256x128xbf16, #tpu.memory_space<vmem>>, %arg8: memref<1x128xf32, #tpu.memory_space<vmem>>, %arg9: memref<1x128x128xbf16, #tpu.memory_space<vmem>>, %arg10: memref<1x1x128x128xf32, #tpu.memory_space<vmem>>) attributes {dimension_semantics = [#tpu.dimension_semantics<parallel>, #tpu.dimension_semantics<parallel>], iteration_bounds = array<i64: 2, 2>, scalar_prefetch = 0 : i64, scratch_operands = 0 : i64, tpu.core_type = #tpu.core_type<tc>, window_params = [{transform_indices = @transform_0, window_bounds = array<i64: 1, 128, 256>}, {transform_indices = @transform_1, window_bounds = array<i64: 256, 128>}, {transform_indices = @transform_2, window_bounds = array<i64: 1, 128>}, {transform_indices = @transform_3, window_bounds = array<i64: 256, 128>}, {transform_indices = @transform_4, window_bounds = array<i64: 1, 128>}, {transform_indices = @transform_5, window_bounds = array<i64: 256, 128>}, {transform_indices = @transform_6, window_bounds = array<i64: 1, 128>}, {transform_indices = @transform_7, window_bounds = array<i64: 1, 128, 128>}, {transform_indices = @transform_8, window_bounds = array<i64: 1, 1, 128, 128>}]} {
    %c0 = arith.constant 0 : index
    %c0_0 = arith.constant 0 : index
    %c0_1 = arith.constant 0 : index
    %0 = vector.load %arg2[%c0, %c0_0, %c0_1] : memref<1x128x256xbf16, #tpu.memory_space<vmem>>, vector<1x128x256xbf16>
    %1 = vector.shape_cast %0 : vector<1x128x256xbf16> to vector<128x256xbf16>
    %c0_2 = arith.constant 0 : index
    %c0_3 = arith.constant 0 : index
    %2 = vector.load %arg3[%c0_2, %c0_3] : memref<256x128xbf16, #tpu.memory_space<vmem>>, vector<256x128xbf16>
    %cst = arith.constant dense<0.000000e+00> : vector<128x128xf32>
    %3 = tpu.matmul %1, %2, %cst {dimension_numbers = #tpu.dot_dimension_numbers<[1], [0], [0], [1], [0, 0, 1, 1], [], []>} : vector<128x256xbf16>, vector<256x128xbf16>, vector<128x128xf32> -> vector<128x128xf32>
    %c0_4 = arith.constant 0 : index
    %c0_5 = arith.constant 0 : index
    %4 = vector.load %arg4[%c0_4, %c0_5] : memref<1x128xf32, #tpu.memory_space<vmem>>, vector<1x128xf32>
    %5 = vector.broadcast %4 : vector<1x128xf32> to vector<128x128xf32>
    %6 = arith.addf %3, %5 : vector<128x128xf32>
    %c0_6 = arith.constant 0 : index
    %c0_7 = arith.constant 0 : index
    %7 = vector.load %arg5[%c0_6, %c0_7] : memref<256x128xbf16, #tpu.memory_space<vmem>>, vector<256x128xbf16>
    %cst_8 = arith.constant dense<0.000000e+00> : vector<128x128xf32>
    %8 = tpu.matmul %1, %7, %cst_8 {dimension_numbers = #tpu.dot_dimension_numbers<[1], [0], [0], [1], [0, 0, 1, 1], [], []>} : vector<128x256xbf16>, vector<256x128xbf16>, vector<128x128xf32> -> vector<128x128xf32>
    %c0_9 = arith.constant 0 : index
    %c0_10 = arith.constant 0 : index
    %9 = vector.load %arg6[%c0_9, %c0_10] : memref<1x128xf32, #tpu.memory_space<vmem>>, vector<1x128xf32>
    %10 = vector.broadcast %9 : vector<1x128xf32> to vector<128x128xf32>
    %11 = arith.addf %8, %10 : vector<128x128xf32>
    %c0_11 = arith.constant 0 : index
    %c0_12 = arith.constant 0 : index
    %12 = vector.load %arg7[%c0_11, %c0_12] : memref<256x128xbf16, #tpu.memory_space<vmem>>, vector<256x128xbf16>
    %cst_13 = arith.constant dense<0.000000e+00> : vector<128x128xf32>
    %13 = tpu.matmul %1, %12, %cst_13 {dimension_numbers = #tpu.dot_dimension_numbers<[1], [0], [0], [1], [0, 0, 1, 1], [], []>} : vector<128x256xbf16>, vector<256x128xbf16>, vector<128x128xf32> -> vector<128x128xf32>
    %c0_14 = arith.constant 0 : index
    %c0_15 = arith.constant 0 : index
    %14 = vector.load %arg8[%c0_14, %c0_15] : memref<1x128xf32, #tpu.memory_space<vmem>>, vector<1x128xf32>
    %15 = vector.broadcast %14 : vector<1x128xf32> to vector<128x128xf32>
    %16 = arith.addf %13, %15 : vector<128x128xf32>
    %17 = tpu.iota {dimensions = array<i32: 0>} : vector<128x128xi32>
    %18 = tpu.iota {dimensions = array<i32: 1>} : vector<128x128xi32>
    %19 = arith.cmpi sge, %17, %18 : vector<128x128xi32>
    %20 = arith.truncf %6 : vector<128x128xf32> to vector<128x128xbf16>
    %21 = arith.truncf %11 : vector<128x128xf32> to vector<128x128xbf16>
    %cst_16 = arith.constant dense<0.000000e+00> : vector<128x128xf32>
    %22 = tpu.matmul %20, %21, %cst_16 {dimension_numbers = #tpu.dot_dimension_numbers<[1], [1], [0], [0], [0, 0, 1, 0], [], []>} : vector<128x128xbf16>, vector<128x128xbf16>, vector<128x128xf32> -> vector<128x128xf32>
    %cst_17 = arith.constant 0.0883883461 : f32
    %23 = vector.broadcast %cst_17 : f32 to vector<128x128xf32>
    %24 = arith.mulf %22, %23 : vector<128x128xf32>
    %cst_18 = arith.constant -1.000000e+09 : f32
    %25 = vector.broadcast %cst_18 : f32 to vector<128x128xf32>
    %26 = arith.select %19, %24, %25 : vector<128x128xi1>, vector<128x128xf32>
    %cst_19 = arith.constant dense<0xFF800000> : vector<128xf32>
    %27 = vector.multi_reduction <maximumf>, %26, %cst_19 [1] : vector<128x128xf32> to vector<128xf32>
    %28 = vector.shape_cast %27 : vector<128xf32> to vector<128x1xf32>
    %29 = vector.broadcast %28 : vector<128x1xf32> to vector<128x128xf32>
    %30 = arith.subf %26, %29 : vector<128x128xf32>
    %31 = math.exp %30 : vector<128x128xf32>
    %cst_20 = arith.constant dense<0.000000e+00> : vector<128xf32>
    %32 = vector.multi_reduction <add>, %31, %cst_20 [1] : vector<128x128xf32> to vector<128xf32>
    %33 = vector.shape_cast %32 : vector<128xf32> to vector<128x1xf32>
    %34 = tpu.reciprocal %33 {approx = true} : vector<128x1xf32> -> vector<128x1xf32>
    %35 = vector.broadcast %34 : vector<128x1xf32> to vector<128x128xf32>
    %36 = arith.mulf %31, %35 : vector<128x128xf32>
    %37 = arith.truncf %36 : vector<128x128xf32> to vector<128x128xbf16>
    %38 = arith.truncf %16 : vector<128x128xf32> to vector<128x128xbf16>
    %cst_21 = arith.constant dense<0.000000e+00> : vector<128x128xf32>
    %39 = tpu.matmul %37, %38, %cst_21 {dimension_numbers = #tpu.dot_dimension_numbers<[1], [0], [0], [1], [0, 0, 1, 1], [], []>} : vector<128x128xbf16>, vector<128x128xbf16>, vector<128x128xf32> -> vector<128x128xf32>
    %40 = arith.truncf %39 : vector<128x128xf32> to vector<128x128xbf16>
    %c0_22 = arith.constant 0 : index
    %c0_23 = arith.constant 0 : index
    %c0_24 = arith.constant 0 : index
    %41 = vector.load %arg9[%c0_22, %c0_23, %c0_24] : memref<1x128x128xbf16, #tpu.memory_space<vmem>>, vector<1x128x128xbf16>
    %42 = vector.shape_cast %41 : vector<1x128x128xbf16> to vector<128x128xbf16>
    %43 = vector.shape_cast %40 : vector<128x128xbf16> to vector<1x128x128xbf16>
    tpu.vector_store %arg9[%c0_22, %c0_23, %c0_24], %43 {strides = array<i32>} : memref<1x128x128xbf16, #tpu.memory_space<vmem>>, vector<1x128x128xbf16>,
    %c0_25 = arith.constant 0 : index
    %c0_26 = arith.constant 0 : index
    %c0_27 = arith.constant 0 : index
    %c0_28 = arith.constant 0 : index
    %44 = vector.load %arg10[%c0_25, %c0_26, %c0_27, %c0_28] : memref<1x1x128x128xf32, #tpu.memory_space<vmem>>, vector<1x1x128x128xf32>
    %45 = vector.shape_cast %44 : vector<1x1x128x128xf32> to vector<128x128xf32>
    %46 = vector.shape_cast %36 : vector<128x128xf32> to vector<1x1x128x128xf32>
    tpu.vector_store %arg10[%c0_25, %c0_26, %c0_27, %c0_28], %46 {strides = array<i32>} : memref<1x1x128x128xf32, #tpu.memory_space<vmem>>, vector<1x1x128x128xf32>,
    return
  }
  func.func @transform_0(%arg0: i32, %arg1: i32) -> (i32, i32, i32) {
    %c0_i32 = arith.constant 0 : i32
    %c0_i32_0 = arith.constant 0 : i32
    %c0_i32_1 = arith.constant 0 : i32
    return %arg0, %c0_i32, %c0_i32_0 : i32, i32, i32
  }
  func.func @transform_1(%arg0: i32, %arg1: i32) -> (i32, i32) {
    %c0_i32 = arith.constant 0 : i32
    %c0_i32_0 = arith.constant 0 : i32
    return %c0_i32, %arg1 : i32, i32
  }
  func.func @transform_2(%arg0: i32, %arg1: i32) -> (i32, i32) {
    %c0_i32 = arith.constant 0 : i32
    %c0_i32_0 = arith.constant 0 : i32
    return %c0_i32, %arg1 : i32, i32
  }
  func.func @transform_3(%arg0: i32, %arg1: i32) -> (i32, i32) {
    %c0_i32 = arith.constant 0 : i32
    %c0_i32_0 = arith.constant 0 : i32
    return %c0_i32, %arg1 : i32, i32
  }
  func.func @transform_4(%arg0: i32, %arg1: i32) -> (i32, i32) {
    %c0_i32 = arith.constant 0 : i32
    %c0_i32_0 = arith.constant 0 : i32
    return %c0_i32, %arg1 : i32, i32
  }
  func.func @transform_5(%arg0: i32, %arg1: i32) -> (i32, i32) {
    %c0_i32 = arith.constant 0 : i32
    %c0_i32_0 = arith.constant 0 : i32
    return %c0_i32, %arg1 : i32, i32
  }
  func.func @transform_6(%arg0: i32, %arg1: i32) -> (i32, i32) {
    %c0_i32 = arith.constant 0 : i32
    %c0_i32_0 = arith.constant 0 : i32
    return %c0_i32, %arg1 : i32, i32
  }
  func.func @transform_7(%arg0: i32, %arg1: i32) -> (i32, i32, i32) {
    %c0_i32 = arith.constant 0 : i32
    %c0_i32_0 = arith.constant 0 : i32
    return %arg0, %c0_i32, %arg1 : i32, i32, i32
  }
  func.func @transform_8(%arg0: i32, %arg1: i32) -> (i32, i32, i32, i32) {
    %c0_i32 = arith.constant 0 : i32
    %c0_i32_0 = arith.constant 0 : i32
    %c0_i32_1 = arith.constant 0 : i32
    return %arg0, %arg1, %c0_i32, %c0_i32_0 : i32, i32, i32, i32
  }
}

module attributes {stable_mosaic.version = 11 : i64} {
  func.func @_out_ffn_kernel(%arg0: i32, %arg1: memref<1x128x256xf32, #tpu.memory_space<vmem>>, %arg2: memref<1x128x256xbf16, #tpu.memory_space<vmem>>, %arg3: memref<256x256xbf16, #tpu.memory_space<vmem>>, %arg4: memref<1x256xf32, #tpu.memory_space<vmem>>, %arg5: memref<1x256xf32, #tpu.memory_space<vmem>>, %arg6: memref<1x256xf32, #tpu.memory_space<vmem>>, %arg7: memref<256x1024xbf16, #tpu.memory_space<vmem>>, %arg8: memref<1x1024xf32, #tpu.memory_space<vmem>>, %arg9: memref<1024x256xbf16, #tpu.memory_space<vmem>>, %arg10: memref<1x256xf32, #tpu.memory_space<vmem>>, %arg11: memref<1x256xf32, #tpu.memory_space<vmem>>, %arg12: memref<1x256xf32, #tpu.memory_space<vmem>>, %arg13: memref<1x128x256xf32, #tpu.memory_space<vmem>>) attributes {dimension_semantics = [#tpu.dimension_semantics<parallel>], iteration_bounds = array<i64: 2>, scalar_prefetch = 0 : i64, scratch_operands = 0 : i64, tpu.core_type = #tpu.core_type<tc>, window_params = [{transform_indices = @transform_0, window_bounds = array<i64: 1, 128, 256>}, {transform_indices = @transform_1, window_bounds = array<i64: 1, 128, 256>}, {pipeline_mode = #tpu.pipeline_mode<synchronous>, transform_indices = @transform_2, window_bounds = array<i64: 256, 256>}, {pipeline_mode = #tpu.pipeline_mode<synchronous>, transform_indices = @transform_3, window_bounds = array<i64: 1, 256>}, {pipeline_mode = #tpu.pipeline_mode<synchronous>, transform_indices = @transform_4, window_bounds = array<i64: 1, 256>}, {pipeline_mode = #tpu.pipeline_mode<synchronous>, transform_indices = @transform_5, window_bounds = array<i64: 1, 256>}, {pipeline_mode = #tpu.pipeline_mode<synchronous>, transform_indices = @transform_6, window_bounds = array<i64: 256, 1024>}, {pipeline_mode = #tpu.pipeline_mode<synchronous>, transform_indices = @transform_7, window_bounds = array<i64: 1, 1024>}, {pipeline_mode = #tpu.pipeline_mode<synchronous>, transform_indices = @transform_8, window_bounds = array<i64: 1024, 256>}, {pipeline_mode = #tpu.pipeline_mode<synchronous>, transform_indices = @transform_9, window_bounds = array<i64: 1, 256>}, {pipeline_mode = #tpu.pipeline_mode<synchronous>, transform_indices = @transform_10, window_bounds = array<i64: 1, 256>}, {pipeline_mode = #tpu.pipeline_mode<synchronous>, transform_indices = @transform_11, window_bounds = array<i64: 1, 256>}, {transform_indices = @transform_12, window_bounds = array<i64: 1, 128, 256>}]} {
    %c0 = arith.constant 0 : index
    %c0_0 = arith.constant 0 : index
    %c0_1 = arith.constant 0 : index
    %0 = vector.load %arg1[%c0, %c0_0, %c0_1] : memref<1x128x256xf32, #tpu.memory_space<vmem>>, vector<1x128x256xf32>
    %1 = vector.shape_cast %0 : vector<1x128x256xf32> to vector<128x256xf32>
    %c0_2 = arith.constant 0 : index
    %c0_3 = arith.constant 0 : index
    %c0_4 = arith.constant 0 : index
    %2 = vector.load %arg2[%c0_2, %c0_3, %c0_4] : memref<1x128x256xbf16, #tpu.memory_space<vmem>>, vector<1x128x256xbf16>
    %3 = vector.shape_cast %2 : vector<1x128x256xbf16> to vector<128x256xbf16>
    %c0_5 = arith.constant 0 : index
    %c0_6 = arith.constant 0 : index
    %4 = vector.load %arg3[%c0_5, %c0_6] : memref<256x256xbf16, #tpu.memory_space<vmem>>, vector<256x256xbf16>
    %cst = arith.constant dense<0.000000e+00> : vector<128x256xf32>
    %5 = tpu.matmul %3, %4, %cst {dimension_numbers = #tpu.dot_dimension_numbers<[1], [0], [0], [1], [0, 0, 1, 1], [], []>} : vector<128x256xbf16>, vector<256x256xbf16>, vector<128x256xf32> -> vector<128x256xf32>
    %c0_7 = arith.constant 0 : index
    %c0_8 = arith.constant 0 : index
    %6 = vector.load %arg4[%c0_7, %c0_8] : memref<1x256xf32, #tpu.memory_space<vmem>>, vector<1x256xf32>
    %7 = vector.broadcast %6 : vector<1x256xf32> to vector<128x256xf32>
    %8 = arith.addf %5, %7 : vector<128x256xf32>
    %9 = arith.addf %1, %8 : vector<128x256xf32>
    %c0_9 = arith.constant 0 : index
    %c0_10 = arith.constant 0 : index
    %10 = vector.load %arg5[%c0_9, %c0_10] : memref<1x256xf32, #tpu.memory_space<vmem>>, vector<1x256xf32>
    %c0_11 = arith.constant 0 : index
    %c0_12 = arith.constant 0 : index
    %11 = vector.load %arg6[%c0_11, %c0_12] : memref<1x256xf32, #tpu.memory_space<vmem>>, vector<1x256xf32>
    %cst_13 = arith.constant dense<0.000000e+00> : vector<128xf32>
    %12 = vector.multi_reduction <add>, %9, %cst_13 [1] : vector<128x256xf32> to vector<128xf32>
    %13 = vector.shape_cast %12 : vector<128xf32> to vector<128x1xf32>
    %cst_14 = arith.constant 2.560000e+02 : f32
    %14 = vector.broadcast %cst_14 : f32 to vector<128x1xf32>
    %15 = arith.divf %13, %14 : vector<128x1xf32>
    %16 = vector.broadcast %15 : vector<128x1xf32> to vector<128x256xf32>
    %17 = arith.subf %9, %16 : vector<128x256xf32>
    %18 = arith.mulf %17, %17 : vector<128x256xf32>
    %cst_15 = arith.constant dense<0.000000e+00> : vector<128xf32>
    %19 = vector.multi_reduction <add>, %18, %cst_15 [1] : vector<128x256xf32> to vector<128xf32>
    %20 = vector.shape_cast %19 : vector<128xf32> to vector<128x1xf32>
    %cst_16 = arith.constant 2.560000e+02 : f32
    %21 = vector.broadcast %cst_16 : f32 to vector<128x1xf32>
    %22 = arith.divf %20, %21 : vector<128x1xf32>
    %23 = vector.broadcast %15 : vector<128x1xf32> to vector<128x256xf32>
    %24 = arith.subf %9, %23 : vector<128x256xf32>
    %cst_17 = arith.constant 9.99999974E-6 : f32
    %25 = vector.broadcast %cst_17 : f32 to vector<128x1xf32>
    %26 = arith.addf %22, %25 : vector<128x1xf32>
    %27 = math.rsqrt %26 : vector<128x1xf32>
    %28 = vector.broadcast %27 : vector<128x1xf32> to vector<128x256xf32>
    %29 = arith.mulf %24, %28 : vector<128x256xf32>
    %30 = vector.broadcast %10 : vector<1x256xf32> to vector<128x256xf32>
    %31 = arith.mulf %29, %30 : vector<128x256xf32>
    %32 = vector.broadcast %11 : vector<1x256xf32> to vector<128x256xf32>
    %33 = arith.addf %31, %32 : vector<128x256xf32>
    %34 = arith.truncf %33 : vector<128x256xf32> to vector<128x256xbf16>
    %c0_18 = arith.constant 0 : index
    %c0_19 = arith.constant 0 : index
    %35 = vector.load %arg7[%c0_18, %c0_19] : memref<256x1024xbf16, #tpu.memory_space<vmem>>, vector<256x1024xbf16>
    %cst_20 = arith.constant dense<0.000000e+00> : vector<128x1024xf32>
    %36 = tpu.matmul %34, %35, %cst_20 {dimension_numbers = #tpu.dot_dimension_numbers<[1], [0], [0], [1], [0, 0, 1, 1], [], []>} : vector<128x256xbf16>, vector<256x1024xbf16>, vector<128x1024xf32> -> vector<128x1024xf32>
    %c0_21 = arith.constant 0 : index
    %c0_22 = arith.constant 0 : index
    %37 = vector.load %arg8[%c0_21, %c0_22] : memref<1x1024xf32, #tpu.memory_space<vmem>>, vector<1x1024xf32>
    %38 = vector.broadcast %37 : vector<1x1024xf32> to vector<128x1024xf32>
    %39 = arith.addf %36, %38 : vector<128x1024xf32>
    %cst_23 = arith.constant 0.000000e+00 : f32
    %40 = vector.broadcast %cst_23 : f32 to vector<128x1024xf32>
    %41 = arith.maximumf %39, %40 : vector<128x1024xf32>
    %42 = arith.truncf %41 : vector<128x1024xf32> to vector<128x1024xbf16>
    %c0_24 = arith.constant 0 : index
    %c0_25 = arith.constant 0 : index
    %43 = vector.load %arg9[%c0_24, %c0_25] : memref<1024x256xbf16, #tpu.memory_space<vmem>>, vector<1024x256xbf16>
    %cst_26 = arith.constant dense<0.000000e+00> : vector<128x256xf32>
    %44 = tpu.matmul %42, %43, %cst_26 {dimension_numbers = #tpu.dot_dimension_numbers<[1], [0], [0], [1], [0, 0, 1, 1], [], []>} : vector<128x1024xbf16>, vector<1024x256xbf16>, vector<128x256xf32> -> vector<128x256xf32>
    %c0_27 = arith.constant 0 : index
    %c0_28 = arith.constant 0 : index
    %45 = vector.load %arg10[%c0_27, %c0_28] : memref<1x256xf32, #tpu.memory_space<vmem>>, vector<1x256xf32>
    %46 = vector.broadcast %45 : vector<1x256xf32> to vector<128x256xf32>
    %47 = arith.addf %44, %46 : vector<128x256xf32>
    %48 = arith.addf %33, %47 : vector<128x256xf32>
    %c0_29 = arith.constant 0 : index
    %c0_30 = arith.constant 0 : index
    %49 = vector.load %arg11[%c0_29, %c0_30] : memref<1x256xf32, #tpu.memory_space<vmem>>, vector<1x256xf32>
    %c0_31 = arith.constant 0 : index
    %c0_32 = arith.constant 0 : index
    %50 = vector.load %arg12[%c0_31, %c0_32] : memref<1x256xf32, #tpu.memory_space<vmem>>, vector<1x256xf32>
    %cst_33 = arith.constant dense<0.000000e+00> : vector<128xf32>
    %51 = vector.multi_reduction <add>, %48, %cst_33 [1] : vector<128x256xf32> to vector<128xf32>
    %52 = vector.shape_cast %51 : vector<128xf32> to vector<128x1xf32>
    %cst_34 = arith.constant 2.560000e+02 : f32
    %53 = vector.broadcast %cst_34 : f32 to vector<128x1xf32>
    %54 = arith.divf %52, %53 : vector<128x1xf32>
    %55 = vector.broadcast %54 : vector<128x1xf32> to vector<128x256xf32>
    %56 = arith.subf %48, %55 : vector<128x256xf32>
    %57 = arith.mulf %56, %56 : vector<128x256xf32>
    %cst_35 = arith.constant dense<0.000000e+00> : vector<128xf32>
    %58 = vector.multi_reduction <add>, %57, %cst_35 [1] : vector<128x256xf32> to vector<128xf32>
    %59 = vector.shape_cast %58 : vector<128xf32> to vector<128x1xf32>
    %cst_36 = arith.constant 2.560000e+02 : f32
    %60 = vector.broadcast %cst_36 : f32 to vector<128x1xf32>
    %61 = arith.divf %59, %60 : vector<128x1xf32>
    %62 = vector.broadcast %54 : vector<128x1xf32> to vector<128x256xf32>
    %63 = arith.subf %48, %62 : vector<128x256xf32>
    %cst_37 = arith.constant 9.99999974E-6 : f32
    %64 = vector.broadcast %cst_37 : f32 to vector<128x1xf32>
    %65 = arith.addf %61, %64 : vector<128x1xf32>
    %66 = math.rsqrt %65 : vector<128x1xf32>
    %67 = vector.broadcast %66 : vector<128x1xf32> to vector<128x256xf32>
    %68 = arith.mulf %63, %67 : vector<128x256xf32>
    %69 = vector.broadcast %49 : vector<1x256xf32> to vector<128x256xf32>
    %70 = arith.mulf %68, %69 : vector<128x256xf32>
    %71 = vector.broadcast %50 : vector<1x256xf32> to vector<128x256xf32>
    %72 = arith.addf %70, %71 : vector<128x256xf32>
    %c0_38 = arith.constant 0 : index
    %c0_39 = arith.constant 0 : index
    %c0_40 = arith.constant 0 : index
    %73 = vector.load %arg13[%c0_38, %c0_39, %c0_40] : memref<1x128x256xf32, #tpu.memory_space<vmem>>, vector<1x128x256xf32>
    %74 = vector.shape_cast %73 : vector<1x128x256xf32> to vector<128x256xf32>
    %75 = vector.shape_cast %72 : vector<128x256xf32> to vector<1x128x256xf32>
    tpu.vector_store %arg13[%c0_38, %c0_39, %c0_40], %75 {strides = array<i32>} : memref<1x128x256xf32, #tpu.memory_space<vmem>>, vector<1x128x256xf32>,
    return
  }
  func.func @transform_0(%arg0: i32) -> (i32, i32, i32) {
    %c0_i32 = arith.constant 0 : i32
    %c0_i32_0 = arith.constant 0 : i32
    %c0_i32_1 = arith.constant 0 : i32
    return %arg0, %c0_i32, %c0_i32_0 : i32, i32, i32
  }
  func.func @transform_1(%arg0: i32) -> (i32, i32, i32) {
    %c0_i32 = arith.constant 0 : i32
    %c0_i32_0 = arith.constant 0 : i32
    %c0_i32_1 = arith.constant 0 : i32
    return %arg0, %c0_i32, %c0_i32_0 : i32, i32, i32
  }
  func.func @transform_2(%arg0: i32) -> (i32, i32) {
    %c0_i32 = arith.constant 0 : i32
    %c0_i32_0 = arith.constant 0 : i32
    %c0_i32_1 = arith.constant 0 : i32
    return %c0_i32, %c0_i32_0 : i32, i32
  }
  func.func @transform_3(%arg0: i32) -> (i32, i32) {
    %c0_i32 = arith.constant 0 : i32
    %c0_i32_0 = arith.constant 0 : i32
    %c0_i32_1 = arith.constant 0 : i32
    return %c0_i32, %c0_i32_0 : i32, i32
  }
  func.func @transform_4(%arg0: i32) -> (i32, i32) {
    %c0_i32 = arith.constant 0 : i32
    %c0_i32_0 = arith.constant 0 : i32
    %c0_i32_1 = arith.constant 0 : i32
    return %c0_i32, %c0_i32_0 : i32, i32
  }
  func.func @transform_5(%arg0: i32) -> (i32, i32) {
    %c0_i32 = arith.constant 0 : i32
    %c0_i32_0 = arith.constant 0 : i32
    %c0_i32_1 = arith.constant 0 : i32
    return %c0_i32, %c0_i32_0 : i32, i32
  }
  func.func @transform_6(%arg0: i32) -> (i32, i32) {
    %c0_i32 = arith.constant 0 : i32
    %c0_i32_0 = arith.constant 0 : i32
    %c0_i32_1 = arith.constant 0 : i32
    return %c0_i32, %c0_i32_0 : i32, i32
  }
  func.func @transform_7(%arg0: i32) -> (i32, i32) {
    %c0_i32 = arith.constant 0 : i32
    %c0_i32_0 = arith.constant 0 : i32
    %c0_i32_1 = arith.constant 0 : i32
    return %c0_i32, %c0_i32_0 : i32, i32
  }
  func.func @transform_8(%arg0: i32) -> (i32, i32) {
    %c0_i32 = arith.constant 0 : i32
    %c0_i32_0 = arith.constant 0 : i32
    %c0_i32_1 = arith.constant 0 : i32
    return %c0_i32, %c0_i32_0 : i32, i32
  }
  func.func @transform_9(%arg0: i32) -> (i32, i32) {
    %c0_i32 = arith.constant 0 : i32
    %c0_i32_0 = arith.constant 0 : i32
    %c0_i32_1 = arith.constant 0 : i32
    return %c0_i32, %c0_i32_0 : i32, i32
  }
  func.func @transform_10(%arg0: i32) -> (i32, i32) {
    %c0_i32 = arith.constant 0 : i32
    %c0_i32_0 = arith.constant 0 : i32
    %c0_i32_1 = arith.constant 0 : i32
    return %c0_i32, %c0_i32_0 : i32, i32
  }
  func.func @transform_11(%arg0: i32) -> (i32, i32) {
    %c0_i32 = arith.constant 0 : i32
    %c0_i32_0 = arith.constant 0 : i32
    %c0_i32_1 = arith.constant 0 : i32
    return %c0_i32, %c0_i32_0 : i32, i32
  }
  func.func @transform_12(%arg0: i32) -> (i32, i32, i32) {
    %c0_i32 = arith.constant 0 : i32
    %c0_i32_0 = arith.constant 0 : i32
    %c0_i32_1 = arith.constant 0 : i32
    return %arg0, %c0_i32, %c0_i32_0 : i32, i32, i32
  }
}

</mosaic_0001>

<llo_original>
// kernel: transformer_decoder_block.2
$region0: #{transformer_decoder_block.2}
  #allocation0 [shape = 'u32[]', space=smem, size = 0x4, offset = 0x4, fixed_abs, tag = 'smem constant byte address 0x4 - core index']
  #allocation1 [shape = 'u32[144,128]{1,0:T(1,128)}', space=vmem, size = 0x12000, scoped, tag = 'internal scratch']
  %s0 = inlined_call_operand.vmem [shape: bf16[2,128,256], index: 0, kind: input, shape index: {}]
  %s1 = inlined_call_operand.vmem [shape: bf16[256,256], index: 1, kind: input, shape index: {}]
  %s2 = inlined_call_operand.vmem [shape: f32[1,256], index: 2, kind: input, shape index: {}]
  %s3 = inlined_call_operand.vmem [shape: bf16[256,256], index: 3, kind: input, shape index: {}]
  %s4 = inlined_call_operand.vmem [shape: f32[1,256], index: 4, kind: input, shape index: {}]
  %s5 = inlined_call_operand.vmem [shape: bf16[256,256], index: 5, kind: input, shape index: {}]
  %s6 = inlined_call_operand.vmem [shape: f32[1,256], index: 6, kind: input, shape index: {}]
  %s7 = inlined_call_operand.vmem [shape: bf16[2,128,256], index: 7, kind: output, shape index: {0}]
  %s8 = inlined_call_operand.hbm [shape: f32[2,2,128,128], index: 8, kind: output, shape index: {1}]
  %9 = xla_tuple %s7, %s8
  %s10 = sld [smem:[#allocation0]]
  $region229: #{transformer_decoder_block.2} parent=0
    _
  %s12 = ssub.s32 1, %s10
  %s13 = scalar_select 0, %s12, %s10
  $region1: #{transformer_decoder_block.2} parent=0
    #allocation2 [shape = 'u8[131072]{0}', space=vmem, size = 0x20000, scoped, tag = 'input window, operand 1']
    #allocation3 [shape = 'u8[131072]{0}', space=vmem, size = 0x20000, scoped, tag = 'input window, operand 3']
    #allocation4 [shape = 'u8[131072]{0}', space=vmem, size = 0x20000, scoped, tag = 'input window, operand 5']
    #allocation5 [shape = 'u8[65536]{0}', space=vmem, size = 0x10000, scoped, tag = 'output window, operand 0']
    #allocation6 [shape = 'u8[131072]{0}', space=vmem, size = 0x20000, scoped, tag = 'output window, operand 1']
    #allocation7 [shape = 's32[2]{0}', space=sflag, size = 0x8, scoped, tag = 'scoped memory for transformer_decoder_block.2']
    %14 = vsyncpa [#allocation7], 0
    %s15 = scalar_lea.sflag [#allocation7], 1
    %16 = vsyncpa %s15, 0
    loop: start=0, step=1, limit=6
    $region2: #{transformer_decoder_block.2} parent=1 // loop_pre_header
      _
    $region3: #{transformer_decoder_block.2} parent=1 // loop_header
      %s18 = sphi 0, %s22
      %p19 = scmp.ge.s32.totalorder %s18, 6
      %s25 = sphi 0, %s37
      %s26 = sphi 0, %s33
      %s27 = sphi 0, %s25
      %s28 = sphi 0, %s26
      %s29 = sphi 0, %s27
      %s30 = sphi 0, %s28
      %s40 = sphi 0, %s42
      %s43 = sphi 0, %s40
      %s44 = sphi 0, %s43
      %s60 = sphi 0, %s44
      %s66 = sphi 0, %s68
      %s69 = sphi 0, %s66
      %s70 = sphi 0, %s69
      %s86 = sphi 0, %s70
      %s92 = sphi 0, %s94
      %s95 = sphi 0, %s92
      %s96 = sphi 0, %s95
      %s112 = sphi 0, %s96
      %s118 = sphi 0, %s120
      %s121 = sphi 0, %s118
      %s122 = sphi 0, %s121
      %s138 = sphi 0, %s122
      %s144 = sphi 0, %s146
      %s147 = sphi 0, %s144
      %s148 = sphi 0, %s147
      %s164 = sphi 0, %s148
      %s170 = sphi 0, %s172
      %s173 = sphi 0, %s170
      %s174 = sphi 0, %s173
      %s190 = sphi 0, %s174
      %s196 = sphi 0, %s198
      %s199 = sphi 0, %s196
      %s200 = sphi 0, %s199
      %s216 = sphi 0, %s200
      %s224 = sphi 0, %s226
      %s227 = sphi 0, %s224
      %s228 = sphi 0, %s227
      %s244 = sphi 0, %s228
      %s252 = sphi 0, %s254
      %s255 = sphi 0, %s252
      %s256 = sphi 0, %s255
      %s272 = sphi 0, %s256
    $region4: #{transformer_decoder_block.2} parent=1 // loop_header_branch
      %21 = sbr.rel (%p19) target = $region8
    $region5: #{transformer_decoder_block.2} parent=1 // loop_body
      %s23 = ssub.s32 %s18, 1
      %s24 = ssub.s32 %s18, 2
      %s31 = sadd.s32 1, %s26
      %p32 = scmp.ge.s32.totalorder %s31, 2
      %s33 = scalar_select %p32, 0, %s31
      %s34 = sadd.s32 1, %s25
      %s35 = scalar_select %p32, %s34, %s25
      %p36 = scmp.ge.s32.totalorder %s35, 2
      %s37 = scalar_select %p36, 0, %s35
      %s38 = ssub.s32 %s25, %s37
      %p39 = scmp.eq.s32.totalorder %s38, 0
      %s41 = sadd.s32 %s40, 1
      %s42 = scalar_select %p39, %s40, %s41
      %p45 = pneg %p39
      %p46 = scmp.eq.s32.totalorder %s18, 3
      %p47 = por %p45, %p46
      %p48 = scmp.ne.s32.totalorder %s40, %s43
      %p49 = scmp.eq.s32.totalorder %s18, 0
      %p50 = por %p48, %p49
      %p51 = scmp.ne.s32.totalorder %s40, %s43
      %p52 = scmp.eq.s32.totalorder %s23, 3
      %p53 = por %p51, %p52
      %p54 = scmp.ne.s32.totalorder %s43, %s44
      %p55 = scmp.eq.s32.totalorder %s23, 0
      %p56 = por %p54, %p55
      %p57 = scmp.ne.s32.totalorder %s43, %s44
      %p58 = scmp.eq.s32.totalorder %s24, 3
      %p59 = por %p57, %p58
      %p61 = scmp.ne.s32.totalorder %s44, %s60
      %p62 = scmp.eq.s32.totalorder %s24, 0
      %p63 = por %p61, %p62
      %s64 = ssub.s32 %s26, %s33
      %p65 = scmp.eq.s32.totalorder %s64, 0
      %s67 = sadd.s32 %s66, 1
      %s68 = scalar_select %p65, %s66, %s67
      %p71 = pneg %p65
      %p72 = scmp.eq.s32.totalorder %s18, 3
      %p73 = por %p71, %p72
      %p74 = scmp.ne.s32.totalorder %s66, %s69
      %p75 = scmp.eq.s32.totalorder %s18, 0
      %p76 = por %p74, %p75
      %p77 = scmp.ne.s32.totalorder %s66, %s69
      %p78 = scmp.eq.s32.totalorder %s23, 3
      %p79 = por %p77, %p78
      %p80 = scmp.ne.s32.totalorder %s69, %s70
      %p81 = scmp.eq.s32.totalorder %s23, 0
      %p82 = por %p80, %p81
      %p83 = scmp.ne.s32.totalorder %s69, %s70
      %p84 = scmp.eq.s32.totalorder %s24, 3
      %p85 = por %p83, %p84
      %p87 = scmp.ne.s32.totalorder %s70, %s86
      %p88 = scmp.eq.s32.totalorder %s24, 0
      %p89 = por %p87, %p88
      %s90 = ssub.s32 %s26, %s33
      %p91 = scmp.eq.s32.totalorder %s90, 0
      %s93 = sadd.s32 %s92, 1
      %s94 = scalar_select %p91, %s92, %s93
      %p97 = pneg %p91
      %p98 = scmp.eq.s32.totalorder %s18, 3
      %p99 = por %p97, %p98
      %p100 = scmp.ne.s32.totalorder %s92, %s95
      %p101 = scmp.eq.s32.totalorder %s18, 0
      %p102 = por %p100, %p101
      %p103 = scmp.ne.s32.totalorder %s92, %s95
      %p104 = scmp.eq.s32.totalorder %s23, 3
      %p105 = por %p103, %p104
      %p106 = scmp.ne.s32.totalorder %s95, %s96
      %p107 = scmp.eq.s32.totalorder %s23, 0
      %p108 = por %p106, %p107
      %p109 = scmp.ne.s32.totalorder %s95, %s96
      %p110 = scmp.eq.s32.totalorder %s24, 3
      %p111 = por %p109, %p110
      %p113 = scmp.ne.s32.totalorder %s96, %s112
      %p114 = scmp.eq.s32.totalorder %s24, 0
      %p115 = por %p113, %p114
      %s116 = ssub.s32 %s26, %s33
      %p117 = scmp.eq.s32.totalorder %s116, 0
      %s119 = sadd.s32 %s118, 1
      %s120 = scalar_select %p117, %s118, %s119
      %p123 = pneg %p117
      %p124 = scmp.eq.s32.totalorder %s18, 3
      %p125 = por %p123, %p124
      %p126 = scmp.ne.s32.totalorder %s118, %s121
      %p127 = scmp.eq.s32.totalorder %s18, 0
      %p128 = por %p126, %p127
      %p129 = scmp.ne.s32.totalorder %s118, %s121
      %p130 = scmp.eq.s32.totalorder %s23, 3
      %p131 = por %p129, %p130
      %p132 = scmp.ne.s32.totalorder %s121, %s122
      %p133 = scmp.eq.s32.totalorder %s23, 0
      %p134 = por %p132, %p133
      %p135 = scmp.ne.s32.totalorder %s121, %s122
      %p136 = scmp.eq.s32.totalorder %s24, 3
      %p137 = por %p135, %p136
      %p139 = scmp.ne.s32.totalorder %s122, %s138
      %p140 = scmp.eq.s32.totalorder %s24, 0
      %p141 = por %p139, %p140
      %s142 = ssub.s32 %s26, %s33
      %p143 = scmp.eq.s32.totalorder %s142, 0
      %s145 = sadd.s32 %s144, 1
      %s146 = scalar_select %p143, %s144, %s145
      %p149 = pneg %p143
      %p150 = scmp.eq.s32.totalorder %s18, 3
      %p151 = por %p149, %p150
      %p152 = scmp.ne.s32.totalorder %s144, %s147
      %p153 = scmp.eq.s32.totalorder %s18, 0
      %p154 = por %p152, %p153
      %p155 = scmp.ne.s32.totalorder %s144, %s147
      %p156 = scmp.eq.s32.totalorder %s23, 3
      %p157 = por %p155, %p156
      %p158 = scmp.ne.s32.totalorder %s147, %s148
      %p159 = scmp.eq.s32.totalorder %s23, 0
      %p160 = por %p158, %p159
      %p161 = scmp.ne.s32.totalorder %s147, %s148
      %p162 = scmp.eq.s32.totalorder %s24, 3
      %p163 = por %p161, %p162
      %p165 = scmp.ne.s32.totalorder %s148, %s164
      %p166 = scmp.eq.s32.totalorder %s24, 0
      %p167 = por %p165, %p166
      %s168 = ssub.s32 %s26, %s33
      %p169 = scmp.eq.s32.totalorder %s168, 0
      %s171 = sadd.s32 %s170, 1
      %s172 = scalar_select %p169, %s170, %s171
      %p175 = pneg %p169
      %p176 = scmp.eq.s32.totalorder %s18, 3
      %p177 = por %p175, %p176
      %p178 = scmp.ne.s32.totalorder %s170, %s173
      %p179 = scmp.eq.s32.totalorder %s18, 0
      %p180 = por %p178, %p179
      %p181 = scmp.ne.s32.totalorder %s170, %s173
      %p182 = scmp.eq.s32.totalorder %s23, 3
      %p183 = por %p181, %p182
      %p184 = scmp.ne.s32.totalorder %s173, %s174
      %p185 = scmp.eq.s32.totalorder %s23, 0
      %p186 = por %p184, %p185
      %p187 = scmp.ne.s32.totalorder %s173, %s174
      %p188 = scmp.eq.s32.totalorder %s24, 3
      %p189 = por %p187, %p188
      %p191 = scmp.ne.s32.totalorder %s174, %s190
      %p192 = scmp.eq.s32.totalorder %s24, 0
      %p193 = por %p191, %p192
      %s194 = ssub.s32 %s26, %s33
      %p195 = scmp.eq.s32.totalorder %s194, 0
      %s197 = sadd.s32 %s196, 1
      %s198 = scalar_select %p195, %s196, %s197
      %p201 = pneg %p195
      %p202 = scmp.eq.s32.totalorder %s18, 3
      %p203 = por %p201, %p202
      %p204 = scmp.ne.s32.totalorder %s196, %s199
      %p205 = scmp.eq.s32.totalorder %s18, 0
      %p206 = por %p204, %p205
      %p207 = scmp.ne.s32.totalorder %s196, %s199
      %p208 = scmp.eq.s32.totalorder %s23, 3
      %p209 = por %p207, %p208
      %p210 = scmp.ne.s32.totalorder %s199, %s200
      %p211 = scmp.eq.s32.totalorder %s23, 0
      %p212 = por %p210, %p211
      %p213 = scmp.ne.s32.totalorder %s199, %s200
      %p214 = scmp.eq.s32.totalorder %s24, 3
      %p215 = por %p213, %p214
      %p217 = scmp.ne.s32.totalorder %s200, %s216
      %p218 = scmp.eq.s32.totalorder %s24, 0
      %p219 = por %p217, %p218
      %s220 = ssub.s32 %s25, %s37
      %s221 = ssub.s32 %s26, %s33
      %s222 = sor.u32 %s220, %s221
      %p223 = scmp.eq.s32.totalorder %s222, 0
      %s225 = sadd.s32 %s224, 1
      %s226 = scalar_select %p223, %s224, %s225
      %p229 = pneg %p223
      %p230 = scmp.eq.s32.totalorder %s18, 3
      %p231 = por %p229, %p230
      %p232 = scmp.ne.s32.totalorder %s224, %s227
      %p233 = scmp.eq.s32.totalorder %s18, 0
      %p234 = por %p232, %p233
      %p235 = scmp.ne.s32.totalorder %s224, %s227
      %p236 = scmp.eq.s32.totalorder %s23, 3
      %p237 = por %p235, %p236
      %p238 = scmp.ne.s32.totalorder %s227, %s228
      %p239 = scmp.eq.s32.totalorder %s23, 0
      %p240 = por %p238, %p239
      %p241 = scmp.ne.s32.totalorder %s227, %s228
      %p242 = scmp.eq.s32.totalorder %s24, 3
      %p243 = por %p241, %p242
      %p245 = scmp.ne.s32.totalorder %s228, %s244
      %p246 = scmp.eq.s32.totalorder %s24, 0
      %p247 = por %p245, %p246
      %s248 = ssub.s32 %s25, %s37
      %s249 = ssub.s32 %s26, %s33
      %s250 = sor.u32 %s248, %s249
      %p251 = scmp.eq.s32.totalorder %s250, 0
      %s253 = sadd.s32 %s252, 1
      %s254 = scalar_select %p251, %s252, %s253
      %p257 = pneg %p251
      %p258 = scmp.eq.s32.totalorder %s18, 3
      %p259 = por %p257, %p258
      %p260 = scmp.ne.s32.totalorder %s252, %s255
      %p261 = scmp.eq.s32.totalorder %s18, 0
      %p262 = por %p260, %p261
      %p263 = scmp.ne.s32.totalorder %s252, %s255
      %p264 = scmp.eq.s32.totalorder %s23, 3
      %p265 = por %p263, %p264
      %p266 = scmp.ne.s32.totalorder %s255, %s256
      %p267 = scmp.eq.s32.totalorder %s23, 0
      %p268 = por %p266, %p267
      %p269 = scmp.ne.s32.totalorder %s255, %s256
      %p270 = scmp.eq.s32.totalorder %s24, 3
      %p271 = por %p269, %p270
      %p273 = scmp.ne.s32.totalorder %s256, %s272
      %p274 = scmp.eq.s32.totalorder %s24, 0
      %p275 = por %p273, %p274
      %p276 = scmp.le.s32.totalorder 1, %s18
      %p277 = scmp.lt.s32.totalorder %s18, 5
      %p278 = pnand %p276, %p277
      %p279 = pneg %p278
      // Predicated region
      $region9: #{transformer_decoder_block.2} parent=5 // pred_check
        _
      $region10: #{transformer_decoder_block.2} parent=5 // pred_check_branch
        %281 = sbr.rel (%p278) target = $region12
      $region11: #{transformer_decoder_block.2} parent=5 // pred_region
        %s282 = ssub.s32 %s18, 1
      $region12: #{transformer_decoder_block.2} parent=5 // pred_fallthru
        _
      %p283 = scmp.lt.s32.totalorder %s18, 4
      // Predicated region
      $region13: #{transformer_decoder_block.2} parent=5 // pred_check
        %p284 = pneg %p283
      $region14: #{transformer_decoder_block.2} parent=5 // pred_check_branch
        %286 = sbr.rel (%p284) target = $region16
      $region15: #{transformer_decoder_block.2} parent=5 // pred_region
        // Predicated region
        $region17: #{transformer_decoder_block.2} parent=15 // pred_check
          %p287 = pneg %p50
        $region18: #{transformer_decoder_block.2} parent=15 // pred_check_branch
          %289 = sbr.rel (%p287) target = $region20
        $region19: #{transformer_decoder_block.2} parent=15 // pred_region
          %p290 = scmp.lt.s32.totalorder %s25, 1
          %s291 = scalar_select %p290, %s25, 1
          %s292 = smul.addr %s291, 32
          %s293 = smul.addr %s292, 4
          %s294 = scalar_lea.vmem %s0, %s293
        $region20: #{transformer_decoder_block.2} parent=15 // pred_fallthru
          _
        // Predicated region
        $region21: #{transformer_decoder_block.2} parent=15 // pred_check
          %p295 = pneg %p76
        $region22: #{transformer_decoder_block.2} parent=15 // pred_check_branch
          %297 = sbr.rel (%p295) target = $region24
        $region23: #{transformer_decoder_block.2} parent=15 // pred_region
          %s298 = sand.u32 %s66, 1
          %s299 = sand.u32 %s66, 1
          %s300 = smul.addr %s299, 128
          %s301 = scalar_lea.vmem [#allocation2], %s300
          %s302 = smul.addr %s26, 4
          %s303 = scalar_lea.vmem %s1, %s302
          // Predicated region
          $region25: #{transformer_decoder_block.2} parent=23 // pred_check
            _
          $region26: #{transformer_decoder_block.2} parent=23 // pred_check_branch
            %305 = sbr.rel (0) target = $region28
          $region27: #{transformer_decoder_block.2} parent=23 // pred_region
            // Predicated region
            $region29: #{transformer_decoder_block.2} parent=27 // pred_check
              _
            $region30: #{transformer_decoder_block.2} parent=27 // pred_check_branch
              %307 = sbr.rel target = $region32
            $region31: #{transformer_decoder_block.2} parent=27 // pred_region
              // Predicated region
              $region44: #{transformer_decoder_block.2} parent=31 // pred_check
                _
              $region45: #{transformer_decoder_block.2} parent=31 // pred_check_branch
                %384 = sbr.rel (0) target = $region47
              $region46: #{transformer_decoder_block.2} parent=31 // pred_region
                loop: start=0, step=1, limit=1
                $region48: #{transformer_decoder_block.2} parent=46 // loop_pre_header
                  _
                $region49: #{transformer_decoder_block.2} parent=46 // loop_header
                  %s386 = sphi 0, %s390
                  %p387 = scmp.ge.s32.totalorder %s386, 1
                  %s391 = sphi %s303, %s303
                  %s392 = sphi %s301, %s301
                $region50: #{transformer_decoder_block.2} parent=46 // loop_header_branch
                  %389 = sbr.rel (%p387) target = $region54
                $region51: #{transformer_decoder_block.2} parent=46 // loop_body
                  _
                $region52: #{transformer_decoder_block.2} parent=46 // loop_footer
                  %s390 = sadd.s32 1, %s386
                $region53: #{transformer_decoder_block.2} parent=46 // loop_footer_branch
                  %385 = sbr.rel target = $region49
                $region54: #{transformer_decoder_block.2} parent=46 // loop_exit
                  _
                loop: start=0, step=1, limit=1
                $region55: #{transformer_decoder_block.2} parent=46 // loop_pre_header
                  _
                $region56: #{transformer_decoder_block.2} parent=46 // loop_header
                  %s395 = sphi 0, %s399
                  %p396 = scmp.ge.s32.totalorder %s395, 1
                  %s400 = sphi %s303, %s303
                  %s401 = sphi %s301, %s301
                $region57: #{transformer_decoder_block.2} parent=46 // loop_header_branch
                  %398 = sbr.rel (%p396) target = $region61
                $region58: #{transformer_decoder_block.2} parent=46 // loop_body
                  %v402 = vld [vmem:[%s400] sm:$0xf]
                  %403 = vst [vmem:[%s401] sm:$0xf] %v402
                  %v404 = vld [vmem:[%s400 + $0x8] sm:$0xf]
                  %405 = vst [vmem:[%s401 + $0x4] sm:$0xf] %v404
                  %v406 = vld [vmem:[%s400 + $0x10] sm:$0xf]
                  %407 = vst [vmem:[%s401 + $0x8] sm:$0xf] %v406
                  %v408 = vld [vmem:[%s400 + $0x18] sm:$0xf]
                  %409 = vst [vmem:[%s401 + $0xc] sm:$0xf] %v408
                  %v410 = vld [vmem:[%s400 + $0x20] sm:$0xf]
                  %411 = vst [vmem:[%s401 + $0x10] sm:$0xf] %v410
                  %v412 = vld [vmem:[%s400 + $0x28] sm:$0xf]
                  %413 = vst [vmem:[%s401 + $0x14] sm:$0xf] %v412
                  %v414 = vld [vmem:[%s400 + $0x30] sm:$0xf]
                  %415 = vst [vmem:[%s401 + $0x18] sm:$0xf] %v414
                  %v416 = vld [vmem:[%s400 + $0x38] sm:$0xf]
                  %417 = vst [vmem:[%s401 + $0x1c] sm:$0xf] %v416
                  %v418 = vld [vmem:[%s400 + $0x40] sm:$0xf]
                  %419 = vst [vmem:[%s401 + $0x20] sm:$0xf] %v418
                  %v420 = vld [vmem:[%s400 + $0x48] sm:$0xf]
                  %421 = vst [vmem:[%s401 + $0x24] sm:$0xf] %v420
                  %v422 = vld [vmem:[%s400 + $0x50] sm:$0xf]
                  %423 = vst [vmem:[%s401 + $0x28] sm:$0xf] %v422
                  %v424 = vld [vmem:[%s400 + $0x58] sm:$0xf]
                  %425 = vst [vmem:[%s401 + $0x2c] sm:$0xf] %v424
                  %v426 = vld [vmem:[%s400 + $0x60] sm:$0xf]
                  %427 = vst [vmem:[%s401 + $0x30] sm:$0xf] %v426
                  %v428 = vld [vmem:[%s400 + $0x68] sm:$0xf]
                  %429 = vst [vmem:[%s401 + $0x34] sm:$0xf] %v428
                  %v430 = vld [vmem:[%s400 + $0x70] sm:$0xf]
                  %431 = vst [vmem:[%s401 + $0x38] sm:$0xf] %v430
                  %v432 = vld [vmem:[%s400 + $0x78] sm:$0xf]
                  %433 = vst [vmem:[%s401 + $0x3c] sm:$0xf] %v432
                  %v434 = vld [vmem:[%s400 + $0x80] sm:$0xf]
                  %435 = vst [vmem:[%s401 + $0x40] sm:$0xf] %v434
                  %v436 = vld [vmem:[%s400 + $0x88] sm:$0xf]
                  %437 = vst [vmem:[%s401 + $0x44] sm:$0xf] %v436
                  %v438 = vld [vmem:[%s400 + $0x90] sm:$0xf]
                  %439 = vst [vmem:[%s401 + $0x48] sm:$0xf] %v438
                  %v440 = vld [vmem:[%s400 + $0x98] sm:$0xf]
                  %441 = vst [vmem:[%s401 + $0x4c] sm:$0xf] %v440
                  %v442 = vld [vmem:[%s400 + $0xa0] sm:$0xf]
                  %443 = vst [vmem:[%s401 + $0x50] sm:$0xf] %v442
                  %v444 = vld [vmem:[%s400 + $0xa8] sm:$0xf]
                  %445 = vst [vmem:[%s401 + $0x54] sm:$0xf] %v444
                  %v446 = vld [vmem:[%s400 + $0xb0] sm:$0xf]
                  %447 = vst [vmem:[%s401 + $0x58] sm:$0xf] %v446
                  %v448 = vld [vmem:[%s400 + $0xb8] sm:$0xf]
                  %449 = vst [vmem:[%s401 + $0x5c] sm:$0xf] %v448
                  %v450 = vld [vmem:[%s400 + $0xc0] sm:$0xf]
                  %451 = vst [vmem:[%s401 + $0x60] sm:$0xf] %v450
                  %v452 = vld [vmem:[%s400 + $0xc8] sm:$0xf]
                  %453 = vst [vmem:[%s401 + $0x64] sm:$0xf] %v452
                  %v454 = vld [vmem:[%s400 + $0xd0] sm:$0xf]
                  %455 = vst [vmem:[%s401 + $0x68] sm:$0xf] %v454
                  %v456 = vld [vmem:[%s400 + $0xd8] sm:$0xf]
                  %457 = vst [vmem:[%s401 + $0x6c] sm:$0xf] %v456
                  %v458 = vld [vmem:[%s400 + $0xe0] sm:$0xf]
                  %459 = vst [vmem:[%s401 + $0x70] sm:$0xf] %v458
                  %v460 = vld [vmem:[%s400 + $0xe8] sm:$0xf]
                  %461 = vst [vmem:[%s401 + $0x74] sm:$0xf] %v460
                  %v462 = vld [vmem:[%s400 + $0xf0] sm:$0xf]
                  %463 = vst [vmem:[%s401 + $0x78] sm:$0xf] %v462
                  %v464 = vld [vmem:[%s400 + $0xf8] sm:$0xf]
                  %465 = vst [vmem:[%s401 + $0x7c] sm:$0xf] %v464
                $region59: #{transformer_decoder_block.2} parent=46 // loop_footer
                  %s399 = sadd.s32 1, %s395
                $region60: #{transformer_decoder_block.2} parent=46 // loop_footer_branch
                  %394 = sbr.rel target = $region56
                $region61: #{transformer_decoder_block.2} parent=46 // loop_exit
                  _
              $region47: #{transformer_decoder_block.2} parent=31 // pred_fallthru
                _
            $region32: #{transformer_decoder_block.2} parent=27 // pred_fallthru
              _
            // Predicated region
            $region33: #{transformer_decoder_block.2} parent=27 // pred_check
              _
            $region34: #{transformer_decoder_block.2} parent=27 // pred_check_branch
              %309 = sbr.rel (0) target = $region36
            $region35: #{transformer_decoder_block.2} parent=27 // pred_region
              loop: start=0, step=1, limit=1
              $region37: #{transformer_decoder_block.2} parent=35 // loop_pre_header
                _
              $region38: #{transformer_decoder_block.2} parent=35 // loop_header
                %s312 = sphi 0, %s316
                %p313 = scmp.ge.s32.totalorder %s312, 1
                %s317 = sphi %s303, %s303
                %s318 = sphi %s301, %s301
              $region39: #{transformer_decoder_block.2} parent=35 // loop_header_branch
                %315 = sbr.rel (%p313) target = $region43
              $region40: #{transformer_decoder_block.2} parent=35 // loop_body
                %v319 = vld [vmem:[%s317] sm:$0xf]
                %320 = vst [vmem:[%s318] sm:$0xf] %v319
                %v321 = vld [vmem:[%s317 + $0x8] sm:$0xf]
                %322 = vst [vmem:[%s318 + $0x4] sm:$0xf] %v321
                %v323 = vld [vmem:[%s317 + $0x10] sm:$0xf]
                %324 = vst [vmem:[%s318 + $0x8] sm:$0xf] %v323
                %v325 = vld [vmem:[%s317 + $0x18] sm:$0xf]
                %326 = vst [vmem:[%s318 + $0xc] sm:$0xf] %v325
                %v327 = vld [vmem:[%s317 + $0x20] sm:$0xf]
                %328 = vst [vmem:[%s318 + $0x10] sm:$0xf] %v327
                %v329 = vld [vmem:[%s317 + $0x28] sm:$0xf]
                %330 = vst [vmem:[%s318 + $0x14] sm:$0xf] %v329
                %v331 = vld [vmem:[%s317 + $0x30] sm:$0xf]
                %332 = vst [vmem:[%s318 + $0x18] sm:$0xf] %v331
                %v333 = vld [vmem:[%s317 + $0x38] sm:$0xf]
                %334 = vst [vmem:[%s318 + $0x1c] sm:$0xf] %v333
                %v335 = vld [vmem:[%s317 + $0x40] sm:$0xf]
                %336 = vst [vmem:[%s318 + $0x20] sm:$0xf] %v335
                %v337 = vld [vmem:[%s317 + $0x48] sm:$0xf]
                %338 = vst [vmem:[%s318 + $0x24] sm:$0xf] %v337
                %v339 = vld [vmem:[%s317 + $0x50] sm:$0xf]
                %340 = vst [vmem:[%s318 + $0x28] sm:$0xf] %v339
                %v341 = vld [vmem:[%s317 + $0x58] sm:$0xf]
                %342 = vst [vmem:[%s318 + $0x2c] sm:$0xf] %v341
                %v343 = vld [vmem:[%s317 + $0x60] sm:$0xf]
                %344 = vst [vmem:[%s318 + $0x30] sm:$0xf] %v343
                %v345 = vld [vmem:[%s317 + $0x68] sm:$0xf]
                %346 = vst [vmem:[%s318 + $0x34] sm:$0xf] %v345
                %v347 = vld [vmem:[%s317 + $0x70] sm:$0xf]
                %348 = vst [vmem:[%s318 + $0x38] sm:$0xf] %v347
                %v349 = vld [vmem:[%s317 + $0x78] sm:$0xf]
                %350 = vst [vmem:[%s318 + $0x3c] sm:$0xf] %v349
                %v351 = vld [vmem:[%s317 + $0x80] sm:$0xf]
                %352 = vst [vmem:[%s318 + $0x40] sm:$0xf] %v351
                %v353 = vld [vmem:[%s317 + $0x88] sm:$0xf]
                %354 = vst [vmem:[%s318 + $0x44] sm:$0xf] %v353
                %v355 = vld [vmem:[%s317 + $0x90] sm:$0xf]
                %356 = vst [vmem:[%s318 + $0x48] sm:$0xf] %v355
                %v357 = vld [vmem:[%s317 + $0x98] sm:$0xf]
                %358 = vst [vmem:[%s318 + $0x4c] sm:$0xf] %v357
                %v359 = vld [vmem:[%s317 + $0xa0] sm:$0xf]
                %360 = vst [vmem:[%s318 + $0x50] sm:$0xf] %v359
                %v361 = vld [vmem:[%s317 + $0xa8] sm:$0xf]
                %362 = vst [vmem:[%s318 + $0x54] sm:$0xf] %v361
                %v363 = vld [vmem:[%s317 + $0xb0] sm:$0xf]
                %364 = vst [vmem:[%s318 + $0x58] sm:$0xf] %v363
                %v365 = vld [vmem:[%s317 + $0xb8] sm:$0xf]
                %366 = vst [vmem:[%s318 + $0x5c] sm:$0xf] %v365
                %v367 = vld [vmem:[%s317 + $0xc0] sm:$0xf]
                %368 = vst [vmem:[%s318 + $0x60] sm:$0xf] %v367
                %v369 = vld [vmem:[%s317 + $0xc8] sm:$0xf]
                %370 = vst [vmem:[%s318 + $0x64] sm:$0xf] %v369
                %v371 = vld [vmem:[%s317 + $0xd0] sm:$0xf]
                %372 = vst [vmem:[%s318 + $0x68] sm:$0xf] %v371
                %v373 = vld [vmem:[%s317 + $0xd8] sm:$0xf]
                %374 = vst [vmem:[%s318 + $0x6c] sm:$0xf] %v373
                %v375 = vld [vmem:[%s317 + $0xe0] sm:$0xf]
                %376 = vst [vmem:[%s318 + $0x70] sm:$0xf] %v375
                %v377 = vld [vmem:[%s317 + $0xe8] sm:$0xf]
                %378 = vst [vmem:[%s318 + $0x74] sm:$0xf] %v377
                %v379 = vld [vmem:[%s317 + $0xf0] sm:$0xf]
                %380 = vst [vmem:[%s318 + $0x78] sm:$0xf] %v379
                %v381 = vld [vmem:[%s317 + $0xf8] sm:$0xf]
                %382 = vst [vmem:[%s318 + $0x7c] sm:$0xf] %v381
              $region41: #{transformer_decoder_block.2} parent=35 // loop_footer
                %s316 = sadd.s32 1, %s312
              $region42: #{transformer_decoder_block.2} parent=35 // loop_footer_branch
                %311 = sbr.rel target = $region38
              $region43: #{transformer_decoder_block.2} parent=35 // loop_exit
                _
            $region36: #{transformer_decoder_block.2} parent=27 // pred_fallthru
              _
          $region28: #{transformer_decoder_block.2} parent=23 // pred_fallthru
            _
          %466 = vnop
        $region24: #{transformer_decoder_block.2} parent=15 // pred_fallthru
          _
        // Predicated region
        $region62: #{transformer_decoder_block.2} parent=15 // pred_check
          %p467 = pneg %p102
        $region63: #{transformer_decoder_block.2} parent=15 // pred_check_branch
          %469 = sbr.rel (%p467) target = $region65
        $region64: #{transformer_decoder_block.2} parent=15 // pred_region
          %p470 = scmp.lt.s32.totalorder %s26, 1
          %s471 = scalar_select %p470, %s26, 1
          %s472 = scalar_lea.vmem %s2, %s471
        $region65: #{transformer_decoder_block.2} parent=15 // pred_fallthru
          _
        // Predicated region
        $region66: #{transformer_decoder_block.2} parent=15 // pred_check
          %p473 = pneg %p128
        $region67: #{transformer_decoder_block.2} parent=15 // pred_check_branch
          %475 = sbr.rel (%p473) target = $region69
        $region68: #{transformer_decoder_block.2} parent=15 // pred_region
          %s476 = sand.u32 %s118, 1
          %s477 = sand.u32 %s118, 1
          %s478 = smul.addr %s477, 128
          %s479 = scalar_lea.vmem [#allocation3], %s478
          %s480 = smul.addr %s26, 4
          %s481 = scalar_lea.vmem %s3, %s480
          // Predicated region
          $region70: #{transformer_decoder_block.2} parent=68 // pred_check
            _
          $region71: #{transformer_decoder_block.2} parent=68 // pred_check_branch
            %483 = sbr.rel (0) target = $region73
          $region72: #{transformer_decoder_block.2} parent=68 // pred_region
            // Predicated region
            $region74: #{transformer_decoder_block.2} parent=72 // pred_check
              _
            $region75: #{transformer_decoder_block.2} parent=72 // pred_check_branch
              %485 = sbr.rel target = $region77
            $region76: #{transformer_decoder_block.2} parent=72 // pred_region
              // Predicated region
              $region89: #{transformer_decoder_block.2} parent=76 // pred_check
                _
              $region90: #{transformer_decoder_block.2} parent=76 // pred_check_branch
                %562 = sbr.rel (0) target = $region92
              $region91: #{transformer_decoder_block.2} parent=76 // pred_region
                loop: start=0, step=1, limit=1
                $region93: #{transformer_decoder_block.2} parent=91 // loop_pre_header
                  _
                $region94: #{transformer_decoder_block.2} parent=91 // loop_header
                  %s564 = sphi 0, %s568
                  %p565 = scmp.ge.s32.totalorder %s564, 1
                  %s569 = sphi %s481, %s481
                  %s570 = sphi %s479, %s479
                $region95: #{transformer_decoder_block.2} parent=91 // loop_header_branch
                  %567 = sbr.rel (%p565) target = $region99
                $region96: #{transformer_decoder_block.2} parent=91 // loop_body
                  _
                $region97: #{transformer_decoder_block.2} parent=91 // loop_footer
                  %s568 = sadd.s32 1, %s564
                $region98: #{transformer_decoder_block.2} parent=91 // loop_footer_branch
                  %563 = sbr.rel target = $region94
                $region99: #{transformer_decoder_block.2} parent=91 // loop_exit
                  _
                loop: start=0, step=1, limit=1
                $region100: #{transformer_decoder_block.2} parent=91 // loop_pre_header
                  _
                $region101: #{transformer_decoder_block.2} parent=91 // loop_header
                  %s573 = sphi 0, %s577
                  %p574 = scmp.ge.s32.totalorder %s573, 1
                  %s578 = sphi %s481, %s481
                  %s579 = sphi %s479, %s479
                $region102: #{transformer_decoder_block.2} parent=91 // loop_header_branch
                  %576 = sbr.rel (%p574) target = $region106
                $region103: #{transformer_decoder_block.2} parent=91 // loop_body
                  %v580 = vld [vmem:[%s578] sm:$0xf]
                  %581 = vst [vmem:[%s579] sm:$0xf] %v580
                  %v582 = vld [vmem:[%s578 + $0x8] sm:$0xf]
                  %583 = vst [vmem:[%s579 + $0x4] sm:$0xf] %v582
                  %v584 = vld [vmem:[%s578 + $0x10] sm:$0xf]
                  %585 = vst [vmem:[%s579 + $0x8] sm:$0xf] %v584
                  %v586 = vld [vmem:[%s578 + $0x18] sm:$0xf]
                  %587 = vst [vmem:[%s579 + $0xc] sm:$0xf] %v586
                  %v588 = vld [vmem:[%s578 + $0x20] sm:$0xf]
                  %589 = vst [vmem:[%s579 + $0x10] sm:$0xf] %v588
                  %v590 = vld [vmem:[%s578 + $0x28] sm:$0xf]
                  %591 = vst [vmem:[%s579 + $0x14] sm:$0xf] %v590
                  %v592 = vld [vmem:[%s578 + $0x30] sm:$0xf]
                  %593 = vst [vmem:[%s579 + $0x18] sm:$0xf] %v592
                  %v594 = vld [vmem:[%s578 + $0x38] sm:$0xf]
                  %595 = vst [vmem:[%s579 + $0x1c] sm:$0xf] %v594
                  %v596 = vld [vmem:[%s578 + $0x40] sm:$0xf]
                  %597 = vst [vmem:[%s579 + $0x20] sm:$0xf] %v596
                  %v598 = vld [vmem:[%s578 + $0x48] sm:$0xf]
                  %599 = vst [vmem:[%s579 + $0x24] sm:$0xf] %v598
                  %v600 = vld [vmem:[%s578 + $0x50] sm:$0xf]
                  %601 = vst [vmem:[%s579 + $0x28] sm:$0xf] %v600
                  %v602 = vld [vmem:[%s578 + $0x58] sm:$0xf]
                  %603 = vst [vmem:[%s579 + $0x2c] sm:$0xf] %v602
                  %v604 = vld [vmem:[%s578 + $0x60] sm:$0xf]
                  %605 = vst [vmem:[%s579 + $0x30] sm:$0xf] %v604
                  %v606 = vld [vmem:[%s578 + $0x68] sm:$0xf]
                  %607 = vst [vmem:[%s579 + $0x34] sm:$0xf] %v606
                  %v608 = vld [vmem:[%s578 + $0x70] sm:$0xf]
                  %609 = vst [vmem:[%s579 + $0x38] sm:$0xf] %v608
                  %v610 = vld [vmem:[%s578 + $0x78] sm:$0xf]
                  %611 = vst [vmem:[%s579 + $0x3c] sm:$0xf] %v610
                  %v612 = vld [vmem:[%s578 + $0x80] sm:$0xf]
                  %613 = vst [vmem:[%s579 + $0x40] sm:$0xf] %v612
                  %v614 = vld [vmem:[%s578 + $0x88] sm:$0xf]
                  %615 = vst [vmem:[%s579 + $0x44] sm:$0xf] %v614
                  %v616 = vld [vmem:[%s578 + $0x90] sm:$0xf]
                  %617 = vst [vmem:[%s579 + $0x48] sm:$0xf] %v616
                  %v618 = vld [vmem:[%s578 + $0x98] sm:$0xf]
                  %619 = vst [vmem:[%s579 + $0x4c] sm:$0xf] %v618
                  %v620 = vld [vmem:[%s578 + $0xa0] sm:$0xf]
                  %621 = vst [vmem:[%s579 + $0x50] sm:$0xf] %v620
                  %v622 = vld [vmem:[%s578 + $0xa8] sm:$0xf]
                  %623 = vst [vmem:[%s579 + $0x54] sm:$0xf] %v622
                  %v624 = vld [vmem:[%s578 + $0xb0] sm:$0xf]
                  %625 = vst [vmem:[%s579 + $0x58] sm:$0xf] %v624
                  %v626 = vld [vmem:[%s578 + $0xb8] sm:$0xf]
                  %627 = vst [vmem:[%s579 + $0x5c] sm:$0xf] %v626
                  %v628 = vld [vmem:[%s578 + $0xc0] sm:$0xf]
                  %629 = vst [vmem:[%s579 + $0x60] sm:$0xf] %v628
                  %v630 = vld [vmem:[%s578 + $0xc8] sm:$0xf]
                  %631 = vst [vmem:[%s579 + $0x64] sm:$0xf] %v630
                  %v632 = vld [vmem:[%s578 + $0xd0] sm:$0xf]
                  %633 = vst [vmem:[%s579 + $0x68] sm:$0xf] %v632
                  %v634 = vld [vmem:[%s578 + $0xd8] sm:$0xf]
                  %635 = vst [vmem:[%s579 + $0x6c] sm:$0xf] %v634
                  %v636 = vld [vmem:[%s578 + $0xe0] sm:$0xf]
                  %637 = vst [vmem:[%s579 + $0x70] sm:$0xf] %v636
                  %v638 = vld [vmem:[%s578 + $0xe8] sm:$0xf]
                  %639 = vst [vmem:[%s579 + $0x74] sm:$0xf] %v638
                  %v640 = vld [vmem:[%s578 + $0xf0] sm:$0xf]
                  %641 = vst [vmem:[%s579 + $0x78] sm:$0xf] %v640
                  %v642 = vld [vmem:[%s578 + $0xf8] sm:$0xf]
                  %643 = vst [vmem:[%s579 + $0x7c] sm:$0xf] %v642
                $region104: #{transformer_decoder_block.2} parent=91 // loop_footer
                  %s577 = sadd.s32 1, %s573
                $region105: #{transformer_decoder_block.2} parent=91 // loop_footer_branch
                  %572 = sbr.rel target = $region101
                $region106: #{transformer_decoder_block.2} parent=91 // loop_exit
                  _
              $region92: #{transformer_decoder_block.2} parent=76 // pred_fallthru
                _
            $region77: #{transformer_decoder_block.2} parent=72 // pred_fallthru
              _
            // Predicated region
            $region78: #{transformer_decoder_block.2} parent=72 // pred_check
              _
            $region79: #{transformer_decoder_block.2} parent=72 // pred_check_branch
              %487 = sbr.rel (0) target = $region81
            $region80: #{transformer_decoder_block.2} parent=72 // pred_region
              loop: start=0, step=1, limit=1
              $region82: #{transformer_decoder_block.2} parent=80 // loop_pre_header
                _
              $region83: #{transformer_decoder_block.2} parent=80 // loop_header
                %s490 = sphi 0, %s494
                %p491 = scmp.ge.s32.totalorder %s490, 1
                %s495 = sphi %s481, %s481
                %s496 = sphi %s479, %s479
              $region84: #{transformer_decoder_block.2} parent=80 // loop_header_branch
                %493 = sbr.rel (%p491) target = $region88
              $region85: #{transformer_decoder_block.2} parent=80 // loop_body
                %v497 = vld [vmem:[%s495] sm:$0xf]
                %498 = vst [vmem:[%s496] sm:$0xf] %v497
                %v499 = vld [vmem:[%s495 + $0x8] sm:$0xf]
                %500 = vst [vmem:[%s496 + $0x4] sm:$0xf] %v499
                %v501 = vld [vmem:[%s495 + $0x10] sm:$0xf]
                %502 = vst [vmem:[%s496 + $0x8] sm:$0xf] %v501
                %v503 = vld [vmem:[%s495 + $0x18] sm:$0xf]
                %504 = vst [vmem:[%s496 + $0xc] sm:$0xf] %v503
                %v505 = vld [vmem:[%s495 + $0x20] sm:$0xf]
                %506 = vst [vmem:[%s496 + $0x10] sm:$0xf] %v505
                %v507 = vld [vmem:[%s495 + $0x28] sm:$0xf]
                %508 = vst [vmem:[%s496 + $0x14] sm:$0xf] %v507
                %v509 = vld [vmem:[%s495 + $0x30] sm:$0xf]
                %510 = vst [vmem:[%s496 + $0x18] sm:$0xf] %v509
                %v511 = vld [vmem:[%s495 + $0x38] sm:$0xf]
                %512 = vst [vmem:[%s496 + $0x1c] sm:$0xf] %v511
                %v513 = vld [vmem:[%s495 + $0x40] sm:$0xf]
                %514 = vst [vmem:[%s496 + $0x20] sm:$0xf] %v513
                %v515 = vld [vmem:[%s495 + $0x48] sm:$0xf]
                %516 = vst [vmem:[%s496 + $0x24] sm:$0xf] %v515
                %v517 = vld [vmem:[%s495 + $0x50] sm:$0xf]
                %518 = vst [vmem:[%s496 + $0x28] sm:$0xf] %v517
                %v519 = vld [vmem:[%s495 + $0x58] sm:$0xf]
                %520 = vst [vmem:[%s496 + $0x2c] sm:$0xf] %v519
                %v521 = vld [vmem:[%s495 + $0x60] sm:$0xf]
                %522 = vst [vmem:[%s496 + $0x30] sm:$0xf] %v521
                %v523 = vld [vmem:[%s495 + $0x68] sm:$0xf]
                %524 = vst [vmem:[%s496 + $0x34] sm:$0xf] %v523
                %v525 = vld [vmem:[%s495 + $0x70] sm:$0xf]
                %526 = vst [vmem:[%s496 + $0x38] sm:$0xf] %v525
                %v527 = vld [vmem:[%s495 + $0x78] sm:$0xf]
                %528 = vst [vmem:[%s496 + $0x3c] sm:$0xf] %v527
                %v529 = vld [vmem:[%s495 + $0x80] sm:$0xf]
                %530 = vst [vmem:[%s496 + $0x40] sm:$0xf] %v529
                %v531 = vld [vmem:[%s495 + $0x88] sm:$0xf]
                %532 = vst [vmem:[%s496 + $0x44] sm:$0xf] %v531
                %v533 = vld [vmem:[%s495 + $0x90] sm:$0xf]
                %534 = vst [vmem:[%s496 + $0x48] sm:$0xf] %v533
                %v535 = vld [vmem:[%s495 + $0x98] sm:$0xf]
                %536 = vst [vmem:[%s496 + $0x4c] sm:$0xf] %v535
                %v537 = vld [vmem:[%s495 + $0xa0] sm:$0xf]
                %538 = vst [vmem:[%s496 + $0x50] sm:$0xf] %v537
                %v539 = vld [vmem:[%s495 + $0xa8] sm:$0xf]
                %540 = vst [vmem:[%s496 + $0x54] sm:$0xf] %v539
                %v541 = vld [vmem:[%s495 + $0xb0] sm:$0xf]
                %542 = vst [vmem:[%s496 + $0x58] sm:$0xf] %v541
                %v543 = vld [vmem:[%s495 + $0xb8] sm:$0xf]
                %544 = vst [vmem:[%s496 + $0x5c] sm:$0xf] %v543
                %v545 = vld [vmem:[%s495 + $0xc0] sm:$0xf]
                %546 = vst [vmem:[%s496 + $0x60] sm:$0xf] %v545
                %v547 = vld [vmem:[%s495 + $0xc8] sm:$0xf]
                %548 = vst [vmem:[%s496 + $0x64] sm:$0xf] %v547
                %v549 = vld [vmem:[%s495 + $0xd0] sm:$0xf]
                %550 = vst [vmem:[%s496 + $0x68] sm:$0xf] %v549
                %v551 = vld [vmem:[%s495 + $0xd8] sm:$0xf]
                %552 = vst [vmem:[%s496 + $0x6c] sm:$0xf] %v551
                %v553 = vld [vmem:[%s495 + $0xe0] sm:$0xf]
                %554 = vst [vmem:[%s496 + $0x70] sm:$0xf] %v553
                %v555 = vld [vmem:[%s495 + $0xe8] sm:$0xf]
                %556 = vst [vmem:[%s496 + $0x74] sm:$0xf] %v555
                %v557 = vld [vmem:[%s495 + $0xf0] sm:$0xf]
                %558 = vst [vmem:[%s496 + $0x78] sm:$0xf] %v557
                %v559 = vld [vmem:[%s495 + $0xf8] sm:$0xf]
                %560 = vst [vmem:[%s496 + $0x7c] sm:$0xf] %v559
              $region86: #{transformer_decoder_block.2} parent=80 // loop_footer
                %s494 = sadd.s32 1, %s490
              $region87: #{transformer_decoder_block.2} parent=80 // loop_footer_branch
                %489 = sbr.rel target = $region83
              $region88: #{transformer_decoder_block.2} parent=80 // loop_exit
                _
            $region81: #{transformer_decoder_block.2} parent=72 // pred_fallthru
              _
          $region73: #{transformer_decoder_block.2} parent=68 // pred_fallthru
            _
          %644 = vnop
        $region69: #{transformer_decoder_block.2} parent=15 // pred_fallthru
          _
        // Predicated region
        $region107: #{transformer_decoder_block.2} parent=15 // pred_check
          %p645 = pneg %p154
        $region108: #{transformer_decoder_block.2} parent=15 // pred_check_branch
          %647 = sbr.rel (%p645) target = $region110
        $region109: #{transformer_decoder_block.2} parent=15 // pred_region
          %p648 = scmp.lt.s32.totalorder %s26, 1
          %s649 = scalar_select %p648, %s26, 1
          %s650 = scalar_lea.vmem %s4, %s649
        $region110: #{transformer_decoder_block.2} parent=15 // pred_fallthru
          _
        // Predicated region
        $region111: #{transformer_decoder_block.2} parent=15 // pred_check
          %p651 = pneg %p180
        $region112: #{transformer_decoder_block.2} parent=15 // pred_check_branch
          %653 = sbr.rel (%p651) target = $region114
        $region113: #{transformer_decoder_block.2} parent=15 // pred_region
          %s654 = sand.u32 %s170, 1
          %s655 = sand.u32 %s170, 1
          %s656 = smul.addr %s655, 128
          %s657 = scalar_lea.vmem [#allocation4], %s656
          %s658 = smul.addr %s26, 4
          %s659 = scalar_lea.vmem %s5, %s658
          // Predicated region
          $region115: #{transformer_decoder_block.2} parent=113 // pred_check
            _
          $region116: #{transformer_decoder_block.2} parent=113 // pred_check_branch
            %661 = sbr.rel (0) target = $region118
          $region117: #{transformer_decoder_block.2} parent=113 // pred_region
            // Predicated region
            $region119: #{transformer_decoder_block.2} parent=117 // pred_check
              _
            $region120: #{transformer_decoder_block.2} parent=117 // pred_check_branch
              %663 = sbr.rel target = $region122
            $region121: #{transformer_decoder_block.2} parent=117 // pred_region
              // Predicated region
              $region134: #{transformer_decoder_block.2} parent=121 // pred_check
                _
              $region135: #{transformer_decoder_block.2} parent=121 // pred_check_branch
                %740 = sbr.rel (0) target = $region137
              $region136: #{transformer_decoder_block.2} parent=121 // pred_region
                loop: start=0, step=1, limit=1
                $region138: #{transformer_decoder_block.2} parent=136 // loop_pre_header
                  _
                $region139: #{transformer_decoder_block.2} parent=136 // loop_header
                  %s742 = sphi 0, %s746
                  %p743 = scmp.ge.s32.totalorder %s742, 1
                  %s747 = sphi %s659, %s659
                  %s748 = sphi %s657, %s657
                $region140: #{transformer_decoder_block.2} parent=136 // loop_header_branch
                  %745 = sbr.rel (%p743) target = $region144
                $region141: #{transformer_decoder_block.2} parent=136 // loop_body
                  _
                $region142: #{transformer_decoder_block.2} parent=136 // loop_footer
                  %s746 = sadd.s32 1, %s742
                $region143: #{transformer_decoder_block.2} parent=136 // loop_footer_branch
                  %741 = sbr.rel target = $region139
                $region144: #{transformer_decoder_block.2} parent=136 // loop_exit
                  _
                loop: start=0, step=1, limit=1
                $region145: #{transformer_decoder_block.2} parent=136 // loop_pre_header
                  _
                $region146: #{transformer_decoder_block.2} parent=136 // loop_header
                  %s751 = sphi 0, %s755
                  %p752 = scmp.ge.s32.totalorder %s751, 1
                  %s756 = sphi %s659, %s659
                  %s757 = sphi %s657, %s657
                $region147: #{transformer_decoder_block.2} parent=136 // loop_header_branch
                  %754 = sbr.rel (%p752) target = $region151
                $region148: #{transformer_decoder_block.2} parent=136 // loop_body
                  %v758 = vld [vmem:[%s756] sm:$0xf]
                  %759 = vst [vmem:[%s757] sm:$0xf] %v758
                  %v760 = vld [vmem:[%s756 + $0x8] sm:$0xf]
                  %761 = vst [vmem:[%s757 + $0x4] sm:$0xf] %v760
                  %v762 = vld [vmem:[%s756 + $0x10] sm:$0xf]
                  %763 = vst [vmem:[%s757 + $0x8] sm:$0xf] %v762
                  %v764 = vld [vmem:[%s756 + $0x18] sm:$0xf]
                  %765 = vst [vmem:[%s757 + $0xc] sm:$0xf] %v764
                  %v766 = vld [vmem:[%s756 + $0x20] sm:$0xf]
                  %767 = vst [vmem:[%s757 + $0x10] sm:$0xf] %v766
                  %v768 = vld [vmem:[%s756 + $0x28] sm:$0xf]
                  %769 = vst [vmem:[%s757 + $0x14] sm:$0xf] %v768
                  %v770 = vld [vmem:[%s756 + $0x30] sm:$0xf]
                  %771 = vst [vmem:[%s757 + $0x18] sm:$0xf] %v770
                  %v772 = vld [vmem:[%s756 + $0x38] sm:$0xf]
                  %773 = vst [vmem:[%s757 + $0x1c] sm:$0xf] %v772
                  %v774 = vld [vmem:[%s756 + $0x40] sm:$0xf]
                  %775 = vst [vmem:[%s757 + $0x20] sm:$0xf] %v774
                  %v776 = vld [vmem:[%s756 + $0x48] sm:$0xf]
                  %777 = vst [vmem:[%s757 + $0x24] sm:$0xf] %v776
                  %v778 = vld [vmem:[%s756 + $0x50] sm:$0xf]
                  %779 = vst [vmem:[%s757 + $0x28] sm:$0xf] %v778
                  %v780 = vld [vmem:[%s756 + $0x58] sm:$0xf]
                  %781 = vst [vmem:[%s757 + $0x2c] sm:$0xf] %v780
                  %v782 = vld [vmem:[%s756 + $0x60] sm:$0xf]
                  %783 = vst [vmem:[%s757 + $0x30] sm:$0xf] %v782
                  %v784 = vld [vmem:[%s756 + $0x68] sm:$0xf]
                  %785 = vst [vmem:[%s757 + $0x34] sm:$0xf] %v784
                  %v786 = vld [vmem:[%s756 + $0x70] sm:$0xf]
                  %787 = vst [vmem:[%s757 + $0x38] sm:$0xf] %v786
                  %v788 = vld [vmem:[%s756 + $0x78] sm:$0xf]
                  %789 = vst [vmem:[%s757 + $0x3c] sm:$0xf] %v788
                  %v790 = vld [vmem:[%s756 + $0x80] sm:$0xf]
                  %791 = vst [vmem:[%s757 + $0x40] sm:$0xf] %v790
                  %v792 = vld [vmem:[%s756 + $0x88] sm:$0xf]
                  %793 = vst [vmem:[%s757 + $0x44] sm:$0xf] %v792
                  %v794 = vld [vmem:[%s756 + $0x90] sm:$0xf]
                  %795 = vst [vmem:[%s757 + $0x48] sm:$0xf] %v794
                  %v796 = vld [vmem:[%s756 + $0x98] sm:$0xf]
                  %797 = vst [vmem:[%s757 + $0x4c] sm:$0xf] %v796
                  %v798 = vld [vmem:[%s756 + $0xa0] sm:$0xf]
                  %799 = vst [vmem:[%s757 + $0x50] sm:$0xf] %v798
                  %v800 = vld [vmem:[%s756 + $0xa8] sm:$0xf]
                  %801 = vst [vmem:[%s757 + $0x54] sm:$0xf] %v800
                  %v802 = vld [vmem:[%s756 + $0xb0] sm:$0xf]
                  %803 = vst [vmem:[%s757 + $0x58] sm:$0xf] %v802
                  %v804 = vld [vmem:[%s756 + $0xb8] sm:$0xf]
                  %805 = vst [vmem:[%s757 + $0x5c] sm:$0xf] %v804
                  %v806 = vld [vmem:[%s756 + $0xc0] sm:$0xf]
                  %807 = vst [vmem:[%s757 + $0x60] sm:$0xf] %v806
                  %v808 = vld [vmem:[%s756 + $0xc8] sm:$0xf]
                  %809 = vst [vmem:[%s757 + $0x64] sm:$0xf] %v808
                  %v810 = vld [vmem:[%s756 + $0xd0] sm:$0xf]
                  %811 = vst [vmem:[%s757 + $0x68] sm:$0xf] %v810
                  %v812 = vld [vmem:[%s756 + $0xd8] sm:$0xf]
                  %813 = vst [vmem:[%s757 + $0x6c] sm:$0xf] %v812
                  %v814 = vld [vmem:[%s756 + $0xe0] sm:$0xf]
                  %815 = vst [vmem:[%s757 + $0x70] sm:$0xf] %v814
                  %v816 = vld [vmem:[%s756 + $0xe8] sm:$0xf]
                  %817 = vst [vmem:[%s757 + $0x74] sm:$0xf] %v816
                  %v818 = vld [vmem:[%s756 + $0xf0] sm:$0xf]
                  %819 = vst [vmem:[%s757 + $0x78] sm:$0xf] %v818
                  %v820 = vld [vmem:[%s756 + $0xf8] sm:$0xf]
                  %821 = vst [vmem:[%s757 + $0x7c] sm:$0xf] %v820
                $region149: #{transformer_decoder_block.2} parent=136 // loop_footer
                  %s755 = sadd.s32 1, %s751
                $region150: #{transformer_decoder_block.2} parent=136 // loop_footer_branch
                  %750 = sbr.rel target = $region146
                $region151: #{transformer_decoder_block.2} parent=136 // loop_exit
                  _
              $region137: #{transformer_decoder_block.2} parent=121 // pred_fallthru
                _
            $region122: #{transformer_decoder_block.2} parent=117 // pred_fallthru
              _
            // Predicated region
            $region123: #{transformer_decoder_block.2} parent=117 // pred_check
              _
            $region124: #{transformer_decoder_block.2} parent=117 // pred_check_branch
              %665 = sbr.rel (0) target = $region126
            $region125: #{transformer_decoder_block.2} parent=117 // pred_region
              loop: start=0, step=1, limit=1
              $region127: #{transformer_decoder_block.2} parent=125 // loop_pre_header
                _
              $region128: #{transformer_decoder_block.2} parent=125 // loop_header
                %s668 = sphi 0, %s672
                %p669 = scmp.ge.s32.totalorder %s668, 1
                %s673 = sphi %s659, %s659
                %s674 = sphi %s657, %s657
              $region129: #{transformer_decoder_block.2} parent=125 // loop_header_branch
                %671 = sbr.rel (%p669) target = $region133
              $region130: #{transformer_decoder_block.2} parent=125 // loop_body
                %v675 = vld [vmem:[%s673] sm:$0xf]
                %676 = vst [vmem:[%s674] sm:$0xf] %v675
                %v677 = vld [vmem:[%s673 + $0x8] sm:$0xf]
                %678 = vst [vmem:[%s674 + $0x4] sm:$0xf] %v677
                %v679 = vld [vmem:[%s673 + $0x10] sm:$0xf]
                %680 = vst [vmem:[%s674 + $0x8] sm:$0xf] %v679
                %v681 = vld [vmem:[%s673 + $0x18] sm:$0xf]
                %682 = vst [vmem:[%s674 + $0xc] sm:$0xf] %v681
                %v683 = vld [vmem:[%s673 + $0x20] sm:$0xf]
                %684 = vst [vmem:[%s674 + $0x10] sm:$0xf] %v683
                %v685 = vld [vmem:[%s673 + $0x28] sm:$0xf]
                %686 = vst [vmem:[%s674 + $0x14] sm:$0xf] %v685
                %v687 = vld [vmem:[%s673 + $0x30] sm:$0xf]
                %688 = vst [vmem:[%s674 + $0x18] sm:$0xf] %v687
                %v689 = vld [vmem:[%s673 + $0x38] sm:$0xf]
                %690 = vst [vmem:[%s674 + $0x1c] sm:$0xf] %v689
                %v691 = vld [vmem:[%s673 + $0x40] sm:$0xf]
                %692 = vst [vmem:[%s674 + $0x20] sm:$0xf] %v691
                %v693 = vld [vmem:[%s673 + $0x48] sm:$0xf]
                %694 = vst [vmem:[%s674 + $0x24] sm:$0xf] %v693
                %v695 = vld [vmem:[%s673 + $0x50] sm:$0xf]
                %696 = vst [vmem:[%s674 + $0x28] sm:$0xf] %v695
                %v697 = vld [vmem:[%s673 + $0x58] sm:$0xf]
                %698 = vst [vmem:[%s674 + $0x2c] sm:$0xf] %v697
                %v699 = vld [vmem:[%s673 + $0x60] sm:$0xf]
                %700 = vst [vmem:[%s674 + $0x30] sm:$0xf] %v699
                %v701 = vld [vmem:[%s673 + $0x68] sm:$0xf]
                %702 = vst [vmem:[%s674 + $0x34] sm:$0xf] %v701
                %v703 = vld [vmem:[%s673 + $0x70] sm:$0xf]
                %704 = vst [vmem:[%s674 + $0x38] sm:$0xf] %v703
                %v705 = vld [vmem:[%s673 + $0x78] sm:$0xf]
                %706 = vst [vmem:[%s674 + $0x3c] sm:$0xf] %v705
                %v707 = vld [vmem:[%s673 + $0x80] sm:$0xf]
                %708 = vst [vmem:[%s674 + $0x40] sm:$0xf] %v707
                %v709 = vld [vmem:[%s673 + $0x88] sm:$0xf]
                %710 = vst [vmem:[%s674 + $0x44] sm:$0xf] %v709
                %v711 = vld [vmem:[%s673 + $0x90] sm:$0xf]
                %712 = vst [vmem:[%s674 + $0x48] sm:$0xf] %v711
                %v713 = vld [vmem:[%s673 + $0x98] sm:$0xf]
                %714 = vst [vmem:[%s674 + $0x4c] sm:$0xf] %v713
                %v715 = vld [vmem:[%s673 + $0xa0] sm:$0xf]
                %716 = vst [vmem:[%s674 + $0x50] sm:$0xf] %v715
                %v717 = vld [vmem:[%s673 + $0xa8] sm:$0xf]
                %718 = vst [vmem:[%s674 + $0x54] sm:$0xf] %v717
                %v719 = vld [vmem:[%s673 + $0xb0] sm:$0xf]
                %720 = vst [vmem:[%s674 + $0x58] sm:$0xf] %v719
                %v721 = vld [vmem:[%s673 + $0xb8] sm:$0xf]
                %722 = vst [vmem:[%s674 + $0x5c] sm:$0xf] %v721
                %v723 = vld [vmem:[%s673 + $0xc0] sm:$0xf]
                %724 = vst [vmem:[%s674 + $0x60] sm:$0xf] %v723
                %v725 = vld [vmem:[%s673 + $0xc8] sm:$0xf]
                %726 = vst [vmem:[%s674 + $0x64] sm:$0xf] %v725
                %v727 = vld [vmem:[%s673 + $0xd0] sm:$0xf]
                %728 = vst [vmem:[%s674 + $0x68] sm:$0xf] %v727
                %v729 = vld [vmem:[%s673 + $0xd8] sm:$0xf]
                %730 = vst [vmem:[%s674 + $0x6c] sm:$0xf] %v729
                %v731 = vld [vmem:[%s673 + $0xe0] sm:$0xf]
                %732 = vst [vmem:[%s674 + $0x70] sm:$0xf] %v731
                %v733 = vld [vmem:[%s673 + $0xe8] sm:$0xf]
                %734 = vst [vmem:[%s674 + $0x74] sm:$0xf] %v733
                %v735 = vld [vmem:[%s673 + $0xf0] sm:$0xf]
                %736 = vst [vmem:[%s674 + $0x78] sm:$0xf] %v735
                %v737 = vld [vmem:[%s673 + $0xf8] sm:$0xf]
                %738 = vst [vmem:[%s674 + $0x7c] sm:$0xf] %v737
              $region131: #{transformer_decoder_block.2} parent=125 // loop_footer
                %s672 = sadd.s32 1, %s668
              $region132: #{transformer_decoder_block.2} parent=125 // loop_footer_branch
                %667 = sbr.rel target = $region128
              $region133: #{transformer_decoder_block.2} parent=125 // loop_exit
                _
            $region126: #{transformer_decoder_block.2} parent=117 // pred_fallthru
              _
          $region118: #{transformer_decoder_block.2} parent=113 // pred_fallthru
            _
          %822 = vnop
        $region114: #{transformer_decoder_block.2} parent=15 // pred_fallthru
          _
        // Predicated region
        $region152: #{transformer_decoder_block.2} parent=15 // pred_check
          %p823 = pneg %p206
        $region153: #{transformer_decoder_block.2} parent=15 // pred_check_branch
          %825 = sbr.rel (%p823) target = $region155
        $region154: #{transformer_decoder_block.2} parent=15 // pred_region
          %p826 = scmp.lt.s32.totalorder %s26, 1
          %s827 = scalar_select %p826, %s26, 1
          %s828 = scalar_lea.vmem %s6, %s827
        $region155: #{transformer_decoder_block.2} parent=15 // pred_fallthru
          _
      $region16: #{transformer_decoder_block.2} parent=5 // pred_fallthru
        _
      %p829 = scmp.le.s32.totalorder 1, %s18
      %p830 = scmp.lt.s32.totalorder %s18, 5
      %p831 = pnand %p829, %p830
      %p832 = pneg %p831
      // Predicated region
      $region156: #{transformer_decoder_block.2} parent=5 // pred_check
        _
      $region157: #{transformer_decoder_block.2} parent=5 // pred_check_branch
        %834 = sbr.rel (%p831) target = $region159
      $region158: #{transformer_decoder_block.2} parent=5 // pred_region
        %s835 = ssub.s32 %s18, 1
        %s836 = sand.u32 %s69, 1
        %s837 = sand.u32 %s69, 1
        %s838 = smul.addr %s837, 128
        %s839 = scalar_lea.vmem [#allocation2], %s838
        // Predicated region
        $region160: #{transformer_decoder_block.2} parent=158 // pred_check
          %p840 = pneg %p82
        $region161: #{transformer_decoder_block.2} parent=158 // pred_check_branch
          %842 = sbr.rel (%p840) target = $region163
        $region162: #{transformer_decoder_block.2} parent=158 // pred_region
          _
        $region163: #{transformer_decoder_block.2} parent=158 // pred_fallthru
          _
        %s843 = sand.u32 %s121, 1
        %s844 = sand.u32 %s121, 1
        %s845 = smul.addr %s844, 128
        %s846 = scalar_lea.vmem [#allocation3], %s845
        // Predicated region
        $region164: #{transformer_decoder_block.2} parent=158 // pred_check
          %p847 = pneg %p134
        $region165: #{transformer_decoder_block.2} parent=158 // pred_check_branch
          %849 = sbr.rel (%p847) target = $region167
        $region166: #{transformer_decoder_block.2} parent=158 // pred_region
          _
        $region167: #{transformer_decoder_block.2} parent=158 // pred_fallthru
          _
        %s850 = sand.u32 %s173, 1
        %s851 = sand.u32 %s173, 1
        %s852 = smul.addr %s851, 128
        %s853 = scalar_lea.vmem [#allocation4], %s852
        // Predicated region
        $region168: #{transformer_decoder_block.2} parent=158 // pred_check
          %p854 = pneg %p186
        $region169: #{transformer_decoder_block.2} parent=158 // pred_check_branch
          %856 = sbr.rel (%p854) target = $region171
        $region170: #{transformer_decoder_block.2} parent=158 // pred_region
          _
        $region171: #{transformer_decoder_block.2} parent=158 // pred_fallthru
          _
        %p857 = scmp.lt.s32.totalorder %s27, 1
        %s858 = scalar_select %p857, %s27, 1
        %s859 = smul.addr %s858, 32
        %s860 = smul.addr %s859, 4
        %s861 = scalar_lea.vmem %s0, %s860
        %p862 = pneg %p56
        %p863 = pneg %p53
        %s864 = sand.u32 %s69, 1
        %s865 = sand.u32 %s69, 1
        %s866 = smul.addr %s865, 128
        %s867 = scalar_lea.vmem [#allocation2], %s866
        %p868 = pneg %p82
        %p869 = pneg %p79
        %p870 = scmp.lt.s32.totalorder %s28, 1
        %s871 = scalar_select %p870, %s28, 1
        %s872 = scalar_lea.vmem %s2, %s871
        %p873 = pneg %p108
        %p874 = pneg %p105
        %s875 = sand.u32 %s121, 1
        %s876 = sand.u32 %s121, 1
        %s877 = smul.addr %s876, 128
        %s878 = scalar_lea.vmem [#allocation3], %s877
        %p879 = pneg %p134
        %p880 = pneg %p131
        %p881 = scmp.lt.s32.totalorder %s28, 1
        %s882 = scalar_select %p881, %s28, 1
        %s883 = scalar_lea.vmem %s4, %s882
        %p884 = pneg %p160
        %p885 = pneg %p157
        %s886 = sand.u32 %s173, 1
        %s887 = sand.u32 %s173, 1
        %s888 = smul.addr %s887, 128
        %s889 = scalar_lea.vmem [#allocation4], %s888
        %p890 = pneg %p186
        %p891 = pneg %p183
        %p892 = scmp.lt.s32.totalorder %s28, 1
        %s893 = scalar_select %p892, %s28, 1
        %s894 = scalar_lea.vmem %s6, %s893
        %p895 = pneg %p212
        %p896 = pneg %p209
        %p897 = pneg %p240
        %p898 = pneg %p237
        %s899 = sand.u32 %s227, 1
        %s900 = sand.u32 %s227, 1
        %s901 = smul.addr %s900, 64
        %s902 = scalar_lea.vmem [#allocation5], %s901
        %p903 = pneg %p268
        %p904 = pneg %p265
        %s905 = sand.u32 %s255, 1
        %s906 = scalar_lea.sflag [#allocation7], %s905
        %s907 = sand.u32 %s255, 1
        %s908 = smul.addr %s907, 128
        %s909 = scalar_lea.vmem [#allocation6], %s908
        %p910 = scmp.lt.s32.totalorder %s27, 1
        %s911 = scalar_select %p910, %s27, 1
        %s912 = smul.addr %s911, 32
        %s913 = smul.addr %s912, 4
        %s914 = scalar_lea.vmem %s0, %s913
        %p915 = scmp.lt.s32.totalorder %s28, 1
        %s916 = scalar_select %p915, %s28, 1
        %s917 = scalar_lea.vmem %s2, %s916
        %p918 = scmp.lt.s32.totalorder %s28, 1
        %s919 = scalar_select %p918, %s28, 1
        %s920 = scalar_lea.vmem %s4, %s919
        %p921 = scmp.lt.s32.totalorder %s28, 1
        %s922 = scalar_select %p921, %s28, 1
        %s923 = scalar_lea.vmem %s6, %s922
        %v925 = vld [vmem:[%s914] sm:$0xff]
        %v926 = vld [vmem:[%s914 + $0x8] sm:$0xff]
        %v927 = vld [vmem:[%s914 + $0x10] sm:$0xff]
        %v928 = vld [vmem:[%s914 + $0x18] sm:$0xff]
        %v929 = vld [vmem:[%s914 + $0x20] sm:$0xff]
        %v930 = vld [vmem:[%s914 + $0x28] sm:$0xff]
        %v931 = vld [vmem:[%s914 + $0x30] sm:$0xff]
        %v932 = vld [vmem:[%s914 + $0x38] sm:$0xff]
        %v933 = vld [vmem:[%s914 + $0x40] sm:$0xff]
        %v934 = vld [vmem:[%s914 + $0x48] sm:$0xff]
        %v935 = vld [vmem:[%s914 + $0x50] sm:$0xff]
        %v936 = vld [vmem:[%s914 + $0x58] sm:$0xff]
        %v937 = vld [vmem:[%s914 + $0x60] sm:$0xff]
        %v938 = vld [vmem:[%s914 + $0x68] sm:$0xff]
        %v939 = vld [vmem:[%s914 + $0x70] sm:$0xff]
        %v940 = vld [vmem:[%s914 + $0x78] sm:$0xff]
        %v941 = vld [vmem:[%s839] sm:$0xf]
        %v942 = vld [vmem:[%s839 + $0x4] sm:$0xf]
        %v943 = vld [vmem:[%s839 + $0x8] sm:$0xf]
        %v944 = vld [vmem:[%s839 + $0xc] sm:$0xf]
        %v945 = vld [vmem:[%s839 + $0x10] sm:$0xf]
        %v946 = vld [vmem:[%s839 + $0x14] sm:$0xf]
        %v947 = vld [vmem:[%s839 + $0x18] sm:$0xf]
        %v948 = vld [vmem:[%s839 + $0x1c] sm:$0xf]
        %v949 = vld [vmem:[%s839 + $0x20] sm:$0xf]
        %v950 = vld [vmem:[%s839 + $0x24] sm:$0xf]
        %v951 = vld [vmem:[%s839 + $0x28] sm:$0xf]
        %v952 = vld [vmem:[%s839 + $0x2c] sm:$0xf]
        %v953 = vld [vmem:[%s839 + $0x30] sm:$0xf]
        %v954 = vld [vmem:[%s839 + $0x34] sm:$0xf]
        %v955 = vld [vmem:[%s839 + $0x38] sm:$0xf]
        %v956 = vld [vmem:[%s839 + $0x3c] sm:$0xf]
        %v957 = vld [vmem:[%s839 + $0x40] sm:$0xf]
        %v958 = vld [vmem:[%s839 + $0x44] sm:$0xf]
        %v959 = vld [vmem:[%s839 + $0x48] sm:$0xf]
        %v960 = vld [vmem:[%s839 + $0x4c] sm:$0xf]
        %v961 = vld [vmem:[%s839 + $0x50] sm:$0xf]
        %v962 = vld [vmem:[%s839 + $0x54] sm:$0xf]
        %v963 = vld [vmem:[%s839 + $0x58] sm:$0xf]
        %v964 = vld [vmem:[%s839 + $0x5c] sm:$0xf]
        %v965 = vld [vmem:[%s839 + $0x60] sm:$0xf]
        %v966 = vld [vmem:[%s839 + $0x64] sm:$0xf]
        %v967 = vld [vmem:[%s839 + $0x68] sm:$0xf]
        %v968 = vld [vmem:[%s839 + $0x6c] sm:$0xf]
        %v969 = vld [vmem:[%s839 + $0x70] sm:$0xf]
        %v970 = vld [vmem:[%s839 + $0x74] sm:$0xf]
        %v971 = vld [vmem:[%s839 + $0x78] sm:$0xf]
        %v972 = vld [vmem:[%s839 + $0x7c] sm:$0xf]
        %v973 = vld [vmem:[%s917] sm:$0x1]
        %v975 = vlaneseq
        %v976 = vshrl.u32 %v975, 7
        %v977 = vsub.s32 0, %v976
        %v978 = vrot.slane %v973, %v977
        %v996 = vunpack.c.l.b16 %v925
        %v997 = vunpack.c.h.b16 %v925
        %v998 = vunpack.c.l.b16 %v926
        %v999 = vunpack.c.h.b16 %v926
        %v1000 = vunpack.c.l.b16 %v927
        %v1001 = vunpack.c.h.b16 %v927
        %v1002 = vunpack.c.l.b16 %v928
        %v1003 = vunpack.c.h.b16 %v928
        %v1004 = vunpack.c.l.b16 %v929
        %v1005 = vunpack.c.h.b16 %v929
        %v1006 = vunpack.c.l.b16 %v930
        %v1007 = vunpack.c.h.b16 %v930
        %v1008 = vunpack.c.l.b16 %v931
        %v1009 = vunpack.c.h.b16 %v931
        %v1010 = vunpack.c.l.b16 %v932
        %v1011 = vunpack.c.h.b16 %v932
        %v1012 = vunpack.c.l.b16 %v933
        %v1013 = vunpack.c.h.b16 %v933
        %v1014 = vunpack.c.l.b16 %v934
        %v1015 = vunpack.c.h.b16 %v934
        %v1016 = vunpack.c.l.b16 %v935
        %v1017 = vunpack.c.h.b16 %v935
        %v1018 = vunpack.c.l.b16 %v936
        %v1019 = vunpack.c.h.b16 %v936
        %v1020 = vunpack.c.l.b16 %v937
        %v1021 = vunpack.c.h.b16 %v937
        %v1022 = vunpack.c.l.b16 %v938
        %v1023 = vunpack.c.h.b16 %v938
        %v1024 = vunpack.c.l.b16 %v939
        %v1025 = vunpack.c.h.b16 %v939
        %v1026 = vunpack.c.l.b16 %v940
        %v1027 = vunpack.c.h.b16 %v940
        %v1028 = vpack.c.b16 %v998, %v996
        %v1029 = vpack.c.b16 %v999, %v997
        %v1030 = vpack.c.b16 %v1002, %v1000
        %v1031 = vpack.c.b16 %v1003, %v1001
        %v1032 = vpack.c.b16 %v1006, %v1004
        %v1033 = vpack.c.b16 %v1007, %v1005
        %v1034 = vpack.c.b16 %v1010, %v1008
        %v1035 = vpack.c.b16 %v1011, %v1009
        %v1036 = vpack.c.b16 %v1014, %v1012
        %v1037 = vpack.c.b16 %v1015, %v1013
        %v1038 = vpack.c.b16 %v1018, %v1016
        %v1039 = vpack.c.b16 %v1019, %v1017
        %v1040 = vpack.c.b16 %v1022, %v1020
        %v1041 = vpack.c.b16 %v1023, %v1021
        %v1042 = vpack.c.b16 %v1026, %v1024
        %v1043 = vpack.c.b16 %v1027, %v1025
        %v1092 = vunpack.c.l.b16 %v941
        %v1093 = vunpack.c.l.b16 %v942
        %v1094 = vunpack.c.l.b16 %v943
        %v1095 = vunpack.c.l.b16 %v944
        %v1096 = vunpack.c.l.b16 %v945
        %v1097 = vunpack.c.l.b16 %v946
        %v1098 = vunpack.c.l.b16 %v947
        %v1099 = vunpack.c.l.b16 %v948
        %v1100 = vunpack.c.l.b16 %v949
        %v1101 = vunpack.c.l.b16 %v950
        %v1102 = vunpack.c.l.b16 %v951
        %v1103 = vunpack.c.l.b16 %v952
        %v1104 = vunpack.c.l.b16 %v953
        %v1105 = vunpack.c.l.b16 %v954
        %v1106 = vunpack.c.l.b16 %v955
        %v1107 = vunpack.c.l.b16 %v956
        %v1108 = vunpack.c.l.b16 %v957
        %v1109 = vunpack.c.l.b16 %v958
        %v1110 = vunpack.c.l.b16 %v959
        %v1111 = vunpack.c.l.b16 %v960
        %v1112 = vunpack.c.l.b16 %v961
        %v1113 = vunpack.c.l.b16 %v962
        %v1114 = vunpack.c.l.b16 %v963
        %v1115 = vunpack.c.l.b16 %v964
        %v1116 = vunpack.c.l.b16 %v965
        %v1117 = vunpack.c.l.b16 %v966
        %v1118 = vunpack.c.l.b16 %v967
        %v1119 = vunpack.c.l.b16 %v968
        %v1120 = vunpack.c.l.b16 %v969
        %v1121 = vunpack.c.l.b16 %v970
        %v1122 = vunpack.c.l.b16 %v971
        %v1123 = vunpack.c.l.b16 %v972
        %v1124 = vpack.c.b16 %v1093, %v1092
        %v1125 = vpack.c.b16 %v1095, %v1094
        %v1126 = vpack.c.b16 %v1097, %v1096
        %v1127 = vpack.c.b16 %v1099, %v1098
        %v1128 = vpack.c.b16 %v1101, %v1100
        %v1129 = vpack.c.b16 %v1103, %v1102
        %v1130 = vpack.c.b16 %v1105, %v1104
        %v1131 = vpack.c.b16 %v1107, %v1106
        %v1132 = vpack.c.b16 %v1109, %v1108
        %v1133 = vpack.c.b16 %v1111, %v1110
        %v1134 = vpack.c.b16 %v1113, %v1112
        %v1135 = vpack.c.b16 %v1115, %v1114
        %v1136 = vpack.c.b16 %v1117, %v1116
        %v1137 = vpack.c.b16 %v1119, %v1118
        %v1138 = vpack.c.b16 %v1121, %v1120
        %v1139 = vpack.c.b16 %v1123, %v1122
        %1156 = vmatprep.subr.bf16.mxu0 0
        %1157 = vmatpush1.bf16.msra.mxu0 %v1124
        %1158 = vmatprep.subr.bf16.mxu0 0
        %1159 = vmatpush1.bf16.msra.mxu0 %v1125
        %1160 = vmatprep.subr.bf16.mxu0 0
        %1161 = vmatpush1.bf16.msra.mxu0 %v1126
        %1162 = vmatprep.subr.bf16.mxu0 0
        %1163 = vmatpush1.bf16.msra.mxu0 %v1127
        %1164 = vmatprep.subr.bf16.mxu0 0
        %1165 = vmatpush1.bf16.msra.mxu0 %v1128
        %1166 = vmatprep.subr.bf16.mxu0 0
        %1167 = vmatpush1.bf16.msra.mxu0 %v1129
        %1168 = vmatprep.subr.bf16.mxu0 0
        %1169 = vmatpush1.bf16.msra.mxu0 %v1130
        %1170 = vmatprep.subr.bf16.mxu0 0
        %1171 = vmatpush1.bf16.msra.mxu0 %v1131
        %1172 = vmatprep.subr.bf16.mxu0 0
        %1173 = vmatpush1.bf16.msra.mxu0 %v1132
        %1174 = vmatprep.subr.bf16.mxu0 0
        %1175 = vmatpush1.bf16.msra.mxu0 %v1133
        %1176 = vmatprep.subr.bf16.mxu0 0
        %1177 = vmatpush1.bf16.msra.mxu0 %v1134
        %1178 = vmatprep.subr.bf16.mxu0 0
        %1179 = vmatpush1.bf16.msra.mxu0 %v1135
        %1180 = vmatprep.subr.bf16.mxu0 0
        %1181 = vmatpush1.bf16.msra.mxu0 %v1136
        %1182 = vmatprep.subr.bf16.mxu0 0
        %1183 = vmatpush1.bf16.msra.mxu0 %v1137
        %1184 = vmatprep.subr.bf16.mxu0 0
        %1185 = vmatpush1.bf16.msra.mxu0 %v1138
        %1186 = vmatprep.subr.bf16.mxu0 0
        %1187 = vmatpush1.bf16.msra.mxu0 %v1139
        %1188 = vmatprep.mubr.bf16.mxu0 %v1029
        %1189 = vmatmul.mubr.bf16.gmra.mrb[0].mxu0 %v1028
        %v1190 = vpop.f32.mrb[0].mxu0
        %v1191 = vadd.f32 %v978, %v1190
        %v1192 = vpop.f32.mrb[0].mxu0
        %v1193 = vpop.f32.mrb[0].mxu0
        %v1194 = vadd.f32 %v978, %v1193
        %v1195 = vpop.f32.mrb[0].mxu0
        %1196 = vmatprep.mubr.bf16.mxu0 %v1031
        %1197 = vmatmul.mubr.bf16.gmra.mrb[0].mxu0 %v1030
        %v1198 = vpop.f32.mrb[0].mxu0
        %v1199 = vadd.f32 %v978, %v1198
        %v1200 = vpop.f32.mrb[0].mxu0
        %v1201 = vpop.f32.mrb[0].mxu0
        %v1202 = vadd.f32 %v978, %v1201
        %v1203 = vpop.f32.mrb[0].mxu0
        %1204 = vmatprep.mubr.bf16.mxu0 %v1033
        %1205 = vmatmul.mubr.bf16.gmra.mrb[0].mxu0 %v1032
        %v1206 = vpop.f32.mrb[0].mxu0
        %v1207 = vadd.f32 %v978, %v1206
        %v1208 = vpop.f32.mrb[0].mxu0
        %v1209 = vpop.f32.mrb[0].mxu0
        %v1210 = vadd.f32 %v978, %v1209
        %v1211 = vpop.f32.mrb[0].mxu0
        %1212 = vmatprep.mubr.bf16.mxu0 %v1035
        %1213 = vmatmul.mubr.bf16.gmra.mrb[0].mxu0 %v1034
        %v1214 = vpop.f32.mrb[0].mxu0
        %v1215 = vadd.f32 %v978, %v1214
        %v1216 = vpop.f32.mrb[0].mxu0
        %v1217 = vpop.f32.mrb[0].mxu0
        %v1218 = vadd.f32 %v978, %v1217
        %v1219 = vpop.f32.mrb[0].mxu0
        %1220 = vmatprep.mubr.bf16.mxu0 %v1037
        %1221 = vmatmul.mubr.bf16.gmra.mrb[0].mxu0 %v1036
        %v1222 = vpop.f32.mrb[0].mxu0
        %v1223 = vadd.f32 %v978, %v1222
        %v1224 = vpop.f32.mrb[0].mxu0
        %v1225 = vpop.f32.mrb[0].mxu0
        %v1226 = vadd.f32 %v978, %v1225
        %v1227 = vpop.f32.mrb[0].mxu0
        %1228 = vmatprep.mubr.bf16.mxu0 %v1039
        %1229 = vmatmul.mubr.bf16.gmra.mrb[0].mxu0 %v1038
        %v1230 = vpop.f32.mrb[0].mxu0
        %v1231 = vadd.f32 %v978, %v1230
        %v1232 = vpop.f32.mrb[0].mxu0
        %v1233 = vpop.f32.mrb[0].mxu0
        %v1234 = vadd.f32 %v978, %v1233
        %v1235 = vpop.f32.mrb[0].mxu0
        %1236 = vmatprep.mubr.bf16.mxu0 %v1041
        %1237 = vmatmul.mubr.bf16.gmra.mrb[0].mxu0 %v1040
        %v1238 = vpop.f32.mrb[0].mxu0
        %v1239 = vadd.f32 %v978, %v1238
        %v1240 = vpop.f32.mrb[0].mxu0
        %v1241 = vpop.f32.mrb[0].mxu0
        %v1242 = vadd.f32 %v978, %v1241
        %v1243 = vpop.f32.mrb[0].mxu0
        %1244 = vmatprep.mubr.bf16.mxu0 %v1043
        %1245 = vmatmul.mubr.bf16.gmra.mrb[0].mxu0 %v1042
        %v1246 = vpop.f32.mrb[0].mxu0
        %v1247 = vadd.f32 %v978, %v1246
        %v1248 = vpop.f32.mrb[0].mxu0
        %v1249 = vpop.f32.mrb[0].mxu0
        %v1250 = vadd.f32 %v978, %v1249
        %v1251 = vpop.f32.mrb[0].mxu0
        %1252 = vdwg.mxu0
        %v1253 = vld [vmem:[%s846] sm:$0xf]
        %v1254 = vld [vmem:[%s846 + $0x4] sm:$0xf]
        %v1255 = vld [vmem:[%s846 + $0x8] sm:$0xf]
        %v1256 = vld [vmem:[%s846 + $0xc] sm:$0xf]
        %v1257 = vld [vmem:[%s846 + $0x10] sm:$0xf]
        %v1258 = vld [vmem:[%s846 + $0x14] sm:$0xf]
        %v1259 = vld [vmem:[%s846 + $0x18] sm:$0xf]
        %v1260 = vld [vmem:[%s846 + $0x1c] sm:$0xf]
        %v1261 = vld [vmem:[%s846 + $0x20] sm:$0xf]
        %v1262 = vld [vmem:[%s846 + $0x24] sm:$0xf]
        %v1263 = vld [vmem:[%s846 + $0x28] sm:$0xf]
        %v1264 = vld [vmem:[%s846 + $0x2c] sm:$0xf]
        %v1265 = vld [vmem:[%s846 + $0x30] sm:$0xf]
        %v1266 = vld [vmem:[%s846 + $0x34] sm:$0xf]
        %v1267 = vld [vmem:[%s846 + $0x38] sm:$0xf]
        %v1268 = vld [vmem:[%s846 + $0x3c] sm:$0xf]
        %v1269 = vld [vmem:[%s846 + $0x40] sm:$0xf]
        %v1270 = vld [vmem:[%s846 + $0x44] sm:$0xf]
        %v1271 = vld [vmem:[%s846 + $0x48] sm:$0xf]
        %v1272 = vld [vmem:[%s846 + $0x4c] sm:$0xf]
        %v1273 = vld [vmem:[%s846 + $0x50] sm:$0xf]
        %v1274 = vld [vmem:[%s846 + $0x54] sm:$0xf]
        %v1275 = vld [vmem:[%s846 + $0x58] sm:$0xf]
        %v1276 = vld [vmem:[%s846 + $0x5c] sm:$0xf]
        %v1277 = vld [vmem:[%s846 + $0x60] sm:$0xf]
        %v1278 = vld [vmem:[%s846 + $0x64] sm:$0xf]
        %v1279 = vld [vmem:[%s846 + $0x68] sm:$0xf]
        %v1280 = vld [vmem:[%s846 + $0x6c] sm:$0xf]
        %v1281 = vld [vmem:[%s846 + $0x70] sm:$0xf]
        %v1282 = vld [vmem:[%s846 + $0x74] sm:$0xf]
        %v1283 = vld [vmem:[%s846 + $0x78] sm:$0xf]
        %v1284 = vld [vmem:[%s846 + $0x7c] sm:$0xf]
        %v1285 = vld [vmem:[%s920] sm:$0x1]
        %v1287 = vlaneseq
        %v1288 = vshrl.u32 %v1287, 7
        %v1289 = vsub.s32 0, %v1288
        %v1290 = vrot.slane %v1285, %v1289
        %v1324 = vunpack.c.l.b16 %v1253
        %v1325 = vunpack.c.l.b16 %v1254
        %v1326 = vunpack.c.l.b16 %v1255
        %v1327 = vunpack.c.l.b16 %v1256
        %v1328 = vunpack.c.l.b16 %v1257
        %v1329 = vunpack.c.l.b16 %v1258
        %v1330 = vunpack.c.l.b16 %v1259
        %v1331 = vunpack.c.l.b16 %v1260
        %v1332 = vunpack.c.l.b16 %v1261
        %v1333 = vunpack.c.l.b16 %v1262
        %v1334 = vunpack.c.l.b16 %v1263
        %v1335 = vunpack.c.l.b16 %v1264
        %v1336 = vunpack.c.l.b16 %v1265
        %v1337 = vunpack.c.l.b16 %v1266
        %v1338 = vunpack.c.l.b16 %v1267
        %v1339 = vunpack.c.l.b16 %v1268
        %v1340 = vunpack.c.l.b16 %v1269
        %v1341 = vunpack.c.l.b16 %v1270
        %v1342 = vunpack.c.l.b16 %v1271
        %v1343 = vunpack.c.l.b16 %v1272
        %v1344 = vunpack.c.l.b16 %v1273
        %v1345 = vunpack.c.l.b16 %v1274
        %v1346 = vunpack.c.l.b16 %v1275
        %v1347 = vunpack.c.l.b16 %v1276
        %v1348 = vunpack.c.l.b16 %v1277
        %v1349 = vunpack.c.l.b16 %v1278
        %v1350 = vunpack.c.l.b16 %v1279
        %v1351 = vunpack.c.l.b16 %v1280
        %v1352 = vunpack.c.l.b16 %v1281
        %v1353 = vunpack.c.l.b16 %v1282
        %v1354 = vunpack.c.l.b16 %v1283
        %v1355 = vunpack.c.l.b16 %v1284
        %v1356 = vpack.c.b16 %v1325, %v1324
        %v1357 = vpack.c.b16 %v1327, %v1326
        %v1358 = vpack.c.b16 %v1329, %v1328
        %v1359 = vpack.c.b16 %v1331, %v1330
        %v1360 = vpack.c.b16 %v1333, %v1332
        %v1361 = vpack.c.b16 %v1335, %v1334
        %v1362 = vpack.c.b16 %v1337, %v1336
        %v1363 = vpack.c.b16 %v1339, %v1338
        %v1364 = vpack.c.b16 %v1341, %v1340
        %v1365 = vpack.c.b16 %v1343, %v1342
        %v1366 = vpack.c.b16 %v1345, %v1344
        %v1367 = vpack.c.b16 %v1347, %v1346
        %v1368 = vpack.c.b16 %v1349, %v1348
        %v1369 = vpack.c.b16 %v1351, %v1350
        %v1370 = vpack.c.b16 %v1353, %v1352
        %v1371 = vpack.c.b16 %v1355, %v1354
        %1388 = vmatprep.subr.bf16.mxu0 0
        %1389 = vmatpush1.bf16.msra.mxu0 %v1356
        %1390 = vmatprep.subr.bf16.mxu0 0
        %1391 = vmatpush1.bf16.msra.mxu0 %v1357
        %1392 = vmatprep.subr.bf16.mxu0 0
        %1393 = vmatpush1.bf16.msra.mxu0 %v1358
        %1394 = vmatprep.subr.bf16.mxu0 0
        %1395 = vmatpush1.bf16.msra.mxu0 %v1359
        %1396 = vmatprep.subr.bf16.mxu0 0
        %1397 = vmatpush1.bf16.msra.mxu0 %v1360
        %1398 = vmatprep.subr.bf16.mxu0 0
        %1399 = vmatpush1.bf16.msra.mxu0 %v1361
        %1400 = vmatprep.subr.bf16.mxu0 0
        %1401 = vmatpush1.bf16.msra.mxu0 %v1362
        %1402 = vmatprep.subr.bf16.mxu0 0
        %1403 = vmatpush1.bf16.msra.mxu0 %v1363
        %1404 = vmatprep.subr.bf16.mxu0 0
        %1405 = vmatpush1.bf16.msra.mxu0 %v1364
        %1406 = vmatprep.subr.bf16.mxu0 0
        %1407 = vmatpush1.bf16.msra.mxu0 %v1365
        %1408 = vmatprep.subr.bf16.mxu0 0
        %1409 = vmatpush1.bf16.msra.mxu0 %v1366
        %1410 = vmatprep.subr.bf16.mxu0 0
        %1411 = vmatpush1.bf16.msra.mxu0 %v1367
        %1412 = vmatprep.subr.bf16.mxu0 0
        %1413 = vmatpush1.bf16.msra.mxu0 %v1368
        %1414 = vmatprep.subr.bf16.mxu0 0
        %1415 = vmatpush1.bf16.msra.mxu0 %v1369
        %1416 = vmatprep.subr.bf16.mxu0 0
        %1417 = vmatpush1.bf16.msra.mxu0 %v1370
        %1418 = vmatprep.subr.bf16.mxu0 0
        %1419 = vmatpush1.bf16.msra.mxu0 %v1371
        %1420 = vmatprep.mubr.bf16.mxu0 %v1029
        %1421 = vmatmul.mubr.bf16.gmra.mrb[0].mxu0 %v1028
        %v1422 = vpop.f32.mrb[0].mxu0
        %v1423 = vadd.f32 %v1290, %v1422
        %v1424 = vpop.f32.mrb[0].mxu0
        %v1425 = vpop.f32.mrb[0].mxu0
        %v1426 = vadd.f32 %v1290, %v1425
        %v1427 = vpop.f32.mrb[0].mxu0
        %1428 = vmatprep.mubr.bf16.mxu0 %v1031
        %1429 = vmatmul.mubr.bf16.gmra.mrb[0].mxu0 %v1030
        %v1430 = vpop.f32.mrb[0].mxu0
        %v1431 = vadd.f32 %v1290, %v1430
        %v1432 = vpop.f32.mrb[0].mxu0
        %v1433 = vpop.f32.mrb[0].mxu0
        %v1434 = vadd.f32 %v1290, %v1433
        %v1435 = vpop.f32.mrb[0].mxu0
        %1436 = vmatprep.mubr.bf16.mxu0 %v1033
        %1437 = vmatmul.mubr.bf16.gmra.mrb[0].mxu0 %v1032
        %v1438 = vpop.f32.mrb[0].mxu0
        %v1439 = vadd.f32 %v1290, %v1438
        %v1440 = vpop.f32.mrb[0].mxu0
        %v1441 = vpop.f32.mrb[0].mxu0
        %v1442 = vadd.f32 %v1290, %v1441
        %v1443 = vpop.f32.mrb[0].mxu0
        %1444 = vmatprep.mubr.bf16.mxu0 %v1035
        %1445 = vmatmul.mubr.bf16.gmra.mrb[0].mxu0 %v1034
        %v1446 = vpop.f32.mrb[0].mxu0
        %v1447 = vadd.f32 %v1290, %v1446
        %v1448 = vpop.f32.mrb[0].mxu0
        %v1449 = vpop.f32.mrb[0].mxu0
        %v1450 = vadd.f32 %v1290, %v1449
        %v1451 = vpop.f32.mrb[0].mxu0
        %1452 = vmatprep.mubr.bf16.mxu0 %v1037
        %1453 = vmatmul.mubr.bf16.gmra.mrb[0].mxu0 %v1036
        %v1454 = vpop.f32.mrb[0].mxu0
        %v1455 = vadd.f32 %v1290, %v1454
        %v1456 = vpop.f32.mrb[0].mxu0
        %v1457 = vpop.f32.mrb[0].mxu0
        %v1458 = vadd.f32 %v1290, %v1457
        %v1459 = vpop.f32.mrb[0].mxu0
        %1460 = vmatprep.mubr.bf16.mxu0 %v1039
        %1461 = vmatmul.mubr.bf16.gmra.mrb[0].mxu0 %v1038
        %v1462 = vpop.f32.mrb[0].mxu0
        %v1463 = vadd.f32 %v1290, %v1462
        %v1464 = vpop.f32.mrb[0].mxu0
        %v1465 = vpop.f32.mrb[0].mxu0
        %v1466 = vadd.f32 %v1290, %v1465
        %v1467 = vpop.f32.mrb[0].mxu0
        %1468 = vmatprep.mubr.bf16.mxu0 %v1041
        %1469 = vmatmul.mubr.bf16.gmra.mrb[0].mxu0 %v1040
        %v1470 = vpop.f32.mrb[0].mxu0
        %v1471 = vadd.f32 %v1290, %v1470
        %v1472 = vpop.f32.mrb[0].mxu0
        %v1473 = vpop.f32.mrb[0].mxu0
        %v1474 = vadd.f32 %v1290, %v1473
        %v1475 = vpop.f32.mrb[0].mxu0
        %1476 = vmatprep.mubr.bf16.mxu0 %v1043
        %1477 = vmatmul.mubr.bf16.gmra.mrb[0].mxu0 %v1042
        %v1478 = vpop.f32.mrb[0].mxu0
        %v1479 = vadd.f32 %v1290, %v1478
        %v1480 = vpop.f32.mrb[0].mxu0
        %v1481 = vpop.f32.mrb[0].mxu0
        %v1482 = vadd.f32 %v1290, %v1481
        %v1483 = vpop.f32.mrb[0].mxu0
        %1484 = vdwg.mxu0
        %v1485 = vld [vmem:[%s853] sm:$0xf]
        %v1486 = vld [vmem:[%s853 + $0x4] sm:$0xf]
        %v1487 = vld [vmem:[%s853 + $0x8] sm:$0xf]
        %v1488 = vld [vmem:[%s853 + $0xc] sm:$0xf]
        %v1489 = vld [vmem:[%s853 + $0x10] sm:$0xf]
        %v1490 = vld [vmem:[%s853 + $0x14] sm:$0xf]
        %v1491 = vld [vmem:[%s853 + $0x18] sm:$0xf]
        %v1492 = vld [vmem:[%s853 + $0x1c] sm:$0xf]
        %v1493 = vld [vmem:[%s853 + $0x20] sm:$0xf]
        %v1494 = vld [vmem:[%s853 + $0x24] sm:$0xf]
        %v1495 = vld [vmem:[%s853 + $0x28] sm:$0xf]
        %v1496 = vld [vmem:[%s853 + $0x2c] sm:$0xf]
        %v1497 = vld [vmem:[%s853 + $0x30] sm:$0xf]
        %v1498 = vld [vmem:[%s853 + $0x34] sm:$0xf]
        %v1499 = vld [vmem:[%s853 + $0x38] sm:$0xf]
        %v1500 = vld [vmem:[%s853 + $0x3c] sm:$0xf]
        %v1501 = vld [vmem:[%s853 + $0x40] sm:$0xf]
        %v1502 = vld [vmem:[%s853 + $0x44] sm:$0xf]
        %v1503 = vld [vmem:[%s853 + $0x48] sm:$0xf]
        %v1504 = vld [vmem:[%s853 + $0x4c] sm:$0xf]
        %v1505 = vld [vmem:[%s853 + $0x50] sm:$0xf]
        %v1506 = vld [vmem:[%s853 + $0x54] sm:$0xf]
        %v1507 = vld [vmem:[%s853 + $0x58] sm:$0xf]
        %v1508 = vld [vmem:[%s853 + $0x5c] sm:$0xf]
        %v1509 = vld [vmem:[%s853 + $0x60] sm:$0xf]
        %v1510 = vld [vmem:[%s853 + $0x64] sm:$0xf]
        %v1511 = vld [vmem:[%s853 + $0x68] sm:$0xf]
        %v1512 = vld [vmem:[%s853 + $0x6c] sm:$0xf]
        %v1513 = vld [vmem:[%s853 + $0x70] sm:$0xf]
        %v1514 = vld [vmem:[%s853 + $0x74] sm:$0xf]
        %v1515 = vld [vmem:[%s853 + $0x78] sm:$0xf]
        %v1516 = vld [vmem:[%s853 + $0x7c] sm:$0xf]
        %v1517 = vld [vmem:[%s923] sm:$0x1]
        %v1519 = vlaneseq
        %v1520 = vshrl.u32 %v1519, 7
        %v1521 = vsub.s32 0, %v1520
        %v1522 = vrot.slane %v1517, %v1521
        %v1556 = vunpack.c.l.b16 %v1485
        %v1557 = vunpack.c.l.b16 %v1486
        %v1558 = vunpack.c.l.b16 %v1487
        %v1559 = vunpack.c.l.b16 %v1488
        %v1560 = vunpack.c.l.b16 %v1489
        %v1561 = vunpack.c.l.b16 %v1490
        %v1562 = vunpack.c.l.b16 %v1491
        %v1563 = vunpack.c.l.b16 %v1492
        %v1564 = vunpack.c.l.b16 %v1493
        %v1565 = vunpack.c.l.b16 %v1494
        %v1566 = vunpack.c.l.b16 %v1495
        %v1567 = vunpack.c.l.b16 %v1496
        %v1568 = vunpack.c.l.b16 %v1497
        %v1569 = vunpack.c.l.b16 %v1498
        %v1570 = vunpack.c.l.b16 %v1499
        %v1571 = vunpack.c.l.b16 %v1500
        %v1572 = vunpack.c.l.b16 %v1501
        %v1573 = vunpack.c.l.b16 %v1502
        %v1574 = vunpack.c.l.b16 %v1503
        %v1575 = vunpack.c.l.b16 %v1504
        %v1576 = vunpack.c.l.b16 %v1505
        %v1577 = vunpack.c.l.b16 %v1506
        %v1578 = vunpack.c.l.b16 %v1507
        %v1579 = vunpack.c.l.b16 %v1508
        %v1580 = vunpack.c.l.b16 %v1509
        %v1581 = vunpack.c.l.b16 %v1510
        %v1582 = vunpack.c.l.b16 %v1511
        %v1583 = vunpack.c.l.b16 %v1512
        %v1584 = vunpack.c.l.b16 %v1513
        %v1585 = vunpack.c.l.b16 %v1514
        %v1586 = vunpack.c.l.b16 %v1515
        %v1587 = vunpack.c.l.b16 %v1516
        %v1588 = vpack.c.b16 %v1557, %v1556
        %v1589 = vpack.c.b16 %v1559, %v1558
        %v1590 = vpack.c.b16 %v1561, %v1560
        %v1591 = vpack.c.b16 %v1563, %v1562
        %v1592 = vpack.c.b16 %v1565, %v1564
        %v1593 = vpack.c.b16 %v1567, %v1566
        %v1594 = vpack.c.b16 %v1569, %v1568
        %v1595 = vpack.c.b16 %v1571, %v1570
        %v1596 = vpack.c.b16 %v1573, %v1572
        %v1597 = vpack.c.b16 %v1575, %v1574
        %v1598 = vpack.c.b16 %v1577, %v1576
        %v1599 = vpack.c.b16 %v1579, %v1578
        %v1600 = vpack.c.b16 %v1581, %v1580
        %v1601 = vpack.c.b16 %v1583, %v1582
        %v1602 = vpack.c.b16 %v1585, %v1584
        %v1603 = vpack.c.b16 %v1587, %v1586
        %1620 = vmatprep.subr.bf16.mxu0 0
        %1621 = vmatpush1.bf16.msra.mxu0 %v1588
        %1622 = vmatprep.subr.bf16.mxu0 0
        %1623 = vmatpush1.bf16.msra.mxu0 %v1589
        %1624 = vmatprep.subr.bf16.mxu0 0
        %1625 = vmatpush1.bf16.msra.mxu0 %v1590
        %1626 = vmatprep.subr.bf16.mxu0 0
        %1627 = vmatpush1.bf16.msra.mxu0 %v1591
        %1628 = vmatprep.subr.bf16.mxu0 0
        %1629 = vmatpush1.bf16.msra.mxu0 %v1592
        %1630 = vmatprep.subr.bf16.mxu0 0
        %1631 = vmatpush1.bf16.msra.mxu0 %v1593
        %1632 = vmatprep.subr.bf16.mxu0 0
        %1633 = vmatpush1.bf16.msra.mxu0 %v1594
        %1634 = vmatprep.subr.bf16.mxu0 0
        %1635 = vmatpush1.bf16.msra.mxu0 %v1595
        %1636 = vmatprep.subr.bf16.mxu0 0
        %1637 = vmatpush1.bf16.msra.mxu0 %v1596
        %1638 = vmatprep.subr.bf16.mxu0 0
        %1639 = vmatpush1.bf16.msra.mxu0 %v1597
        %1640 = vmatprep.subr.bf16.mxu0 0
        %1641 = vmatpush1.bf16.msra.mxu0 %v1598
        %1642 = vmatprep.subr.bf16.mxu0 0
        %1643 = vmatpush1.bf16.msra.mxu0 %v1599
        %1644 = vmatprep.subr.bf16.mxu0 0
        %1645 = vmatpush1.bf16.msra.mxu0 %v1600
        %1646 = vmatprep.subr.bf16.mxu0 0
        %1647 = vmatpush1.bf16.msra.mxu0 %v1601
        %1648 = vmatprep.subr.bf16.mxu0 0
        %1649 = vmatpush1.bf16.msra.mxu0 %v1602
        %1650 = vmatprep.subr.bf16.mxu0 0
        %1651 = vmatpush1.bf16.msra.mxu0 %v1603
        %1652 = vmatprep.mubr.bf16.mxu0 %v1029
        %1653 = vmatmul.mubr.bf16.gmra.mrb[0].mxu0 %v1028
        %v1654 = vpop.f32.mrb[0].mxu0
        %v1655 = vadd.f32 %v1522, %v1654
        %v1656 = vpop.f32.mrb[0].mxu0
        %v1657 = vpop.f32.mrb[0].mxu0
        %v1658 = vadd.f32 %v1522, %v1657
        %v1659 = vpop.f32.mrb[0].mxu0
        %1660 = vmatprep.mubr.bf16.mxu0 %v1031
        %1661 = vmatmul.mubr.bf16.gmra.mrb[0].mxu0 %v1030
        %v1662 = vpop.f32.mrb[0].mxu0
        %v1663 = vadd.f32 %v1522, %v1662
        %v1664 = vpop.f32.mrb[0].mxu0
        %v1665 = vpop.f32.mrb[0].mxu0
        %v1666 = vadd.f32 %v1522, %v1665
        %v1667 = vpop.f32.mrb[0].mxu0
        %1668 = vmatprep.mubr.bf16.mxu0 %v1033
        %1669 = vmatmul.mubr.bf16.gmra.mrb[0].mxu0 %v1032
        %v1670 = vpop.f32.mrb[0].mxu0
        %v1671 = vadd.f32 %v1522, %v1670
        %v1672 = vpop.f32.mrb[0].mxu0
        %v1673 = vpop.f32.mrb[0].mxu0
        %v1674 = vadd.f32 %v1522, %v1673
        %v1675 = vpop.f32.mrb[0].mxu0
        %1676 = vmatprep.mubr.bf16.mxu0 %v1035
        %1677 = vmatmul.mubr.bf16.gmra.mrb[0].mxu0 %v1034
        %v1678 = vpop.f32.mrb[0].mxu0
        %v1679 = vadd.f32 %v1522, %v1678
        %v1680 = vpop.f32.mrb[0].mxu0
        %v1681 = vpop.f32.mrb[0].mxu0
        %v1682 = vadd.f32 %v1522, %v1681
        %v1683 = vpop.f32.mrb[0].mxu0
        %1684 = vmatprep.mubr.bf16.mxu0 %v1037
        %1685 = vmatmul.mubr.bf16.gmra.mrb[0].mxu0 %v1036
        %v1686 = vpop.f32.mrb[0].mxu0
        %v1687 = vadd.f32 %v1522, %v1686
        %v1688 = vpop.f32.mrb[0].mxu0
        %v1689 = vpop.f32.mrb[0].mxu0
        %v1690 = vadd.f32 %v1522, %v1689
        %v1691 = vpop.f32.mrb[0].mxu0
        %1692 = vmatprep.mubr.bf16.mxu0 %v1039
        %1693 = vmatmul.mubr.bf16.gmra.mrb[0].mxu0 %v1038
        %v1694 = vpop.f32.mrb[0].mxu0
        %v1695 = vadd.f32 %v1522, %v1694
        %v1696 = vpop.f32.mrb[0].mxu0
        %v1697 = vpop.f32.mrb[0].mxu0
        %v1698 = vadd.f32 %v1522, %v1697
        %v1699 = vpop.f32.mrb[0].mxu0
        %1700 = vmatprep.mubr.bf16.mxu0 %v1041
        %1701 = vmatmul.mubr.bf16.gmra.mrb[0].mxu0 %v1040
        %v1702 = vpop.f32.mrb[0].mxu0
        %v1703 = vadd.f32 %v1522, %v1702
        %v1704 = vpop.f32.mrb[0].mxu0
        %v1705 = vpop.f32.mrb[0].mxu0
        %v1706 = vadd.f32 %v1522, %v1705
        %v1707 = vpop.f32.mrb[0].mxu0
        %1708 = vmatprep.mubr.bf16.mxu0 %v1043
        %1709 = vmatmul.mubr.bf16.gmra.mrb[0].mxu0 %v1042
        %v1710 = vpop.f32.mrb[0].mxu0
        %v1711 = vadd.f32 %v1522, %v1710
        %v1712 = vpop.f32.mrb[0].mxu0
        %v1713 = vpop.f32.mrb[0].mxu0
        %v1714 = vadd.f32 %v1522, %v1713
        %v1715 = vpop.f32.mrb[0].mxu0
        %1716 = vdwg.mxu0
        %v1717 = vlaneseq
        %v1718 = vshrl.u32 %v1717, 7
        %v1719 = vadd.s32 %v1718, 8
        %v1720 = vadd.s32 %v1718, 16
        %v1721 = vadd.s32 %v1718, 24
        %v1722 = vadd.s32 %v1718, 32
        %v1723 = vadd.s32 %v1718, 40
        %v1724 = vadd.s32 %v1718, 48
        %v1725 = vadd.s32 %v1718, 56
        %v1726 = vadd.s32 %v1718, 64
        %v1727 = vadd.s32 %v1718, 72
        %v1728 = vadd.s32 %v1718, 80
        %v1729 = vadd.s32 %v1718, 88
        %v1730 = vadd.s32 %v1718, 96
        %v1731 = vadd.s32 %v1718, 104
        %v1732 = vadd.s32 %v1718, 112
        %v1733 = vadd.s32 %v1718, 120
        %v1734 = vlaneseq
        %v1735 = vand.u32 %v1734, 127
        %vm1736 = vcmp.ge.s32.totalorder %v1718, %v1735
        %vm1737 = vcmp.ge.s32.totalorder %v1719, %v1735
        %vm1738 = vcmp.ge.s32.totalorder %v1720, %v1735
        %vm1739 = vcmp.ge.s32.totalorder %v1721, %v1735
        %vm1740 = vcmp.ge.s32.totalorder %v1722, %v1735
        %vm1741 = vcmp.ge.s32.totalorder %v1723, %v1735
        %vm1742 = vcmp.ge.s32.totalorder %v1724, %v1735
        %vm1743 = vcmp.ge.s32.totalorder %v1725, %v1735
        %vm1744 = vcmp.ge.s32.totalorder %v1726, %v1735
        %vm1745 = vcmp.ge.s32.totalorder %v1727, %v1735
        %vm1746 = vcmp.ge.s32.totalorder %v1728, %v1735
        %vm1747 = vcmp.ge.s32.totalorder %v1729, %v1735
        %vm1748 = vcmp.ge.s32.totalorder %v1730, %v1735
        %vm1749 = vcmp.ge.s32.totalorder %v1731, %v1735
        %vm1750 = vcmp.ge.s32.totalorder %v1732, %v1735
        %vm1751 = vcmp.ge.s32.totalorder %v1733, %v1735
        %v1752 = vpack.c.bf16 %v1194, %v1191
        %v1753 = vpack.c.bf16 %v1202, %v1199
        %v1754 = vpack.c.bf16 %v1210, %v1207
        %v1755 = vpack.c.bf16 %v1218, %v1215
        %v1756 = vpack.c.bf16 %v1226, %v1223
        %v1757 = vpack.c.bf16 %v1234, %v1231
        %v1758 = vpack.c.bf16 %v1242, %v1239
        %v1759 = vpack.c.bf16 %v1250, %v1247
        %v1760 = vpack.c.bf16 %v1426, %v1423
        %v1761 = vpack.c.bf16 %v1434, %v1431
        %v1762 = vpack.c.bf16 %v1442, %v1439
        %v1763 = vpack.c.bf16 %v1450, %v1447
        %v1764 = vpack.c.bf16 %v1458, %v1455
        %v1765 = vpack.c.bf16 %v1466, %v1463
        %v1766 = vpack.c.bf16 %v1474, %v1471
        %v1767 = vpack.c.bf16 %v1482, %v1479
        %1768 = vmatprep.subr.bf16.mxu0 0
        %1769 = vmatpush1.bf16.xpose.msra.mxu0 %v1760
        %1770 = vmatprep.subr.bf16.mxu0 0
        %1771 = vmatpush1.bf16.xpose.msra.mxu0 %v1761
        %1772 = vmatprep.subr.bf16.mxu0 0
        %1773 = vmatpush1.bf16.xpose.msra.mxu0 %v1762
        %1774 = vmatprep.subr.bf16.mxu0 0
        %1775 = vmatpush1.bf16.xpose.msra.mxu0 %v1763
        %1776 = vmatprep.subr.bf16.mxu0 0
        %1777 = vmatpush1.bf16.xpose.msra.mxu0 %v1764
        %1778 = vmatprep.subr.bf16.mxu0 0
        %1779 = vmatpush1.bf16.xpose.msra.mxu0 %v1765
        %1780 = vmatprep.subr.bf16.mxu0 0
        %1781 = vmatpush1.bf16.xpose.msra.mxu0 %v1766
        %1782 = vmatprep.subr.bf16.mxu0 0
        %1783 = vmatpush1.bf16.xpose.msra.mxu0 %v1767
        %1784 = vmatprep.subr.bf16.mxu0 0
        %1785 = vmatpush1.bf16.xpose.msra.mxu0 0
        %1786 = vmatprep.subr.bf16.mxu0 0
        %1787 = vmatpush1.bf16.xpose.msra.mxu0 0
        %1788 = vmatprep.subr.bf16.mxu0 0
        %1789 = vmatpush1.bf16.xpose.msra.mxu0 0
        %1790 = vmatprep.subr.bf16.mxu0 0
        %1791 = vmatpush1.bf16.xpose.msra.mxu0 0
        %1792 = vmatprep.subr.bf16.mxu0 0
        %1793 = vmatpush1.bf16.xpose.msra.mxu0 0
        %1794 = vmatprep.subr.bf16.mxu0 0
        %1795 = vmatpush1.bf16.xpose.msra.mxu0 0
        %1796 = vmatprep.subr.bf16.mxu0 0
        %1797 = vmatpush1.bf16.xpose.msra.mxu0 0
        %1798 = vmatprep.subr.bf16.mxu0 0
        %1799 = vmatpush1.bf16.xpose.msra.mxu0 0
        %1800 = vmatprep.mubr.bf16.mxu0 0
        %1801 = vmatmul.mubr.bf16.gmra.mrb[0].mxu0 %v1752
        %v1802 = vpop.f32.mrb[0].mxu0
        %v1803 = vadd.f32 0.0, %v1802
        %v1804 = vpop.f32.mrb[0].mxu0
        %v1805 = vpop.f32.mrb[0].mxu0
        %v1806 = vadd.f32 0.0, %v1805
        %v1807 = vpop.f32.mrb[0].mxu0
        %1808 = vmatprep.mubr.bf16.mxu0 0
        %1809 = vmatmul.mubr.bf16.gmra.mrb[0].mxu0 %v1753
        %v1810 = vpop.f32.mrb[0].mxu0
        %v1811 = vadd.f32 0.0, %v1810
        %v1812 = vpop.f32.mrb[0].mxu0
        %v1813 = vpop.f32.mrb[0].mxu0
        %v1814 = vadd.f32 0.0, %v1813
        %v1815 = vpop.f32.mrb[0].mxu0
        %1816 = vmatprep.mubr.bf16.mxu0 0
        %1817 = vmatmul.mubr.bf16.gmra.mrb[0].mxu0 %v1754
        %v1818 = vpop.f32.mrb[0].mxu0
        %v1819 = vadd.f32 0.0, %v1818
        %v1820 = vpop.f32.mrb[0].mxu0
        %v1821 = vpop.f32.mrb[0].mxu0
        %v1822 = vadd.f32 0.0, %v1821
        %v1823 = vpop.f32.mrb[0].mxu0
        %1824 = vmatprep.mubr.bf16.mxu0 0
        %1825 = vmatmul.mubr.bf16.gmra.mrb[0].mxu0 %v1755
        %v1826 = vpop.f32.mrb[0].mxu0
        %v1827 = vadd.f32 0.0, %v1826
        %v1828 = vpop.f32.mrb[0].mxu0
        %v1829 = vpop.f32.mrb[0].mxu0
        %v1830 = vadd.f32 0.0, %v1829
        %v1831 = vpop.f32.mrb[0].mxu0
        %1832 = vmatprep.mubr.bf16.mxu0 0
        %1833 = vmatmul.mubr.bf16.gmra.mrb[0].mxu0 %v1756
        %v1834 = vpop.f32.mrb[0].mxu0
        %v1835 = vadd.f32 0.0, %v1834
        %v1836 = vpop.f32.mrb[0].mxu0
        %v1837 = vpop.f32.mrb[0].mxu0
        %v1838 = vadd.f32 0.0, %v1837
        %v1839 = vpop.f32.mrb[0].mxu0
        %1840 = vmatprep.mubr.bf16.mxu0 0
        %1841 = vmatmul.mubr.bf16.gmra.mrb[0].mxu0 %v1757
        %v1842 = vpop.f32.mrb[0].mxu0
        %v1843 = vadd.f32 0.0, %v1842
        %v1844 = vpop.f32.mrb[0].mxu0
        %v1845 = vpop.f32.mrb[0].mxu0
        %v1846 = vadd.f32 0.0, %v1845
        %v1847 = vpop.f32.mrb[0].mxu0
        %1848 = vmatprep.mubr.bf16.mxu0 0
        %1849 = vmatmul.mubr.bf16.gmra.mrb[0].mxu0 %v1758
        %v1850 = vpop.f32.mrb[0].mxu0
        %v1851 = vadd.f32 0.0, %v1850
        %v1852 = vpop.f32.mrb[0].mxu0
        %v1853 = vpop.f32.mrb[0].mxu0
        %v1854 = vadd.f32 0.0, %v1853
        %v1855 = vpop.f32.mrb[0].mxu0
        %1856 = vmatprep.mubr.bf16.mxu0 0
        %1857 = vmatmul.mubr.bf16.gmra.mrb[0].mxu0 %v1759
        %v1858 = vpop.f32.mrb[0].mxu0
        %v1859 = vadd.f32 0.0, %v1858
        %v1860 = vpop.f32.mrb[0].mxu0
        %v1861 = vpop.f32.mrb[0].mxu0
        %v1862 = vadd.f32 0.0, %v1861
        %v1863 = vpop.f32.mrb[0].mxu0
        %1864 = vdwg.mxu0
        %v1865 = vmul.f32 %v1803, 0.088388346
        %v1866 = vmul.f32 %v1806, 0.088388346
        %v1867 = vmul.f32 %v1811, 0.088388346
        %v1868 = vmul.f32 %v1814, 0.088388346
        %v1869 = vmul.f32 %v1819, 0.088388346
        %v1870 = vmul.f32 %v1822, 0.088388346
        %v1871 = vmul.f32 %v1827, 0.088388346
        %v1872 = vmul.f32 %v1830, 0.088388346
        %v1873 = vmul.f32 %v1835, 0.088388346
        %v1874 = vmul.f32 %v1838, 0.088388346
        %v1875 = vmul.f32 %v1843, 0.088388346
        %v1876 = vmul.f32 %v1846, 0.088388346
        %v1877 = vmul.f32 %v1851, 0.088388346
        %v1878 = vmul.f32 %v1854, 0.088388346
        %v1879 = vmul.f32 %v1859, 0.088388346
        %v1880 = vmul.f32 %v1862, 0.088388346
        %v1881 = vsel %vm1736, %v1865, -1e+09
        %v1882 = vsel %vm1737, %v1866, -1e+09
        %v1883 = vsel %vm1738, %v1867, -1e+09
        %v1884 = vsel %vm1739, %v1868, -1e+09
        %v1885 = vsel %vm1740, %v1869, -1e+09
        %v1886 = vsel %vm1741, %v1870, -1e+09
        %v1887 = vsel %vm1742, %v1871, -1e+09
        %v1888 = vsel %vm1743, %v1872, -1e+09
        %v1889 = vsel %vm1744, %v1873, -1e+09
        %v1890 = vsel %vm1745, %v1874, -1e+09
        %v1891 = vsel %vm1746, %v1875, -1e+09
        %v1892 = vsel %vm1747, %v1876, -1e+09
        %v1893 = vsel %vm1748, %v1877, -1e+09
        %v1894 = vsel %vm1749, %v1878, -1e+09
        %v1895 = vsel %vm1750, %v1879, -1e+09
        %v1896 = vsel %vm1751, %v1880, -1e+09
        %1897 = vmax.xlane.f32.xlu0 %v1881
        %v1898 = vpop.xlane.xlu0 %1897
        %1899 = vmax.xlane.f32.xlu0 %v1882
        %v1900 = vpop.xlane.xlu0 %1899
        %1901 = vmax.xlane.f32.xlu0 %v1883
        %v1902 = vpop.xlane.xlu0 %1901
        %1903 = vmax.xlane.f32.xlu0 %v1884
        %v1904 = vpop.xlane.xlu0 %1903
        %1905 = vmax.xlane.f32.xlu0 %v1885
        %v1906 = vpop.xlane.xlu0 %1905
        %1907 = vmax.xlane.f32.xlu0 %v1886
        %v1908 = vpop.xlane.xlu0 %1907
        %1909 = vmax.xlane.f32.xlu0 %v1887
        %v1910 = vpop.xlane.xlu0 %1909
        %1911 = vmax.xlane.f32.xlu0 %v1888
        %v1912 = vpop.xlane.xlu0 %1911
        %1913 = vmax.xlane.f32.xlu0 %v1889
        %v1914 = vpop.xlane.xlu0 %1913
        %1915 = vmax.xlane.f32.xlu0 %v1890
        %v1916 = vpop.xlane.xlu0 %1915
        %1917 = vmax.xlane.f32.xlu0 %v1891
        %v1918 = vpop.xlane.xlu0 %1917
        %1919 = vmax.xlane.f32.xlu0 %v1892
        %v1920 = vpop.xlane.xlu0 %1919
        %1921 = vmax.xlane.f32.xlu0 %v1893
        %v1922 = vpop.xlane.xlu0 %1921
        %1923 = vmax.xlane.f32.xlu0 %v1894
        %v1924 = vpop.xlane.xlu0 %1923
        %1925 = vmax.xlane.f32.xlu0 %v1895
        %v1926 = vpop.xlane.xlu0 %1925
        %1927 = vmax.xlane.f32.xlu0 %v1896
        %v1928 = vpop.xlane.xlu0 %1927
        %v1929 = vsub.f32 %v1881, %v1898
        %v1930 = vsub.f32 %v1882, %v1900
        %v1931 = vsub.f32 %v1883, %v1902
        %v1932 = vsub.f32 %v1884, %v1904
        %v1933 = vsub.f32 %v1885, %v1906
        %v1934 = vsub.f32 %v1886, %v1908
        %v1935 = vsub.f32 %v1887, %v1910
        %v1936 = vsub.f32 %v1888, %v1912
        %v1937 = vsub.f32 %v1889, %v1914
        %v1938 = vsub.f32 %v1890, %v1916
        %v1939 = vsub.f32 %v1891, %v1918
        %v1940 = vsub.f32 %v1892, %v1920
        %v1941 = vsub.f32 %v1893, %v1922
        %v1942 = vsub.f32 %v1894, %v1924
        %v1943 = vsub.f32 %v1895, %v1926
        %v1944 = vsub.f32 %v1896, %v1928
        %v1945 = vmul.f32 %v1929, 1.442695
        %v1946 = vpow.pop %v1945
        %v1947 = vmul.f32 %v1930, 1.442695
        %v1948 = vpow.pop %v1947
        %v1949 = vmul.f32 %v1931, 1.442695
        %v1950 = vpow.pop %v1949
        %v1951 = vmul.f32 %v1932, 1.442695
        %v1952 = vpow.pop %v1951
        %v1953 = vmul.f32 %v1933, 1.442695
        %v1954 = vpow.pop %v1953
        %v1955 = vmul.f32 %v1934, 1.442695
        %v1956 = vpow.pop %v1955
        %v1957 = vmul.f32 %v1935, 1.442695
        %v1958 = vpow.pop %v1957
        %v1959 = vmul.f32 %v1936, 1.442695
        %v1960 = vpow.pop %v1959
        %v1961 = vmul.f32 %v1937, 1.442695
        %v1962 = vpow.pop %v1961
        %v1963 = vmul.f32 %v1938, 1.442695
        %v1964 = vpow.pop %v1963
        %v1965 = vmul.f32 %v1939, 1.442695
        %v1966 = vpow.pop %v1965
        %v1967 = vmul.f32 %v1940, 1.442695
        %v1968 = vpow.pop %v1967
        %v1969 = vmul.f32 %v1941, 1.442695
        %v1970 = vpow.pop %v1969
        %v1971 = vmul.f32 %v1942, 1.442695
        %v1972 = vpow.pop %v1971
        %v1973 = vmul.f32 %v1943, 1.442695
        %v1974 = vpow.pop %v1973
        %v1975 = vmul.f32 %v1944, 1.442695
        %v1976 = vpow.pop %v1975
        %1977 = vadd.xlane.f32.xlu0 %v1946
        %v1978 = vpop.xlane.xlu0 %1977
        %1979 = vadd.xlane.f32.xlu0 %v1948
        %v1980 = vpop.xlane.xlu0 %1979
        %1981 = vadd.xlane.f32.xlu0 %v1950
        %v1982 = vpop.xlane.xlu0 %1981
        %1983 = vadd.xlane.f32.xlu0 %v1952
        %v1984 = vpop.xlane.xlu0 %1983
        %1985 = vadd.xlane.f32.xlu0 %v1954
        %v1986 = vpop.xlane.xlu0 %1985
        %1987 = vadd.xlane.f32.xlu0 %v1956
        %v1988 = vpop.xlane.xlu0 %1987
        %1989 = vadd.xlane.f32.xlu0 %v1958
        %v1990 = vpop.xlane.xlu0 %1989
        %1991 = vadd.xlane.f32.xlu0 %v1960
        %v1992 = vpop.xlane.xlu0 %1991
        %1993 = vadd.xlane.f32.xlu0 %v1962
        %v1994 = vpop.xlane.xlu0 %1993
        %1995 = vadd.xlane.f32.xlu0 %v1964
        %v1996 = vpop.xlane.xlu0 %1995
        %1997 = vadd.xlane.f32.xlu0 %v1966
        %v1998 = vpop.xlane.xlu0 %1997
        %1999 = vadd.xlane.f32.xlu0 %v1968
        %v2000 = vpop.xlane.xlu0 %1999
        %2001 = vadd.xlane.f32.xlu0 %v1970
        %v2002 = vpop.xlane.xlu0 %2001
        %2003 = vadd.xlane.f32.xlu0 %v1972
        %v2004 = vpop.xlane.xlu0 %2003
        %2005 = vadd.xlane.f32.xlu0 %v1974
        %v2006 = vpop.xlane.xlu0 %2005
        %2007 = vadd.xlane.f32.xlu0 %v1976
        %v2008 = vpop.xlane.xlu0 %2007
        %v2009 = vrcp.pop %v1978
        %v2010 = vrcp.pop %v1980
        %v2011 = vrcp.pop %v1982
        %v2012 = vrcp.pop %v1984
        %v2013 = vrcp.pop %v1986
        %v2014 = vrcp.pop %v1988
        %v2015 = vrcp.pop %v1990
        %v2016 = vrcp.pop %v1992
        %v2017 = vrcp.pop %v1994
        %v2018 = vrcp.pop %v1996
        %v2019 = vrcp.pop %v1998
        %v2020 = vrcp.pop %v2000
        %v2021 = vrcp.pop %v2002
        %v2022 = vrcp.pop %v2004
        %v2023 = vrcp.pop %v2006
        %v2024 = vrcp.pop %v2008
        %v2025 = vmul.f32 %v1946, %v2009
        %v2026 = vmul.f32 %v1948, %v2010
        %v2027 = vmul.f32 %v1950, %v2011
        %v2028 = vmul.f32 %v1952, %v2012
        %v2029 = vmul.f32 %v1954, %v2013
        %v2030 = vmul.f32 %v1956, %v2014
        %v2031 = vmul.f32 %v1958, %v2015
        %v2032 = vmul.f32 %v1960, %v2016
        %v2033 = vmul.f32 %v1962, %v2017
        %v2034 = vmul.f32 %v1964, %v2018
        %v2035 = vmul.f32 %v1966, %v2019
        %v2036 = vmul.f32 %v1968, %v2020
        %v2037 = vmul.f32 %v1970, %v2021
        %v2038 = vmul.f32 %v1972, %v2022
        %v2039 = vmul.f32 %v1974, %v2023
        %v2040 = vmul.f32 %v1976, %v2024
        %v2041 = vpack.c.bf16 %v2026, %v2025
        %v2042 = vpack.c.bf16 %v2028, %v2027
        %v2043 = vpack.c.bf16 %v2030, %v2029
        %v2044 = vpack.c.bf16 %v2032, %v2031
        %v2045 = vpack.c.bf16 %v2034, %v2033
        %v2046 = vpack.c.bf16 %v2036, %v2035
        %v2047 = vpack.c.bf16 %v2038, %v2037
        %v2048 = vpack.c.bf16 %v2040, %v2039
        %v2049 = vpack.c.bf16 %v1658, %v1655
        %v2050 = vpack.c.bf16 %v1666, %v1663
        %v2051 = vpack.c.bf16 %v1674, %v1671
        %v2052 = vpack.c.bf16 %v1682, %v1679
        %v2053 = vpack.c.bf16 %v1690, %v1687
        %v2054 = vpack.c.bf16 %v1698, %v1695
        %v2055 = vpack.c.bf16 %v1706, %v1703
        %v2056 = vpack.c.bf16 %v1714, %v1711
        %2057 = vmatprep.subr.bf16.mxu0 0
        %2058 = vmatpush1.bf16.msra.mxu0 %v2049
        %2059 = vmatprep.subr.bf16.mxu0 0
        %2060 = vmatpush1.bf16.msra.mxu0 %v2050
        %2061 = vmatprep.subr.bf16.mxu0 0
        %2062 = vmatpush1.bf16.msra.mxu0 %v2051
        %2063 = vmatprep.subr.bf16.mxu0 0
        %2064 = vmatpush1.bf16.msra.mxu0 %v2052
        %2065 = vmatprep.subr.bf16.mxu0 0
        %2066 = vmatpush1.bf16.msra.mxu0 %v2053
        %2067 = vmatprep.subr.bf16.mxu0 0
        %2068 = vmatpush1.bf16.msra.mxu0 %v2054
        %2069 = vmatprep.subr.bf16.mxu0 0
        %2070 = vmatpush1.bf16.msra.mxu0 %v2055
        %2071 = vmatprep.subr.bf16.mxu0 0
        %2072 = vmatpush1.bf16.msra.mxu0 %v2056
        %2073 = vmatprep.subr.bf16.mxu0 0
        %2074 = vmatpush1.bf16.msra.mxu0 0
        %2075 = vmatprep.subr.bf16.mxu0 0
        %2076 = vmatpush1.bf16.msra.mxu0 0
        %2077 = vmatprep.subr.bf16.mxu0 0
        %2078 = vmatpush1.bf16.msra.mxu0 0
        %2079 = vmatprep.subr.bf16.mxu0 0
        %2080 = vmatpush1.bf16.msra.mxu0 0
        %2081 = vmatprep.subr.bf16.mxu0 0
        %2082 = vmatpush1.bf16.msra.mxu0 0
        %2083 = vmatprep.subr.bf16.mxu0 0
        %2084 = vmatpush1.bf16.msra.mxu0 0
        %2085 = vmatprep.subr.bf16.mxu0 0
        %2086 = vmatpush1.bf16.msra.mxu0 0
        %2087 = vmatprep.subr.bf16.mxu0 0
        %2088 = vmatpush1.bf16.msra.mxu0 0
        %2089 = vmatprep.mubr.bf16.mxu0 0
        %2090 = vmatmul.mubr.bf16.gmra.mrb[0].mxu0 %v2041
        %v2091 = vpop.f32.mrb[0].mxu0
        %v2092 = vadd.f32 0.0, %v2091
        %v2093 = vpop.f32.mrb[0].mxu0
        %v2094 = vpop.f32.mrb[0].mxu0
        %v2095 = vadd.f32 0.0, %v2094
        %v2096 = vpop.f32.mrb[0].mxu0
        %2097 = vmatprep.mubr.bf16.mxu0 0
        %2098 = vmatmul.mubr.bf16.gmra.mrb[0].mxu0 %v2042
        %v2099 = vpop.f32.mrb[0].mxu0
        %v2100 = vadd.f32 0.0, %v2099
        %v2101 = vpop.f32.mrb[0].mxu0
        %v2102 = vpop.f32.mrb[0].mxu0
        %v2103 = vadd.f32 0.0, %v2102
        %v2104 = vpop.f32.mrb[0].mxu0
        %2105 = vmatprep.mubr.bf16.mxu0 0
        %2106 = vmatmul.mubr.bf16.gmra.mrb[0].mxu0 %v2043
        %v2107 = vpop.f32.mrb[0].mxu0
        %v2108 = vadd.f32 0.0, %v2107
        %v2109 = vpop.f32.mrb[0].mxu0
        %v2110 = vpop.f32.mrb[0].mxu0
        %v2111 = vadd.f32 0.0, %v2110
        %v2112 = vpop.f32.mrb[0].mxu0
        %2113 = vmatprep.mubr.bf16.mxu0 0
        %2114 = vmatmul.mubr.bf16.gmra.mrb[0].mxu0 %v2044
        %v2115 = vpop.f32.mrb[0].mxu0
        %v2116 = vadd.f32 0.0, %v2115
        %v2117 = vpop.f32.mrb[0].mxu0
        %v2118 = vpop.f32.mrb[0].mxu0
        %v2119 = vadd.f32 0.0, %v2118
        %v2120 = vpop.f32.mrb[0].mxu0
        %2121 = vmatprep.mubr.bf16.mxu0 0
        %2122 = vmatmul.mubr.bf16.gmra.mrb[0].mxu0 %v2045
        %v2123 = vpop.f32.mrb[0].mxu0
        %v2124 = vadd.f32 0.0, %v2123
        %v2125 = vpop.f32.mrb[0].mxu0
        %v2126 = vpop.f32.mrb[0].mxu0
        %v2127 = vadd.f32 0.0, %v2126
        %v2128 = vpop.f32.mrb[0].mxu0
        %2129 = vmatprep.mubr.bf16.mxu0 0
        %2130 = vmatmul.mubr.bf16.gmra.mrb[0].mxu0 %v2046
        %v2131 = vpop.f32.mrb[0].mxu0
        %v2132 = vadd.f32 0.0, %v2131
        %v2133 = vpop.f32.mrb[0].mxu0
        %v2134 = vpop.f32.mrb[0].mxu0
        %v2135 = vadd.f32 0.0, %v2134
        %v2136 = vpop.f32.mrb[0].mxu0
        %2137 = vmatprep.mubr.bf16.mxu0 0
        %2138 = vmatmul.mubr.bf16.gmra.mrb[0].mxu0 %v2047
        %v2139 = vpop.f32.mrb[0].mxu0
        %v2140 = vadd.f32 0.0, %v2139
        %v2141 = vpop.f32.mrb[0].mxu0
        %v2142 = vpop.f32.mrb[0].mxu0
        %v2143 = vadd.f32 0.0, %v2142
        %v2144 = vpop.f32.mrb[0].mxu0
        %2145 = vmatprep.mubr.bf16.mxu0 0
        %2146 = vmatmul.mubr.bf16.gmra.mrb[0].mxu0 %v2048
        %v2147 = vpop.f32.mrb[0].mxu0
        %v2148 = vadd.f32 0.0, %v2147
        %v2149 = vpop.f32.mrb[0].mxu0
        %v2150 = vpop.f32.mrb[0].mxu0
        %v2151 = vadd.f32 0.0, %v2150
        %v2152 = vpop.f32.mrb[0].mxu0
        %2153 = vdwg.mxu0
        %v2154 = vpack.c.bf16 %v2095, %v2092
        %v2155 = vpack.c.bf16 %v2103, %v2100
        %v2156 = vpack.c.bf16 %v2111, %v2108
        %v2157 = vpack.c.bf16 %v2119, %v2116
        %v2158 = vpack.c.bf16 %v2127, %v2124
        %v2159 = vpack.c.bf16 %v2135, %v2132
        %v2160 = vpack.c.bf16 %v2143, %v2140
        %v2161 = vpack.c.bf16 %v2151, %v2148
        %v2170 = vunpack.c.l.b16 %v2154
        %v2171 = vunpack.c.h.b16 %v2154
        %v2172 = vunpack.c.l.b16 %v2155
        %v2173 = vunpack.c.h.b16 %v2155
        %v2174 = vunpack.c.l.b16 %v2156
        %v2175 = vunpack.c.h.b16 %v2156
        %v2176 = vunpack.c.l.b16 %v2157
        %v2177 = vunpack.c.h.b16 %v2157
        %v2178 = vunpack.c.l.b16 %v2158
        %v2179 = vunpack.c.h.b16 %v2158
        %v2180 = vunpack.c.l.b16 %v2159
        %v2181 = vunpack.c.h.b16 %v2159
        %v2182 = vunpack.c.l.b16 %v2160
        %v2183 = vunpack.c.h.b16 %v2160
        %v2184 = vunpack.c.l.b16 %v2161
        %v2185 = vunpack.c.h.b16 %v2161
        %v2186 = vpack.c.b16 %v2170, %v2170
        %v2187 = vpack.c.b16 %v2171, %v2171
        %v2188 = vpack.c.b16 %v2172, %v2172
        %v2189 = vpack.c.b16 %v2173, %v2173
        %v2190 = vpack.c.b16 %v2174, %v2174
        %v2191 = vpack.c.b16 %v2175, %v2175
        %v2192 = vpack.c.b16 %v2176, %v2176
        %v2193 = vpack.c.b16 %v2177, %v2177
        %v2194 = vpack.c.b16 %v2178, %v2178
        %v2195 = vpack.c.b16 %v2179, %v2179
        %v2196 = vpack.c.b16 %v2180, %v2180
        %v2197 = vpack.c.b16 %v2181, %v2181
        %v2198 = vpack.c.b16 %v2182, %v2182
        %v2199 = vpack.c.b16 %v2183, %v2183
        %v2200 = vpack.c.b16 %v2184, %v2184
        %v2201 = vpack.c.b16 %v2185, %v2185
        %2218 = vst [vmem:[%s902] sm:$0xf] %v2186
        %2219 = vst [vmem:[%s902 + $0x4] sm:$0xf] %v2187
        %2220 = vst [vmem:[%s902 + $0x8] sm:$0xf] %v2188
        %2221 = vst [vmem:[%s902 + $0xc] sm:$0xf] %v2189
        %2222 = vst [vmem:[%s902 + $0x10] sm:$0xf] %v2190
        %2223 = vst [vmem:[%s902 + $0x14] sm:$0xf] %v2191
        %2224 = vst [vmem:[%s902 + $0x18] sm:$0xf] %v2192
        %2225 = vst [vmem:[%s902 + $0x1c] sm:$0xf] %v2193
        %2226 = vst [vmem:[%s902 + $0x20] sm:$0xf] %v2194
        %2227 = vst [vmem:[%s902 + $0x24] sm:$0xf] %v2195
        %2228 = vst [vmem:[%s902 + $0x28] sm:$0xf] %v2196
        %2229 = vst [vmem:[%s902 + $0x2c] sm:$0xf] %v2197
        %2230 = vst [vmem:[%s902 + $0x30] sm:$0xf] %v2198
        %2231 = vst [vmem:[%s902 + $0x34] sm:$0xf] %v2199
        %2232 = vst [vmem:[%s902 + $0x38] sm:$0xf] %v2200
        %2233 = vst [vmem:[%s902 + $0x3c] sm:$0xf] %v2201
        %2234 = vst [vmem:[%s909] sm:$0xff] %v2025
        %2235 = vst [vmem:[%s909 + $0x8] sm:$0xff] %v2026
        %2236 = vst [vmem:[%s909 + $0x10] sm:$0xff] %v2027
        %2237 = vst [vmem:[%s909 + $0x18] sm:$0xff] %v2028
        %2238 = vst [vmem:[%s909 + $0x20] sm:$0xff] %v2029
        %2239 = vst [vmem:[%s909 + $0x28] sm:$0xff] %v2030
        %2240 = vst [vmem:[%s909 + $0x30] sm:$0xff] %v2031
        %2241 = vst [vmem:[%s909 + $0x38] sm:$0xff] %v2032
        %2242 = vst [vmem:[%s909 + $0x40] sm:$0xff] %v2033
        %2243 = vst [vmem:[%s909 + $0x48] sm:$0xff] %v2034
        %2244 = vst [vmem:[%s909 + $0x50] sm:$0xff] %v2035
        %2245 = vst [vmem:[%s909 + $0x58] sm:$0xff] %v2036
        %2246 = vst [vmem:[%s909 + $0x60] sm:$0xff] %v2037
        %2247 = vst [vmem:[%s909 + $0x68] sm:$0xff] %v2038
        %2248 = vst [vmem:[%s909 + $0x70] sm:$0xff] %v2039
        %2249 = vst [vmem:[%s909 + $0x78] sm:$0xff] %v2040
        %s2250 = sand.u32 %s227, 1
        %s2251 = sand.u32 %s227, 1
        %s2252 = smul.addr %s2251, 64
        %s2253 = scalar_lea.vmem [#allocation5], %s2252
        %s2254 = sand.u32 %s255, 1
        %s2255 = scalar_lea.sflag [#allocation7], %s2254
        %s2256 = sand.u32 %s255, 1
        %s2257 = smul.addr %s2256, 128
        %s2258 = scalar_lea.vmem [#allocation6], %s2257
        // Predicated region
        $region172: #{transformer_decoder_block.2} parent=158 // pred_check
          %p2259 = pneg %p237
        $region173: #{transformer_decoder_block.2} parent=158 // pred_check_branch
          %2261 = sbr.rel (%p2259) target = $region175
        $region174: #{transformer_decoder_block.2} parent=158 // pred_region
          %s2262 = smul.addr %s27, 32
          %s2263 = sadd.s32 %s28, %s2262
          %s2264 = smul.addr %s2263, 4
          %s2265 = scalar_lea.vmem %s7, %s2264
          // Predicated region
          $region176: #{transformer_decoder_block.2} parent=174 // pred_check
            _
          $region177: #{transformer_decoder_block.2} parent=174 // pred_check_branch
            %2267 = sbr.rel (0) target = $region179
          $region178: #{transformer_decoder_block.2} parent=174 // pred_region
            // Predicated region
            $region180: #{transformer_decoder_block.2} parent=178 // pred_check
              _
            $region181: #{transformer_decoder_block.2} parent=178 // pred_check_branch
              %2269 = sbr.rel target = $region183
            $region182: #{transformer_decoder_block.2} parent=178 // pred_region
              // Predicated region
              $region195: #{transformer_decoder_block.2} parent=182 // pred_check
                _
              $region196: #{transformer_decoder_block.2} parent=182 // pred_check_branch
                %2314 = sbr.rel (0) target = $region198
              $region197: #{transformer_decoder_block.2} parent=182 // pred_region
                loop: start=0, step=1, limit=1
                $region199: #{transformer_decoder_block.2} parent=197 // loop_pre_header
                  _
                $region200: #{transformer_decoder_block.2} parent=197 // loop_header
                  %s2316 = sphi 0, %s2320
                  %p2317 = scmp.ge.s32.totalorder %s2316, 1
                  %s2321 = sphi %s2253, %s2253
                  %s2322 = sphi %s2265, %s2265
                $region201: #{transformer_decoder_block.2} parent=197 // loop_header_branch
                  %2319 = sbr.rel (%p2317) target = $region205
                $region202: #{transformer_decoder_block.2} parent=197 // loop_body
                  _
                $region203: #{transformer_decoder_block.2} parent=197 // loop_footer
                  %s2320 = sadd.s32 1, %s2316
                $region204: #{transformer_decoder_block.2} parent=197 // loop_footer_branch
                  %2315 = sbr.rel target = $region200
                $region205: #{transformer_decoder_block.2} parent=197 // loop_exit
                  _
                loop: start=0, step=1, limit=1
                $region206: #{transformer_decoder_block.2} parent=197 // loop_pre_header
                  _
                $region207: #{transformer_decoder_block.2} parent=197 // loop_header
                  %s2325 = sphi 0, %s2329
                  %p2326 = scmp.ge.s32.totalorder %s2325, 1
                  %s2330 = sphi %s2253, %s2253
                  %s2331 = sphi %s2265, %s2265
                $region208: #{transformer_decoder_block.2} parent=197 // loop_header_branch
                  %2328 = sbr.rel (%p2326) target = $region212
                $region209: #{transformer_decoder_block.2} parent=197 // loop_body
                  %v2332 = vld [vmem:[%s2330] sm:$0xf]
                  %2333 = vst [vmem:[%s2331] sm:$0xf] %v2332
                  %v2334 = vld [vmem:[%s2330 + $0x4] sm:$0xf]
                  %2335 = vst [vmem:[%s2331 + $0x8] sm:$0xf] %v2334
                  %v2336 = vld [vmem:[%s2330 + $0x8] sm:$0xf]
                  %2337 = vst [vmem:[%s2331 + $0x10] sm:$0xf] %v2336
                  %v2338 = vld [vmem:[%s2330 + $0xc] sm:$0xf]
                  %2339 = vst [vmem:[%s2331 + $0x18] sm:$0xf] %v2338
                  %v2340 = vld [vmem:[%s2330 + $0x10] sm:$0xf]
                  %2341 = vst [vmem:[%s2331 + $0x20] sm:$0xf] %v2340
                  %v2342 = vld [vmem:[%s2330 + $0x14] sm:$0xf]
                  %2343 = vst [vmem:[%s2331 + $0x28] sm:$0xf] %v2342
                  %v2344 = vld [vmem:[%s2330 + $0x18] sm:$0xf]
                  %2345 = vst [vmem:[%s2331 + $0x30] sm:$0xf] %v2344
                  %v2346 = vld [vmem:[%s2330 + $0x1c] sm:$0xf]
                  %2347 = vst [vmem:[%s2331 + $0x38] sm:$0xf] %v2346
                  %v2348 = vld [vmem:[%s2330 + $0x20] sm:$0xf]
                  %2349 = vst [vmem:[%s2331 + $0x40] sm:$0xf] %v2348
                  %v2350 = vld [vmem:[%s2330 + $0x24] sm:$0xf]
                  %2351 = vst [vmem:[%s2331 + $0x48] sm:$0xf] %v2350
                  %v2352 = vld [vmem:[%s2330 + $0x28] sm:$0xf]
                  %2353 = vst [vmem:[%s2331 + $0x50] sm:$0xf] %v2352
                  %v2354 = vld [vmem:[%s2330 + $0x2c] sm:$0xf]
                  %2355 = vst [vmem:[%s2331 + $0x58] sm:$0xf] %v2354
                  %v2356 = vld [vmem:[%s2330 + $0x30] sm:$0xf]
                  %2357 = vst [vmem:[%s2331 + $0x60] sm:$0xf] %v2356
                  %v2358 = vld [vmem:[%s2330 + $0x34] sm:$0xf]
                  %2359 = vst [vmem:[%s2331 + $0x68] sm:$0xf] %v2358
                  %v2360 = vld [vmem:[%s2330 + $0x38] sm:$0xf]
                  %2361 = vst [vmem:[%s2331 + $0x70] sm:$0xf] %v2360
                  %v2362 = vld [vmem:[%s2330 + $0x3c] sm:$0xf]
                  %2363 = vst [vmem:[%s2331 + $0x78] sm:$0xf] %v2362
                $region210: #{transformer_decoder_block.2} parent=197 // loop_footer
                  %s2329 = sadd.s32 1, %s2325
                $region211: #{transformer_decoder_block.2} parent=197 // loop_footer_branch
                  %2324 = sbr.rel target = $region207
                $region212: #{transformer_decoder_block.2} parent=197 // loop_exit
                  _
              $region198: #{transformer_decoder_block.2} parent=182 // pred_fallthru
                _
            $region183: #{transformer_decoder_block.2} parent=178 // pred_fallthru
              _
            // Predicated region
            $region184: #{transformer_decoder_block.2} parent=178 // pred_check
              _
            $region185: #{transformer_decoder_block.2} parent=178 // pred_check_branch
              %2271 = sbr.rel (0) target = $region187
            $region186: #{transformer_decoder_block.2} parent=178 // pred_region
              loop: start=0, step=1, limit=1
              $region188: #{transformer_decoder_block.2} parent=186 // loop_pre_header
                _
              $region189: #{transformer_decoder_block.2} parent=186 // loop_header
                %s2274 = sphi 0, %s2278
                %p2275 = scmp.ge.s32.totalorder %s2274, 1
                %s2279 = sphi %s2253, %s2253
                %s2280 = sphi %s2265, %s2265
              $region190: #{transformer_decoder_block.2} parent=186 // loop_header_branch
                %2277 = sbr.rel (%p2275) target = $region194
              $region191: #{transformer_decoder_block.2} parent=186 // loop_body
                %v2281 = vld [vmem:[%s2279] sm:$0xf]
                %2282 = vst [vmem:[%s2280] sm:$0xf] %v2281
                %v2283 = vld [vmem:[%s2279 + $0x4] sm:$0xf]
                %2284 = vst [vmem:[%s2280 + $0x8] sm:$0xf] %v2283
                %v2285 = vld [vmem:[%s2279 + $0x8] sm:$0xf]
                %2286 = vst [vmem:[%s2280 + $0x10] sm:$0xf] %v2285
                %v2287 = vld [vmem:[%s2279 + $0xc] sm:$0xf]
                %2288 = vst [vmem:[%s2280 + $0x18] sm:$0xf] %v2287
                %v2289 = vld [vmem:[%s2279 + $0x10] sm:$0xf]
                %2290 = vst [vmem:[%s2280 + $0x20] sm:$0xf] %v2289
                %v2291 = vld [vmem:[%s2279 + $0x14] sm:$0xf]
                %2292 = vst [vmem:[%s2280 + $0x28] sm:$0xf] %v2291
                %v2293 = vld [vmem:[%s2279 + $0x18] sm:$0xf]
                %2294 = vst [vmem:[%s2280 + $0x30] sm:$0xf] %v2293
                %v2295 = vld [vmem:[%s2279 + $0x1c] sm:$0xf]
                %2296 = vst [vmem:[%s2280 + $0x38] sm:$0xf] %v2295
                %v2297 = vld [vmem:[%s2279 + $0x20] sm:$0xf]
                %2298 = vst [vmem:[%s2280 + $0x40] sm:$0xf] %v2297
                %v2299 = vld [vmem:[%s2279 + $0x24] sm:$0xf]
                %2300 = vst [vmem:[%s2280 + $0x48] sm:$0xf] %v2299
                %v2301 = vld [vmem:[%s2279 + $0x28] sm:$0xf]
                %2302 = vst [vmem:[%s2280 + $0x50] sm:$0xf] %v2301
                %v2303 = vld [vmem:[%s2279 + $0x2c] sm:$0xf]
                %2304 = vst [vmem:[%s2280 + $0x58] sm:$0xf] %v2303
                %v2305 = vld [vmem:[%s2279 + $0x30] sm:$0xf]
                %2306 = vst [vmem:[%s2280 + $0x60] sm:$0xf] %v2305
                %v2307 = vld [vmem:[%s2279 + $0x34] sm:$0xf]
                %2308 = vst [vmem:[%s2280 + $0x68] sm:$0xf] %v2307
                %v2309 = vld [vmem:[%s2279 + $0x38] sm:$0xf]
                %2310 = vst [vmem:[%s2280 + $0x70] sm:$0xf] %v2309
                %v2311 = vld [vmem:[%s2279 + $0x3c] sm:$0xf]
                %2312 = vst [vmem:[%s2280 + $0x78] sm:$0xf] %v2311
              $region192: #{transformer_decoder_block.2} parent=186 // loop_footer
                %s2278 = sadd.s32 1, %s2274
              $region193: #{transformer_decoder_block.2} parent=186 // loop_footer_branch
                %2273 = sbr.rel target = $region189
              $region194: #{transformer_decoder_block.2} parent=186 // loop_exit
                _
            $region187: #{transformer_decoder_block.2} parent=178 // pred_fallthru
              _
          $region179: #{transformer_decoder_block.2} parent=174 // pred_fallthru
            _
          %2364 = vnop
        $region175: #{transformer_decoder_block.2} parent=158 // pred_fallthru
          _
        // Predicated region
        $region213: #{transformer_decoder_block.2} parent=158 // pred_check
          %p2365 = pneg %p265
        $region214: #{transformer_decoder_block.2} parent=158 // pred_check_branch
          %2367 = sbr.rel (%p2365) target = $region216
        $region215: #{transformer_decoder_block.2} parent=158 // pred_region
          %s2369 = ssub.s32 2048, 2048
          %2370 = vsyncadd %s2255, %s2369
          %s2371 = smul.addr %s28, 16
          %s2372 = smul.addr %s27, 32
          %s2373 = sadd.s32 %s2371, %s2372
          %s2374 = smul.addr %s2373, 128
          %s2375 = scalar_lea.hbm %s8, %s2374
          %s2376 = sshll.u32 %s2258, 4
          %s2377 = int_to_ptr.vmem [resolvable:$true] %s2376
          %2382 = dma.vmem_to_hbm [thread:$0]  %s2377, 2048, %s2375, %s2255, 128, 128, 8
        $region216: #{transformer_decoder_block.2} parent=158 // pred_fallthru
          _
      $region159: #{transformer_decoder_block.2} parent=5 // pred_fallthru
        _
      %p2383 = scmp.le.s32.totalorder 2, %s18
      // Predicated region
      $region217: #{transformer_decoder_block.2} parent=5 // pred_check
        %p2384 = pneg %p2383
      $region218: #{transformer_decoder_block.2} parent=5 // pred_check_branch
        %2386 = sbr.rel (%p2384) target = $region220
      $region219: #{transformer_decoder_block.2} parent=5 // pred_region
        %s2387 = ssub.s32 %s18, 2
        // Predicated region
        $region221: #{transformer_decoder_block.2} parent=219 // pred_check
          %p2388 = pneg %p243
        $region222: #{transformer_decoder_block.2} parent=219 // pred_check_branch
          %2390 = sbr.rel (%p2388) target = $region224
        $region223: #{transformer_decoder_block.2} parent=219 // pred_region
          %s2391 = sand.u32 %s228, 1
          %s2392 = sand.u32 %s228, 1
          %s2393 = smul.addr %s2392, 64
          %s2394 = scalar_lea.vmem [#allocation5], %s2393
        $region224: #{transformer_decoder_block.2} parent=219 // pred_fallthru
          _
        // Predicated region
        $region225: #{transformer_decoder_block.2} parent=219 // pred_check
          %p2395 = pneg %p271
        $region226: #{transformer_decoder_block.2} parent=219 // pred_check_branch
          %2397 = sbr.rel (%p2395) target = $region228
        $region227: #{transformer_decoder_block.2} parent=219 // pred_region
          %s2398 = sand.u32 %s256, 1
          %s2399 = scalar_lea.sflag [#allocation7], %s2398
          %s2400 = sand.u32 %s256, 1
          %s2401 = smul.addr %s2400, 128
          %s2402 = scalar_lea.vmem [#allocation6], %s2401
          %2403 = dma.done %s2399, 2048
        $region228: #{transformer_decoder_block.2} parent=219 // pred_fallthru
          _
      $region220: #{transformer_decoder_block.2} parent=5 // pred_fallthru
        _
    $region6: #{transformer_decoder_block.2} parent=1 // loop_footer
      %s22 = sadd.s32 1, %s18
    $region7: #{transformer_decoder_block.2} parent=1 // loop_footer_branch
      %17 = sbr.rel target = $region3
    $region8: #{transformer_decoder_block.2} parent=1 // loop_exit
      _
    %2404 = vsyncpa [#allocation7], 1
    %s2405 = scalar_lea.sflag [#allocation7], 1
    %2406 = vsyncpa %s2405, 1

// kernel: transformer_decoder_block.3
$region0: #{transformer_decoder_block.3}
  #allocation0 [shape = 'u32[]', space=smem, size = 0x4, offset = 0x4, fixed_abs, tag = 'smem constant byte address 0x4 - core index']
  #allocation1 [shape = 'u32[144,128]{1,0:T(1,128)}', space=vmem, size = 0x12000, scoped, tag = 'internal scratch']
  %s0 = inlined_call_operand.vmem [shape: f32[2,128,256], index: 0, kind: input, shape index: {}]
  %s1 = inlined_call_operand.vmem [shape: bf16[2,128,256], index: 1, kind: input, shape index: {}]
  %s2 = inlined_call_operand.vmem [shape: bf16[256,256], index: 2, kind: input, shape index: {}]
  %s3 = inlined_call_operand.vmem [shape: f32[1,256], index: 3, kind: input, shape index: {}]
  %s4 = inlined_call_operand.vmem [shape: f32[1,256], index: 4, kind: input, shape index: {}]
  %s5 = inlined_call_operand.vmem [shape: f32[1,256], index: 5, kind: input, shape index: {}]
  %s6 = inlined_call_operand.vmem [shape: bf16[256,1024], index: 6, kind: input, shape index: {}]
  %s7 = inlined_call_operand.vmem [shape: f32[1,1024], index: 7, kind: input, shape index: {}]
  %s8 = inlined_call_operand.vmem [shape: bf16[1024,256], index: 8, kind: input, shape index: {}]
  %s9 = inlined_call_operand.vmem [shape: f32[1,256], index: 9, kind: input, shape index: {}]
  %s10 = inlined_call_operand.vmem [shape: f32[1,256], index: 10, kind: input, shape index: {}]
  %s11 = inlined_call_operand.vmem [shape: f32[1,256], index: 11, kind: input, shape index: {}]
  %s12 = inlined_call_operand.hbm [shape: f32[2,128,256], index: 12, kind: output, shape index: {}]
  %s13 = sld [smem:[#allocation0]]
  $region81: #{transformer_decoder_block.3} parent=0
    _
  %s15 = ssub.s32 1, %s13
  %s16 = scalar_select 0, %s15, %s13
  $region1: #{transformer_decoder_block.3} parent=0
    #allocation2 [shape = 'u8[262144]{0}', space=vmem, size = 0x40000, scoped, tag = 'output window, operand 0']
    #allocation3 [shape = 's32[2]{0}', space=sflag, size = 0x8, scoped, tag = 'scoped memory for transformer_decoder_block.3']
    %17 = vsyncpa [#allocation3], 0
    %s18 = scalar_lea.sflag [#allocation3], 1
    %19 = vsyncpa %s18, 0
    loop: start=0, step=1, limit=4
    $region2: #{transformer_decoder_block.3} parent=1 // loop_pre_header
      _
    $region3: #{transformer_decoder_block.3} parent=1 // loop_header
      %s21 = sphi 0, %s25
      %p22 = scmp.ge.s32.totalorder %s21, 4
      %s31 = sphi 0, %s33
      %s34 = sphi 0, %s31
      %s35 = sphi 0, %s34
      %s51 = sphi 0, %s35
      %s57 = sphi 0, %s59
      %s60 = sphi 0, %s57
      %s61 = sphi 0, %s60
      %s77 = sphi 0, %s61
      %s81 = sphi 0, %s81
      %s83 = sphi 0, %s81
      %s84 = sphi 0, %s83
      %s98 = sphi 0, %s84
      %s102 = sphi 0, %s102
      %s104 = sphi 0, %s102
      %s105 = sphi 0, %s104
      %s119 = sphi 0, %s105
      %s123 = sphi 0, %s123
      %s125 = sphi 0, %s123
      %s126 = sphi 0, %s125
      %s140 = sphi 0, %s126
      %s144 = sphi 0, %s144
      %s146 = sphi 0, %s144
      %s147 = sphi 0, %s146
      %s161 = sphi 0, %s147
      %s165 = sphi 0, %s165
      %s167 = sphi 0, %s165
      %s168 = sphi 0, %s167
      %s182 = sphi 0, %s168
      %s186 = sphi 0, %s186
      %s188 = sphi 0, %s186
      %s189 = sphi 0, %s188
      %s203 = sphi 0, %s189
      %s207 = sphi 0, %s207
      %s209 = sphi 0, %s207
      %s210 = sphi 0, %s209
      %s224 = sphi 0, %s210
      %s228 = sphi 0, %s228
      %s230 = sphi 0, %s228
      %s231 = sphi 0, %s230
      %s245 = sphi 0, %s231
      %s249 = sphi 0, %s249
      %s251 = sphi 0, %s249
      %s252 = sphi 0, %s251
      %s266 = sphi 0, %s252
      %s270 = sphi 0, %s270
      %s272 = sphi 0, %s270
      %s273 = sphi 0, %s272
      %s287 = sphi 0, %s273
      %s293 = sphi 0, %s295
      %s296 = sphi 0, %s293
      %s297 = sphi 0, %s296
      %s313 = sphi 0, %s297
    $region4: #{transformer_decoder_block.3} parent=1 // loop_header_branch
      %24 = sbr.rel (%p22) target = $region8
    $region5: #{transformer_decoder_block.3} parent=1 // loop_body
      %s26 = ssub.s32 %s21, 1
      %s27 = ssub.s32 %s21, 2
      %s28 = sadd.s32 %s21, 1
      %s29 = ssub.s32 %s21, %s28
      %p30 = scmp.eq.s32.totalorder %s29, 0
      %s32 = sadd.s32 %s31, 1
      %s33 = scalar_select %p30, %s31, %s32
      %p36 = pneg %p30
      %p37 = scmp.eq.s32.totalorder %s21, 1
      %p38 = por %p36, %p37
      %p39 = scmp.ne.s32.totalorder %s31, %s34
      %p40 = scmp.eq.s32.totalorder %s21, 0
      %p41 = por %p39, %p40
      %p42 = scmp.ne.s32.totalorder %s31, %s34
      %p43 = scmp.eq.s32.totalorder %s26, 1
      %p44 = por %p42, %p43
      %p45 = scmp.ne.s32.totalorder %s34, %s35
      %p46 = scmp.eq.s32.totalorder %s26, 0
      %p47 = por %p45, %p46
      %p48 = scmp.ne.s32.totalorder %s34, %s35
      %p49 = scmp.eq.s32.totalorder %s27, 1
      %p50 = por %p48, %p49
      %p52 = scmp.ne.s32.totalorder %s35, %s51
      %p53 = scmp.eq.s32.totalorder %s27, 0
      %p54 = por %p52, %p53
      %s55 = ssub.s32 %s21, %s28
      %p56 = scmp.eq.s32.totalorder %s55, 0
      %s58 = sadd.s32 %s57, 1
      %s59 = scalar_select %p56, %s57, %s58
      %p62 = pneg %p56
      %p63 = scmp.eq.s32.totalorder %s21, 1
      %p64 = por %p62, %p63
      %p65 = scmp.ne.s32.totalorder %s57, %s60
      %p66 = scmp.eq.s32.totalorder %s21, 0
      %p67 = por %p65, %p66
      %p68 = scmp.ne.s32.totalorder %s57, %s60
      %p69 = scmp.eq.s32.totalorder %s26, 1
      %p70 = por %p68, %p69
      %p71 = scmp.ne.s32.totalorder %s60, %s61
      %p72 = scmp.eq.s32.totalorder %s26, 0
      %p73 = por %p71, %p72
      %p74 = scmp.ne.s32.totalorder %s60, %s61
      %p75 = scmp.eq.s32.totalorder %s27, 1
      %p76 = por %p74, %p75
      %p78 = scmp.ne.s32.totalorder %s61, %s77
      %p79 = scmp.eq.s32.totalorder %s27, 0
      %p80 = por %p78, %p79
      %s82 = sadd.s32 %s81, 1
      %p85 = scmp.eq.s32.totalorder %s21, 1
      %p86 = scmp.ne.s32.totalorder %s81, %s83
      %p87 = scmp.eq.s32.totalorder %s21, 0
      %p88 = por %p86, %p87
      %p89 = scmp.ne.s32.totalorder %s81, %s83
      %p90 = scmp.eq.s32.totalorder %s26, 1
      %p91 = por %p89, %p90
      %p92 = scmp.ne.s32.totalorder %s83, %s84
      %p93 = scmp.eq.s32.totalorder %s26, 0
      %p94 = por %p92, %p93
      %p95 = scmp.ne.s32.totalorder %s83, %s84
      %p96 = scmp.eq.s32.totalorder %s27, 1
      %p97 = por %p95, %p96
      %p99 = scmp.ne.s32.totalorder %s84, %s98
      %p100 = scmp.eq.s32.totalorder %s27, 0
      %p101 = por %p99, %p100
      %s103 = sadd.s32 %s102, 1
      %p106 = scmp.eq.s32.totalorder %s21, 1
      %p107 = scmp.ne.s32.totalorder %s102, %s104
      %p108 = scmp.eq.s32.totalorder %s21, 0
      %p109 = por %p107, %p108
      %p110 = scmp.ne.s32.totalorder %s102, %s104
      %p111 = scmp.eq.s32.totalorder %s26, 1
      %p112 = por %p110, %p111
      %p113 = scmp.ne.s32.totalorder %s104, %s105
      %p114 = scmp.eq.s32.totalorder %s26, 0
      %p115 = por %p113, %p114
      %p116 = scmp.ne.s32.totalorder %s104, %s105
      %p117 = scmp.eq.s32.totalorder %s27, 1
      %p118 = por %p116, %p117
      %p120 = scmp.ne.s32.totalorder %s105, %s119
      %p121 = scmp.eq.s32.totalorder %s27, 0
      %p122 = por %p120, %p121
      %s124 = sadd.s32 %s123, 1
      %p127 = scmp.eq.s32.totalorder %s21, 1
      %p128 = scmp.ne.s32.totalorder %s123, %s125
      %p129 = scmp.eq.s32.totalorder %s21, 0
      %p130 = por %p128, %p129
      %p131 = scmp.ne.s32.totalorder %s123, %s125
      %p132 = scmp.eq.s32.totalorder %s26, 1
      %p133 = por %p131, %p132
      %p134 = scmp.ne.s32.totalorder %s125, %s126
      %p135 = scmp.eq.s32.totalorder %s26, 0
      %p136 = por %p134, %p135
      %p137 = scmp.ne.s32.totalorder %s125, %s126
      %p138 = scmp.eq.s32.totalorder %s27, 1
      %p139 = por %p137, %p138
      %p141 = scmp.ne.s32.totalorder %s126, %s140
      %p142 = scmp.eq.s32.totalorder %s27, 0
      %p143 = por %p141, %p142
      %s145 = sadd.s32 %s144, 1
      %p148 = scmp.eq.s32.totalorder %s21, 1
      %p149 = scmp.ne.s32.totalorder %s144, %s146
      %p150 = scmp.eq.s32.totalorder %s21, 0
      %p151 = por %p149, %p150
      %p152 = scmp.ne.s32.totalorder %s144, %s146
      %p153 = scmp.eq.s32.totalorder %s26, 1
      %p154 = por %p152, %p153
      %p155 = scmp.ne.s32.totalorder %s146, %s147
      %p156 = scmp.eq.s32.totalorder %s26, 0
      %p157 = por %p155, %p156
      %p158 = scmp.ne.s32.totalorder %s146, %s147
      %p159 = scmp.eq.s32.totalorder %s27, 1
      %p160 = por %p158, %p159
      %p162 = scmp.ne.s32.totalorder %s147, %s161
      %p163 = scmp.eq.s32.totalorder %s27, 0
      %p164 = por %p162, %p163
      %s166 = sadd.s32 %s165, 1
      %p169 = scmp.eq.s32.totalorder %s21, 1
      %p170 = scmp.ne.s32.totalorder %s165, %s167
      %p171 = scmp.eq.s32.totalorder %s21, 0
      %p172 = por %p170, %p171
      %p173 = scmp.ne.s32.totalorder %s165, %s167
      %p174 = scmp.eq.s32.totalorder %s26, 1
      %p175 = por %p173, %p174
      %p176 = scmp.ne.s32.totalorder %s167, %s168
      %p177 = scmp.eq.s32.totalorder %s26, 0
      %p178 = por %p176, %p177
      %p179 = scmp.ne.s32.totalorder %s167, %s168
      %p180 = scmp.eq.s32.totalorder %s27, 1
      %p181 = por %p179, %p180
      %p183 = scmp.ne.s32.totalorder %s168, %s182
      %p184 = scmp.eq.s32.totalorder %s27, 0
      %p185 = por %p183, %p184
      %s187 = sadd.s32 %s186, 1
      %p190 = scmp.eq.s32.totalorder %s21, 1
      %p191 = scmp.ne.s32.totalorder %s186, %s188
      %p192 = scmp.eq.s32.totalorder %s21, 0
      %p193 = por %p191, %p192
      %p194 = scmp.ne.s32.totalorder %s186, %s188
      %p195 = scmp.eq.s32.totalorder %s26, 1
      %p196 = por %p194, %p195
      %p197 = scmp.ne.s32.totalorder %s188, %s189
      %p198 = scmp.eq.s32.totalorder %s26, 0
      %p199 = por %p197, %p198
      %p200 = scmp.ne.s32.totalorder %s188, %s189
      %p201 = scmp.eq.s32.totalorder %s27, 1
      %p202 = por %p200, %p201
      %p204 = scmp.ne.s32.totalorder %s189, %s203
      %p205 = scmp.eq.s32.totalorder %s27, 0
      %p206 = por %p204, %p205
      %s208 = sadd.s32 %s207, 1
      %p211 = scmp.eq.s32.totalorder %s21, 1
      %p212 = scmp.ne.s32.totalorder %s207, %s209
      %p213 = scmp.eq.s32.totalorder %s21, 0
      %p214 = por %p212, %p213
      %p215 = scmp.ne.s32.totalorder %s207, %s209
      %p216 = scmp.eq.s32.totalorder %s26, 1
      %p217 = por %p215, %p216
      %p218 = scmp.ne.s32.totalorder %s209, %s210
      %p219 = scmp.eq.s32.totalorder %s26, 0
      %p220 = por %p218, %p219
      %p221 = scmp.ne.s32.totalorder %s209, %s210
      %p222 = scmp.eq.s32.totalorder %s27, 1
      %p223 = por %p221, %p222
      %p225 = scmp.ne.s32.totalorder %s210, %s224
      %p226 = scmp.eq.s32.totalorder %s27, 0
      %p227 = por %p225, %p226
      %s229 = sadd.s32 %s228, 1
      %p232 = scmp.eq.s32.totalorder %s21, 1
      %p233 = scmp.ne.s32.totalorder %s228, %s230
      %p234 = scmp.eq.s32.totalorder %s21, 0
      %p235 = por %p233, %p234
      %p236 = scmp.ne.s32.totalorder %s228, %s230
      %p237 = scmp.eq.s32.totalorder %s26, 1
      %p238 = por %p236, %p237
      %p239 = scmp.ne.s32.totalorder %s230, %s231
      %p240 = scmp.eq.s32.totalorder %s26, 0
      %p241 = por %p239, %p240
      %p242 = scmp.ne.s32.totalorder %s230, %s231
      %p243 = scmp.eq.s32.totalorder %s27, 1
      %p244 = por %p242, %p243
      %p246 = scmp.ne.s32.totalorder %s231, %s245
      %p247 = scmp.eq.s32.totalorder %s27, 0
      %p248 = por %p246, %p247
      %s250 = sadd.s32 %s249, 1
      %p253 = scmp.eq.s32.totalorder %s21, 1
      %p254 = scmp.ne.s32.totalorder %s249, %s251
      %p255 = scmp.eq.s32.totalorder %s21, 0
      %p256 = por %p254, %p255
      %p257 = scmp.ne.s32.totalorder %s249, %s251
      %p258 = scmp.eq.s32.totalorder %s26, 1
      %p259 = por %p257, %p258
      %p260 = scmp.ne.s32.totalorder %s251, %s252
      %p261 = scmp.eq.s32.totalorder %s26, 0
      %p262 = por %p260, %p261
      %p263 = scmp.ne.s32.totalorder %s251, %s252
      %p264 = scmp.eq.s32.totalorder %s27, 1
      %p265 = por %p263, %p264
      %p267 = scmp.ne.s32.totalorder %s252, %s266
      %p268 = scmp.eq.s32.totalorder %s27, 0
      %p269 = por %p267, %p268
      %s271 = sadd.s32 %s270, 1
      %p274 = scmp.eq.s32.totalorder %s21, 1
      %p275 = scmp.ne.s32.totalorder %s270, %s272
      %p276 = scmp.eq.s32.totalorder %s21, 0
      %p277 = por %p275, %p276
      %p278 = scmp.ne.s32.totalorder %s270, %s272
      %p279 = scmp.eq.s32.totalorder %s26, 1
      %p280 = por %p278, %p279
      %p281 = scmp.ne.s32.totalorder %s272, %s273
      %p282 = scmp.eq.s32.totalorder %s26, 0
      %p283 = por %p281, %p282
      %p284 = scmp.ne.s32.totalorder %s272, %s273
      %p285 = scmp.eq.s32.totalorder %s27, 1
      %p286 = por %p284, %p285
      %p288 = scmp.ne.s32.totalorder %s273, %s287
      %p289 = scmp.eq.s32.totalorder %s27, 0
      %p290 = por %p288, %p289
      %s291 = ssub.s32 %s21, %s28
      %p292 = scmp.eq.s32.totalorder %s291, 0
      %s294 = sadd.s32 %s293, 1
      %s295 = scalar_select %p292, %s293, %s294
      %p298 = pneg %p292
      %p299 = scmp.eq.s32.totalorder %s21, 1
      %p300 = por %p298, %p299
      %p301 = scmp.ne.s32.totalorder %s293, %s296
      %p302 = scmp.eq.s32.totalorder %s21, 0
      %p303 = por %p301, %p302
      %p304 = scmp.ne.s32.totalorder %s293, %s296
      %p305 = scmp.eq.s32.totalorder %s26, 1
      %p306 = por %p304, %p305
      %p307 = scmp.ne.s32.totalorder %s296, %s297
      %p308 = scmp.eq.s32.totalorder %s26, 0
      %p309 = por %p307, %p308
      %p310 = scmp.ne.s32.totalorder %s296, %s297
      %p311 = scmp.eq.s32.totalorder %s27, 1
      %p312 = por %p310, %p311
      %p314 = scmp.ne.s32.totalorder %s297, %s313
      %p315 = scmp.eq.s32.totalorder %s27, 0
      %p316 = por %p314, %p315
      %p317 = scmp.le.s32.totalorder 1, %s21
      %p318 = scmp.lt.s32.totalorder %s21, 3
      %p319 = pnand %p317, %p318
      %p320 = pneg %p319
      // Predicated region
      $region9: #{transformer_decoder_block.3} parent=5 // pred_check
        _
      $region10: #{transformer_decoder_block.3} parent=5 // pred_check_branch
        %322 = sbr.rel (%p319) target = $region12
      $region11: #{transformer_decoder_block.3} parent=5 // pred_region
        %s323 = ssub.s32 %s21, 1
        // Predicated region
        $region13: #{transformer_decoder_block.3} parent=11 // pred_check
          %p324 = pneg %p94
        $region14: #{transformer_decoder_block.3} parent=11 // pred_check_branch
          %326 = sbr.rel (%p324) target = $region16
        $region15: #{transformer_decoder_block.3} parent=11 // pred_region
          _
        $region16: #{transformer_decoder_block.3} parent=11 // pred_fallthru
          _
        // Predicated region
        $region17: #{transformer_decoder_block.3} parent=11 // pred_check
          %p327 = pneg %p115
        $region18: #{transformer_decoder_block.3} parent=11 // pred_check_branch
          %329 = sbr.rel (%p327) target = $region20
        $region19: #{transformer_decoder_block.3} parent=11 // pred_region
          _
        $region20: #{transformer_decoder_block.3} parent=11 // pred_fallthru
          _
        // Predicated region
        $region21: #{transformer_decoder_block.3} parent=11 // pred_check
          %p330 = pneg %p136
        $region22: #{transformer_decoder_block.3} parent=11 // pred_check_branch
          %332 = sbr.rel (%p330) target = $region24
        $region23: #{transformer_decoder_block.3} parent=11 // pred_region
          _
        $region24: #{transformer_decoder_block.3} parent=11 // pred_fallthru
          _
        // Predicated region
        $region25: #{transformer_decoder_block.3} parent=11 // pred_check
          %p333 = pneg %p157
        $region26: #{transformer_decoder_block.3} parent=11 // pred_check_branch
          %335 = sbr.rel (%p333) target = $region28
        $region27: #{transformer_decoder_block.3} parent=11 // pred_region
          _
        $region28: #{transformer_decoder_block.3} parent=11 // pred_fallthru
          _
        // Predicated region
        $region29: #{transformer_decoder_block.3} parent=11 // pred_check
          %p336 = pneg %p178
        $region30: #{transformer_decoder_block.3} parent=11 // pred_check_branch
          %338 = sbr.rel (%p336) target = $region32
        $region31: #{transformer_decoder_block.3} parent=11 // pred_region
          _
        $region32: #{transformer_decoder_block.3} parent=11 // pred_fallthru
          _
        // Predicated region
        $region33: #{transformer_decoder_block.3} parent=11 // pred_check
          %p339 = pneg %p199
        $region34: #{transformer_decoder_block.3} parent=11 // pred_check_branch
          %341 = sbr.rel (%p339) target = $region36
        $region35: #{transformer_decoder_block.3} parent=11 // pred_region
          _
        $region36: #{transformer_decoder_block.3} parent=11 // pred_fallthru
          _
        // Predicated region
        $region37: #{transformer_decoder_block.3} parent=11 // pred_check
          %p342 = pneg %p220
        $region38: #{transformer_decoder_block.3} parent=11 // pred_check_branch
          %344 = sbr.rel (%p342) target = $region40
        $region39: #{transformer_decoder_block.3} parent=11 // pred_region
          _
        $region40: #{transformer_decoder_block.3} parent=11 // pred_fallthru
          _
        // Predicated region
        $region41: #{transformer_decoder_block.3} parent=11 // pred_check
          %p345 = pneg %p241
        $region42: #{transformer_decoder_block.3} parent=11 // pred_check_branch
          %347 = sbr.rel (%p345) target = $region44
        $region43: #{transformer_decoder_block.3} parent=11 // pred_region
          _
        $region44: #{transformer_decoder_block.3} parent=11 // pred_fallthru
          _
        // Predicated region
        $region45: #{transformer_decoder_block.3} parent=11 // pred_check
          %p348 = pneg %p262
        $region46: #{transformer_decoder_block.3} parent=11 // pred_check_branch
          %350 = sbr.rel (%p348) target = $region48
        $region47: #{transformer_decoder_block.3} parent=11 // pred_region
          _
        $region48: #{transformer_decoder_block.3} parent=11 // pred_fallthru
          _
        // Predicated region
        $region49: #{transformer_decoder_block.3} parent=11 // pred_check
          %p351 = pneg %p283
        $region50: #{transformer_decoder_block.3} parent=11 // pred_check_branch
          %353 = sbr.rel (%p351) target = $region52
        $region51: #{transformer_decoder_block.3} parent=11 // pred_region
          _
        $region52: #{transformer_decoder_block.3} parent=11 // pred_fallthru
          _
      $region12: #{transformer_decoder_block.3} parent=5 // pred_fallthru
        _
      %p354 = scmp.lt.s32.totalorder %s21, 2
      // Predicated region
      $region53: #{transformer_decoder_block.3} parent=5 // pred_check
        %p355 = pneg %p354
      $region54: #{transformer_decoder_block.3} parent=5 // pred_check_branch
        %357 = sbr.rel (%p355) target = $region56
      $region55: #{transformer_decoder_block.3} parent=5 // pred_region
        // Predicated region
        $region57: #{transformer_decoder_block.3} parent=55 // pred_check
          %p358 = pneg %p41
        $region58: #{transformer_decoder_block.3} parent=55 // pred_check_branch
          %360 = sbr.rel (%p358) target = $region60
        $region59: #{transformer_decoder_block.3} parent=55 // pred_region
          %p361 = scmp.lt.s32.totalorder %s21, 1
          %s362 = scalar_select %p361, %s21, 1
          %s363 = smul.addr %s362, 32
          %s364 = smul.addr %s363, 8
          %s365 = scalar_lea.vmem %s0, %s364
        $region60: #{transformer_decoder_block.3} parent=55 // pred_fallthru
          _
        // Predicated region
        $region61: #{transformer_decoder_block.3} parent=55 // pred_check
          %p366 = pneg %p67
        $region62: #{transformer_decoder_block.3} parent=55 // pred_check_branch
          %368 = sbr.rel (%p366) target = $region64
        $region63: #{transformer_decoder_block.3} parent=55 // pred_region
          %p369 = scmp.lt.s32.totalorder %s21, 1
          %s370 = scalar_select %p369, %s21, 1
          %s371 = smul.addr %s370, 32
          %s372 = smul.addr %s371, 4
          %s373 = scalar_lea.vmem %s1, %s372
        $region64: #{transformer_decoder_block.3} parent=55 // pred_fallthru
          _
      $region56: #{transformer_decoder_block.3} parent=5 // pred_fallthru
        _
      %p374 = scmp.le.s32.totalorder 1, %s21
      %p375 = scmp.lt.s32.totalorder %s21, 3
      %p376 = pnand %p374, %p375
      %p377 = pneg %p376
      // Predicated region
      $region65: #{transformer_decoder_block.3} parent=5 // pred_check
        _
      $region66: #{transformer_decoder_block.3} parent=5 // pred_check_branch
        %379 = sbr.rel (%p376) target = $region68
      $region67: #{transformer_decoder_block.3} parent=5 // pred_region
        %s380 = ssub.s32 %s21, 1
        %p381 = scmp.lt.s32.totalorder %s26, 1
        %s382 = scalar_select %p381, %s26, 1
        %s383 = smul.addr %s382, 32
        %s384 = smul.addr %s383, 8
        %s385 = scalar_lea.vmem %s0, %s384
        %p386 = pneg %p47
        %p387 = pneg %p44
        %p388 = scmp.lt.s32.totalorder %s26, 1
        %s389 = scalar_select %p388, %s26, 1
        %s390 = smul.addr %s389, 32
        %s391 = smul.addr %s390, 4
        %s392 = scalar_lea.vmem %s1, %s391
        %p393 = pneg %p73
        %p394 = pneg %p70
        %p395 = pneg %p94
        %p396 = pneg %p91
        %p397 = pneg %p115
        %p398 = pneg %p112
        %p399 = pneg %p136
        %p400 = pneg %p133
        %p401 = pneg %p157
        %p402 = pneg %p154
        %p403 = pneg %p178
        %p404 = pneg %p175
        %p405 = pneg %p199
        %p406 = pneg %p196
        %p407 = pneg %p220
        %p408 = pneg %p217
        %p409 = pneg %p241
        %p410 = pneg %p238
        %p411 = pneg %p262
        %p412 = pneg %p259
        %p413 = pneg %p283
        %p414 = pneg %p280
        %p415 = pneg %p309
        %p416 = pneg %p306
        %s417 = sand.u32 %s296, 1
        %s418 = scalar_lea.sflag [#allocation3], %s417
        %s419 = sand.u32 %s296, 1
        %s420 = smul.addr %s419, 256
        %s421 = scalar_lea.vmem [#allocation2], %s420
        %p422 = scmp.lt.s32.totalorder %s26, 1
        %s423 = scalar_select %p422, %s26, 1
        %s424 = smul.addr %s423, 32
        %s425 = smul.addr %s424, 8
        %s426 = scalar_lea.vmem %s0, %s425
        %p427 = scmp.lt.s32.totalorder %s26, 1
        %s428 = scalar_select %p427, %s26, 1
        %s429 = smul.addr %s428, 32
        %s430 = smul.addr %s429, 4
        %s431 = scalar_lea.vmem %s1, %s430
        %v432 = vld [vmem:[%s426] sm:$0xff]
        %v433 = vld [vmem:[%s426 + $0x8] sm:$0xff]
        %v434 = vld [vmem:[%s426 + $0x10] sm:$0xff]
        %v435 = vld [vmem:[%s426 + $0x18] sm:$0xff]
        %v436 = vld [vmem:[%s426 + $0x20] sm:$0xff]
        %v437 = vld [vmem:[%s426 + $0x28] sm:$0xff]
        %v438 = vld [vmem:[%s426 + $0x30] sm:$0xff]
        %v439 = vld [vmem:[%s426 + $0x38] sm:$0xff]
        %v440 = vld [vmem:[%s426 + $0x40] sm:$0xff]
        %v441 = vld [vmem:[%s426 + $0x48] sm:$0xff]
        %v442 = vld [vmem:[%s426 + $0x50] sm:$0xff]
        %v443 = vld [vmem:[%s426 + $0x58] sm:$0xff]
        %v444 = vld [vmem:[%s426 + $0x60] sm:$0xff]
        %v445 = vld [vmem:[%s426 + $0x68] sm:$0xff]
        %v446 = vld [vmem:[%s426 + $0x70] sm:$0xff]
        %v447 = vld [vmem:[%s426 + $0x78] sm:$0xff]
        %v448 = vld [vmem:[%s426 + $0x80] sm:$0xff]
        %v449 = vld [vmem:[%s426 + $0x88] sm:$0xff]
        %v450 = vld [vmem:[%s426 + $0x90] sm:$0xff]
        %v451 = vld [vmem:[%s426 + $0x98] sm:$0xff]
        %v452 = vld [vmem:[%s426 + $0xa0] sm:$0xff]
        %v453 = vld [vmem:[%s426 + $0xa8] sm:$0xff]
        %v454 = vld [vmem:[%s426 + $0xb0] sm:$0xff]
        %v455 = vld [vmem:[%s426 + $0xb8] sm:$0xff]
        %v456 = vld [vmem:[%s426 + $0xc0] sm:$0xff]
        %v457 = vld [vmem:[%s426 + $0xc8] sm:$0xff]
        %v458 = vld [vmem:[%s426 + $0xd0] sm:$0xff]
        %v459 = vld [vmem:[%s426 + $0xd8] sm:$0xff]
        %v460 = vld [vmem:[%s426 + $0xe0] sm:$0xff]
        %v461 = vld [vmem:[%s426 + $0xe8] sm:$0xff]
        %v462 = vld [vmem:[%s426 + $0xf0] sm:$0xff]
        %v463 = vld [vmem:[%s426 + $0xf8] sm:$0xff]
        %v464 = vld [vmem:[%s431] sm:$0xff]
        %v465 = vld [vmem:[%s431 + $0x8] sm:$0xff]
        %v466 = vld [vmem:[%s431 + $0x10] sm:$0xff]
        %v467 = vld [vmem:[%s431 + $0x18] sm:$0xff]
        %v468 = vld [vmem:[%s431 + $0x20] sm:$0xff]
        %v469 = vld [vmem:[%s431 + $0x28] sm:$0xff]
        %v470 = vld [vmem:[%s431 + $0x30] sm:$0xff]
        %v471 = vld [vmem:[%s431 + $0x38] sm:$0xff]
        %v472 = vld [vmem:[%s431 + $0x40] sm:$0xff]
        %v473 = vld [vmem:[%s431 + $0x48] sm:$0xff]
        %v474 = vld [vmem:[%s431 + $0x50] sm:$0xff]
        %v475 = vld [vmem:[%s431 + $0x58] sm:$0xff]
        %v476 = vld [vmem:[%s431 + $0x60] sm:$0xff]
        %v477 = vld [vmem:[%s431 + $0x68] sm:$0xff]
        %v478 = vld [vmem:[%s431 + $0x70] sm:$0xff]
        %v479 = vld [vmem:[%s431 + $0x78] sm:$0xff]
        %v480 = vld [vmem:[%s2] sm:$0xff]
        %v481 = vld [vmem:[%s2 + $0x8] sm:$0xff]
        %v482 = vld [vmem:[%s2 + $0x10] sm:$0xff]
        %v483 = vld [vmem:[%s2 + $0x18] sm:$0xff]
        %v484 = vld [vmem:[%s2 + $0x20] sm:$0xff]
        %v485 = vld [vmem:[%s2 + $0x28] sm:$0xff]
        %v486 = vld [vmem:[%s2 + $0x30] sm:$0xff]
        %v487 = vld [vmem:[%s2 + $0x38] sm:$0xff]
        %v488 = vld [vmem:[%s2 + $0x40] sm:$0xff]
        %v489 = vld [vmem:[%s2 + $0x48] sm:$0xff]
        %v490 = vld [vmem:[%s2 + $0x50] sm:$0xff]
        %v491 = vld [vmem:[%s2 + $0x58] sm:$0xff]
        %v492 = vld [vmem:[%s2 + $0x60] sm:$0xff]
        %v493 = vld [vmem:[%s2 + $0x68] sm:$0xff]
        %v494 = vld [vmem:[%s2 + $0x70] sm:$0xff]
        %v495 = vld [vmem:[%s2 + $0x78] sm:$0xff]
        %v496 = vld [vmem:[%s2 + $0x80] sm:$0xff]
        %v497 = vld [vmem:[%s2 + $0x88] sm:$0xff]
        %v498 = vld [vmem:[%s2 + $0x90] sm:$0xff]
        %v499 = vld [vmem:[%s2 + $0x98] sm:$0xff]
        %v500 = vld [vmem:[%s2 + $0xa0] sm:$0xff]
        %v501 = vld [vmem:[%s2 + $0xa8] sm:$0xff]
        %v502 = vld [vmem:[%s2 + $0xb0] sm:$0xff]
        %v503 = vld [vmem:[%s2 + $0xb8] sm:$0xff]
        %v504 = vld [vmem:[%s2 + $0xc0] sm:$0xff]
        %v505 = vld [vmem:[%s2 + $0xc8] sm:$0xff]
        %v506 = vld [vmem:[%s2 + $0xd0] sm:$0xff]
        %v507 = vld [vmem:[%s2 + $0xd8] sm:$0xff]
        %v508 = vld [vmem:[%s2 + $0xe0] sm:$0xff]
        %v509 = vld [vmem:[%s2 + $0xe8] sm:$0xff]
        %v510 = vld [vmem:[%s2 + $0xf0] sm:$0xff]
        %v511 = vld [vmem:[%s2 + $0xf8] sm:$0xff]
        %v512 = vld [vmem:[%s3] sm:$0x3]
        %v514 = vlaneseq
        %v515 = vshrl.u32 %v514, 7
        %v516 = vsub.s32 0, %v515
        %v517 = vrot.slane %v512, %v516
        %v518 = vlaneseq
        %v519 = vshrl.u32 %v518, 7
        %v520 = vsub.s32 1, %v519
        %v521 = vrot.slane %v512, %v520
        %v540 = vunpack.c.l.b16 %v464
        %v541 = vunpack.c.h.b16 %v464
        %v542 = vunpack.c.l.b16 %v465
        %v543 = vunpack.c.h.b16 %v465
        %v544 = vunpack.c.l.b16 %v466
        %v545 = vunpack.c.h.b16 %v466
        %v546 = vunpack.c.l.b16 %v467
        %v547 = vunpack.c.h.b16 %v467
        %v548 = vunpack.c.l.b16 %v468
        %v549 = vunpack.c.h.b16 %v468
        %v550 = vunpack.c.l.b16 %v469
        %v551 = vunpack.c.h.b16 %v469
        %v552 = vunpack.c.l.b16 %v470
        %v553 = vunpack.c.h.b16 %v470
        %v554 = vunpack.c.l.b16 %v471
        %v555 = vunpack.c.h.b16 %v471
        %v556 = vunpack.c.l.b16 %v472
        %v557 = vunpack.c.h.b16 %v472
        %v558 = vunpack.c.l.b16 %v473
        %v559 = vunpack.c.h.b16 %v473
        %v560 = vunpack.c.l.b16 %v474
        %v561 = vunpack.c.h.b16 %v474
        %v562 = vunpack.c.l.b16 %v475
        %v563 = vunpack.c.h.b16 %v475
        %v564 = vunpack.c.l.b16 %v476
        %v565 = vunpack.c.h.b16 %v476
        %v566 = vunpack.c.l.b16 %v477
        %v567 = vunpack.c.h.b16 %v477
        %v568 = vunpack.c.l.b16 %v478
        %v569 = vunpack.c.h.b16 %v478
        %v570 = vunpack.c.l.b16 %v479
        %v571 = vunpack.c.h.b16 %v479
        %v572 = vpack.c.b16 %v542, %v540
        %v573 = vpack.c.b16 %v543, %v541
        %v574 = vpack.c.b16 %v546, %v544
        %v575 = vpack.c.b16 %v547, %v545
        %v576 = vpack.c.b16 %v550, %v548
        %v577 = vpack.c.b16 %v551, %v549
        %v578 = vpack.c.b16 %v554, %v552
        %v579 = vpack.c.b16 %v555, %v553
        %v580 = vpack.c.b16 %v558, %v556
        %v581 = vpack.c.b16 %v559, %v557
        %v582 = vpack.c.b16 %v562, %v560
        %v583 = vpack.c.b16 %v563, %v561
        %v584 = vpack.c.b16 %v566, %v564
        %v585 = vpack.c.b16 %v567, %v565
        %v586 = vpack.c.b16 %v570, %v568
        %v587 = vpack.c.b16 %v571, %v569
        %v636 = vunpack.c.l.b16 %v480
        %v637 = vunpack.c.h.b16 %v480
        %v638 = vunpack.c.l.b16 %v481
        %v639 = vunpack.c.h.b16 %v481
        %v640 = vunpack.c.l.b16 %v482
        %v641 = vunpack.c.h.b16 %v482
        %v642 = vunpack.c.l.b16 %v483
        %v643 = vunpack.c.h.b16 %v483
        %v644 = vunpack.c.l.b16 %v484
        %v645 = vunpack.c.h.b16 %v484
        %v646 = vunpack.c.l.b16 %v485
        %v647 = vunpack.c.h.b16 %v485
        %v648 = vunpack.c.l.b16 %v486
        %v649 = vunpack.c.h.b16 %v486
        %v650 = vunpack.c.l.b16 %v487
        %v651 = vunpack.c.h.b16 %v487
        %v652 = vunpack.c.l.b16 %v488
        %v653 = vunpack.c.h.b16 %v488
        %v654 = vunpack.c.l.b16 %v489
        %v655 = vunpack.c.h.b16 %v489
        %v656 = vunpack.c.l.b16 %v490
        %v657 = vunpack.c.h.b16 %v490
        %v658 = vunpack.c.l.b16 %v491
        %v659 = vunpack.c.h.b16 %v491
        %v660 = vunpack.c.l.b16 %v492
        %v661 = vunpack.c.h.b16 %v492
        %v662 = vunpack.c.l.b16 %v493
        %v663 = vunpack.c.h.b16 %v493
        %v664 = vunpack.c.l.b16 %v494
        %v665 = vunpack.c.h.b16 %v494
        %v666 = vunpack.c.l.b16 %v495
        %v667 = vunpack.c.h.b16 %v495
        %v668 = vunpack.c.l.b16 %v496
        %v669 = vunpack.c.h.b16 %v496
        %v670 = vunpack.c.l.b16 %v497
        %v671 = vunpack.c.h.b16 %v497
        %v672 = vunpack.c.l.b16 %v498
        %v673 = vunpack.c.h.b16 %v498
        %v674 = vunpack.c.l.b16 %v499
        %v675 = vunpack.c.h.b16 %v499
        %v676 = vunpack.c.l.b16 %v500
        %v677 = vunpack.c.h.b16 %v500
        %v678 = vunpack.c.l.b16 %v501
        %v679 = vunpack.c.h.b16 %v501
        %v680 = vunpack.c.l.b16 %v502
        %v681 = vunpack.c.h.b16 %v502
        %v682 = vunpack.c.l.b16 %v503
        %v683 = vunpack.c.h.b16 %v503
        %v684 = vunpack.c.l.b16 %v504
        %v685 = vunpack.c.h.b16 %v504
        %v686 = vunpack.c.l.b16 %v505
        %v687 = vunpack.c.h.b16 %v505
        %v688 = vunpack.c.l.b16 %v506
        %v689 = vunpack.c.h.b16 %v506
        %v690 = vunpack.c.l.b16 %v507
        %v691 = vunpack.c.h.b16 %v507
        %v692 = vunpack.c.l.b16 %v508
        %v693 = vunpack.c.h.b16 %v508
        %v694 = vunpack.c.l.b16 %v509
        %v695 = vunpack.c.h.b16 %v509
        %v696 = vunpack.c.l.b16 %v510
        %v697 = vunpack.c.h.b16 %v510
        %v698 = vunpack.c.l.b16 %v511
        %v699 = vunpack.c.h.b16 %v511
        %v700 = vpack.c.b16 %v638, %v636
        %v701 = vpack.c.b16 %v639, %v637
        %v702 = vpack.c.b16 %v642, %v640
        %v703 = vpack.c.b16 %v643, %v641
        %v704 = vpack.c.b16 %v646, %v644
        %v705 = vpack.c.b16 %v647, %v645
        %v706 = vpack.c.b16 %v650, %v648
        %v707 = vpack.c.b16 %v651, %v649
        %v708 = vpack.c.b16 %v654, %v652
        %v709 = vpack.c.b16 %v655, %v653
        %v710 = vpack.c.b16 %v658, %v656
        %v711 = vpack.c.b16 %v659, %v657
        %v712 = vpack.c.b16 %v662, %v660
        %v713 = vpack.c.b16 %v663, %v661
        %v714 = vpack.c.b16 %v666, %v664
        %v715 = vpack.c.b16 %v667, %v665
        %v716 = vpack.c.b16 %v670, %v668
        %v717 = vpack.c.b16 %v671, %v669
        %v718 = vpack.c.b16 %v674, %v672
        %v719 = vpack.c.b16 %v675, %v673
        %v720 = vpack.c.b16 %v678, %v676
        %v721 = vpack.c.b16 %v679, %v677
        %v722 = vpack.c.b16 %v682, %v680
        %v723 = vpack.c.b16 %v683, %v681
        %v724 = vpack.c.b16 %v686, %v684
        %v725 = vpack.c.b16 %v687, %v685
        %v726 = vpack.c.b16 %v690, %v688
        %v727 = vpack.c.b16 %v691, %v689
        %v728 = vpack.c.b16 %v694, %v692
        %v729 = vpack.c.b16 %v695, %v693
        %v730 = vpack.c.b16 %v698, %v696
        %v731 = vpack.c.b16 %v699, %v697
        %764 = vmatprep.subr.bf16.mxu0 %v701
        %765 = vmatpush1.bf16.msra.mxu0 %v700
        %766 = vmatprep.subr.bf16.mxu0 %v703
        %767 = vmatpush1.bf16.msra.mxu0 %v702
        %768 = vmatprep.subr.bf16.mxu0 %v705
        %769 = vmatpush1.bf16.msra.mxu0 %v704
        %770 = vmatprep.subr.bf16.mxu0 %v707
        %771 = vmatpush1.bf16.msra.mxu0 %v706
        %772 = vmatprep.subr.bf16.mxu0 %v709
        %773 = vmatpush1.bf16.msra.mxu0 %v708
        %774 = vmatprep.subr.bf16.mxu0 %v711
        %775 = vmatpush1.bf16.msra.mxu0 %v710
        %776 = vmatprep.subr.bf16.mxu0 %v713
        %777 = vmatpush1.bf16.msra.mxu0 %v712
        %778 = vmatprep.subr.bf16.mxu0 %v715
        %779 = vmatpush1.bf16.msra.mxu0 %v714
        %780 = vmatprep.subr.bf16.mxu0 %v717
        %781 = vmatpush1.bf16.msra.mxu0 %v716
        %782 = vmatprep.subr.bf16.mxu0 %v719
        %783 = vmatpush1.bf16.msra.mxu0 %v718
        %784 = vmatprep.subr.bf16.mxu0 %v721
        %785 = vmatpush1.bf16.msra.mxu0 %v720
        %786 = vmatprep.subr.bf16.mxu0 %v723
        %787 = vmatpush1.bf16.msra.mxu0 %v722
        %788 = vmatprep.subr.bf16.mxu0 %v725
        %789 = vmatpush1.bf16.msra.mxu0 %v724
        %790 = vmatprep.subr.bf16.mxu0 %v727
        %791 = vmatpush1.bf16.msra.mxu0 %v726
        %792 = vmatprep.subr.bf16.mxu0 %v729
        %793 = vmatpush1.bf16.msra.mxu0 %v728
        %794 = vmatprep.subr.bf16.mxu0 %v731
        %795 = vmatpush1.bf16.msra.mxu0 %v730
        %796 = vmatprep.mubr.bf16.mxu0 %v573
        %797 = vmatmul.mubr.bf16.gmra.mrb[0].mxu0 %v572
        %v798 = vpop.f32.mrb[0].mxu0
        %v799 = vadd.f32 %v517, %v798
        %v800 = vpop.f32.mrb[0].mxu0
        %v801 = vadd.f32 %v521, %v800
        %v802 = vpop.f32.mrb[0].mxu0
        %v803 = vadd.f32 %v517, %v802
        %v804 = vpop.f32.mrb[0].mxu0
        %v805 = vadd.f32 %v521, %v804
        %806 = vmatprep.mubr.bf16.mxu0 %v575
        %807 = vmatmul.mubr.bf16.gmra.mrb[0].mxu0 %v574
        %v808 = vpop.f32.mrb[0].mxu0
        %v809 = vadd.f32 %v517, %v808
        %v810 = vpop.f32.mrb[0].mxu0
        %v811 = vadd.f32 %v521, %v810
        %v812 = vpop.f32.mrb[0].mxu0
        %v813 = vadd.f32 %v517, %v812
        %v814 = vpop.f32.mrb[0].mxu0
        %v815 = vadd.f32 %v521, %v814
        %816 = vmatprep.mubr.bf16.mxu0 %v577
        %817 = vmatmul.mubr.bf16.gmra.mrb[0].mxu0 %v576
        %v818 = vpop.f32.mrb[0].mxu0
        %v819 = vadd.f32 %v517, %v818
        %v820 = vpop.f32.mrb[0].mxu0
        %v821 = vadd.f32 %v521, %v820
        %v822 = vpop.f32.mrb[0].mxu0
        %v823 = vadd.f32 %v517, %v822
        %v824 = vpop.f32.mrb[0].mxu0
        %v825 = vadd.f32 %v521, %v824
        %826 = vmatprep.mubr.bf16.mxu0 %v579
        %827 = vmatmul.mubr.bf16.gmra.mrb[0].mxu0 %v578
        %v828 = vpop.f32.mrb[0].mxu0
        %v829 = vadd.f32 %v517, %v828
        %v830 = vpop.f32.mrb[0].mxu0
        %v831 = vadd.f32 %v521, %v830
        %v832 = vpop.f32.mrb[0].mxu0
        %v833 = vadd.f32 %v517, %v832
        %v834 = vpop.f32.mrb[0].mxu0
        %v835 = vadd.f32 %v521, %v834
        %836 = vmatprep.mubr.bf16.mxu0 %v581
        %837 = vmatmul.mubr.bf16.gmra.mrb[0].mxu0 %v580
        %v838 = vpop.f32.mrb[0].mxu0
        %v839 = vadd.f32 %v517, %v838
        %v840 = vpop.f32.mrb[0].mxu0
        %v841 = vadd.f32 %v521, %v840
        %v842 = vpop.f32.mrb[0].mxu0
        %v843 = vadd.f32 %v517, %v842
        %v844 = vpop.f32.mrb[0].mxu0
        %v845 = vadd.f32 %v521, %v844
        %846 = vmatprep.mubr.bf16.mxu0 %v583
        %847 = vmatmul.mubr.bf16.gmra.mrb[0].mxu0 %v582
        %v848 = vpop.f32.mrb[0].mxu0
        %v849 = vadd.f32 %v517, %v848
        %v850 = vpop.f32.mrb[0].mxu0
        %v851 = vadd.f32 %v521, %v850
        %v852 = vpop.f32.mrb[0].mxu0
        %v853 = vadd.f32 %v517, %v852
        %v854 = vpop.f32.mrb[0].mxu0
        %v855 = vadd.f32 %v521, %v854
        %856 = vmatprep.mubr.bf16.mxu0 %v585
        %857 = vmatmul.mubr.bf16.gmra.mrb[0].mxu0 %v584
        %v858 = vpop.f32.mrb[0].mxu0
        %v859 = vadd.f32 %v517, %v858
        %v860 = vpop.f32.mrb[0].mxu0
        %v861 = vadd.f32 %v521, %v860
        %v862 = vpop.f32.mrb[0].mxu0
        %v863 = vadd.f32 %v517, %v862
        %v864 = vpop.f32.mrb[0].mxu0
        %v865 = vadd.f32 %v521, %v864
        %866 = vmatprep.mubr.bf16.mxu0 %v587
        %867 = vmatmul.mubr.bf16.gmra.mrb[0].mxu0 %v586
        %v868 = vpop.f32.mrb[0].mxu0
        %v869 = vadd.f32 %v517, %v868
        %v870 = vpop.f32.mrb[0].mxu0
        %v871 = vadd.f32 %v521, %v870
        %v872 = vpop.f32.mrb[0].mxu0
        %v873 = vadd.f32 %v517, %v872
        %v874 = vpop.f32.mrb[0].mxu0
        %v875 = vadd.f32 %v521, %v874
        %876 = vdwg.mxu0
        %v877 = vadd.f32 %v432, %v799
        %v878 = vadd.f32 %v433, %v801
        %v879 = vadd.f32 %v434, %v803
        %v880 = vadd.f32 %v435, %v805
        %v881 = vadd.f32 %v436, %v809
        %v882 = vadd.f32 %v437, %v811
        %v883 = vadd.f32 %v438, %v813
        %v884 = vadd.f32 %v439, %v815
        %v885 = vadd.f32 %v440, %v819
        %v886 = vadd.f32 %v441, %v821
        %v887 = vadd.f32 %v442, %v823
        %v888 = vadd.f32 %v443, %v825
        %v889 = vadd.f32 %v444, %v829
        %v890 = vadd.f32 %v445, %v831
        %v891 = vadd.f32 %v446, %v833
        %v892 = vadd.f32 %v447, %v835
        %v893 = vadd.f32 %v448, %v839
        %v894 = vadd.f32 %v449, %v841
        %v895 = vadd.f32 %v450, %v843
        %v896 = vadd.f32 %v451, %v845
        %v897 = vadd.f32 %v452, %v849
        %v898 = vadd.f32 %v453, %v851
        %v899 = vadd.f32 %v454, %v853
        %v900 = vadd.f32 %v455, %v855
        %v901 = vadd.f32 %v456, %v859
        %v902 = vadd.f32 %v457, %v861
        %v903 = vadd.f32 %v458, %v863
        %v904 = vadd.f32 %v459, %v865
        %v905 = vadd.f32 %v460, %v869
        %v906 = vadd.f32 %v461, %v871
        %v907 = vadd.f32 %v462, %v873
        %v908 = vadd.f32 %v463, %v875
        %v909 = vld [vmem:[%s4] sm:$0x3]
        %v910 = vld [vmem:[%s5] sm:$0x3]
        %v911 = vadd.f32 %v877, %v878
        %912 = vadd.xlane.f32.xlu0 %v911
        %v913 = vpop.xlane.xlu0 %912
        %v914 = vadd.f32 %v879, %v880
        %915 = vadd.xlane.f32.xlu0 %v914
        %v916 = vpop.xlane.xlu0 %915
        %v917 = vadd.f32 %v881, %v882
        %918 = vadd.xlane.f32.xlu0 %v917
        %v919 = vpop.xlane.xlu0 %918
        %v920 = vadd.f32 %v883, %v884
        %921 = vadd.xlane.f32.xlu0 %v920
        %v922 = vpop.xlane.xlu0 %921
        %v923 = vadd.f32 %v885, %v886
        %924 = vadd.xlane.f32.xlu0 %v923
        %v925 = vpop.xlane.xlu0 %924
        %v926 = vadd.f32 %v887, %v888
        %927 = vadd.xlane.f32.xlu0 %v926
        %v928 = vpop.xlane.xlu0 %927
        %v929 = vadd.f32 %v889, %v890
        %930 = vadd.xlane.f32.xlu0 %v929
        %v931 = vpop.xlane.xlu0 %930
        %v932 = vadd.f32 %v891, %v892
        %933 = vadd.xlane.f32.xlu0 %v932
        %v934 = vpop.xlane.xlu0 %933
        %v935 = vadd.f32 %v893, %v894
        %936 = vadd.xlane.f32.xlu0 %v935
        %v937 = vpop.xlane.xlu0 %936
        %v938 = vadd.f32 %v895, %v896
        %939 = vadd.xlane.f32.xlu0 %v938
        %v940 = vpop.xlane.xlu0 %939
        %v941 = vadd.f32 %v897, %v898
        %942 = vadd.xlane.f32.xlu0 %v941
        %v943 = vpop.xlane.xlu0 %942
        %v944 = vadd.f32 %v899, %v900
        %945 = vadd.xlane.f32.xlu0 %v944
        %v946 = vpop.xlane.xlu0 %945
        %v947 = vadd.f32 %v901, %v902
        %948 = vadd.xlane.f32.xlu0 %v947
        %v949 = vpop.xlane.xlu0 %948
        %v950 = vadd.f32 %v903, %v904
        %951 = vadd.xlane.f32.xlu0 %v950
        %v952 = vpop.xlane.xlu0 %951
        %v953 = vadd.f32 %v905, %v906
        %954 = vadd.xlane.f32.xlu0 %v953
        %v955 = vpop.xlane.xlu0 %954
        %v956 = vadd.f32 %v907, %v908
        %957 = vadd.xlane.f32.xlu0 %v956
        %v958 = vpop.xlane.xlu0 %957
        %v959 = vrcp.pop 256.0
        %v960 = vmul.f32 %v913, %v959
        %v961 = vmul.f32 %v916, %v959
        %v962 = vmul.f32 %v919, %v959
        %v963 = vmul.f32 %v922, %v959
        %v964 = vmul.f32 %v925, %v959
        %v965 = vmul.f32 %v928, %v959
        %v966 = vmul.f32 %v931, %v959
        %v967 = vmul.f32 %v934, %v959
        %v968 = vmul.f32 %v937, %v959
        %v969 = vmul.f32 %v940, %v959
        %v970 = vmul.f32 %v943, %v959
        %v971 = vmul.f32 %v946, %v959
        %v972 = vmul.f32 %v949, %v959
        %v973 = vmul.f32 %v952, %v959
        %v974 = vmul.f32 %v955, %v959
        %v975 = vmul.f32 %v958, %v959
        %v976 = vsub.f32 %v877, %v960
        %v977 = vsub.f32 %v878, %v960
        %v978 = vsub.f32 %v879, %v961
        %v979 = vsub.f32 %v880, %v961
        %v980 = vsub.f32 %v881, %v962
        %v981 = vsub.f32 %v882, %v962
        %v982 = vsub.f32 %v883, %v963
        %v983 = vsub.f32 %v884, %v963
        %v984 = vsub.f32 %v885, %v964
        %v985 = vsub.f32 %v886, %v964
        %v986 = vsub.f32 %v887, %v965
        %v987 = vsub.f32 %v888, %v965
        %v988 = vsub.f32 %v889, %v966
        %v989 = vsub.f32 %v890, %v966
        %v990 = vsub.f32 %v891, %v967
        %v991 = vsub.f32 %v892, %v967
        %v992 = vsub.f32 %v893, %v968
        %v993 = vsub.f32 %v894, %v968
        %v994 = vsub.f32 %v895, %v969
        %v995 = vsub.f32 %v896, %v969
        %v996 = vsub.f32 %v897, %v970
        %v997 = vsub.f32 %v898, %v970
        %v998 = vsub.f32 %v899, %v971
        %v999 = vsub.f32 %v900, %v971
        %v1000 = vsub.f32 %v901, %v972
        %v1001 = vsub.f32 %v902, %v972
        %v1002 = vsub.f32 %v903, %v973
        %v1003 = vsub.f32 %v904, %v973
        %v1004 = vsub.f32 %v905, %v974
        %v1005 = vsub.f32 %v906, %v974
        %v1006 = vsub.f32 %v907, %v975
        %v1007 = vsub.f32 %v908, %v975
        %v1008 = vmul.f32 %v976, %v976
        %v1009 = vmul.f32 %v977, %v977
        %v1010 = vmul.f32 %v978, %v978
        %v1011 = vmul.f32 %v979, %v979
        %v1012 = vmul.f32 %v980, %v980
        %v1013 = vmul.f32 %v981, %v981
        %v1014 = vmul.f32 %v982, %v982
        %v1015 = vmul.f32 %v983, %v983
        %v1016 = vmul.f32 %v984, %v984
        %v1017 = vmul.f32 %v985, %v985
        %v1018 = vmul.f32 %v986, %v986
        %v1019 = vmul.f32 %v987, %v987
        %v1020 = vmul.f32 %v988, %v988
        %v1021 = vmul.f32 %v989, %v989
        %v1022 = vmul.f32 %v990, %v990
        %v1023 = vmul.f32 %v991, %v991
        %v1024 = vmul.f32 %v992, %v992
        %v1025 = vmul.f32 %v993, %v993
        %v1026 = vmul.f32 %v994, %v994
        %v1027 = vmul.f32 %v995, %v995
        %v1028 = vmul.f32 %v996, %v996
        %v1029 = vmul.f32 %v997, %v997
        %v1030 = vmul.f32 %v998, %v998
        %v1031 = vmul.f32 %v999, %v999
        %v1032 = vmul.f32 %v1000, %v1000
        %v1033 = vmul.f32 %v1001, %v1001
        %v1034 = vmul.f32 %v1002, %v1002
        %v1035 = vmul.f32 %v1003, %v1003
        %v1036 = vmul.f32 %v1004, %v1004
        %v1037 = vmul.f32 %v1005, %v1005
        %v1038 = vmul.f32 %v1006, %v1006
        %v1039 = vmul.f32 %v1007, %v1007
        %v1040 = vadd.f32 %v1008, %v1009
        %1041 = vadd.xlane.f32.xlu0 %v1040
        %v1042 = vpop.xlane.xlu0 %1041
        %v1043 = vadd.f32 %v1010, %v1011
        %1044 = vadd.xlane.f32.xlu0 %v1043
        %v1045 = vpop.xlane.xlu0 %1044
        %v1046 = vadd.f32 %v1012, %v1013
        %1047 = vadd.xlane.f32.xlu0 %v1046
        %v1048 = vpop.xlane.xlu0 %1047
        %v1049 = vadd.f32 %v1014, %v1015
        %1050 = vadd.xlane.f32.xlu0 %v1049
        %v1051 = vpop.xlane.xlu0 %1050
        %v1052 = vadd.f32 %v1016, %v1017
        %1053 = vadd.xlane.f32.xlu0 %v1052
        %v1054 = vpop.xlane.xlu0 %1053
        %v1055 = vadd.f32 %v1018, %v1019
        %1056 = vadd.xlane.f32.xlu0 %v1055
        %v1057 = vpop.xlane.xlu0 %1056
        %v1058 = vadd.f32 %v1020, %v1021
        %1059 = vadd.xlane.f32.xlu0 %v1058
        %v1060 = vpop.xlane.xlu0 %1059
        %v1061 = vadd.f32 %v1022, %v1023
        %1062 = vadd.xlane.f32.xlu0 %v1061
        %v1063 = vpop.xlane.xlu0 %1062
        %v1064 = vadd.f32 %v1024, %v1025
        %1065 = vadd.xlane.f32.xlu0 %v1064
        %v1066 = vpop.xlane.xlu0 %1065
        %v1067 = vadd.f32 %v1026, %v1027
        %1068 = vadd.xlane.f32.xlu0 %v1067
        %v1069 = vpop.xlane.xlu0 %1068
        %v1070 = vadd.f32 %v1028, %v1029
        %1071 = vadd.xlane.f32.xlu0 %v1070
        %v1072 = vpop.xlane.xlu0 %1071
        %v1073 = vadd.f32 %v1030, %v1031
        %1074 = vadd.xlane.f32.xlu0 %v1073
        %v1075 = vpop.xlane.xlu0 %1074
        %v1076 = vadd.f32 %v1032, %v1033
        %1077 = vadd.xlane.f32.xlu0 %v1076
        %v1078 = vpop.xlane.xlu0 %1077
        %v1079 = vadd.f32 %v1034, %v1035
        %1080 = vadd.xlane.f32.xlu0 %v1079
        %v1081 = vpop.xlane.xlu0 %1080
        %v1082 = vadd.f32 %v1036, %v1037
        %1083 = vadd.xlane.f32.xlu0 %v1082
        %v1084 = vpop.xlane.xlu0 %1083
        %v1085 = vadd.f32 %v1038, %v1039
        %1086 = vadd.xlane.f32.xlu0 %v1085
        %v1087 = vpop.xlane.xlu0 %1086
        %v1088 = vmul.f32 %v1042, %v959
        %v1089 = vmul.f32 %v1045, %v959
        %v1090 = vmul.f32 %v1048, %v959
        %v1091 = vmul.f32 %v1051, %v959
        %v1092 = vmul.f32 %v1054, %v959
        %v1093 = vmul.f32 %v1057, %v959
        %v1094 = vmul.f32 %v1060, %v959
        %v1095 = vmul.f32 %v1063, %v959
        %v1096 = vmul.f32 %v1066, %v959
        %v1097 = vmul.f32 %v1069, %v959
        %v1098 = vmul.f32 %v1072, %v959
        %v1099 = vmul.f32 %v1075, %v959
        %v1100 = vmul.f32 %v1078, %v959
        %v1101 = vmul.f32 %v1081, %v959
        %v1102 = vmul.f32 %v1084, %v959
        %v1103 = vmul.f32 %v1087, %v959
        %v1104 = vadd.f32 %v1088, 1e-05
        %v1105 = vadd.f32 %v1089, 1e-05
        %v1106 = vadd.f32 %v1090, 1e-05
        %v1107 = vadd.f32 %v1091, 1e-05
        %v1108 = vadd.f32 %v1092, 1e-05
        %v1109 = vadd.f32 %v1093, 1e-05
        %v1110 = vadd.f32 %v1094, 1e-05
        %v1111 = vadd.f32 %v1095, 1e-05
        %v1112 = vadd.f32 %v1096, 1e-05
        %v1113 = vadd.f32 %v1097, 1e-05
        %v1114 = vadd.f32 %v1098, 1e-05
        %v1115 = vadd.f32 %v1099, 1e-05
        %v1116 = vadd.f32 %v1100, 1e-05
        %v1117 = vadd.f32 %v1101, 1e-05
        %v1118 = vadd.f32 %v1102, 1e-05
        %v1119 = vadd.f32 %v1103, 1e-05
        %v1120 = vrsqrt.pop %v1104
        %v1121 = vrsqrt.pop %v1105
        %v1122 = vrsqrt.pop %v1106
        %v1123 = vrsqrt.pop %v1107
        %v1124 = vrsqrt.pop %v1108
        %v1125 = vrsqrt.pop %v1109
        %v1126 = vrsqrt.pop %v1110
        %v1127 = vrsqrt.pop %v1111
        %v1128 = vrsqrt.pop %v1112
        %v1129 = vrsqrt.pop %v1113
        %v1130 = vrsqrt.pop %v1114
        %v1131 = vrsqrt.pop %v1115
        %v1132 = vrsqrt.pop %v1116
        %v1133 = vrsqrt.pop %v1117
        %v1134 = vrsqrt.pop %v1118
        %v1135 = vrsqrt.pop %v1119
        %v1136 = vmul.f32 %v976, %v1120
        %v1137 = vmul.f32 %v977, %v1120
        %v1138 = vmul.f32 %v978, %v1121
        %v1139 = vmul.f32 %v979, %v1121
        %v1140 = vmul.f32 %v980, %v1122
        %v1141 = vmul.f32 %v981, %v1122
        %v1142 = vmul.f32 %v982, %v1123
        %v1143 = vmul.f32 %v983, %v1123
        %v1144 = vmul.f32 %v984, %v1124
        %v1145 = vmul.f32 %v985, %v1124
        %v1146 = vmul.f32 %v986, %v1125
        %v1147 = vmul.f32 %v987, %v1125
        %v1148 = vmul.f32 %v988, %v1126
        %v1149 = vmul.f32 %v989, %v1126
        %v1150 = vmul.f32 %v990, %v1127
        %v1151 = vmul.f32 %v991, %v1127
        %v1152 = vmul.f32 %v992, %v1128
        %v1153 = vmul.f32 %v993, %v1128
        %v1154 = vmul.f32 %v994, %v1129
        %v1155 = vmul.f32 %v995, %v1129
        %v1156 = vmul.f32 %v996, %v1130
        %v1157 = vmul.f32 %v997, %v1130
        %v1158 = vmul.f32 %v998, %v1131
        %v1159 = vmul.f32 %v999, %v1131
        %v1160 = vmul.f32 %v1000, %v1132
        %v1161 = vmul.f32 %v1001, %v1132
        %v1162 = vmul.f32 %v1002, %v1133
        %v1163 = vmul.f32 %v1003, %v1133
        %v1164 = vmul.f32 %v1004, %v1134
        %v1165 = vmul.f32 %v1005, %v1134
        %v1166 = vmul.f32 %v1006, %v1135
        %v1167 = vmul.f32 %v1007, %v1135
        %v1169 = vlaneseq
        %v1170 = vshrl.u32 %v1169, 7
        %v1171 = vsub.s32 0, %v1170
        %v1172 = vrot.slane %v909, %v1171
        %v1173 = vlaneseq
        %v1174 = vshrl.u32 %v1173, 7
        %v1175 = vsub.s32 1, %v1174
        %v1176 = vrot.slane %v909, %v1175
        %v1179 = vmul.f32 %v1136, %v1172
        %v1180 = vmul.f32 %v1137, %v1176
        %v1181 = vmul.f32 %v1138, %v1172
        %v1182 = vmul.f32 %v1139, %v1176
        %v1183 = vmul.f32 %v1140, %v1172
        %v1184 = vmul.f32 %v1141, %v1176
        %v1185 = vmul.f32 %v1142, %v1172
        %v1186 = vmul.f32 %v1143, %v1176
        %v1187 = vmul.f32 %v1144, %v1172
        %v1188 = vmul.f32 %v1145, %v1176
        %v1189 = vmul.f32 %v1146, %v1172
        %v1190 = vmul.f32 %v1147, %v1176
        %v1191 = vmul.f32 %v1148, %v1172
        %v1192 = vmul.f32 %v1149, %v1176
        %v1193 = vmul.f32 %v1150, %v1172
        %v1194 = vmul.f32 %v1151, %v1176
        %v1195 = vmul.f32 %v1152, %v1172
        %v1196 = vmul.f32 %v1153, %v1176
        %v1197 = vmul.f32 %v1154, %v1172
        %v1198 = vmul.f32 %v1155, %v1176
        %v1199 = vmul.f32 %v1156, %v1172
        %v1200 = vmul.f32 %v1157, %v1176
        %v1201 = vmul.f32 %v1158, %v1172
        %v1202 = vmul.f32 %v1159, %v1176
        %v1203 = vmul.f32 %v1160, %v1172
        %v1204 = vmul.f32 %v1161, %v1176
        %v1205 = vmul.f32 %v1162, %v1172
        %v1206 = vmul.f32 %v1163, %v1176
        %v1207 = vmul.f32 %v1164, %v1172
        %v1208 = vmul.f32 %v1165, %v1176
        %v1209 = vmul.f32 %v1166, %v1172
        %v1210 = vmul.f32 %v1167, %v1176
        %v1212 = vlaneseq
        %v1213 = vshrl.u32 %v1212, 7
        %v1214 = vsub.s32 0, %v1213
        %v1215 = vrot.slane %v910, %v1214
        %v1216 = vlaneseq
        %v1217 = vshrl.u32 %v1216, 7
        %v1218 = vsub.s32 1, %v1217
        %v1219 = vrot.slane %v910, %v1218
        %v1222 = vadd.f32 %v1179, %v1215
        %v1223 = vadd.f32 %v1180, %v1219
        %v1224 = vadd.f32 %v1181, %v1215
        %v1225 = vadd.f32 %v1182, %v1219
        %v1226 = vadd.f32 %v1183, %v1215
        %v1227 = vadd.f32 %v1184, %v1219
        %v1228 = vadd.f32 %v1185, %v1215
        %v1229 = vadd.f32 %v1186, %v1219
        %v1230 = vadd.f32 %v1187, %v1215
        %v1231 = vadd.f32 %v1188, %v1219
        %v1232 = vadd.f32 %v1189, %v1215
        %v1233 = vadd.f32 %v1190, %v1219
        %v1234 = vadd.f32 %v1191, %v1215
        %v1235 = vadd.f32 %v1192, %v1219
        %v1236 = vadd.f32 %v1193, %v1215
        %v1237 = vadd.f32 %v1194, %v1219
        %v1238 = vadd.f32 %v1195, %v1215
        %v1239 = vadd.f32 %v1196, %v1219
        %v1240 = vadd.f32 %v1197, %v1215
        %v1241 = vadd.f32 %v1198, %v1219
        %v1242 = vadd.f32 %v1199, %v1215
        %v1243 = vadd.f32 %v1200, %v1219
        %v1244 = vadd.f32 %v1201, %v1215
        %v1245 = vadd.f32 %v1202, %v1219
        %v1246 = vadd.f32 %v1203, %v1215
        %v1247 = vadd.f32 %v1204, %v1219
        %v1248 = vadd.f32 %v1205, %v1215
        %v1249 = vadd.f32 %v1206, %v1219
        %v1250 = vadd.f32 %v1207, %v1215
        %v1251 = vadd.f32 %v1208, %v1219
        %v1252 = vadd.f32 %v1209, %v1215
        %v1253 = vadd.f32 %v1210, %v1219
        %v1254 = vpack.c.bf16 %v1224, %v1222
        %v1255 = vpack.c.bf16 %v1225, %v1223
        %v1256 = vpack.c.bf16 %v1228, %v1226
        %v1257 = vpack.c.bf16 %v1229, %v1227
        %v1258 = vpack.c.bf16 %v1232, %v1230
        %v1259 = vpack.c.bf16 %v1233, %v1231
        %v1260 = vpack.c.bf16 %v1236, %v1234
        %v1261 = vpack.c.bf16 %v1237, %v1235
        %v1262 = vpack.c.bf16 %v1240, %v1238
        %v1263 = vpack.c.bf16 %v1241, %v1239
        %v1264 = vpack.c.bf16 %v1244, %v1242
        %v1265 = vpack.c.bf16 %v1245, %v1243
        %v1266 = vpack.c.bf16 %v1248, %v1246
        %v1267 = vpack.c.bf16 %v1249, %v1247
        %v1268 = vpack.c.bf16 %v1252, %v1250
        %v1269 = vpack.c.bf16 %v1253, %v1251
        %v1270 = vld [vmem:[%s6] sm:$0xff]
        %v1271 = vld [vmem:[%s6 + $0x8] sm:$0xff]
        %v1272 = vld [vmem:[%s6 + $0x10] sm:$0xff]
        %v1273 = vld [vmem:[%s6 + $0x18] sm:$0xff]
        %v1274 = vld [vmem:[%s6 + $0x20] sm:$0xff]
        %v1275 = vld [vmem:[%s6 + $0x28] sm:$0xff]
        %v1276 = vld [vmem:[%s6 + $0x30] sm:$0xff]
        %v1277 = vld [vmem:[%s6 + $0x38] sm:$0xff]
        %v1278 = vld [vmem:[%s6 + $0x40] sm:$0xff]
        %v1279 = vld [vmem:[%s6 + $0x48] sm:$0xff]
        %v1280 = vld [vmem:[%s6 + $0x50] sm:$0xff]
        %v1281 = vld [vmem:[%s6 + $0x58] sm:$0xff]
        %v1282 = vld [vmem:[%s6 + $0x60] sm:$0xff]
        %v1283 = vld [vmem:[%s6 + $0x68] sm:$0xff]
        %v1284 = vld [vmem:[%s6 + $0x70] sm:$0xff]
        %v1285 = vld [vmem:[%s6 + $0x78] sm:$0xff]
        %v1286 = vld [vmem:[%s6 + $0x80] sm:$0xff]
        %v1287 = vld [vmem:[%s6 + $0x88] sm:$0xff]
        %v1288 = vld [vmem:[%s6 + $0x90] sm:$0xff]
        %v1289 = vld [vmem:[%s6 + $0x98] sm:$0xff]
        %v1290 = vld [vmem:[%s6 + $0xa0] sm:$0xff]
        %v1291 = vld [vmem:[%s6 + $0xa8] sm:$0xff]
        %v1292 = vld [vmem:[%s6 + $0xb0] sm:$0xff]
        %v1293 = vld [vmem:[%s6 + $0xb8] sm:$0xff]
        %v1294 = vld [vmem:[%s6 + $0xc0] sm:$0xff]
        %v1295 = vld [vmem:[%s6 + $0xc8] sm:$0xff]
        %v1296 = vld [vmem:[%s6 + $0xd0] sm:$0xff]
        %v1297 = vld [vmem:[%s6 + $0xd8] sm:$0xff]
        %v1298 = vld [vmem:[%s6 + $0xe0] sm:$0xff]
        %v1299 = vld [vmem:[%s6 + $0xe8] sm:$0xff]
        %v1300 = vld [vmem:[%s6 + $0xf0] sm:$0xff]
        %v1301 = vld [vmem:[%s6 + $0xf8] sm:$0xff]
        %v1302 = vld [vmem:[%s6 + $0x100] sm:$0xff]
        %v1303 = vld [vmem:[%s6 + $0x108] sm:$0xff]
        %v1304 = vld [vmem:[%s6 + $0x110] sm:$0xff]
        %v1305 = vld [vmem:[%s6 + $0x118] sm:$0xff]
        %v1306 = vld [vmem:[%s6 + $0x120] sm:$0xff]
        %v1307 = vld [vmem:[%s6 + $0x128] sm:$0xff]
        %v1308 = vld [vmem:[%s6 + $0x130] sm:$0xff]
        %v1309 = vld [vmem:[%s6 + $0x138] sm:$0xff]
        %v1310 = vld [vmem:[%s6 + $0x140] sm:$0xff]
        %v1311 = vld [vmem:[%s6 + $0x148] sm:$0xff]
        %v1312 = vld [vmem:[%s6 + $0x150] sm:$0xff]
        %v1313 = vld [vmem:[%s6 + $0x158] sm:$0xff]
        %v1314 = vld [vmem:[%s6 + $0x160] sm:$0xff]
        %v1315 = vld [vmem:[%s6 + $0x168] sm:$0xff]
        %v1316 = vld [vmem:[%s6 + $0x170] sm:$0xff]
        %v1317 = vld [vmem:[%s6 + $0x178] sm:$0xff]
        %v1318 = vld [vmem:[%s6 + $0x180] sm:$0xff]
        %v1319 = vld [vmem:[%s6 + $0x188] sm:$0xff]
        %v1320 = vld [vmem:[%s6 + $0x190] sm:$0xff]
        %v1321 = vld [vmem:[%s6 + $0x198] sm:$0xff]
        %v1322 = vld [vmem:[%s6 + $0x1a0] sm:$0xff]
        %v1323 = vld [vmem:[%s6 + $0x1a8] sm:$0xff]
        %v1324 = vld [vmem:[%s6 + $0x1b0] sm:$0xff]
        %v1325 = vld [vmem:[%s6 + $0x1b8] sm:$0xff]
        %v1326 = vld [vmem:[%s6 + $0x1c0] sm:$0xff]
        %v1327 = vld [vmem:[%s6 + $0x1c8] sm:$0xff]
        %v1328 = vld [vmem:[%s6 + $0x1d0] sm:$0xff]
        %v1329 = vld [vmem:[%s6 + $0x1d8] sm:$0xff]
        %v1330 = vld [vmem:[%s6 + $0x1e0] sm:$0xff]
        %v1331 = vld [vmem:[%s6 + $0x1e8] sm:$0xff]
        %v1332 = vld [vmem:[%s6 + $0x1f0] sm:$0xff]
        %v1333 = vld [vmem:[%s6 + $0x1f8] sm:$0xff]
        %v1334 = vld [vmem:[%s6 + $0x200] sm:$0xff]
        %v1335 = vld [vmem:[%s6 + $0x208] sm:$0xff]
        %v1336 = vld [vmem:[%s6 + $0x210] sm:$0xff]
        %v1337 = vld [vmem:[%s6 + $0x218] sm:$0xff]
        %v1338 = vld [vmem:[%s6 + $0x220] sm:$0xff]
        %v1339 = vld [vmem:[%s6 + $0x228] sm:$0xff]
        %v1340 = vld [vmem:[%s6 + $0x230] sm:$0xff]
        %v1341 = vld [vmem:[%s6 + $0x238] sm:$0xff]
        %v1342 = vld [vmem:[%s6 + $0x240] sm:$0xff]
        %v1343 = vld [vmem:[%s6 + $0x248] sm:$0xff]
        %v1344 = vld [vmem:[%s6 + $0x250] sm:$0xff]
        %v1345 = vld [vmem:[%s6 + $0x258] sm:$0xff]
        %v1346 = vld [vmem:[%s6 + $0x260] sm:$0xff]
        %v1347 = vld [vmem:[%s6 + $0x268] sm:$0xff]
        %v1348 = vld [vmem:[%s6 + $0x270] sm:$0xff]
        %v1349 = vld [vmem:[%s6 + $0x278] sm:$0xff]
        %v1350 = vld [vmem:[%s6 + $0x280] sm:$0xff]
        %v1351 = vld [vmem:[%s6 + $0x288] sm:$0xff]
        %v1352 = vld [vmem:[%s6 + $0x290] sm:$0xff]
        %v1353 = vld [vmem:[%s6 + $0x298] sm:$0xff]
        %v1354 = vld [vmem:[%s6 + $0x2a0] sm:$0xff]
        %v1355 = vld [vmem:[%s6 + $0x2a8] sm:$0xff]
        %v1356 = vld [vmem:[%s6 + $0x2b0] sm:$0xff]
        %v1357 = vld [vmem:[%s6 + $0x2b8] sm:$0xff]
        %v1358 = vld [vmem:[%s6 + $0x2c0] sm:$0xff]
        %v1359 = vld [vmem:[%s6 + $0x2c8] sm:$0xff]
        %v1360 = vld [vmem:[%s6 + $0x2d0] sm:$0xff]
        %v1361 = vld [vmem:[%s6 + $0x2d8] sm:$0xff]
        %v1362 = vld [vmem:[%s6 + $0x2e0] sm:$0xff]
        %v1363 = vld [vmem:[%s6 + $0x2e8] sm:$0xff]
        %v1364 = vld [vmem:[%s6 + $0x2f0] sm:$0xff]
        %v1365 = vld [vmem:[%s6 + $0x2f8] sm:$0xff]
        %v1366 = vld [vmem:[%s6 + $0x300] sm:$0xff]
        %v1367 = vld [vmem:[%s6 + $0x308] sm:$0xff]
        %v1368 = vld [vmem:[%s6 + $0x310] sm:$0xff]
        %v1369 = vld [vmem:[%s6 + $0x318] sm:$0xff]
        %v1370 = vld [vmem:[%s6 + $0x320] sm:$0xff]
        %v1371 = vld [vmem:[%s6 + $0x328] sm:$0xff]
        %v1372 = vld [vmem:[%s6 + $0x330] sm:$0xff]
        %v1373 = vld [vmem:[%s6 + $0x338] sm:$0xff]
        %v1374 = vld [vmem:[%s6 + $0x340] sm:$0xff]
        %v1375 = vld [vmem:[%s6 + $0x348] sm:$0xff]
        %v1376 = vld [vmem:[%s6 + $0x350] sm:$0xff]
        %v1377 = vld [vmem:[%s6 + $0x358] sm:$0xff]
        %v1378 = vld [vmem:[%s6 + $0x360] sm:$0xff]
        %v1379 = vld [vmem:[%s6 + $0x368] sm:$0xff]
        %v1380 = vld [vmem:[%s6 + $0x370] sm:$0xff]
        %v1381 = vld [vmem:[%s6 + $0x378] sm:$0xff]
        %v1382 = vld [vmem:[%s6 + $0x380] sm:$0xff]
        %v1383 = vld [vmem:[%s6 + $0x388] sm:$0xff]
        %v1384 = vld [vmem:[%s6 + $0x390] sm:$0xff]
        %v1385 = vld [vmem:[%s6 + $0x398] sm:$0xff]
        %v1386 = vld [vmem:[%s6 + $0x3a0] sm:$0xff]
        %v1387 = vld [vmem:[%s6 + $0x3a8] sm:$0xff]
        %v1388 = vld [vmem:[%s6 + $0x3b0] sm:$0xff]
        %v1389 = vld [vmem:[%s6 + $0x3b8] sm:$0xff]
        %v1390 = vld [vmem:[%s6 + $0x3c0] sm:$0xff]
        %v1391 = vld [vmem:[%s6 + $0x3c8] sm:$0xff]
        %v1392 = vld [vmem:[%s6 + $0x3d0] sm:$0xff]
        %v1393 = vld [vmem:[%s6 + $0x3d8] sm:$0xff]
        %v1394 = vld [vmem:[%s6 + $0x3e0] sm:$0xff]
        %v1395 = vld [vmem:[%s6 + $0x3e8] sm:$0xff]
        %v1396 = vld [vmem:[%s6 + $0x3f0] sm:$0xff]
        %v1397 = vld [vmem:[%s6 + $0x3f8] sm:$0xff]
        %v1398 = vld [vmem:[%s7] sm:$0xff]
        %v1400 = vlaneseq
        %v1401 = vshrl.u32 %v1400, 7
        %v1402 = vsub.s32 0, %v1401
        %v1403 = vrot.slane %v1398, %v1402
        %v1404 = vlaneseq
        %v1405 = vshrl.u32 %v1404, 7
        %v1406 = vsub.s32 1, %v1405
        %v1407 = vrot.slane %v1398, %v1406
        %v1408 = vlaneseq
        %v1409 = vshrl.u32 %v1408, 7
        %v1410 = vsub.s32 2, %v1409
        %v1411 = vrot.slane %v1398, %v1410
        %v1412 = vlaneseq
        %v1413 = vshrl.u32 %v1412, 7
        %v1414 = vsub.s32 3, %v1413
        %v1415 = vrot.slane %v1398, %v1414
        %v1416 = vlaneseq
        %v1417 = vshrl.u32 %v1416, 7
        %v1418 = vsub.s32 4, %v1417
        %v1419 = vrot.slane %v1398, %v1418
        %v1420 = vlaneseq
        %v1421 = vshrl.u32 %v1420, 7
        %v1422 = vsub.s32 5, %v1421
        %v1423 = vrot.slane %v1398, %v1422
        %v1424 = vlaneseq
        %v1425 = vshrl.u32 %v1424, 7
        %v1426 = vsub.s32 6, %v1425
        %v1427 = vrot.slane %v1398, %v1426
        %v1428 = vlaneseq
        %v1429 = vshrl.u32 %v1428, 7
        %v1430 = vsub.s32 7, %v1429
        %v1431 = vrot.slane %v1398, %v1430
        %v1568 = vunpack.c.l.b16 %v1270
        %v1569 = vunpack.c.h.b16 %v1270
        %v1570 = vunpack.c.l.b16 %v1271
        %v1571 = vunpack.c.h.b16 %v1271
        %v1572 = vunpack.c.l.b16 %v1272
        %v1573 = vunpack.c.h.b16 %v1272
        %v1574 = vunpack.c.l.b16 %v1273
        %v1575 = vunpack.c.h.b16 %v1273
        %v1576 = vunpack.c.l.b16 %v1274
        %v1577 = vunpack.c.h.b16 %v1274
        %v1578 = vunpack.c.l.b16 %v1275
        %v1579 = vunpack.c.h.b16 %v1275
        %v1580 = vunpack.c.l.b16 %v1276
        %v1581 = vunpack.c.h.b16 %v1276
        %v1582 = vunpack.c.l.b16 %v1277
        %v1583 = vunpack.c.h.b16 %v1277
        %v1584 = vunpack.c.l.b16 %v1278
        %v1585 = vunpack.c.h.b16 %v1278
        %v1586 = vunpack.c.l.b16 %v1279
        %v1587 = vunpack.c.h.b16 %v1279
        %v1588 = vunpack.c.l.b16 %v1280
        %v1589 = vunpack.c.h.b16 %v1280
        %v1590 = vunpack.c.l.b16 %v1281
        %v1591 = vunpack.c.h.b16 %v1281
        %v1592 = vunpack.c.l.b16 %v1282
        %v1593 = vunpack.c.h.b16 %v1282
        %v1594 = vunpack.c.l.b16 %v1283
        %v1595 = vunpack.c.h.b16 %v1283
        %v1596 = vunpack.c.l.b16 %v1284
        %v1597 = vunpack.c.h.b16 %v1284
        %v1598 = vunpack.c.l.b16 %v1285
        %v1599 = vunpack.c.h.b16 %v1285
        %v1600 = vunpack.c.l.b16 %v1286
        %v1601 = vunpack.c.h.b16 %v1286
        %v1602 = vunpack.c.l.b16 %v1287
        %v1603 = vunpack.c.h.b16 %v1287
        %v1604 = vunpack.c.l.b16 %v1288
        %v1605 = vunpack.c.h.b16 %v1288
        %v1606 = vunpack.c.l.b16 %v1289
        %v1607 = vunpack.c.h.b16 %v1289
        %v1608 = vunpack.c.l.b16 %v1290
        %v1609 = vunpack.c.h.b16 %v1290
        %v1610 = vunpack.c.l.b16 %v1291
        %v1611 = vunpack.c.h.b16 %v1291
        %v1612 = vunpack.c.l.b16 %v1292
        %v1613 = vunpack.c.h.b16 %v1292
        %v1614 = vunpack.c.l.b16 %v1293
        %v1615 = vunpack.c.h.b16 %v1293
        %v1616 = vunpack.c.l.b16 %v1294
        %v1617 = vunpack.c.h.b16 %v1294
        %v1618 = vunpack.c.l.b16 %v1295
        %v1619 = vunpack.c.h.b16 %v1295
        %v1620 = vunpack.c.l.b16 %v1296
        %v1621 = vunpack.c.h.b16 %v1296
        %v1622 = vunpack.c.l.b16 %v1297
        %v1623 = vunpack.c.h.b16 %v1297
        %v1624 = vunpack.c.l.b16 %v1298
        %v1625 = vunpack.c.h.b16 %v1298
        %v1626 = vunpack.c.l.b16 %v1299
        %v1627 = vunpack.c.h.b16 %v1299
        %v1628 = vunpack.c.l.b16 %v1300
        %v1629 = vunpack.c.h.b16 %v1300
        %v1630 = vunpack.c.l.b16 %v1301
        %v1631 = vunpack.c.h.b16 %v1301
        %v1632 = vunpack.c.l.b16 %v1302
        %v1633 = vunpack.c.h.b16 %v1302
        %v1634 = vunpack.c.l.b16 %v1303
        %v1635 = vunpack.c.h.b16 %v1303
        %v1636 = vunpack.c.l.b16 %v1304
        %v1637 = vunpack.c.h.b16 %v1304
        %v1638 = vunpack.c.l.b16 %v1305
        %v1639 = vunpack.c.h.b16 %v1305
        %v1640 = vunpack.c.l.b16 %v1306
        %v1641 = vunpack.c.h.b16 %v1306
        %v1642 = vunpack.c.l.b16 %v1307
        %v1643 = vunpack.c.h.b16 %v1307
        %v1644 = vunpack.c.l.b16 %v1308
        %v1645 = vunpack.c.h.b16 %v1308
        %v1646 = vunpack.c.l.b16 %v1309
        %v1647 = vunpack.c.h.b16 %v1309
        %v1648 = vunpack.c.l.b16 %v1310
        %v1649 = vunpack.c.h.b16 %v1310
        %v1650 = vunpack.c.l.b16 %v1311
        %v1651 = vunpack.c.h.b16 %v1311
        %v1652 = vunpack.c.l.b16 %v1312
        %v1653 = vunpack.c.h.b16 %v1312
        %v1654 = vunpack.c.l.b16 %v1313
        %v1655 = vunpack.c.h.b16 %v1313
        %v1656 = vunpack.c.l.b16 %v1314
        %v1657 = vunpack.c.h.b16 %v1314
        %v1658 = vunpack.c.l.b16 %v1315
        %v1659 = vunpack.c.h.b16 %v1315
        %v1660 = vunpack.c.l.b16 %v1316
        %v1661 = vunpack.c.h.b16 %v1316
        %v1662 = vunpack.c.l.b16 %v1317
        %v1663 = vunpack.c.h.b16 %v1317
        %v1664 = vunpack.c.l.b16 %v1318
        %v1665 = vunpack.c.h.b16 %v1318
        %v1666 = vunpack.c.l.b16 %v1319
        %v1667 = vunpack.c.h.b16 %v1319
        %v1668 = vunpack.c.l.b16 %v1320
        %v1669 = vunpack.c.h.b16 %v1320
        %v1670 = vunpack.c.l.b16 %v1321
        %v1671 = vunpack.c.h.b16 %v1321
        %v1672 = vunpack.c.l.b16 %v1322
        %v1673 = vunpack.c.h.b16 %v1322
        %v1674 = vunpack.c.l.b16 %v1323
        %v1675 = vunpack.c.h.b16 %v1323
        %v1676 = vunpack.c.l.b16 %v1324
        %v1677 = vunpack.c.h.b16 %v1324
        %v1678 = vunpack.c.l.b16 %v1325
        %v1679 = vunpack.c.h.b16 %v1325
        %v1680 = vunpack.c.l.b16 %v1326
        %v1681 = vunpack.c.h.b16 %v1326
        %v1682 = vunpack.c.l.b16 %v1327
        %v1683 = vunpack.c.h.b16 %v1327
        %v1684 = vunpack.c.l.b16 %v1328
        %v1685 = vunpack.c.h.b16 %v1328
        %v1686 = vunpack.c.l.b16 %v1329
        %v1687 = vunpack.c.h.b16 %v1329
        %v1688 = vunpack.c.l.b16 %v1330
        %v1689 = vunpack.c.h.b16 %v1330
        %v1690 = vunpack.c.l.b16 %v1331
        %v1691 = vunpack.c.h.b16 %v1331
        %v1692 = vunpack.c.l.b16 %v1332
        %v1693 = vunpack.c.h.b16 %v1332
        %v1694 = vunpack.c.l.b16 %v1333
        %v1695 = vunpack.c.h.b16 %v1333
        %v1696 = vunpack.c.l.b16 %v1334
        %v1697 = vunpack.c.h.b16 %v1334
        %v1698 = vunpack.c.l.b16 %v1335
        %v1699 = vunpack.c.h.b16 %v1335
        %v1700 = vunpack.c.l.b16 %v1336
        %v1701 = vunpack.c.h.b16 %v1336
        %v1702 = vunpack.c.l.b16 %v1337
        %v1703 = vunpack.c.h.b16 %v1337
        %v1704 = vunpack.c.l.b16 %v1338
        %v1705 = vunpack.c.h.b16 %v1338
        %v1706 = vunpack.c.l.b16 %v1339
        %v1707 = vunpack.c.h.b16 %v1339
        %v1708 = vunpack.c.l.b16 %v1340
        %v1709 = vunpack.c.h.b16 %v1340
        %v1710 = vunpack.c.l.b16 %v1341
        %v1711 = vunpack.c.h.b16 %v1341
        %v1712 = vunpack.c.l.b16 %v1342
        %v1713 = vunpack.c.h.b16 %v1342
        %v1714 = vunpack.c.l.b16 %v1343
        %v1715 = vunpack.c.h.b16 %v1343
        %v1716 = vunpack.c.l.b16 %v1344
        %v1717 = vunpack.c.h.b16 %v1344
        %v1718 = vunpack.c.l.b16 %v1345
        %v1719 = vunpack.c.h.b16 %v1345
        %v1720 = vunpack.c.l.b16 %v1346
        %v1721 = vunpack.c.h.b16 %v1346
        %v1722 = vunpack.c.l.b16 %v1347
        %v1723 = vunpack.c.h.b16 %v1347
        %v1724 = vunpack.c.l.b16 %v1348
        %v1725 = vunpack.c.h.b16 %v1348
        %v1726 = vunpack.c.l.b16 %v1349
        %v1727 = vunpack.c.h.b16 %v1349
        %v1728 = vunpack.c.l.b16 %v1350
        %v1729 = vunpack.c.h.b16 %v1350
        %v1730 = vunpack.c.l.b16 %v1351
        %v1731 = vunpack.c.h.b16 %v1351
        %v1732 = vunpack.c.l.b16 %v1352
        %v1733 = vunpack.c.h.b16 %v1352
        %v1734 = vunpack.c.l.b16 %v1353
        %v1735 = vunpack.c.h.b16 %v1353
        %v1736 = vunpack.c.l.b16 %v1354
        %v1737 = vunpack.c.h.b16 %v1354
        %v1738 = vunpack.c.l.b16 %v1355
        %v1739 = vunpack.c.h.b16 %v1355
        %v1740 = vunpack.c.l.b16 %v1356
        %v1741 = vunpack.c.h.b16 %v1356
        %v1742 = vunpack.c.l.b16 %v1357
        %v1743 = vunpack.c.h.b16 %v1357
        %v1744 = vunpack.c.l.b16 %v1358
        %v1745 = vunpack.c.h.b16 %v1358
        %v1746 = vunpack.c.l.b16 %v1359
        %v1747 = vunpack.c.h.b16 %v1359
        %v1748 = vunpack.c.l.b16 %v1360
        %v1749 = vunpack.c.h.b16 %v1360
        %v1750 = vunpack.c.l.b16 %v1361
        %v1751 = vunpack.c.h.b16 %v1361
        %v1752 = vunpack.c.l.b16 %v1362
        %v1753 = vunpack.c.h.b16 %v1362
        %v1754 = vunpack.c.l.b16 %v1363
        %v1755 = vunpack.c.h.b16 %v1363
        %v1756 = vunpack.c.l.b16 %v1364
        %v1757 = vunpack.c.h.b16 %v1364
        %v1758 = vunpack.c.l.b16 %v1365
        %v1759 = vunpack.c.h.b16 %v1365
        %v1760 = vunpack.c.l.b16 %v1366
        %v1761 = vunpack.c.h.b16 %v1366
        %v1762 = vunpack.c.l.b16 %v1367
        %v1763 = vunpack.c.h.b16 %v1367
        %v1764 = vunpack.c.l.b16 %v1368
        %v1765 = vunpack.c.h.b16 %v1368
        %v1766 = vunpack.c.l.b16 %v1369
        %v1767 = vunpack.c.h.b16 %v1369
        %v1768 = vunpack.c.l.b16 %v1370
        %v1769 = vunpack.c.h.b16 %v1370
        %v1770 = vunpack.c.l.b16 %v1371
        %v1771 = vunpack.c.h.b16 %v1371
        %v1772 = vunpack.c.l.b16 %v1372
        %v1773 = vunpack.c.h.b16 %v1372
        %v1774 = vunpack.c.l.b16 %v1373
        %v1775 = vunpack.c.h.b16 %v1373
        %v1776 = vunpack.c.l.b16 %v1374
        %v1777 = vunpack.c.h.b16 %v1374
        %v1778 = vunpack.c.l.b16 %v1375
        %v1779 = vunpack.c.h.b16 %v1375
        %v1780 = vunpack.c.l.b16 %v1376
        %v1781 = vunpack.c.h.b16 %v1376
        %v1782 = vunpack.c.l.b16 %v1377
        %v1783 = vunpack.c.h.b16 %v1377
        %v1784 = vunpack.c.l.b16 %v1378
        %v1785 = vunpack.c.h.b16 %v1378
        %v1786 = vunpack.c.l.b16 %v1379
        %v1787 = vunpack.c.h.b16 %v1379
        %v1788 = vunpack.c.l.b16 %v1380
        %v1789 = vunpack.c.h.b16 %v1380
        %v1790 = vunpack.c.l.b16 %v1381
        %v1791 = vunpack.c.h.b16 %v1381
        %v1792 = vunpack.c.l.b16 %v1382
        %v1793 = vunpack.c.h.b16 %v1382
        %v1794 = vunpack.c.l.b16 %v1383
        %v1795 = vunpack.c.h.b16 %v1383
        %v1796 = vunpack.c.l.b16 %v1384
        %v1797 = vunpack.c.h.b16 %v1384
        %v1798 = vunpack.c.l.b16 %v1385
        %v1799 = vunpack.c.h.b16 %v1385
        %v1800 = vunpack.c.l.b16 %v1386
        %v1801 = vunpack.c.h.b16 %v1386
        %v1802 = vunpack.c.l.b16 %v1387
        %v1803 = vunpack.c.h.b16 %v1387
        %v1804 = vunpack.c.l.b16 %v1388
        %v1805 = vunpack.c.h.b16 %v1388
        %v1806 = vunpack.c.l.b16 %v1389
        %v1807 = vunpack.c.h.b16 %v1389
        %v1808 = vunpack.c.l.b16 %v1390
        %v1809 = vunpack.c.h.b16 %v1390
        %v1810 = vunpack.c.l.b16 %v1391
        %v1811 = vunpack.c.h.b16 %v1391
        %v1812 = vunpack.c.l.b16 %v1392
        %v1813 = vunpack.c.h.b16 %v1392
        %v1814 = vunpack.c.l.b16 %v1393
        %v1815 = vunpack.c.h.b16 %v1393
        %v1816 = vunpack.c.l.b16 %v1394
        %v1817 = vunpack.c.h.b16 %v1394
        %v1818 = vunpack.c.l.b16 %v1395
        %v1819 = vunpack.c.h.b16 %v1395
        %v1820 = vunpack.c.l.b16 %v1396
        %v1821 = vunpack.c.h.b16 %v1396
        %v1822 = vunpack.c.l.b16 %v1397
        %v1823 = vunpack.c.h.b16 %v1397
        %v1824 = vpack.c.b16 %v1576, %v1568
        %v1825 = vpack.c.b16 %v1577, %v1569
        %v1826 = vpack.c.b16 %v1578, %v1570
        %v1827 = vpack.c.b16 %v1579, %v1571
        %v1828 = vpack.c.b16 %v1580, %v1572
        %v1829 = vpack.c.b16 %v1581, %v1573
        %v1830 = vpack.c.b16 %v1582, %v1574
        %v1831 = vpack.c.b16 %v1583, %v1575
        %v1832 = vpack.c.b16 %v1592, %v1584
        %v1833 = vpack.c.b16 %v1593, %v1585
        %v1834 = vpack.c.b16 %v1594, %v1586
        %v1835 = vpack.c.b16 %v1595, %v1587
        %v1836 = vpack.c.b16 %v1596, %v1588
        %v1837 = vpack.c.b16 %v1597, %v1589
        %v1838 = vpack.c.b16 %v1598, %v1590
        %v1839 = vpack.c.b16 %v1599, %v1591
        %v1840 = vpack.c.b16 %v1608, %v1600
        %v1841 = vpack.c.b16 %v1609, %v1601
        %v1842 = vpack.c.b16 %v1610, %v1602
        %v1843 = vpack.c.b16 %v1611, %v1603
        %v1844 = vpack.c.b16 %v1612, %v1604
        %v1845 = vpack.c.b16 %v1613, %v1605
        %v1846 = vpack.c.b16 %v1614, %v1606
        %v1847 = vpack.c.b16 %v1615, %v1607
        %v1848 = vpack.c.b16 %v1624, %v1616
        %v1849 = vpack.c.b16 %v1625, %v1617
        %v1850 = vpack.c.b16 %v1626, %v1618
        %v1851 = vpack.c.b16 %v1627, %v1619
        %v1852 = vpack.c.b16 %v1628, %v1620
        %v1853 = vpack.c.b16 %v1629, %v1621
        %v1854 = vpack.c.b16 %v1630, %v1622
        %v1855 = vpack.c.b16 %v1631, %v1623
        %v1856 = vpack.c.b16 %v1640, %v1632
        %v1857 = vpack.c.b16 %v1641, %v1633
        %v1858 = vpack.c.b16 %v1642, %v1634
        %v1859 = vpack.c.b16 %v1643, %v1635
        %v1860 = vpack.c.b16 %v1644, %v1636
        %v1861 = vpack.c.b16 %v1645, %v1637
        %v1862 = vpack.c.b16 %v1646, %v1638
        %v1863 = vpack.c.b16 %v1647, %v1639
        %v1864 = vpack.c.b16 %v1656, %v1648
        %v1865 = vpack.c.b16 %v1657, %v1649
        %v1866 = vpack.c.b16 %v1658, %v1650
        %v1867 = vpack.c.b16 %v1659, %v1651
        %v1868 = vpack.c.b16 %v1660, %v1652
        %v1869 = vpack.c.b16 %v1661, %v1653
        %v1870 = vpack.c.b16 %v1662, %v1654
        %v1871 = vpack.c.b16 %v1663, %v1655
        %v1872 = vpack.c.b16 %v1672, %v1664
        %v1873 = vpack.c.b16 %v1673, %v1665
        %v1874 = vpack.c.b16 %v1674, %v1666
        %v1875 = vpack.c.b16 %v1675, %v1667
        %v1876 = vpack.c.b16 %v1676, %v1668
        %v1877 = vpack.c.b16 %v1677, %v1669
        %v1878 = vpack.c.b16 %v1678, %v1670
        %v1879 = vpack.c.b16 %v1679, %v1671
        %v1880 = vpack.c.b16 %v1688, %v1680
        %v1881 = vpack.c.b16 %v1689, %v1681
        %v1882 = vpack.c.b16 %v1690, %v1682
        %v1883 = vpack.c.b16 %v1691, %v1683
        %v1884 = vpack.c.b16 %v1692, %v1684
        %v1885 = vpack.c.b16 %v1693, %v1685
        %v1886 = vpack.c.b16 %v1694, %v1686
        %v1887 = vpack.c.b16 %v1695, %v1687
        %v1888 = vpack.c.b16 %v1704, %v1696
        %v1889 = vpack.c.b16 %v1705, %v1697
        %v1890 = vpack.c.b16 %v1706, %v1698
        %v1891 = vpack.c.b16 %v1707, %v1699
        %v1892 = vpack.c.b16 %v1708, %v1700
        %v1893 = vpack.c.b16 %v1709, %v1701
        %v1894 = vpack.c.b16 %v1710, %v1702
        %v1895 = vpack.c.b16 %v1711, %v1703
        %v1896 = vpack.c.b16 %v1720, %v1712
        %v1897 = vpack.c.b16 %v1721, %v1713
        %v1898 = vpack.c.b16 %v1722, %v1714
        %v1899 = vpack.c.b16 %v1723, %v1715
        %v1900 = vpack.c.b16 %v1724, %v1716
        %v1901 = vpack.c.b16 %v1725, %v1717
        %v1902 = vpack.c.b16 %v1726, %v1718
        %v1903 = vpack.c.b16 %v1727, %v1719
        %v1904 = vpack.c.b16 %v1736, %v1728
        %v1905 = vpack.c.b16 %v1737, %v1729
        %v1906 = vpack.c.b16 %v1738, %v1730
        %v1907 = vpack.c.b16 %v1739, %v1731
        %v1908 = vpack.c.b16 %v1740, %v1732
        %v1909 = vpack.c.b16 %v1741, %v1733
        %v1910 = vpack.c.b16 %v1742, %v1734
        %v1911 = vpack.c.b16 %v1743, %v1735
        %v1912 = vpack.c.b16 %v1752, %v1744
        %v1913 = vpack.c.b16 %v1753, %v1745
        %v1914 = vpack.c.b16 %v1754, %v1746
        %v1915 = vpack.c.b16 %v1755, %v1747
        %v1916 = vpack.c.b16 %v1756, %v1748
        %v1917 = vpack.c.b16 %v1757, %v1749
        %v1918 = vpack.c.b16 %v1758, %v1750
        %v1919 = vpack.c.b16 %v1759, %v1751
        %v1920 = vpack.c.b16 %v1768, %v1760
        %v1921 = vpack.c.b16 %v1769, %v1761
        %v1922 = vpack.c.b16 %v1770, %v1762
        %v1923 = vpack.c.b16 %v1771, %v1763
        %v1924 = vpack.c.b16 %v1772, %v1764
        %v1925 = vpack.c.b16 %v1773, %v1765
        %v1926 = vpack.c.b16 %v1774, %v1766
        %v1927 = vpack.c.b16 %v1775, %v1767
        %v1928 = vpack.c.b16 %v1784, %v1776
        %v1929 = vpack.c.b16 %v1785, %v1777
        %v1930 = vpack.c.b16 %v1786, %v1778
        %v1931 = vpack.c.b16 %v1787, %v1779
        %v1932 = vpack.c.b16 %v1788, %v1780
        %v1933 = vpack.c.b16 %v1789, %v1781
        %v1934 = vpack.c.b16 %v1790, %v1782
        %v1935 = vpack.c.b16 %v1791, %v1783
        %v1936 = vpack.c.b16 %v1800, %v1792
        %v1937 = vpack.c.b16 %v1801, %v1793
        %v1938 = vpack.c.b16 %v1802, %v1794
        %v1939 = vpack.c.b16 %v1803, %v1795
        %v1940 = vpack.c.b16 %v1804, %v1796
        %v1941 = vpack.c.b16 %v1805, %v1797
        %v1942 = vpack.c.b16 %v1806, %v1798
        %v1943 = vpack.c.b16 %v1807, %v1799
        %v1944 = vpack.c.b16 %v1816, %v1808
        %v1945 = vpack.c.b16 %v1817, %v1809
        %v1946 = vpack.c.b16 %v1818, %v1810
        %v1947 = vpack.c.b16 %v1819, %v1811
        %v1948 = vpack.c.b16 %v1820, %v1812
        %v1949 = vpack.c.b16 %v1821, %v1813
        %v1950 = vpack.c.b16 %v1822, %v1814
        %v1951 = vpack.c.b16 %v1823, %v1815
        %2080 = vmatprep.subr.bf16.mxu0 %v1825
        %2081 = vmatpush1.bf16.msra.mxu0 %v1824
        %2082 = vmatprep.subr.bf16.mxu0 %v1833
        %2083 = vmatpush1.bf16.msra.mxu0 %v1832
        %2084 = vmatprep.subr.bf16.mxu0 %v1841
        %2085 = vmatpush1.bf16.msra.mxu0 %v1840
        %2086 = vmatprep.subr.bf16.mxu0 %v1849
        %2087 = vmatpush1.bf16.msra.mxu0 %v1848
        %2088 = vmatprep.subr.bf16.mxu0 %v1857
        %2089 = vmatpush1.bf16.msra.mxu0 %v1856
        %2090 = vmatprep.subr.bf16.mxu0 %v1865
        %2091 = vmatpush1.bf16.msra.mxu0 %v1864
        %2092 = vmatprep.subr.bf16.mxu0 %v1873
        %2093 = vmatpush1.bf16.msra.mxu0 %v1872
        %2094 = vmatprep.subr.bf16.mxu0 %v1881
        %2095 = vmatpush1.bf16.msra.mxu0 %v1880
        %2096 = vmatprep.subr.bf16.mxu0 %v1889
        %2097 = vmatpush1.bf16.msra.mxu0 %v1888
        %2098 = vmatprep.subr.bf16.mxu0 %v1897
        %2099 = vmatpush1.bf16.msra.mxu0 %v1896
        %2100 = vmatprep.subr.bf16.mxu0 %v1905
        %2101 = vmatpush1.bf16.msra.mxu0 %v1904
        %2102 = vmatprep.subr.bf16.mxu0 %v1913
        %2103 = vmatpush1.bf16.msra.mxu0 %v1912
        %2104 = vmatprep.subr.bf16.mxu0 %v1921
        %2105 = vmatpush1.bf16.msra.mxu0 %v1920
        %2106 = vmatprep.subr.bf16.mxu0 %v1929
        %2107 = vmatpush1.bf16.msra.mxu0 %v1928
        %2108 = vmatprep.subr.bf16.mxu0 %v1937
        %2109 = vmatpush1.bf16.msra.mxu0 %v1936
        %2110 = vmatprep.subr.bf16.mxu0 %v1945
        %2111 = vmatpush1.bf16.msra.mxu0 %v1944
        %2112 = vmatprep.mubr.bf16.mxu0 %v1255
        %2113 = vmatmul.mubr.bf16.gmra.mrb[0].mxu0 %v1254
        %v2114 = vpop.f32.mrb[0].mxu0
        %v2115 = vadd.f32 %v1403, %v2114
        %v2116 = vpop.f32.mrb[0].mxu0
        %v2117 = vadd.f32 %v1407, %v2116
        %v2118 = vpop.f32.mrb[0].mxu0
        %v2119 = vadd.f32 %v1403, %v2118
        %v2120 = vpop.f32.mrb[0].mxu0
        %v2121 = vadd.f32 %v1407, %v2120
        %2122 = vmatprep.mubr.bf16.mxu0 %v1257
        %2123 = vmatmul.mubr.bf16.gmra.mrb[0].mxu0 %v1256
        %v2124 = vpop.f32.mrb[0].mxu0
        %v2125 = vadd.f32 %v1403, %v2124
        %v2126 = vpop.f32.mrb[0].mxu0
        %v2127 = vadd.f32 %v1407, %v2126
        %v2128 = vpop.f32.mrb[0].mxu0
        %v2129 = vadd.f32 %v1403, %v2128
        %v2130 = vpop.f32.mrb[0].mxu0
        %v2131 = vadd.f32 %v1407, %v2130
        %2132 = vmatprep.mubr.bf16.mxu0 %v1259
        %2133 = vmatmul.mubr.bf16.gmra.mrb[0].mxu0 %v1258
        %v2134 = vpop.f32.mrb[0].mxu0
        %v2135 = vadd.f32 %v1403, %v2134
        %v2136 = vpop.f32.mrb[0].mxu0
        %v2137 = vadd.f32 %v1407, %v2136
        %v2138 = vpop.f32.mrb[0].mxu0
        %v2139 = vadd.f32 %v1403, %v2138
        %v2140 = vpop.f32.mrb[0].mxu0
        %v2141 = vadd.f32 %v1407, %v2140
        %2142 = vmatprep.mubr.bf16.mxu0 %v1261
        %2143 = vmatmul.mubr.bf16.gmra.mrb[0].mxu0 %v1260
        %v2144 = vpop.f32.mrb[0].mxu0
        %v2145 = vadd.f32 %v1403, %v2144
        %v2146 = vpop.f32.mrb[0].mxu0
        %v2147 = vadd.f32 %v1407, %v2146
        %v2148 = vpop.f32.mrb[0].mxu0
        %v2149 = vadd.f32 %v1403, %v2148
        %v2150 = vpop.f32.mrb[0].mxu0
        %v2151 = vadd.f32 %v1407, %v2150
        %2152 = vmatprep.mubr.bf16.mxu0 %v1263
        %2153 = vmatmul.mubr.bf16.gmra.mrb[0].mxu0 %v1262
        %v2154 = vpop.f32.mrb[0].mxu0
        %v2155 = vadd.f32 %v1403, %v2154
        %v2156 = vpop.f32.mrb[0].mxu0
        %v2157 = vadd.f32 %v1407, %v2156
        %v2158 = vpop.f32.mrb[0].mxu0
        %v2159 = vadd.f32 %v1403, %v2158
        %v2160 = vpop.f32.mrb[0].mxu0
        %v2161 = vadd.f32 %v1407, %v2160
        %2162 = vmatprep.mubr.bf16.mxu0 %v1265
        %2163 = vmatmul.mubr.bf16.gmra.mrb[0].mxu0 %v1264
        %v2164 = vpop.f32.mrb[0].mxu0
        %v2165 = vadd.f32 %v1403, %v2164
        %v2166 = vpop.f32.mrb[0].mxu0
        %v2167 = vadd.f32 %v1407, %v2166
        %v2168 = vpop.f32.mrb[0].mxu0
        %v2169 = vadd.f32 %v1403, %v2168
        %v2170 = vpop.f32.mrb[0].mxu0
        %v2171 = vadd.f32 %v1407, %v2170
        %2172 = vmatprep.mubr.bf16.mxu0 %v1267
        %2173 = vmatmul.mubr.bf16.gmra.mrb[0].mxu0 %v1266
        %v2174 = vpop.f32.mrb[0].mxu0
        %v2175 = vadd.f32 %v1403, %v2174
        %v2176 = vpop.f32.mrb[0].mxu0
        %v2177 = vadd.f32 %v1407, %v2176
        %v2178 = vpop.f32.mrb[0].mxu0
        %v2179 = vadd.f32 %v1403, %v2178
        %v2180 = vpop.f32.mrb[0].mxu0
        %v2181 = vadd.f32 %v1407, %v2180
        %2182 = vmatprep.mubr.bf16.mxu0 %v1269
        %2183 = vmatmul.mubr.bf16.gmra.mrb[0].mxu0 %v1268
        %v2184 = vpop.f32.mrb[0].mxu0
        %v2185 = vadd.f32 %v1403, %v2184
        %v2186 = vpop.f32.mrb[0].mxu0
        %v2187 = vadd.f32 %v1407, %v2186
        %v2188 = vpop.f32.mrb[0].mxu0
        %v2189 = vadd.f32 %v1403, %v2188
        %v2190 = vpop.f32.mrb[0].mxu0
        %v2191 = vadd.f32 %v1407, %v2190
        %2192 = vdwg.mxu0
        %2193 = vmatprep.subr.bf16.mxu0 %v1827
        %2194 = vmatpush1.bf16.msra.mxu0 %v1826
        %2195 = vmatprep.subr.bf16.mxu0 %v1835
        %2196 = vmatpush1.bf16.msra.mxu0 %v1834
        %2197 = vmatprep.subr.bf16.mxu0 %v1843
        %2198 = vmatpush1.bf16.msra.mxu0 %v1842
        %2199 = vmatprep.subr.bf16.mxu0 %v1851
        %2200 = vmatpush1.bf16.msra.mxu0 %v1850
        %2201 = vmatprep.subr.bf16.mxu0 %v1859
        %2202 = vmatpush1.bf16.msra.mxu0 %v1858
        %2203 = vmatprep.subr.bf16.mxu0 %v1867
        %2204 = vmatpush1.bf16.msra.mxu0 %v1866
        %2205 = vmatprep.subr.bf16.mxu0 %v1875
        %2206 = vmatpush1.bf16.msra.mxu0 %v1874
        %2207 = vmatprep.subr.bf16.mxu0 %v1883
        %2208 = vmatpush1.bf16.msra.mxu0 %v1882
        %2209 = vmatprep.subr.bf16.mxu0 %v1891
        %2210 = vmatpush1.bf16.msra.mxu0 %v1890
        %2211 = vmatprep.subr.bf16.mxu0 %v1899
        %2212 = vmatpush1.bf16.msra.mxu0 %v1898
        %2213 = vmatprep.subr.bf16.mxu0 %v1907
        %2214 = vmatpush1.bf16.msra.mxu0 %v1906
        %2215 = vmatprep.subr.bf16.mxu0 %v1915
        %2216 = vmatpush1.bf16.msra.mxu0 %v1914
        %2217 = vmatprep.subr.bf16.mxu0 %v1923
        %2218 = vmatpush1.bf16.msra.mxu0 %v1922
        %2219 = vmatprep.subr.bf16.mxu0 %v1931
        %2220 = vmatpush1.bf16.msra.mxu0 %v1930
        %2221 = vmatprep.subr.bf16.mxu0 %v1939
        %2222 = vmatpush1.bf16.msra.mxu0 %v1938
        %2223 = vmatprep.subr.bf16.mxu0 %v1947
        %2224 = vmatpush1.bf16.msra.mxu0 %v1946
        %2225 = vmatprep.mubr.bf16.mxu0 %v1255
        %2226 = vmatmul.mubr.bf16.gmra.mrb[0].mxu0 %v1254
        %v2227 = vpop.f32.mrb[0].mxu0
        %v2228 = vadd.f32 %v1411, %v2227
        %v2229 = vpop.f32.mrb[0].mxu0
        %v2230 = vadd.f32 %v1415, %v2229
        %v2231 = vpop.f32.mrb[0].mxu0
        %v2232 = vadd.f32 %v1411, %v2231
        %v2233 = vpop.f32.mrb[0].mxu0
        %v2234 = vadd.f32 %v1415, %v2233
        %2235 = vmatprep.mubr.bf16.mxu0 %v1257
        %2236 = vmatmul.mubr.bf16.gmra.mrb[0].mxu0 %v1256
        %v2237 = vpop.f32.mrb[0].mxu0
        %v2238 = vadd.f32 %v1411, %v2237
        %v2239 = vpop.f32.mrb[0].mxu0
        %v2240 = vadd.f32 %v1415, %v2239
        %v2241 = vpop.f32.mrb[0].mxu0
        %v2242 = vadd.f32 %v1411, %v2241
        %v2243 = vpop.f32.mrb[0].mxu0
        %v2244 = vadd.f32 %v1415, %v2243
        %2245 = vmatprep.mubr.bf16.mxu0 %v1259
        %2246 = vmatmul.mubr.bf16.gmra.mrb[0].mxu0 %v1258
        %v2247 = vpop.f32.mrb[0].mxu0
        %v2248 = vadd.f32 %v1411, %v2247
        %v2249 = vpop.f32.mrb[0].mxu0
        %v2250 = vadd.f32 %v1415, %v2249
        %v2251 = vpop.f32.mrb[0].mxu0
        %v2252 = vadd.f32 %v1411, %v2251
        %v2253 = vpop.f32.mrb[0].mxu0
        %v2254 = vadd.f32 %v1415, %v2253
        %2255 = vmatprep.mubr.bf16.mxu0 %v1261
        %2256 = vmatmul.mubr.bf16.gmra.mrb[0].mxu0 %v1260
        %v2257 = vpop.f32.mrb[0].mxu0
        %v2258 = vadd.f32 %v1411, %v2257
        %v2259 = vpop.f32.mrb[0].mxu0
        %v2260 = vadd.f32 %v1415, %v2259
        %v2261 = vpop.f32.mrb[0].mxu0
        %v2262 = vadd.f32 %v1411, %v2261
        %v2263 = vpop.f32.mrb[0].mxu0
        %v2264 = vadd.f32 %v1415, %v2263
        %2265 = vmatprep.mubr.bf16.mxu0 %v1263
        %2266 = vmatmul.mubr.bf16.gmra.mrb[0].mxu0 %v1262
        %v2267 = vpop.f32.mrb[0].mxu0
        %v2268 = vadd.f32 %v1411, %v2267
        %v2269 = vpop.f32.mrb[0].mxu0
        %v2270 = vadd.f32 %v1415, %v2269
        %v2271 = vpop.f32.mrb[0].mxu0
        %v2272 = vadd.f32 %v1411, %v2271
        %v2273 = vpop.f32.mrb[0].mxu0
        %v2274 = vadd.f32 %v1415, %v2273
        %2275 = vmatprep.mubr.bf16.mxu0 %v1265
        %2276 = vmatmul.mubr.bf16.gmra.mrb[0].mxu0 %v1264
        %v2277 = vpop.f32.mrb[0].mxu0
        %v2278 = vadd.f32 %v1411, %v2277
        %v2279 = vpop.f32.mrb[0].mxu0
        %v2280 = vadd.f32 %v1415, %v2279
        %v2281 = vpop.f32.mrb[0].mxu0
        %v2282 = vadd.f32 %v1411, %v2281
        %v2283 = vpop.f32.mrb[0].mxu0
        %v2284 = vadd.f32 %v1415, %v2283
        %2285 = vmatprep.mubr.bf16.mxu0 %v1267
        %2286 = vmatmul.mubr.bf16.gmra.mrb[0].mxu0 %v1266
        %v2287 = vpop.f32.mrb[0].mxu0
        %v2288 = vadd.f32 %v1411, %v2287
        %v2289 = vpop.f32.mrb[0].mxu0
        %v2290 = vadd.f32 %v1415, %v2289
        %v2291 = vpop.f32.mrb[0].mxu0
        %v2292 = vadd.f32 %v1411, %v2291
        %v2293 = vpop.f32.mrb[0].mxu0
        %v2294 = vadd.f32 %v1415, %v2293
        %2295 = vmatprep.mubr.bf16.mxu0 %v1269
        %2296 = vmatmul.mubr.bf16.gmra.mrb[0].mxu0 %v1268
        %v2297 = vpop.f32.mrb[0].mxu0
        %v2298 = vadd.f32 %v1411, %v2297
        %v2299 = vpop.f32.mrb[0].mxu0
        %v2300 = vadd.f32 %v1415, %v2299
        %v2301 = vpop.f32.mrb[0].mxu0
        %v2302 = vadd.f32 %v1411, %v2301
        %v2303 = vpop.f32.mrb[0].mxu0
        %v2304 = vadd.f32 %v1415, %v2303
        %2305 = vdwg.mxu0
        %2306 = vmatprep.subr.bf16.mxu0 %v1829
        %2307 = vmatpush1.bf16.msra.mxu0 %v1828
        %2308 = vmatprep.subr.bf16.mxu0 %v1837
        %2309 = vmatpush1.bf16.msra.mxu0 %v1836
        %2310 = vmatprep.subr.bf16.mxu0 %v1845
        %2311 = vmatpush1.bf16.msra.mxu0 %v1844
        %2312 = vmatprep.subr.bf16.mxu0 %v1853
        %2313 = vmatpush1.bf16.msra.mxu0 %v1852
        %2314 = vmatprep.subr.bf16.mxu0 %v1861
        %2315 = vmatpush1.bf16.msra.mxu0 %v1860
        %2316 = vmatprep.subr.bf16.mxu0 %v1869
        %2317 = vmatpush1.bf16.msra.mxu0 %v1868
        %2318 = vmatprep.subr.bf16.mxu0 %v1877
        %2319 = vmatpush1.bf16.msra.mxu0 %v1876
        %2320 = vmatprep.subr.bf16.mxu0 %v1885
        %2321 = vmatpush1.bf16.msra.mxu0 %v1884
        %2322 = vmatprep.subr.bf16.mxu0 %v1893
        %2323 = vmatpush1.bf16.msra.mxu0 %v1892
        %2324 = vmatprep.subr.bf16.mxu0 %v1901
        %2325 = vmatpush1.bf16.msra.mxu0 %v1900
        %2326 = vmatprep.subr.bf16.mxu0 %v1909
        %2327 = vmatpush1.bf16.msra.mxu0 %v1908
        %2328 = vmatprep.subr.bf16.mxu0 %v1917
        %2329 = vmatpush1.bf16.msra.mxu0 %v1916
        %2330 = vmatprep.subr.bf16.mxu0 %v1925
        %2331 = vmatpush1.bf16.msra.mxu0 %v1924
        %2332 = vmatprep.subr.bf16.mxu0 %v1933
        %2333 = vmatpush1.bf16.msra.mxu0 %v1932
        %2334 = vmatprep.subr.bf16.mxu0 %v1941
        %2335 = vmatpush1.bf16.msra.mxu0 %v1940
        %2336 = vmatprep.subr.bf16.mxu0 %v1949
        %2337 = vmatpush1.bf16.msra.mxu0 %v1948
        %2338 = vmatprep.mubr.bf16.mxu0 %v1255
        %2339 = vmatmul.mubr.bf16.gmra.mrb[0].mxu0 %v1254
        %v2340 = vpop.f32.mrb[0].mxu0
        %v2341 = vadd.f32 %v1419, %v2340
        %v2342 = vpop.f32.mrb[0].mxu0
        %v2343 = vadd.f32 %v1423, %v2342
        %v2344 = vpop.f32.mrb[0].mxu0
        %v2345 = vadd.f32 %v1419, %v2344
        %v2346 = vpop.f32.mrb[0].mxu0
        %v2347 = vadd.f32 %v1423, %v2346
        %2348 = vmatprep.mubr.bf16.mxu0 %v1257
        %2349 = vmatmul.mubr.bf16.gmra.mrb[0].mxu0 %v1256
        %v2350 = vpop.f32.mrb[0].mxu0
        %v2351 = vadd.f32 %v1419, %v2350
        %v2352 = vpop.f32.mrb[0].mxu0
        %v2353 = vadd.f32 %v1423, %v2352
        %v2354 = vpop.f32.mrb[0].mxu0
        %v2355 = vadd.f32 %v1419, %v2354
        %v2356 = vpop.f32.mrb[0].mxu0
        %v2357 = vadd.f32 %v1423, %v2356
        %2358 = vmatprep.mubr.bf16.mxu0 %v1259
        %2359 = vmatmul.mubr.bf16.gmra.mrb[0].mxu0 %v1258
        %v2360 = vpop.f32.mrb[0].mxu0
        %v2361 = vadd.f32 %v1419, %v2360
        %v2362 = vpop.f32.mrb[0].mxu0
        %v2363 = vadd.f32 %v1423, %v2362
        %v2364 = vpop.f32.mrb[0].mxu0
        %v2365 = vadd.f32 %v1419, %v2364
        %v2366 = vpop.f32.mrb[0].mxu0
        %v2367 = vadd.f32 %v1423, %v2366
        %2368 = vmatprep.mubr.bf16.mxu0 %v1261
        %2369 = vmatmul.mubr.bf16.gmra.mrb[0].mxu0 %v1260
        %v2370 = vpop.f32.mrb[0].mxu0
        %v2371 = vadd.f32 %v1419, %v2370
        %v2372 = vpop.f32.mrb[0].mxu0
        %v2373 = vadd.f32 %v1423, %v2372
        %v2374 = vpop.f32.mrb[0].mxu0
        %v2375 = vadd.f32 %v1419, %v2374
        %v2376 = vpop.f32.mrb[0].mxu0
        %v2377 = vadd.f32 %v1423, %v2376
        %2378 = vmatprep.mubr.bf16.mxu0 %v1263
        %2379 = vmatmul.mubr.bf16.gmra.mrb[0].mxu0 %v1262
        %v2380 = vpop.f32.mrb[0].mxu0
        %v2381 = vadd.f32 %v1419, %v2380
        %v2382 = vpop.f32.mrb[0].mxu0
        %v2383 = vadd.f32 %v1423, %v2382
        %v2384 = vpop.f32.mrb[0].mxu0
        %v2385 = vadd.f32 %v1419, %v2384
        %v2386 = vpop.f32.mrb[0].mxu0
        %v2387 = vadd.f32 %v1423, %v2386
        %2388 = vmatprep.mubr.bf16.mxu0 %v1265
        %2389 = vmatmul.mubr.bf16.gmra.mrb[0].mxu0 %v1264
        %v2390 = vpop.f32.mrb[0].mxu0
        %v2391 = vadd.f32 %v1419, %v2390
        %v2392 = vpop.f32.mrb[0].mxu0
        %v2393 = vadd.f32 %v1423, %v2392
        %v2394 = vpop.f32.mrb[0].mxu0
        %v2395 = vadd.f32 %v1419, %v2394
        %v2396 = vpop.f32.mrb[0].mxu0
        %v2397 = vadd.f32 %v1423, %v2396
        %2398 = vmatprep.mubr.bf16.mxu0 %v1267
        %2399 = vmatmul.mubr.bf16.gmra.mrb[0].mxu0 %v1266
        %v2400 = vpop.f32.mrb[0].mxu0
        %v2401 = vadd.f32 %v1419, %v2400
        %v2402 = vpop.f32.mrb[0].mxu0
        %v2403 = vadd.f32 %v1423, %v2402
        %v2404 = vpop.f32.mrb[0].mxu0
        %v2405 = vadd.f32 %v1419, %v2404
        %v2406 = vpop.f32.mrb[0].mxu0
        %v2407 = vadd.f32 %v1423, %v2406
        %2408 = vmatprep.mubr.bf16.mxu0 %v1269
        %2409 = vmatmul.mubr.bf16.gmra.mrb[0].mxu0 %v1268
        %v2410 = vpop.f32.mrb[0].mxu0
        %v2411 = vadd.f32 %v1419, %v2410
        %v2412 = vpop.f32.mrb[0].mxu0
        %v2413 = vadd.f32 %v1423, %v2412
        %v2414 = vpop.f32.mrb[0].mxu0
        %v2415 = vadd.f32 %v1419, %v2414
        %v2416 = vpop.f32.mrb[0].mxu0
        %v2417 = vadd.f32 %v1423, %v2416
        %2418 = vdwg.mxu0
        %2419 = vmatprep.subr.bf16.mxu0 %v1831
        %2420 = vmatpush1.bf16.msra.mxu0 %v1830
        %2421 = vmatprep.subr.bf16.mxu0 %v1839
        %2422 = vmatpush1.bf16.msra.mxu0 %v1838
        %2423 = vmatprep.subr.bf16.mxu0 %v1847
        %2424 = vmatpush1.bf16.msra.mxu0 %v1846
        %2425 = vmatprep.subr.bf16.mxu0 %v1855
        %2426 = vmatpush1.bf16.msra.mxu0 %v1854
        %2427 = vmatprep.subr.bf16.mxu0 %v1863
        %2428 = vmatpush1.bf16.msra.mxu0 %v1862
        %2429 = vmatprep.subr.bf16.mxu0 %v1871
        %2430 = vmatpush1.bf16.msra.mxu0 %v1870
        %2431 = vmatprep.subr.bf16.mxu0 %v1879
        %2432 = vmatpush1.bf16.msra.mxu0 %v1878
        %2433 = vmatprep.subr.bf16.mxu0 %v1887
        %2434 = vmatpush1.bf16.msra.mxu0 %v1886
        %2435 = vmatprep.subr.bf16.mxu0 %v1895
        %2436 = vmatpush1.bf16.msra.mxu0 %v1894
        %2437 = vmatprep.subr.bf16.mxu0 %v1903
        %2438 = vmatpush1.bf16.msra.mxu0 %v1902
        %2439 = vmatprep.subr.bf16.mxu0 %v1911
        %2440 = vmatpush1.bf16.msra.mxu0 %v1910
        %2441 = vmatprep.subr.bf16.mxu0 %v1919
        %2442 = vmatpush1.bf16.msra.mxu0 %v1918
        %2443 = vmatprep.subr.bf16.mxu0 %v1927
        %2444 = vmatpush1.bf16.msra.mxu0 %v1926
        %2445 = vmatprep.subr.bf16.mxu0 %v1935
        %2446 = vmatpush1.bf16.msra.mxu0 %v1934
        %2447 = vmatprep.subr.bf16.mxu0 %v1943
        %2448 = vmatpush1.bf16.msra.mxu0 %v1942
        %2449 = vmatprep.subr.bf16.mxu0 %v1951
        %2450 = vmatpush1.bf16.msra.mxu0 %v1950
        %2451 = vmatprep.mubr.bf16.mxu0 %v1255
        %2452 = vmatmul.mubr.bf16.gmra.mrb[0].mxu0 %v1254
        %v2453 = vpop.f32.mrb[0].mxu0
        %v2454 = vadd.f32 %v1427, %v2453
        %v2455 = vpop.f32.mrb[0].mxu0
        %v2456 = vadd.f32 %v1431, %v2455
        %v2457 = vpop.f32.mrb[0].mxu0
        %v2458 = vadd.f32 %v1427, %v2457
        %v2459 = vpop.f32.mrb[0].mxu0
        %v2460 = vadd.f32 %v1431, %v2459
        %2461 = vmatprep.mubr.bf16.mxu0 %v1257
        %2462 = vmatmul.mubr.bf16.gmra.mrb[0].mxu0 %v1256
        %v2463 = vpop.f32.mrb[0].mxu0
        %v2464 = vadd.f32 %v1427, %v2463
        %v2465 = vpop.f32.mrb[0].mxu0
        %v2466 = vadd.f32 %v1431, %v2465
        %v2467 = vpop.f32.mrb[0].mxu0
        %v2468 = vadd.f32 %v1427, %v2467
        %v2469 = vpop.f32.mrb[0].mxu0
        %v2470 = vadd.f32 %v1431, %v2469
        %2471 = vmatprep.mubr.bf16.mxu0 %v1259
        %2472 = vmatmul.mubr.bf16.gmra.mrb[0].mxu0 %v1258
        %v2473 = vpop.f32.mrb[0].mxu0
        %v2474 = vadd.f32 %v1427, %v2473
        %v2475 = vpop.f32.mrb[0].mxu0
        %v2476 = vadd.f32 %v1431, %v2475
        %v2477 = vpop.f32.mrb[0].mxu0
        %v2478 = vadd.f32 %v1427, %v2477
        %v2479 = vpop.f32.mrb[0].mxu0
        %v2480 = vadd.f32 %v1431, %v2479
        %2481 = vmatprep.mubr.bf16.mxu0 %v1261
        %2482 = vmatmul.mubr.bf16.gmra.mrb[0].mxu0 %v1260
        %v2483 = vpop.f32.mrb[0].mxu0
        %v2484 = vadd.f32 %v1427, %v2483
        %v2485 = vpop.f32.mrb[0].mxu0
        %v2486 = vadd.f32 %v1431, %v2485
        %v2487 = vpop.f32.mrb[0].mxu0
        %v2488 = vadd.f32 %v1427, %v2487
        %v2489 = vpop.f32.mrb[0].mxu0
        %v2490 = vadd.f32 %v1431, %v2489
        %2491 = vmatprep.mubr.bf16.mxu0 %v1263
        %2492 = vmatmul.mubr.bf16.gmra.mrb[0].mxu0 %v1262
        %v2493 = vpop.f32.mrb[0].mxu0
        %v2494 = vadd.f32 %v1427, %v2493
        %v2495 = vpop.f32.mrb[0].mxu0
        %v2496 = vadd.f32 %v1431, %v2495
        %v2497 = vpop.f32.mrb[0].mxu0
        %v2498 = vadd.f32 %v1427, %v2497
        %v2499 = vpop.f32.mrb[0].mxu0
        %v2500 = vadd.f32 %v1431, %v2499
        %2501 = vmatprep.mubr.bf16.mxu0 %v1265
        %2502 = vmatmul.mubr.bf16.gmra.mrb[0].mxu0 %v1264
        %v2503 = vpop.f32.mrb[0].mxu0
        %v2504 = vadd.f32 %v1427, %v2503
        %v2505 = vpop.f32.mrb[0].mxu0
        %v2506 = vadd.f32 %v1431, %v2505
        %v2507 = vpop.f32.mrb[0].mxu0
        %v2508 = vadd.f32 %v1427, %v2507
        %v2509 = vpop.f32.mrb[0].mxu0
        %v2510 = vadd.f32 %v1431, %v2509
        %2511 = vmatprep.mubr.bf16.mxu0 %v1267
        %2512 = vmatmul.mubr.bf16.gmra.mrb[0].mxu0 %v1266
        %v2513 = vpop.f32.mrb[0].mxu0
        %v2514 = vadd.f32 %v1427, %v2513
        %v2515 = vpop.f32.mrb[0].mxu0
        %v2516 = vadd.f32 %v1431, %v2515
        %v2517 = vpop.f32.mrb[0].mxu0
        %v2518 = vadd.f32 %v1427, %v2517
        %v2519 = vpop.f32.mrb[0].mxu0
        %v2520 = vadd.f32 %v1431, %v2519
        %2521 = vmatprep.mubr.bf16.mxu0 %v1269
        %2522 = vmatmul.mubr.bf16.gmra.mrb[0].mxu0 %v1268
        %v2523 = vpop.f32.mrb[0].mxu0
        %v2524 = vadd.f32 %v1427, %v2523
        %v2525 = vpop.f32.mrb[0].mxu0
        %v2526 = vadd.f32 %v1431, %v2525
        %v2527 = vpop.f32.mrb[0].mxu0
        %v2528 = vadd.f32 %v1427, %v2527
        %v2529 = vpop.f32.mrb[0].mxu0
        %v2530 = vadd.f32 %v1431, %v2529
        %2531 = vdwg.mxu0
        %v2532 = vmax.f32 %v2115, 0.0
        %v2533 = vmax.f32 %v2117, 0.0
        %v2534 = vmax.f32 %v2228, 0.0
        %v2535 = vmax.f32 %v2230, 0.0
        %v2536 = vmax.f32 %v2341, 0.0
        %v2537 = vmax.f32 %v2343, 0.0
        %v2538 = vmax.f32 %v2454, 0.0
        %v2539 = vmax.f32 %v2456, 0.0
        %v2540 = vmax.f32 %v2119, 0.0
        %v2541 = vmax.f32 %v2121, 0.0
        %v2542 = vmax.f32 %v2232, 0.0
        %v2543 = vmax.f32 %v2234, 0.0
        %v2544 = vmax.f32 %v2345, 0.0
        %v2545 = vmax.f32 %v2347, 0.0
        %v2546 = vmax.f32 %v2458, 0.0
        %v2547 = vmax.f32 %v2460, 0.0
        %v2548 = vmax.f32 %v2125, 0.0
        %v2549 = vmax.f32 %v2127, 0.0
        %v2550 = vmax.f32 %v2238, 0.0
        %v2551 = vmax.f32 %v2240, 0.0
        %v2552 = vmax.f32 %v2351, 0.0
        %v2553 = vmax.f32 %v2353, 0.0
        %v2554 = vmax.f32 %v2464, 0.0
        %v2555 = vmax.f32 %v2466, 0.0
        %v2556 = vmax.f32 %v2129, 0.0
        %v2557 = vmax.f32 %v2131, 0.0
        %v2558 = vmax.f32 %v2242, 0.0
        %v2559 = vmax.f32 %v2244, 0.0
        %v2560 = vmax.f32 %v2355, 0.0
        %v2561 = vmax.f32 %v2357, 0.0
        %v2562 = vmax.f32 %v2468, 0.0
        %v2563 = vmax.f32 %v2470, 0.0
        %v2564 = vmax.f32 %v2135, 0.0
        %v2565 = vmax.f32 %v2137, 0.0
        %v2566 = vmax.f32 %v2248, 0.0
        %v2567 = vmax.f32 %v2250, 0.0
        %v2568 = vmax.f32 %v2361, 0.0
        %v2569 = vmax.f32 %v2363, 0.0
        %v2570 = vmax.f32 %v2474, 0.0
        %v2571 = vmax.f32 %v2476, 0.0
        %v2572 = vmax.f32 %v2139, 0.0
        %v2573 = vmax.f32 %v2141, 0.0
        %v2574 = vmax.f32 %v2252, 0.0
        %v2575 = vmax.f32 %v2254, 0.0
        %v2576 = vmax.f32 %v2365, 0.0
        %v2577 = vmax.f32 %v2367, 0.0
        %v2578 = vmax.f32 %v2478, 0.0
        %v2579 = vmax.f32 %v2480, 0.0
        %v2580 = vmax.f32 %v2145, 0.0
        %v2581 = vmax.f32 %v2147, 0.0
        %v2582 = vmax.f32 %v2258, 0.0
        %v2583 = vmax.f32 %v2260, 0.0
        %v2584 = vmax.f32 %v2371, 0.0
        %v2585 = vmax.f32 %v2373, 0.0
        %v2586 = vmax.f32 %v2484, 0.0
        %v2587 = vmax.f32 %v2486, 0.0
        %v2588 = vmax.f32 %v2149, 0.0
        %v2589 = vmax.f32 %v2151, 0.0
        %v2590 = vmax.f32 %v2262, 0.0
        %v2591 = vmax.f32 %v2264, 0.0
        %v2592 = vmax.f32 %v2375, 0.0
        %v2593 = vmax.f32 %v2377, 0.0
        %v2594 = vmax.f32 %v2488, 0.0
        %v2595 = vmax.f32 %v2490, 0.0
        %v2596 = vmax.f32 %v2155, 0.0
        %v2597 = vmax.f32 %v2157, 0.0
        %v2598 = vmax.f32 %v2268, 0.0
        %v2599 = vmax.f32 %v2270, 0.0
        %v2600 = vmax.f32 %v2381, 0.0
        %v2601 = vmax.f32 %v2383, 0.0
        %v2602 = vmax.f32 %v2494, 0.0
        %v2603 = vmax.f32 %v2496, 0.0
        %v2604 = vmax.f32 %v2159, 0.0
        %v2605 = vmax.f32 %v2161, 0.0
        %v2606 = vmax.f32 %v2272, 0.0
        %v2607 = vmax.f32 %v2274, 0.0
        %v2608 = vmax.f32 %v2385, 0.0
        %v2609 = vmax.f32 %v2387, 0.0
        %v2610 = vmax.f32 %v2498, 0.0
        %v2611 = vmax.f32 %v2500, 0.0
        %v2612 = vmax.f32 %v2165, 0.0
        %v2613 = vmax.f32 %v2167, 0.0
        %v2614 = vmax.f32 %v2278, 0.0
        %v2615 = vmax.f32 %v2280, 0.0
        %v2616 = vmax.f32 %v2391, 0.0
        %v2617 = vmax.f32 %v2393, 0.0
        %v2618 = vmax.f32 %v2504, 0.0
        %v2619 = vmax.f32 %v2506, 0.0
        %v2620 = vmax.f32 %v2169, 0.0
        %v2621 = vmax.f32 %v2171, 0.0
        %v2622 = vmax.f32 %v2282, 0.0
        %v2623 = vmax.f32 %v2284, 0.0
        %v2624 = vmax.f32 %v2395, 0.0
        %v2625 = vmax.f32 %v2397, 0.0
        %v2626 = vmax.f32 %v2508, 0.0
        %v2627 = vmax.f32 %v2510, 0.0
        %v2628 = vmax.f32 %v2175, 0.0
        %v2629 = vmax.f32 %v2177, 0.0
        %v2630 = vmax.f32 %v2288, 0.0
        %v2631 = vmax.f32 %v2290, 0.0
        %v2632 = vmax.f32 %v2401, 0.0
        %v2633 = vmax.f32 %v2403, 0.0
        %v2634 = vmax.f32 %v2514, 0.0
        %v2635 = vmax.f32 %v2516, 0.0
        %v2636 = vmax.f32 %v2179, 0.0
        %v2637 = vmax.f32 %v2181, 0.0
        %v2638 = vmax.f32 %v2292, 0.0
        %v2639 = vmax.f32 %v2294, 0.0
        %v2640 = vmax.f32 %v2405, 0.0
        %v2641 = vmax.f32 %v2407, 0.0
        %v2642 = vmax.f32 %v2518, 0.0
        %v2643 = vmax.f32 %v2520, 0.0
        %v2644 = vmax.f32 %v2185, 0.0
        %v2645 = vmax.f32 %v2187, 0.0
        %v2646 = vmax.f32 %v2298, 0.0
        %v2647 = vmax.f32 %v2300, 0.0
        %v2648 = vmax.f32 %v2411, 0.0
        %v2649 = vmax.f32 %v2413, 0.0
        %v2650 = vmax.f32 %v2524, 0.0
        %v2651 = vmax.f32 %v2526, 0.0
        %v2652 = vmax.f32 %v2189, 0.0
        %v2653 = vmax.f32 %v2191, 0.0
        %v2654 = vmax.f32 %v2302, 0.0
        %v2655 = vmax.f32 %v2304, 0.0
        %v2656 = vmax.f32 %v2415, 0.0
        %v2657 = vmax.f32 %v2417, 0.0
        %v2658 = vmax.f32 %v2528, 0.0
        %v2659 = vmax.f32 %v2530, 0.0
        %v2660 = vpack.c.bf16 %v2540, %v2532
        %v2661 = vpack.c.bf16 %v2541, %v2533
        %v2662 = vpack.c.bf16 %v2542, %v2534
        %v2663 = vpack.c.bf16 %v2543, %v2535
        %v2664 = vpack.c.bf16 %v2544, %v2536
        %v2665 = vpack.c.bf16 %v2545, %v2537
        %v2666 = vpack.c.bf16 %v2546, %v2538
        %v2667 = vpack.c.bf16 %v2547, %v2539
        %v2668 = vpack.c.bf16 %v2556, %v2548
        %v2669 = vpack.c.bf16 %v2557, %v2549
        %v2670 = vpack.c.bf16 %v2558, %v2550
        %v2671 = vpack.c.bf16 %v2559, %v2551
        %v2672 = vpack.c.bf16 %v2560, %v2552
        %v2673 = vpack.c.bf16 %v2561, %v2553
        %v2674 = vpack.c.bf16 %v2562, %v2554
        %v2675 = vpack.c.bf16 %v2563, %v2555
        %v2676 = vpack.c.bf16 %v2572, %v2564
        %v2677 = vpack.c.bf16 %v2573, %v2565
        %v2678 = vpack.c.bf16 %v2574, %v2566
        %v2679 = vpack.c.bf16 %v2575, %v2567
        %v2680 = vpack.c.bf16 %v2576, %v2568
        %v2681 = vpack.c.bf16 %v2577, %v2569
        %v2682 = vpack.c.bf16 %v2578, %v2570
        %v2683 = vpack.c.bf16 %v2579, %v2571
        %v2684 = vpack.c.bf16 %v2588, %v2580
        %v2685 = vpack.c.bf16 %v2589, %v2581
        %v2686 = vpack.c.bf16 %v2590, %v2582
        %v2687 = vpack.c.bf16 %v2591, %v2583
        %v2688 = vpack.c.bf16 %v2592, %v2584
        %v2689 = vpack.c.bf16 %v2593, %v2585
        %v2690 = vpack.c.bf16 %v2594, %v2586
        %v2691 = vpack.c.bf16 %v2595, %v2587
        %v2692 = vpack.c.bf16 %v2604, %v2596
        %v2693 = vpack.c.bf16 %v2605, %v2597
        %v2694 = vpack.c.bf16 %v2606, %v2598
        %v2695 = vpack.c.bf16 %v2607, %v2599
        %v2696 = vpack.c.bf16 %v2608, %v2600
        %v2697 = vpack.c.bf16 %v2609, %v2601
        %v2698 = vpack.c.bf16 %v2610, %v2602
        %v2699 = vpack.c.bf16 %v2611, %v2603
        %v2700 = vpack.c.bf16 %v2620, %v2612
        %v2701 = vpack.c.bf16 %v2621, %v2613
        %v2702 = vpack.c.bf16 %v2622, %v2614
        %v2703 = vpack.c.bf16 %v2623, %v2615
        %v2704 = vpack.c.bf16 %v2624, %v2616
        %v2705 = vpack.c.bf16 %v2625, %v2617
        %v2706 = vpack.c.bf16 %v2626, %v2618
        %v2707 = vpack.c.bf16 %v2627, %v2619
        %v2708 = vpack.c.bf16 %v2636, %v2628
        %v2709 = vpack.c.bf16 %v2637, %v2629
        %v2710 = vpack.c.bf16 %v2638, %v2630
        %v2711 = vpack.c.bf16 %v2639, %v2631
        %v2712 = vpack.c.bf16 %v2640, %v2632
        %v2713 = vpack.c.bf16 %v2641, %v2633
        %v2714 = vpack.c.bf16 %v2642, %v2634
        %v2715 = vpack.c.bf16 %v2643, %v2635
        %v2716 = vpack.c.bf16 %v2652, %v2644
        %v2717 = vpack.c.bf16 %v2653, %v2645
        %v2718 = vpack.c.bf16 %v2654, %v2646
        %v2719 = vpack.c.bf16 %v2655, %v2647
        %v2720 = vpack.c.bf16 %v2656, %v2648
        %v2721 = vpack.c.bf16 %v2657, %v2649
        %v2722 = vpack.c.bf16 %v2658, %v2650
        %v2723 = vpack.c.bf16 %v2659, %v2651
        %v2724 = vld [vmem:[%s8] sm:$0xff]
        %v2725 = vld [vmem:[%s8 + $0x8] sm:$0xff]
        %v2726 = vld [vmem:[%s8 + $0x10] sm:$0xff]
        %v2727 = vld [vmem:[%s8 + $0x18] sm:$0xff]
        %v2728 = vld [vmem:[%s8 + $0x20] sm:$0xff]
        %v2729 = vld [vmem:[%s8 + $0x28] sm:$0xff]
        %v2730 = vld [vmem:[%s8 + $0x30] sm:$0xff]
        %v2731 = vld [vmem:[%s8 + $0x38] sm:$0xff]
        %v2732 = vld [vmem:[%s8 + $0x40] sm:$0xff]
        %v2733 = vld [vmem:[%s8 + $0x48] sm:$0xff]
        %v2734 = vld [vmem:[%s8 + $0x50] sm:$0xff]
        %v2735 = vld [vmem:[%s8 + $0x58] sm:$0xff]
        %v2736 = vld [vmem:[%s8 + $0x60] sm:$0xff]
        %v2737 = vld [vmem:[%s8 + $0x68] sm:$0xff]
        %v2738 = vld [vmem:[%s8 + $0x70] sm:$0xff]
        %v2739 = vld [vmem:[%s8 + $0x78] sm:$0xff]
        %v2740 = vld [vmem:[%s8 + $0x80] sm:$0xff]
        %v2741 = vld [vmem:[%s8 + $0x88] sm:$0xff]
        %v2742 = vld [vmem:[%s8 + $0x90] sm:$0xff]
        %v2743 = vld [vmem:[%s8 + $0x98] sm:$0xff]
        %v2744 = vld [vmem:[%s8 + $0xa0] sm:$0xff]
        %v2745 = vld [vmem:[%s8 + $0xa8] sm:$0xff]
        %v2746 = vld [vmem:[%s8 + $0xb0] sm:$0xff]
        %v2747 = vld [vmem:[%s8 + $0xb8] sm:$0xff]
        %v2748 = vld [vmem:[%s8 + $0xc0] sm:$0xff]
        %v2749 = vld [vmem:[%s8 + $0xc8] sm:$0xff]
        %v2750 = vld [vmem:[%s8 + $0xd0] sm:$0xff]
        %v2751 = vld [vmem:[%s8 + $0xd8] sm:$0xff]
        %v2752 = vld [vmem:[%s8 + $0xe0] sm:$0xff]
        %v2753 = vld [vmem:[%s8 + $0xe8] sm:$0xff]
        %v2754 = vld [vmem:[%s8 + $0xf0] sm:$0xff]
        %v2755 = vld [vmem:[%s8 + $0xf8] sm:$0xff]
        %v2756 = vld [vmem:[%s8 + $0x100] sm:$0xff]
        %v2757 = vld [vmem:[%s8 + $0x108] sm:$0xff]
        %v2758 = vld [vmem:[%s8 + $0x110] sm:$0xff]
        %v2759 = vld [vmem:[%s8 + $0x118] sm:$0xff]
        %v2760 = vld [vmem:[%s8 + $0x120] sm:$0xff]
        %v2761 = vld [vmem:[%s8 + $0x128] sm:$0xff]
        %v2762 = vld [vmem:[%s8 + $0x130] sm:$0xff]
        %v2763 = vld [vmem:[%s8 + $0x138] sm:$0xff]
        %v2764 = vld [vmem:[%s8 + $0x140] sm:$0xff]
        %v2765 = vld [vmem:[%s8 + $0x148] sm:$0xff]
        %v2766 = vld [vmem:[%s8 + $0x150] sm:$0xff]
        %v2767 = vld [vmem:[%s8 + $0x158] sm:$0xff]
        %v2768 = vld [vmem:[%s8 + $0x160] sm:$0xff]
        %v2769 = vld [vmem:[%s8 + $0x168] sm:$0xff]
        %v2770 = vld [vmem:[%s8 + $0x170] sm:$0xff]
        %v2771 = vld [vmem:[%s8 + $0x178] sm:$0xff]
        %v2772 = vld [vmem:[%s8 + $0x180] sm:$0xff]
        %v2773 = vld [vmem:[%s8 + $0x188] sm:$0xff]
        %v2774 = vld [vmem:[%s8 + $0x190] sm:$0xff]
        %v2775 = vld [vmem:[%s8 + $0x198] sm:$0xff]
        %v2776 = vld [vmem:[%s8 + $0x1a0] sm:$0xff]
        %v2777 = vld [vmem:[%s8 + $0x1a8] sm:$0xff]
        %v2778 = vld [vmem:[%s8 + $0x1b0] sm:$0xff]
        %v2779 = vld [vmem:[%s8 + $0x1b8] sm:$0xff]
        %v2780 = vld [vmem:[%s8 + $0x1c0] sm:$0xff]
        %v2781 = vld [vmem:[%s8 + $0x1c8] sm:$0xff]
        %v2782 = vld [vmem:[%s8 + $0x1d0] sm:$0xff]
        %v2783 = vld [vmem:[%s8 + $0x1d8] sm:$0xff]
        %v2784 = vld [vmem:[%s8 + $0x1e0] sm:$0xff]
        %v2785 = vld [vmem:[%s8 + $0x1e8] sm:$0xff]
        %v2786 = vld [vmem:[%s8 + $0x1f0] sm:$0xff]
        %v2787 = vld [vmem:[%s8 + $0x1f8] sm:$0xff]
        %v2788 = vld [vmem:[%s8 + $0x200] sm:$0xff]
        %v2789 = vld [vmem:[%s8 + $0x208] sm:$0xff]
        %v2790 = vld [vmem:[%s8 + $0x210] sm:$0xff]
        %v2791 = vld [vmem:[%s8 + $0x218] sm:$0xff]
        %v2792 = vld [vmem:[%s8 + $0x220] sm:$0xff]
        %v2793 = vld [vmem:[%s8 + $0x228] sm:$0xff]
        %v2794 = vld [vmem:[%s8 + $0x230] sm:$0xff]
        %v2795 = vld [vmem:[%s8 + $0x238] sm:$0xff]
        %v2796 = vld [vmem:[%s8 + $0x240] sm:$0xff]
        %v2797 = vld [vmem:[%s8 + $0x248] sm:$0xff]
        %v2798 = vld [vmem:[%s8 + $0x250] sm:$0xff]
        %v2799 = vld [vmem:[%s8 + $0x258] sm:$0xff]
        %v2800 = vld [vmem:[%s8 + $0x260] sm:$0xff]
        %v2801 = vld [vmem:[%s8 + $0x268] sm:$0xff]
        %v2802 = vld [vmem:[%s8 + $0x270] sm:$0xff]
        %v2803 = vld [vmem:[%s8 + $0x278] sm:$0xff]
        %v2804 = vld [vmem:[%s8 + $0x280] sm:$0xff]
        %v2805 = vld [vmem:[%s8 + $0x288] sm:$0xff]
        %v2806 = vld [vmem:[%s8 + $0x290] sm:$0xff]
        %v2807 = vld [vmem:[%s8 + $0x298] sm:$0xff]
        %v2808 = vld [vmem:[%s8 + $0x2a0] sm:$0xff]
        %v2809 = vld [vmem:[%s8 + $0x2a8] sm:$0xff]
        %v2810 = vld [vmem:[%s8 + $0x2b0] sm:$0xff]
        %v2811 = vld [vmem:[%s8 + $0x2b8] sm:$0xff]
        %v2812 = vld [vmem:[%s8 + $0x2c0] sm:$0xff]
        %v2813 = vld [vmem:[%s8 + $0x2c8] sm:$0xff]
        %v2814 = vld [vmem:[%s8 + $0x2d0] sm:$0xff]
        %v2815 = vld [vmem:[%s8 + $0x2d8] sm:$0xff]
        %v2816 = vld [vmem:[%s8 + $0x2e0] sm:$0xff]
        %v2817 = vld [vmem:[%s8 + $0x2e8] sm:$0xff]
        %v2818 = vld [vmem:[%s8 + $0x2f0] sm:$0xff]
        %v2819 = vld [vmem:[%s8 + $0x2f8] sm:$0xff]
        %v2820 = vld [vmem:[%s8 + $0x300] sm:$0xff]
        %v2821 = vld [vmem:[%s8 + $0x308] sm:$0xff]
        %v2822 = vld [vmem:[%s8 + $0x310] sm:$0xff]
        %v2823 = vld [vmem:[%s8 + $0x318] sm:$0xff]
        %v2824 = vld [vmem:[%s8 + $0x320] sm:$0xff]
        %v2825 = vld [vmem:[%s8 + $0x328] sm:$0xff]
        %v2826 = vld [vmem:[%s8 + $0x330] sm:$0xff]
        %v2827 = vld [vmem:[%s8 + $0x338] sm:$0xff]
        %v2828 = vld [vmem:[%s8 + $0x340] sm:$0xff]
        %v2829 = vld [vmem:[%s8 + $0x348] sm:$0xff]
        %v2830 = vld [vmem:[%s8 + $0x350] sm:$0xff]
        %v2831 = vld [vmem:[%s8 + $0x358] sm:$0xff]
        %v2832 = vld [vmem:[%s8 + $0x360] sm:$0xff]
        %v2833 = vld [vmem:[%s8 + $0x368] sm:$0xff]
        %v2834 = vld [vmem:[%s8 + $0x370] sm:$0xff]
        %v2835 = vld [vmem:[%s8 + $0x378] sm:$0xff]
        %v2836 = vld [vmem:[%s8 + $0x380] sm:$0xff]
        %v2837 = vld [vmem:[%s8 + $0x388] sm:$0xff]
        %v2838 = vld [vmem:[%s8 + $0x390] sm:$0xff]
        %v2839 = vld [vmem:[%s8 + $0x398] sm:$0xff]
        %v2840 = vld [vmem:[%s8 + $0x3a0] sm:$0xff]
        %v2841 = vld [vmem:[%s8 + $0x3a8] sm:$0xff]
        %v2842 = vld [vmem:[%s8 + $0x3b0] sm:$0xff]
        %v2843 = vld [vmem:[%s8 + $0x3b8] sm:$0xff]
        %v2844 = vld [vmem:[%s8 + $0x3c0] sm:$0xff]
        %v2845 = vld [vmem:[%s8 + $0x3c8] sm:$0xff]
        %v2846 = vld [vmem:[%s8 + $0x3d0] sm:$0xff]
        %v2847 = vld [vmem:[%s8 + $0x3d8] sm:$0xff]
        %v2848 = vld [vmem:[%s8 + $0x3e0] sm:$0xff]
        %v2849 = vld [vmem:[%s8 + $0x3e8] sm:$0xff]
        %v2850 = vld [vmem:[%s8 + $0x3f0] sm:$0xff]
        %v2851 = vld [vmem:[%s8 + $0x3f8] sm:$0xff]
        %v2852 = vld [vmem:[%s9] sm:$0x3]
        %v2854 = vlaneseq
        %v2855 = vshrl.u32 %v2854, 7
        %v2856 = vsub.s32 0, %v2855
        %v2857 = vrot.slane %v2852, %v2856
        %v2858 = vlaneseq
        %v2859 = vshrl.u32 %v2858, 7
        %v2860 = vsub.s32 1, %v2859
        %v2861 = vrot.slane %v2852, %v2860
        %v2992 = vunpack.c.l.b16 %v2724
        %v2993 = vunpack.c.h.b16 %v2724
        %v2994 = vunpack.c.l.b16 %v2725
        %v2995 = vunpack.c.h.b16 %v2725
        %v2996 = vunpack.c.l.b16 %v2726
        %v2997 = vunpack.c.h.b16 %v2726
        %v2998 = vunpack.c.l.b16 %v2727
        %v2999 = vunpack.c.h.b16 %v2727
        %v3000 = vunpack.c.l.b16 %v2728
        %v3001 = vunpack.c.h.b16 %v2728
        %v3002 = vunpack.c.l.b16 %v2729
        %v3003 = vunpack.c.h.b16 %v2729
        %v3004 = vunpack.c.l.b16 %v2730
        %v3005 = vunpack.c.h.b16 %v2730
        %v3006 = vunpack.c.l.b16 %v2731
        %v3007 = vunpack.c.h.b16 %v2731
        %v3008 = vunpack.c.l.b16 %v2732
        %v3009 = vunpack.c.h.b16 %v2732
        %v3010 = vunpack.c.l.b16 %v2733
        %v3011 = vunpack.c.h.b16 %v2733
        %v3012 = vunpack.c.l.b16 %v2734
        %v3013 = vunpack.c.h.b16 %v2734
        %v3014 = vunpack.c.l.b16 %v2735
        %v3015 = vunpack.c.h.b16 %v2735
        %v3016 = vunpack.c.l.b16 %v2736
        %v3017 = vunpack.c.h.b16 %v2736
        %v3018 = vunpack.c.l.b16 %v2737
        %v3019 = vunpack.c.h.b16 %v2737
        %v3020 = vunpack.c.l.b16 %v2738
        %v3021 = vunpack.c.h.b16 %v2738
        %v3022 = vunpack.c.l.b16 %v2739
        %v3023 = vunpack.c.h.b16 %v2739
        %v3024 = vunpack.c.l.b16 %v2740
        %v3025 = vunpack.c.h.b16 %v2740
        %v3026 = vunpack.c.l.b16 %v2741
        %v3027 = vunpack.c.h.b16 %v2741
        %v3028 = vunpack.c.l.b16 %v2742
        %v3029 = vunpack.c.h.b16 %v2742
        %v3030 = vunpack.c.l.b16 %v2743
        %v3031 = vunpack.c.h.b16 %v2743
        %v3032 = vunpack.c.l.b16 %v2744
        %v3033 = vunpack.c.h.b16 %v2744
        %v3034 = vunpack.c.l.b16 %v2745
        %v3035 = vunpack.c.h.b16 %v2745
        %v3036 = vunpack.c.l.b16 %v2746
        %v3037 = vunpack.c.h.b16 %v2746
        %v3038 = vunpack.c.l.b16 %v2747
        %v3039 = vunpack.c.h.b16 %v2747
        %v3040 = vunpack.c.l.b16 %v2748
        %v3041 = vunpack.c.h.b16 %v2748
        %v3042 = vunpack.c.l.b16 %v2749
        %v3043 = vunpack.c.h.b16 %v2749
        %v3044 = vunpack.c.l.b16 %v2750
        %v3045 = vunpack.c.h.b16 %v2750
        %v3046 = vunpack.c.l.b16 %v2751
        %v3047 = vunpack.c.h.b16 %v2751
        %v3048 = vunpack.c.l.b16 %v2752
        %v3049 = vunpack.c.h.b16 %v2752
        %v3050 = vunpack.c.l.b16 %v2753
        %v3051 = vunpack.c.h.b16 %v2753
        %v3052 = vunpack.c.l.b16 %v2754
        %v3053 = vunpack.c.h.b16 %v2754
        %v3054 = vunpack.c.l.b16 %v2755
        %v3055 = vunpack.c.h.b16 %v2755
        %v3056 = vunpack.c.l.b16 %v2756
        %v3057 = vunpack.c.h.b16 %v2756
        %v3058 = vunpack.c.l.b16 %v2757
        %v3059 = vunpack.c.h.b16 %v2757
        %v3060 = vunpack.c.l.b16 %v2758
        %v3061 = vunpack.c.h.b16 %v2758
        %v3062 = vunpack.c.l.b16 %v2759
        %v3063 = vunpack.c.h.b16 %v2759
        %v3064 = vunpack.c.l.b16 %v2760
        %v3065 = vunpack.c.h.b16 %v2760
        %v3066 = vunpack.c.l.b16 %v2761
        %v3067 = vunpack.c.h.b16 %v2761
        %v3068 = vunpack.c.l.b16 %v2762
        %v3069 = vunpack.c.h.b16 %v2762
        %v3070 = vunpack.c.l.b16 %v2763
        %v3071 = vunpack.c.h.b16 %v2763
        %v3072 = vunpack.c.l.b16 %v2764
        %v3073 = vunpack.c.h.b16 %v2764
        %v3074 = vunpack.c.l.b16 %v2765
        %v3075 = vunpack.c.h.b16 %v2765
        %v3076 = vunpack.c.l.b16 %v2766
        %v3077 = vunpack.c.h.b16 %v2766
        %v3078 = vunpack.c.l.b16 %v2767
        %v3079 = vunpack.c.h.b16 %v2767
        %v3080 = vunpack.c.l.b16 %v2768
        %v3081 = vunpack.c.h.b16 %v2768
        %v3082 = vunpack.c.l.b16 %v2769
        %v3083 = vunpack.c.h.b16 %v2769
        %v3084 = vunpack.c.l.b16 %v2770
        %v3085 = vunpack.c.h.b16 %v2770
        %v3086 = vunpack.c.l.b16 %v2771
        %v3087 = vunpack.c.h.b16 %v2771
        %v3088 = vunpack.c.l.b16 %v2772
        %v3089 = vunpack.c.h.b16 %v2772
        %v3090 = vunpack.c.l.b16 %v2773
        %v3091 = vunpack.c.h.b16 %v2773
        %v3092 = vunpack.c.l.b16 %v2774
        %v3093 = vunpack.c.h.b16 %v2774
        %v3094 = vunpack.c.l.b16 %v2775
        %v3095 = vunpack.c.h.b16 %v2775
        %v3096 = vunpack.c.l.b16 %v2776
        %v3097 = vunpack.c.h.b16 %v2776
        %v3098 = vunpack.c.l.b16 %v2777
        %v3099 = vunpack.c.h.b16 %v2777
        %v3100 = vunpack.c.l.b16 %v2778
        %v3101 = vunpack.c.h.b16 %v2778
        %v3102 = vunpack.c.l.b16 %v2779
        %v3103 = vunpack.c.h.b16 %v2779
        %v3104 = vunpack.c.l.b16 %v2780
        %v3105 = vunpack.c.h.b16 %v2780
        %v3106 = vunpack.c.l.b16 %v2781
        %v3107 = vunpack.c.h.b16 %v2781
        %v3108 = vunpack.c.l.b16 %v2782
        %v3109 = vunpack.c.h.b16 %v2782
        %v3110 = vunpack.c.l.b16 %v2783
        %v3111 = vunpack.c.h.b16 %v2783
        %v3112 = vunpack.c.l.b16 %v2784
        %v3113 = vunpack.c.h.b16 %v2784
        %v3114 = vunpack.c.l.b16 %v2785
        %v3115 = vunpack.c.h.b16 %v2785
        %v3116 = vunpack.c.l.b16 %v2786
        %v3117 = vunpack.c.h.b16 %v2786
        %v3118 = vunpack.c.l.b16 %v2787
        %v3119 = vunpack.c.h.b16 %v2787
        %v3120 = vunpack.c.l.b16 %v2788
        %v3121 = vunpack.c.h.b16 %v2788
        %v3122 = vunpack.c.l.b16 %v2789
        %v3123 = vunpack.c.h.b16 %v2789
        %v3124 = vunpack.c.l.b16 %v2790
        %v3125 = vunpack.c.h.b16 %v2790
        %v3126 = vunpack.c.l.b16 %v2791
        %v3127 = vunpack.c.h.b16 %v2791
        %v3128 = vunpack.c.l.b16 %v2792
        %v3129 = vunpack.c.h.b16 %v2792
        %v3130 = vunpack.c.l.b16 %v2793
        %v3131 = vunpack.c.h.b16 %v2793
        %v3132 = vunpack.c.l.b16 %v2794
        %v3133 = vunpack.c.h.b16 %v2794
        %v3134 = vunpack.c.l.b16 %v2795
        %v3135 = vunpack.c.h.b16 %v2795
        %v3136 = vunpack.c.l.b16 %v2796
        %v3137 = vunpack.c.h.b16 %v2796
        %v3138 = vunpack.c.l.b16 %v2797
        %v3139 = vunpack.c.h.b16 %v2797
        %v3140 = vunpack.c.l.b16 %v2798
        %v3141 = vunpack.c.h.b16 %v2798
        %v3142 = vunpack.c.l.b16 %v2799
        %v3143 = vunpack.c.h.b16 %v2799
        %v3144 = vunpack.c.l.b16 %v2800
        %v3145 = vunpack.c.h.b16 %v2800
        %v3146 = vunpack.c.l.b16 %v2801
        %v3147 = vunpack.c.h.b16 %v2801
        %v3148 = vunpack.c.l.b16 %v2802
        %v3149 = vunpack.c.h.b16 %v2802
        %v3150 = vunpack.c.l.b16 %v2803
        %v3151 = vunpack.c.h.b16 %v2803
        %v3152 = vunpack.c.l.b16 %v2804
        %v3153 = vunpack.c.h.b16 %v2804
        %v3154 = vunpack.c.l.b16 %v2805
        %v3155 = vunpack.c.h.b16 %v2805
        %v3156 = vunpack.c.l.b16 %v2806
        %v3157 = vunpack.c.h.b16 %v2806
        %v3158 = vunpack.c.l.b16 %v2807
        %v3159 = vunpack.c.h.b16 %v2807
        %v3160 = vunpack.c.l.b16 %v2808
        %v3161 = vunpack.c.h.b16 %v2808
        %v3162 = vunpack.c.l.b16 %v2809
        %v3163 = vunpack.c.h.b16 %v2809
        %v3164 = vunpack.c.l.b16 %v2810
        %v3165 = vunpack.c.h.b16 %v2810
        %v3166 = vunpack.c.l.b16 %v2811
        %v3167 = vunpack.c.h.b16 %v2811
        %v3168 = vunpack.c.l.b16 %v2812
        %v3169 = vunpack.c.h.b16 %v2812
        %v3170 = vunpack.c.l.b16 %v2813
        %v3171 = vunpack.c.h.b16 %v2813
        %v3172 = vunpack.c.l.b16 %v2814
        %v3173 = vunpack.c.h.b16 %v2814
        %v3174 = vunpack.c.l.b16 %v2815
        %v3175 = vunpack.c.h.b16 %v2815
        %v3176 = vunpack.c.l.b16 %v2816
        %v3177 = vunpack.c.h.b16 %v2816
        %v3178 = vunpack.c.l.b16 %v2817
        %v3179 = vunpack.c.h.b16 %v2817
        %v3180 = vunpack.c.l.b16 %v2818
        %v3181 = vunpack.c.h.b16 %v2818
        %v3182 = vunpack.c.l.b16 %v2819
        %v3183 = vunpack.c.h.b16 %v2819
        %v3184 = vunpack.c.l.b16 %v2820
        %v3185 = vunpack.c.h.b16 %v2820
        %v3186 = vunpack.c.l.b16 %v2821
        %v3187 = vunpack.c.h.b16 %v2821
        %v3188 = vunpack.c.l.b16 %v2822
        %v3189 = vunpack.c.h.b16 %v2822
        %v3190 = vunpack.c.l.b16 %v2823
        %v3191 = vunpack.c.h.b16 %v2823
        %v3192 = vunpack.c.l.b16 %v2824
        %v3193 = vunpack.c.h.b16 %v2824
        %v3194 = vunpack.c.l.b16 %v2825
        %v3195 = vunpack.c.h.b16 %v2825
        %v3196 = vunpack.c.l.b16 %v2826
        %v3197 = vunpack.c.h.b16 %v2826
        %v3198 = vunpack.c.l.b16 %v2827
        %v3199 = vunpack.c.h.b16 %v2827
        %v3200 = vunpack.c.l.b16 %v2828
        %v3201 = vunpack.c.h.b16 %v2828
        %v3202 = vunpack.c.l.b16 %v2829
        %v3203 = vunpack.c.h.b16 %v2829
        %v3204 = vunpack.c.l.b16 %v2830
        %v3205 = vunpack.c.h.b16 %v2830
        %v3206 = vunpack.c.l.b16 %v2831
        %v3207 = vunpack.c.h.b16 %v2831
        %v3208 = vunpack.c.l.b16 %v2832
        %v3209 = vunpack.c.h.b16 %v2832
        %v3210 = vunpack.c.l.b16 %v2833
        %v3211 = vunpack.c.h.b16 %v2833
        %v3212 = vunpack.c.l.b16 %v2834
        %v3213 = vunpack.c.h.b16 %v2834
        %v3214 = vunpack.c.l.b16 %v2835
        %v3215 = vunpack.c.h.b16 %v2835
        %v3216 = vunpack.c.l.b16 %v2836
        %v3217 = vunpack.c.h.b16 %v2836
        %v3218 = vunpack.c.l.b16 %v2837
        %v3219 = vunpack.c.h.b16 %v2837
        %v3220 = vunpack.c.l.b16 %v2838
        %v3221 = vunpack.c.h.b16 %v2838
        %v3222 = vunpack.c.l.b16 %v2839
        %v3223 = vunpack.c.h.b16 %v2839
        %v3224 = vunpack.c.l.b16 %v2840
        %v3225 = vunpack.c.h.b16 %v2840
        %v3226 = vunpack.c.l.b16 %v2841
        %v3227 = vunpack.c.h.b16 %v2841
        %v3228 = vunpack.c.l.b16 %v2842
        %v3229 = vunpack.c.h.b16 %v2842
        %v3230 = vunpack.c.l.b16 %v2843
        %v3231 = vunpack.c.h.b16 %v2843
        %v3232 = vunpack.c.l.b16 %v2844
        %v3233 = vunpack.c.h.b16 %v2844
        %v3234 = vunpack.c.l.b16 %v2845
        %v3235 = vunpack.c.h.b16 %v2845
        %v3236 = vunpack.c.l.b16 %v2846
        %v3237 = vunpack.c.h.b16 %v2846
        %v3238 = vunpack.c.l.b16 %v2847
        %v3239 = vunpack.c.h.b16 %v2847
        %v3240 = vunpack.c.l.b16 %v2848
        %v3241 = vunpack.c.h.b16 %v2848
        %v3242 = vunpack.c.l.b16 %v2849
        %v3243 = vunpack.c.h.b16 %v2849
        %v3244 = vunpack.c.l.b16 %v2850
        %v3245 = vunpack.c.h.b16 %v2850
        %v3246 = vunpack.c.l.b16 %v2851
        %v3247 = vunpack.c.h.b16 %v2851
        %v3248 = vpack.c.b16 %v2994, %v2992
        %v3249 = vpack.c.b16 %v2995, %v2993
        %v3250 = vpack.c.b16 %v2998, %v2996
        %v3251 = vpack.c.b16 %v2999, %v2997
        %v3252 = vpack.c.b16 %v3002, %v3000
        %v3253 = vpack.c.b16 %v3003, %v3001
        %v3254 = vpack.c.b16 %v3006, %v3004
        %v3255 = vpack.c.b16 %v3007, %v3005
        %v3256 = vpack.c.b16 %v3010, %v3008
        %v3257 = vpack.c.b16 %v3011, %v3009
        %v3258 = vpack.c.b16 %v3014, %v3012
        %v3259 = vpack.c.b16 %v3015, %v3013
        %v3260 = vpack.c.b16 %v3018, %v3016
        %v3261 = vpack.c.b16 %v3019, %v3017
        %v3262 = vpack.c.b16 %v3022, %v3020
        %v3263 = vpack.c.b16 %v3023, %v3021
        %v3264 = vpack.c.b16 %v3026, %v3024
        %v3265 = vpack.c.b16 %v3027, %v3025
        %v3266 = vpack.c.b16 %v3030, %v3028
        %v3267 = vpack.c.b16 %v3031, %v3029
        %v3268 = vpack.c.b16 %v3034, %v3032
        %v3269 = vpack.c.b16 %v3035, %v3033
        %v3270 = vpack.c.b16 %v3038, %v3036
        %v3271 = vpack.c.b16 %v3039, %v3037
        %v3272 = vpack.c.b16 %v3042, %v3040
        %v3273 = vpack.c.b16 %v3043, %v3041
        %v3274 = vpack.c.b16 %v3046, %v3044
        %v3275 = vpack.c.b16 %v3047, %v3045
        %v3276 = vpack.c.b16 %v3050, %v3048
        %v3277 = vpack.c.b16 %v3051, %v3049
        %v3278 = vpack.c.b16 %v3054, %v3052
        %v3279 = vpack.c.b16 %v3055, %v3053
        %v3280 = vpack.c.b16 %v3058, %v3056
        %v3281 = vpack.c.b16 %v3059, %v3057
        %v3282 = vpack.c.b16 %v3062, %v3060
        %v3283 = vpack.c.b16 %v3063, %v3061
        %v3284 = vpack.c.b16 %v3066, %v3064
        %v3285 = vpack.c.b16 %v3067, %v3065
        %v3286 = vpack.c.b16 %v3070, %v3068
        %v3287 = vpack.c.b16 %v3071, %v3069
        %v3288 = vpack.c.b16 %v3074, %v3072
        %v3289 = vpack.c.b16 %v3075, %v3073
        %v3290 = vpack.c.b16 %v3078, %v3076
        %v3291 = vpack.c.b16 %v3079, %v3077
        %v3292 = vpack.c.b16 %v3082, %v3080
        %v3293 = vpack.c.b16 %v3083, %v3081
        %v3294 = vpack.c.b16 %v3086, %v3084
        %v3295 = vpack.c.b16 %v3087, %v3085
        %v3296 = vpack.c.b16 %v3090, %v3088
        %v3297 = vpack.c.b16 %v3091, %v3089
        %v3298 = vpack.c.b16 %v3094, %v3092
        %v3299 = vpack.c.b16 %v3095, %v3093
        %v3300 = vpack.c.b16 %v3098, %v3096
        %v3301 = vpack.c.b16 %v3099, %v3097
        %v3302 = vpack.c.b16 %v3102, %v3100
        %v3303 = vpack.c.b16 %v3103, %v3101
        %v3304 = vpack.c.b16 %v3106, %v3104
        %v3305 = vpack.c.b16 %v3107, %v3105
        %v3306 = vpack.c.b16 %v3110, %v3108
        %v3307 = vpack.c.b16 %v3111, %v3109
        %v3308 = vpack.c.b16 %v3114, %v3112
        %v3309 = vpack.c.b16 %v3115, %v3113
        %v3310 = vpack.c.b16 %v3118, %v3116
        %v3311 = vpack.c.b16 %v3119, %v3117
        %v3312 = vpack.c.b16 %v3122, %v3120
        %v3313 = vpack.c.b16 %v3123, %v3121
        %v3314 = vpack.c.b16 %v3126, %v3124
        %v3315 = vpack.c.b16 %v3127, %v3125
        %v3316 = vpack.c.b16 %v3130, %v3128
        %v3317 = vpack.c.b16 %v3131, %v3129
        %v3318 = vpack.c.b16 %v3134, %v3132
        %v3319 = vpack.c.b16 %v3135, %v3133
        %v3320 = vpack.c.b16 %v3138, %v3136
        %v3321 = vpack.c.b16 %v3139, %v3137
        %v3322 = vpack.c.b16 %v3142, %v3140
        %v3323 = vpack.c.b16 %v3143, %v3141
        %v3324 = vpack.c.b16 %v3146, %v3144
        %v3325 = vpack.c.b16 %v3147, %v3145
        %v3326 = vpack.c.b16 %v3150, %v3148
        %v3327 = vpack.c.b16 %v3151, %v3149
        %v3328 = vpack.c.b16 %v3154, %v3152
        %v3329 = vpack.c.b16 %v3155, %v3153
        %v3330 = vpack.c.b16 %v3158, %v3156
        %v3331 = vpack.c.b16 %v3159, %v3157
        %v3332 = vpack.c.b16 %v3162, %v3160
        %v3333 = vpack.c.b16 %v3163, %v3161
        %v3334 = vpack.c.b16 %v3166, %v3164
        %v3335 = vpack.c.b16 %v3167, %v3165
        %v3336 = vpack.c.b16 %v3170, %v3168
        %v3337 = vpack.c.b16 %v3171, %v3169
        %v3338 = vpack.c.b16 %v3174, %v3172
        %v3339 = vpack.c.b16 %v3175, %v3173
        %v3340 = vpack.c.b16 %v3178, %v3176
        %v3341 = vpack.c.b16 %v3179, %v3177
        %v3342 = vpack.c.b16 %v3182, %v3180
        %v3343 = vpack.c.b16 %v3183, %v3181
        %v3344 = vpack.c.b16 %v3186, %v3184
        %v3345 = vpack.c.b16 %v3187, %v3185
        %v3346 = vpack.c.b16 %v3190, %v3188
        %v3347 = vpack.c.b16 %v3191, %v3189
        %v3348 = vpack.c.b16 %v3194, %v3192
        %v3349 = vpack.c.b16 %v3195, %v3193
        %v3350 = vpack.c.b16 %v3198, %v3196
        %v3351 = vpack.c.b16 %v3199, %v3197
        %v3352 = vpack.c.b16 %v3202, %v3200
        %v3353 = vpack.c.b16 %v3203, %v3201
        %v3354 = vpack.c.b16 %v3206, %v3204
        %v3355 = vpack.c.b16 %v3207, %v3205
        %v3356 = vpack.c.b16 %v3210, %v3208
        %v3357 = vpack.c.b16 %v3211, %v3209
        %v3358 = vpack.c.b16 %v3214, %v3212
        %v3359 = vpack.c.b16 %v3215, %v3213
        %v3360 = vpack.c.b16 %v3218, %v3216
        %v3361 = vpack.c.b16 %v3219, %v3217
        %v3362 = vpack.c.b16 %v3222, %v3220
        %v3363 = vpack.c.b16 %v3223, %v3221
        %v3364 = vpack.c.b16 %v3226, %v3224
        %v3365 = vpack.c.b16 %v3227, %v3225
        %v3366 = vpack.c.b16 %v3230, %v3228
        %v3367 = vpack.c.b16 %v3231, %v3229
        %v3368 = vpack.c.b16 %v3234, %v3232
        %v3369 = vpack.c.b16 %v3235, %v3233
        %v3370 = vpack.c.b16 %v3238, %v3236
        %v3371 = vpack.c.b16 %v3239, %v3237
        %v3372 = vpack.c.b16 %v3242, %v3240
        %v3373 = vpack.c.b16 %v3243, %v3241
        %v3374 = vpack.c.b16 %v3246, %v3244
        %v3375 = vpack.c.b16 %v3247, %v3245
        %3504 = vmatprep.subr.bf16.mxu0 %v3249
        %3505 = vmatpush1.bf16.msra.mxu0 %v3248
        %3506 = vmatprep.subr.bf16.mxu0 %v3251
        %3507 = vmatpush1.bf16.msra.mxu0 %v3250
        %3508 = vmatprep.subr.bf16.mxu0 %v3253
        %3509 = vmatpush1.bf16.msra.mxu0 %v3252
        %3510 = vmatprep.subr.bf16.mxu0 %v3255
        %3511 = vmatpush1.bf16.msra.mxu0 %v3254
        %3512 = vmatprep.subr.bf16.mxu0 %v3257
        %3513 = vmatpush1.bf16.msra.mxu0 %v3256
        %3514 = vmatprep.subr.bf16.mxu0 %v3259
        %3515 = vmatpush1.bf16.msra.mxu0 %v3258
        %3516 = vmatprep.subr.bf16.mxu0 %v3261
        %3517 = vmatpush1.bf16.msra.mxu0 %v3260
        %3518 = vmatprep.subr.bf16.mxu0 %v3263
        %3519 = vmatpush1.bf16.msra.mxu0 %v3262
        %3520 = vmatprep.subr.bf16.mxu0 %v3265
        %3521 = vmatpush1.bf16.msra.mxu0 %v3264
        %3522 = vmatprep.subr.bf16.mxu0 %v3267
        %3523 = vmatpush1.bf16.msra.mxu0 %v3266
        %3524 = vmatprep.subr.bf16.mxu0 %v3269
        %3525 = vmatpush1.bf16.msra.mxu0 %v3268
        %3526 = vmatprep.subr.bf16.mxu0 %v3271
        %3527 = vmatpush1.bf16.msra.mxu0 %v3270
        %3528 = vmatprep.subr.bf16.mxu0 %v3273
        %3529 = vmatpush1.bf16.msra.mxu0 %v3272
        %3530 = vmatprep.subr.bf16.mxu0 %v3275
        %3531 = vmatpush1.bf16.msra.mxu0 %v3274
        %3532 = vmatprep.subr.bf16.mxu0 %v3277
        %3533 = vmatpush1.bf16.msra.mxu0 %v3276
        %3534 = vmatprep.subr.bf16.mxu0 %v3279
        %3535 = vmatpush1.bf16.msra.mxu0 %v3278
        %3536 = vmatprep.mubr.bf16.mxu0 %v2661
        %3537 = vmatmul.mubr.bf16.gmra.mrb[0].mxu0 %v2660
        %v3538 = vpop.f32.mrb[0].mxu0
        %v3539 = vadd.f32 %v2857, %v3538
        %v3540 = vpop.f32.mrb[0].mxu0
        %v3541 = vadd.f32 %v2861, %v3540
        %v3542 = vpop.f32.mrb[0].mxu0
        %v3543 = vadd.f32 %v2857, %v3542
        %v3544 = vpop.f32.mrb[0].mxu0
        %v3545 = vadd.f32 %v2861, %v3544
        %3546 = vmatprep.mubr.bf16.mxu0 %v2669
        %3547 = vmatmul.mubr.bf16.gmra.mrb[0].mxu0 %v2668
        %v3548 = vpop.f32.mrb[0].mxu0
        %v3549 = vadd.f32 %v2857, %v3548
        %v3550 = vpop.f32.mrb[0].mxu0
        %v3551 = vadd.f32 %v2861, %v3550
        %v3552 = vpop.f32.mrb[0].mxu0
        %v3553 = vadd.f32 %v2857, %v3552
        %v3554 = vpop.f32.mrb[0].mxu0
        %v3555 = vadd.f32 %v2861, %v3554
        %3556 = vmatprep.mubr.bf16.mxu0 %v2677
        %3557 = vmatmul.mubr.bf16.gmra.mrb[0].mxu0 %v2676
        %v3558 = vpop.f32.mrb[0].mxu0
        %v3559 = vadd.f32 %v2857, %v3558
        %v3560 = vpop.f32.mrb[0].mxu0
        %v3561 = vadd.f32 %v2861, %v3560
        %v3562 = vpop.f32.mrb[0].mxu0
        %v3563 = vadd.f32 %v2857, %v3562
        %v3564 = vpop.f32.mrb[0].mxu0
        %v3565 = vadd.f32 %v2861, %v3564
        %3566 = vmatprep.mubr.bf16.mxu0 %v2685
        %3567 = vmatmul.mubr.bf16.gmra.mrb[0].mxu0 %v2684
        %v3568 = vpop.f32.mrb[0].mxu0
        %v3569 = vadd.f32 %v2857, %v3568
        %v3570 = vpop.f32.mrb[0].mxu0
        %v3571 = vadd.f32 %v2861, %v3570
        %v3572 = vpop.f32.mrb[0].mxu0
        %v3573 = vadd.f32 %v2857, %v3572
        %v3574 = vpop.f32.mrb[0].mxu0
        %v3575 = vadd.f32 %v2861, %v3574
        %3576 = vmatprep.mubr.bf16.mxu0 %v2693
        %3577 = vmatmul.mubr.bf16.gmra.mrb[0].mxu0 %v2692
        %v3578 = vpop.f32.mrb[0].mxu0
        %v3579 = vadd.f32 %v2857, %v3578
        %v3580 = vpop.f32.mrb[0].mxu0
        %v3581 = vadd.f32 %v2861, %v3580
        %v3582 = vpop.f32.mrb[0].mxu0
        %v3583 = vadd.f32 %v2857, %v3582
        %v3584 = vpop.f32.mrb[0].mxu0
        %v3585 = vadd.f32 %v2861, %v3584
        %3586 = vmatprep.mubr.bf16.mxu0 %v2701
        %3587 = vmatmul.mubr.bf16.gmra.mrb[0].mxu0 %v2700
        %v3588 = vpop.f32.mrb[0].mxu0
        %v3589 = vadd.f32 %v2857, %v3588
        %v3590 = vpop.f32.mrb[0].mxu0
        %v3591 = vadd.f32 %v2861, %v3590
        %v3592 = vpop.f32.mrb[0].mxu0
        %v3593 = vadd.f32 %v2857, %v3592
        %v3594 = vpop.f32.mrb[0].mxu0
        %v3595 = vadd.f32 %v2861, %v3594
        %3596 = vmatprep.mubr.bf16.mxu0 %v2709
        %3597 = vmatmul.mubr.bf16.gmra.mrb[0].mxu0 %v2708
        %v3598 = vpop.f32.mrb[0].mxu0
        %v3599 = vadd.f32 %v2857, %v3598
        %v3600 = vpop.f32.mrb[0].mxu0
        %v3601 = vadd.f32 %v2861, %v3600
        %v3602 = vpop.f32.mrb[0].mxu0
        %v3603 = vadd.f32 %v2857, %v3602
        %v3604 = vpop.f32.mrb[0].mxu0
        %v3605 = vadd.f32 %v2861, %v3604
        %3606 = vmatprep.mubr.bf16.mxu0 %v2717
        %3607 = vmatmul.mubr.bf16.gmra.mrb[0].mxu0 %v2716
        %v3608 = vpop.f32.mrb[0].mxu0
        %v3609 = vadd.f32 %v2857, %v3608
        %v3610 = vpop.f32.mrb[0].mxu0
        %v3611 = vadd.f32 %v2861, %v3610
        %v3612 = vpop.f32.mrb[0].mxu0
        %v3613 = vadd.f32 %v2857, %v3612
        %v3614 = vpop.f32.mrb[0].mxu0
        %v3615 = vadd.f32 %v2861, %v3614
        %3616 = vdwg.mxu0
        %3617 = vmatprep.subr.bf16.mxu0 %v3281
        %3618 = vmatpush1.bf16.msra.mxu0 %v3280
        %3619 = vmatprep.subr.bf16.mxu0 %v3283
        %3620 = vmatpush1.bf16.msra.mxu0 %v3282
        %3621 = vmatprep.subr.bf16.mxu0 %v3285
        %3622 = vmatpush1.bf16.msra.mxu0 %v3284
        %3623 = vmatprep.subr.bf16.mxu0 %v3287
        %3624 = vmatpush1.bf16.msra.mxu0 %v3286
        %3625 = vmatprep.subr.bf16.mxu0 %v3289
        %3626 = vmatpush1.bf16.msra.mxu0 %v3288
        %3627 = vmatprep.subr.bf16.mxu0 %v3291
        %3628 = vmatpush1.bf16.msra.mxu0 %v3290
        %3629 = vmatprep.subr.bf16.mxu0 %v3293
        %3630 = vmatpush1.bf16.msra.mxu0 %v3292
        %3631 = vmatprep.subr.bf16.mxu0 %v3295
        %3632 = vmatpush1.bf16.msra.mxu0 %v3294
        %3633 = vmatprep.subr.bf16.mxu0 %v3297
        %3634 = vmatpush1.bf16.msra.mxu0 %v3296
        %3635 = vmatprep.subr.bf16.mxu0 %v3299
        %3636 = vmatpush1.bf16.msra.mxu0 %v3298
        %3637 = vmatprep.subr.bf16.mxu0 %v3301
        %3638 = vmatpush1.bf16.msra.mxu0 %v3300
        %3639 = vmatprep.subr.bf16.mxu0 %v3303
        %3640 = vmatpush1.bf16.msra.mxu0 %v3302
        %3641 = vmatprep.subr.bf16.mxu0 %v3305
        %3642 = vmatpush1.bf16.msra.mxu0 %v3304
        %3643 = vmatprep.subr.bf16.mxu0 %v3307
        %3644 = vmatpush1.bf16.msra.mxu0 %v3306
        %3645 = vmatprep.subr.bf16.mxu0 %v3309
        %3646 = vmatpush1.bf16.msra.mxu0 %v3308
        %3647 = vmatprep.subr.bf16.mxu0 %v3311
        %3648 = vmatpush1.bf16.msra.mxu0 %v3310
        %3649 = vmatprep.mubr.bf16.mxu0 %v2663
        %3650 = vmatmul.mubr.bf16.gmra.mrb[0].mxu0 %v2662
        %v3651 = vpop.f32.mrb[0].mxu0
        %v3652 = vadd.f32 %v3539, %v3651
        %v3653 = vpop.f32.mrb[0].mxu0
        %v3654 = vadd.f32 %v3541, %v3653
        %v3655 = vpop.f32.mrb[0].mxu0
        %v3656 = vadd.f32 %v3543, %v3655
        %v3657 = vpop.f32.mrb[0].mxu0
        %v3658 = vadd.f32 %v3545, %v3657
        %3659 = vmatprep.mubr.bf16.mxu0 %v2671
        %3660 = vmatmul.mubr.bf16.gmra.mrb[0].mxu0 %v2670
        %v3661 = vpop.f32.mrb[0].mxu0
        %v3662 = vadd.f32 %v3549, %v3661
        %v3663 = vpop.f32.mrb[0].mxu0
        %v3664 = vadd.f32 %v3551, %v3663
        %v3665 = vpop.f32.mrb[0].mxu0
        %v3666 = vadd.f32 %v3553, %v3665
        %v3667 = vpop.f32.mrb[0].mxu0
        %v3668 = vadd.f32 %v3555, %v3667
        %3669 = vmatprep.mubr.bf16.mxu0 %v2679
        %3670 = vmatmul.mubr.bf16.gmra.mrb[0].mxu0 %v2678
        %v3671 = vpop.f32.mrb[0].mxu0
        %v3672 = vadd.f32 %v3559, %v3671
        %v3673 = vpop.f32.mrb[0].mxu0
        %v3674 = vadd.f32 %v3561, %v3673
        %v3675 = vpop.f32.mrb[0].mxu0
        %v3676 = vadd.f32 %v3563, %v3675
        %v3677 = vpop.f32.mrb[0].mxu0
        %v3678 = vadd.f32 %v3565, %v3677
        %3679 = vmatprep.mubr.bf16.mxu0 %v2687
        %3680 = vmatmul.mubr.bf16.gmra.mrb[0].mxu0 %v2686
        %v3681 = vpop.f32.mrb[0].mxu0
        %v3682 = vadd.f32 %v3569, %v3681
        %v3683 = vpop.f32.mrb[0].mxu0
        %v3684 = vadd.f32 %v3571, %v3683
        %v3685 = vpop.f32.mrb[0].mxu0
        %v3686 = vadd.f32 %v3573, %v3685
        %v3687 = vpop.f32.mrb[0].mxu0
        %v3688 = vadd.f32 %v3575, %v3687
        %3689 = vmatprep.mubr.bf16.mxu0 %v2695
        %3690 = vmatmul.mubr.bf16.gmra.mrb[0].mxu0 %v2694
        %v3691 = vpop.f32.mrb[0].mxu0
        %v3692 = vadd.f32 %v3579, %v3691
        %v3693 = vpop.f32.mrb[0].mxu0
        %v3694 = vadd.f32 %v3581, %v3693
        %v3695 = vpop.f32.mrb[0].mxu0
        %v3696 = vadd.f32 %v3583, %v3695
        %v3697 = vpop.f32.mrb[0].mxu0
        %v3698 = vadd.f32 %v3585, %v3697
        %3699 = vmatprep.mubr.bf16.mxu0 %v2703
        %3700 = vmatmul.mubr.bf16.gmra.mrb[0].mxu0 %v2702
        %v3701 = vpop.f32.mrb[0].mxu0
        %v3702 = vadd.f32 %v3589, %v3701
        %v3703 = vpop.f32.mrb[0].mxu0
        %v3704 = vadd.f32 %v3591, %v3703
        %v3705 = vpop.f32.mrb[0].mxu0
        %v3706 = vadd.f32 %v3593, %v3705
        %v3707 = vpop.f32.mrb[0].mxu0
        %v3708 = vadd.f32 %v3595, %v3707
        %3709 = vmatprep.mubr.bf16.mxu0 %v2711
        %3710 = vmatmul.mubr.bf16.gmra.mrb[0].mxu0 %v2710
        %v3711 = vpop.f32.mrb[0].mxu0
        %v3712 = vadd.f32 %v3599, %v3711
        %v3713 = vpop.f32.mrb[0].mxu0
        %v3714 = vadd.f32 %v3601, %v3713
        %v3715 = vpop.f32.mrb[0].mxu0
        %v3716 = vadd.f32 %v3603, %v3715
        %v3717 = vpop.f32.mrb[0].mxu0
        %v3718 = vadd.f32 %v3605, %v3717
        %3719 = vmatprep.mubr.bf16.mxu0 %v2719
        %3720 = vmatmul.mubr.bf16.gmra.mrb[0].mxu0 %v2718
        %v3721 = vpop.f32.mrb[0].mxu0
        %v3722 = vadd.f32 %v3609, %v3721
        %v3723 = vpop.f32.mrb[0].mxu0
        %v3724 = vadd.f32 %v3611, %v3723
        %v3725 = vpop.f32.mrb[0].mxu0
        %v3726 = vadd.f32 %v3613, %v3725
        %v3727 = vpop.f32.mrb[0].mxu0
        %v3728 = vadd.f32 %v3615, %v3727
        %3729 = vdwg.mxu0
        %3730 = vmatprep.subr.bf16.mxu0 %v3313
        %3731 = vmatpush1.bf16.msra.mxu0 %v3312
        %3732 = vmatprep.subr.bf16.mxu0 %v3315
        %3733 = vmatpush1.bf16.msra.mxu0 %v3314
        %3734 = vmatprep.subr.bf16.mxu0 %v3317
        %3735 = vmatpush1.bf16.msra.mxu0 %v3316
        %3736 = vmatprep.subr.bf16.mxu0 %v3319
        %3737 = vmatpush1.bf16.msra.mxu0 %v3318
        %3738 = vmatprep.subr.bf16.mxu0 %v3321
        %3739 = vmatpush1.bf16.msra.mxu0 %v3320
        %3740 = vmatprep.subr.bf16.mxu0 %v3323
        %3741 = vmatpush1.bf16.msra.mxu0 %v3322
        %3742 = vmatprep.subr.bf16.mxu0 %v3325
        %3743 = vmatpush1.bf16.msra.mxu0 %v3324
        %3744 = vmatprep.subr.bf16.mxu0 %v3327
        %3745 = vmatpush1.bf16.msra.mxu0 %v3326
        %3746 = vmatprep.subr.bf16.mxu0 %v3329
        %3747 = vmatpush1.bf16.msra.mxu0 %v3328
        %3748 = vmatprep.subr.bf16.mxu0 %v3331
        %3749 = vmatpush1.bf16.msra.mxu0 %v3330
        %3750 = vmatprep.subr.bf16.mxu0 %v3333
        %3751 = vmatpush1.bf16.msra.mxu0 %v3332
        %3752 = vmatprep.subr.bf16.mxu0 %v3335
        %3753 = vmatpush1.bf16.msra.mxu0 %v3334
        %3754 = vmatprep.subr.bf16.mxu0 %v3337
        %3755 = vmatpush1.bf16.msra.mxu0 %v3336
        %3756 = vmatprep.subr.bf16.mxu0 %v3339
        %3757 = vmatpush1.bf16.msra.mxu0 %v3338
        %3758 = vmatprep.subr.bf16.mxu0 %v3341
        %3759 = vmatpush1.bf16.msra.mxu0 %v3340
        %3760 = vmatprep.subr.bf16.mxu0 %v3343
        %3761 = vmatpush1.bf16.msra.mxu0 %v3342
        %3762 = vmatprep.mubr.bf16.mxu0 %v2665
        %3763 = vmatmul.mubr.bf16.gmra.mrb[0].mxu0 %v2664
        %v3764 = vpop.f32.mrb[0].mxu0
        %v3765 = vadd.f32 %v3652, %v3764
        %v3766 = vpop.f32.mrb[0].mxu0
        %v3767 = vadd.f32 %v3654, %v3766
        %v3768 = vpop.f32.mrb[0].mxu0
        %v3769 = vadd.f32 %v3656, %v3768
        %v3770 = vpop.f32.mrb[0].mxu0
        %v3771 = vadd.f32 %v3658, %v3770
        %3772 = vmatprep.mubr.bf16.mxu0 %v2673
        %3773 = vmatmul.mubr.bf16.gmra.mrb[0].mxu0 %v2672
        %v3774 = vpop.f32.mrb[0].mxu0
        %v3775 = vadd.f32 %v3662, %v3774
        %v3776 = vpop.f32.mrb[0].mxu0
        %v3777 = vadd.f32 %v3664, %v3776
        %v3778 = vpop.f32.mrb[0].mxu0
        %v3779 = vadd.f32 %v3666, %v3778
        %v3780 = vpop.f32.mrb[0].mxu0
        %v3781 = vadd.f32 %v3668, %v3780
        %3782 = vmatprep.mubr.bf16.mxu0 %v2681
        %3783 = vmatmul.mubr.bf16.gmra.mrb[0].mxu0 %v2680
        %v3784 = vpop.f32.mrb[0].mxu0
        %v3785 = vadd.f32 %v3672, %v3784
        %v3786 = vpop.f32.mrb[0].mxu0
        %v3787 = vadd.f32 %v3674, %v3786
        %v3788 = vpop.f32.mrb[0].mxu0
        %v3789 = vadd.f32 %v3676, %v3788
        %v3790 = vpop.f32.mrb[0].mxu0
        %v3791 = vadd.f32 %v3678, %v3790
        %3792 = vmatprep.mubr.bf16.mxu0 %v2689
        %3793 = vmatmul.mubr.bf16.gmra.mrb[0].mxu0 %v2688
        %v3794 = vpop.f32.mrb[0].mxu0
        %v3795 = vadd.f32 %v3682, %v3794
        %v3796 = vpop.f32.mrb[0].mxu0
        %v3797 = vadd.f32 %v3684, %v3796
        %v3798 = vpop.f32.mrb[0].mxu0
        %v3799 = vadd.f32 %v3686, %v3798
        %v3800 = vpop.f32.mrb[0].mxu0
        %v3801 = vadd.f32 %v3688, %v3800
        %3802 = vmatprep.mubr.bf16.mxu0 %v2697
        %3803 = vmatmul.mubr.bf16.gmra.mrb[0].mxu0 %v2696
        %v3804 = vpop.f32.mrb[0].mxu0
        %v3805 = vadd.f32 %v3692, %v3804
        %v3806 = vpop.f32.mrb[0].mxu0
        %v3807 = vadd.f32 %v3694, %v3806
        %v3808 = vpop.f32.mrb[0].mxu0
        %v3809 = vadd.f32 %v3696, %v3808
        %v3810 = vpop.f32.mrb[0].mxu0
        %v3811 = vadd.f32 %v3698, %v3810
        %3812 = vmatprep.mubr.bf16.mxu0 %v2705
        %3813 = vmatmul.mubr.bf16.gmra.mrb[0].mxu0 %v2704
        %v3814 = vpop.f32.mrb[0].mxu0
        %v3815 = vadd.f32 %v3702, %v3814
        %v3816 = vpop.f32.mrb[0].mxu0
        %v3817 = vadd.f32 %v3704, %v3816
        %v3818 = vpop.f32.mrb[0].mxu0
        %v3819 = vadd.f32 %v3706, %v3818
        %v3820 = vpop.f32.mrb[0].mxu0
        %v3821 = vadd.f32 %v3708, %v3820
        %3822 = vmatprep.mubr.bf16.mxu0 %v2713
        %3823 = vmatmul.mubr.bf16.gmra.mrb[0].mxu0 %v2712
        %v3824 = vpop.f32.mrb[0].mxu0
        %v3825 = vadd.f32 %v3712, %v3824
        %v3826 = vpop.f32.mrb[0].mxu0
        %v3827 = vadd.f32 %v3714, %v3826
        %v3828 = vpop.f32.mrb[0].mxu0
        %v3829 = vadd.f32 %v3716, %v3828
        %v3830 = vpop.f32.mrb[0].mxu0
        %v3831 = vadd.f32 %v3718, %v3830
        %3832 = vmatprep.mubr.bf16.mxu0 %v2721
        %3833 = vmatmul.mubr.bf16.gmra.mrb[0].mxu0 %v2720
        %v3834 = vpop.f32.mrb[0].mxu0
        %v3835 = vadd.f32 %v3722, %v3834
        %v3836 = vpop.f32.mrb[0].mxu0
        %v3837 = vadd.f32 %v3724, %v3836
        %v3838 = vpop.f32.mrb[0].mxu0
        %v3839 = vadd.f32 %v3726, %v3838
        %v3840 = vpop.f32.mrb[0].mxu0
        %v3841 = vadd.f32 %v3728, %v3840
        %3842 = vdwg.mxu0
        %3843 = vmatprep.subr.bf16.mxu0 %v3345
        %3844 = vmatpush1.bf16.msra.mxu0 %v3344
        %3845 = vmatprep.subr.bf16.mxu0 %v3347
        %3846 = vmatpush1.bf16.msra.mxu0 %v3346
        %3847 = vmatprep.subr.bf16.mxu0 %v3349
        %3848 = vmatpush1.bf16.msra.mxu0 %v3348
        %3849 = vmatprep.subr.bf16.mxu0 %v3351
        %3850 = vmatpush1.bf16.msra.mxu0 %v3350
        %3851 = vmatprep.subr.bf16.mxu0 %v3353
        %3852 = vmatpush1.bf16.msra.mxu0 %v3352
        %3853 = vmatprep.subr.bf16.mxu0 %v3355
        %3854 = vmatpush1.bf16.msra.mxu0 %v3354
        %3855 = vmatprep.subr.bf16.mxu0 %v3357
        %3856 = vmatpush1.bf16.msra.mxu0 %v3356
        %3857 = vmatprep.subr.bf16.mxu0 %v3359
        %3858 = vmatpush1.bf16.msra.mxu0 %v3358
        %3859 = vmatprep.subr.bf16.mxu0 %v3361
        %3860 = vmatpush1.bf16.msra.mxu0 %v3360
        %3861 = vmatprep.subr.bf16.mxu0 %v3363
        %3862 = vmatpush1.bf16.msra.mxu0 %v3362
        %3863 = vmatprep.subr.bf16.mxu0 %v3365
        %3864 = vmatpush1.bf16.msra.mxu0 %v3364
        %3865 = vmatprep.subr.bf16.mxu0 %v3367
        %3866 = vmatpush1.bf16.msra.mxu0 %v3366
        %3867 = vmatprep.subr.bf16.mxu0 %v3369
        %3868 = vmatpush1.bf16.msra.mxu0 %v3368
        %3869 = vmatprep.subr.bf16.mxu0 %v3371
        %3870 = vmatpush1.bf16.msra.mxu0 %v3370
        %3871 = vmatprep.subr.bf16.mxu0 %v3373
        %3872 = vmatpush1.bf16.msra.mxu0 %v3372
        %3873 = vmatprep.subr.bf16.mxu0 %v3375
        %3874 = vmatpush1.bf16.msra.mxu0 %v3374
        %3875 = vmatprep.mubr.bf16.mxu0 %v2667
        %3876 = vmatmul.mubr.bf16.gmra.mrb[0].mxu0 %v2666
        %v3877 = vpop.f32.mrb[0].mxu0
        %v3878 = vadd.f32 %v3765, %v3877
        %v3879 = vpop.f32.mrb[0].mxu0
        %v3880 = vadd.f32 %v3767, %v3879
        %v3881 = vpop.f32.mrb[0].mxu0
        %v3882 = vadd.f32 %v3769, %v3881
        %v3883 = vpop.f32.mrb[0].mxu0
        %v3884 = vadd.f32 %v3771, %v3883
        %3885 = vmatprep.mubr.bf16.mxu0 %v2675
        %3886 = vmatmul.mubr.bf16.gmra.mrb[0].mxu0 %v2674
        %v3887 = vpop.f32.mrb[0].mxu0
        %v3888 = vadd.f32 %v3775, %v3887
        %v3889 = vpop.f32.mrb[0].mxu0
        %v3890 = vadd.f32 %v3777, %v3889
        %v3891 = vpop.f32.mrb[0].mxu0
        %v3892 = vadd.f32 %v3779, %v3891
        %v3893 = vpop.f32.mrb[0].mxu0
        %v3894 = vadd.f32 %v3781, %v3893
        %3895 = vmatprep.mubr.bf16.mxu0 %v2683
        %3896 = vmatmul.mubr.bf16.gmra.mrb[0].mxu0 %v2682
        %v3897 = vpop.f32.mrb[0].mxu0
        %v3898 = vadd.f32 %v3785, %v3897
        %v3899 = vpop.f32.mrb[0].mxu0
        %v3900 = vadd.f32 %v3787, %v3899
        %v3901 = vpop.f32.mrb[0].mxu0
        %v3902 = vadd.f32 %v3789, %v3901
        %v3903 = vpop.f32.mrb[0].mxu0
        %v3904 = vadd.f32 %v3791, %v3903
        %3905 = vmatprep.mubr.bf16.mxu0 %v2691
        %3906 = vmatmul.mubr.bf16.gmra.mrb[0].mxu0 %v2690
        %v3907 = vpop.f32.mrb[0].mxu0
        %v3908 = vadd.f32 %v3795, %v3907
        %v3909 = vpop.f32.mrb[0].mxu0
        %v3910 = vadd.f32 %v3797, %v3909
        %v3911 = vpop.f32.mrb[0].mxu0
        %v3912 = vadd.f32 %v3799, %v3911
        %v3913 = vpop.f32.mrb[0].mxu0
        %v3914 = vadd.f32 %v3801, %v3913
        %3915 = vmatprep.mubr.bf16.mxu0 %v2699
        %3916 = vmatmul.mubr.bf16.gmra.mrb[0].mxu0 %v2698
        %v3917 = vpop.f32.mrb[0].mxu0
        %v3918 = vadd.f32 %v3805, %v3917
        %v3919 = vpop.f32.mrb[0].mxu0
        %v3920 = vadd.f32 %v3807, %v3919
        %v3921 = vpop.f32.mrb[0].mxu0
        %v3922 = vadd.f32 %v3809, %v3921
        %v3923 = vpop.f32.mrb[0].mxu0
        %v3924 = vadd.f32 %v3811, %v3923
        %3925 = vmatprep.mubr.bf16.mxu0 %v2707
        %3926 = vmatmul.mubr.bf16.gmra.mrb[0].mxu0 %v2706
        %v3927 = vpop.f32.mrb[0].mxu0
        %v3928 = vadd.f32 %v3815, %v3927
        %v3929 = vpop.f32.mrb[0].mxu0
        %v3930 = vadd.f32 %v3817, %v3929
        %v3931 = vpop.f32.mrb[0].mxu0
        %v3932 = vadd.f32 %v3819, %v3931
        %v3933 = vpop.f32.mrb[0].mxu0
        %v3934 = vadd.f32 %v3821, %v3933
        %3935 = vmatprep.mubr.bf16.mxu0 %v2715
        %3936 = vmatmul.mubr.bf16.gmra.mrb[0].mxu0 %v2714
        %v3937 = vpop.f32.mrb[0].mxu0
        %v3938 = vadd.f32 %v3825, %v3937
        %v3939 = vpop.f32.mrb[0].mxu0
        %v3940 = vadd.f32 %v3827, %v3939
        %v3941 = vpop.f32.mrb[0].mxu0
        %v3942 = vadd.f32 %v3829, %v3941
        %v3943 = vpop.f32.mrb[0].mxu0
        %v3944 = vadd.f32 %v3831, %v3943
        %3945 = vmatprep.mubr.bf16.mxu0 %v2723
        %3946 = vmatmul.mubr.bf16.gmra.mrb[0].mxu0 %v2722
        %v3947 = vpop.f32.mrb[0].mxu0
        %v3948 = vadd.f32 %v3835, %v3947
        %v3949 = vpop.f32.mrb[0].mxu0
        %v3950 = vadd.f32 %v3837, %v3949
        %v3951 = vpop.f32.mrb[0].mxu0
        %v3952 = vadd.f32 %v3839, %v3951
        %v3953 = vpop.f32.mrb[0].mxu0
        %v3954 = vadd.f32 %v3841, %v3953
        %3955 = vdwg.mxu0
        %v3956 = vadd.f32 %v1222, %v3878
        %v3957 = vadd.f32 %v1223, %v3880
        %v3958 = vadd.f32 %v1224, %v3882
        %v3959 = vadd.f32 %v1225, %v3884
        %v3960 = vadd.f32 %v1226, %v3888
        %v3961 = vadd.f32 %v1227, %v3890
        %v3962 = vadd.f32 %v1228, %v3892
        %v3963 = vadd.f32 %v1229, %v3894
        %v3964 = vadd.f32 %v1230, %v3898
        %v3965 = vadd.f32 %v1231, %v3900
        %v3966 = vadd.f32 %v1232, %v3902
        %v3967 = vadd.f32 %v1233, %v3904
        %v3968 = vadd.f32 %v1234, %v3908
        %v3969 = vadd.f32 %v1235, %v3910
        %v3970 = vadd.f32 %v1236, %v3912
        %v3971 = vadd.f32 %v1237, %v3914
        %v3972 = vadd.f32 %v1238, %v3918
        %v3973 = vadd.f32 %v1239, %v3920
        %v3974 = vadd.f32 %v1240, %v3922
        %v3975 = vadd.f32 %v1241, %v3924
        %v3976 = vadd.f32 %v1242, %v3928
        %v3977 = vadd.f32 %v1243, %v3930
        %v3978 = vadd.f32 %v1244, %v3932
        %v3979 = vadd.f32 %v1245, %v3934
        %v3980 = vadd.f32 %v1246, %v3938
        %v3981 = vadd.f32 %v1247, %v3940
        %v3982 = vadd.f32 %v1248, %v3942
        %v3983 = vadd.f32 %v1249, %v3944
        %v3984 = vadd.f32 %v1250, %v3948
        %v3985 = vadd.f32 %v1251, %v3950
        %v3986 = vadd.f32 %v1252, %v3952
        %v3987 = vadd.f32 %v1253, %v3954
        %v3988 = vld [vmem:[%s10] sm:$0x3]
        %v3989 = vld [vmem:[%s11] sm:$0x3]
        %v3990 = vadd.f32 %v3956, %v3957
        %3991 = vadd.xlane.f32.xlu0 %v3990
        %v3992 = vpop.xlane.xlu0 %3991
        %v3993 = vadd.f32 %v3958, %v3959
        %3994 = vadd.xlane.f32.xlu0 %v3993
        %v3995 = vpop.xlane.xlu0 %3994
        %v3996 = vadd.f32 %v3960, %v3961
        %3997 = vadd.xlane.f32.xlu0 %v3996
        %v3998 = vpop.xlane.xlu0 %3997
        %v3999 = vadd.f32 %v3962, %v3963
        %4000 = vadd.xlane.f32.xlu0 %v3999
        %v4001 = vpop.xlane.xlu0 %4000
        %v4002 = vadd.f32 %v3964, %v3965
        %4003 = vadd.xlane.f32.xlu0 %v4002
        %v4004 = vpop.xlane.xlu0 %4003
        %v4005 = vadd.f32 %v3966, %v3967
        %4006 = vadd.xlane.f32.xlu0 %v4005
        %v4007 = vpop.xlane.xlu0 %4006
        %v4008 = vadd.f32 %v3968, %v3969
        %4009 = vadd.xlane.f32.xlu0 %v4008
        %v4010 = vpop.xlane.xlu0 %4009
        %v4011 = vadd.f32 %v3970, %v3971
        %4012 = vadd.xlane.f32.xlu0 %v4011
        %v4013 = vpop.xlane.xlu0 %4012
        %v4014 = vadd.f32 %v3972, %v3973
        %4015 = vadd.xlane.f32.xlu0 %v4014
        %v4016 = vpop.xlane.xlu0 %4015
        %v4017 = vadd.f32 %v3974, %v3975
        %4018 = vadd.xlane.f32.xlu0 %v4017
        %v4019 = vpop.xlane.xlu0 %4018
        %v4020 = vadd.f32 %v3976, %v3977
        %4021 = vadd.xlane.f32.xlu0 %v4020
        %v4022 = vpop.xlane.xlu0 %4021
        %v4023 = vadd.f32 %v3978, %v3979
        %4024 = vadd.xlane.f32.xlu0 %v4023
        %v4025 = vpop.xlane.xlu0 %4024
        %v4026 = vadd.f32 %v3980, %v3981
        %4027 = vadd.xlane.f32.xlu0 %v4026
        %v4028 = vpop.xlane.xlu0 %4027
        %v4029 = vadd.f32 %v3982, %v3983
        %4030 = vadd.xlane.f32.xlu0 %v4029
        %v4031 = vpop.xlane.xlu0 %4030
        %v4032 = vadd.f32 %v3984, %v3985
        %4033 = vadd.xlane.f32.xlu0 %v4032
        %v4034 = vpop.xlane.xlu0 %4033
        %v4035 = vadd.f32 %v3986, %v3987
        %4036 = vadd.xlane.f32.xlu0 %v4035
        %v4037 = vpop.xlane.xlu0 %4036
        %v4038 = vmul.f32 %v3992, %v959
        %v4039 = vmul.f32 %v3995, %v959
        %v4040 = vmul.f32 %v3998, %v959
        %v4041 = vmul.f32 %v4001, %v959
        %v4042 = vmul.f32 %v4004, %v959
        %v4043 = vmul.f32 %v4007, %v959
        %v4044 = vmul.f32 %v4010, %v959
        %v4045 = vmul.f32 %v4013, %v959
        %v4046 = vmul.f32 %v4016, %v959
        %v4047 = vmul.f32 %v4019, %v959
        %v4048 = vmul.f32 %v4022, %v959
        %v4049 = vmul.f32 %v4025, %v959
        %v4050 = vmul.f32 %v4028, %v959
        %v4051 = vmul.f32 %v4031, %v959
        %v4052 = vmul.f32 %v4034, %v959
        %v4053 = vmul.f32 %v4037, %v959
        %v4054 = vsub.f32 %v3956, %v4038
        %v4055 = vsub.f32 %v3957, %v4038
        %v4056 = vsub.f32 %v3958, %v4039
        %v4057 = vsub.f32 %v3959, %v4039
        %v4058 = vsub.f32 %v3960, %v4040
        %v4059 = vsub.f32 %v3961, %v4040
        %v4060 = vsub.f32 %v3962, %v4041
        %v4061 = vsub.f32 %v3963, %v4041
        %v4062 = vsub.f32 %v3964, %v4042
        %v4063 = vsub.f32 %v3965, %v4042
        %v4064 = vsub.f32 %v3966, %v4043
        %v4065 = vsub.f32 %v3967, %v4043
        %v4066 = vsub.f32 %v3968, %v4044
        %v4067 = vsub.f32 %v3969, %v4044
        %v4068 = vsub.f32 %v3970, %v4045
        %v4069 = vsub.f32 %v3971, %v4045
        %v4070 = vsub.f32 %v3972, %v4046
        %v4071 = vsub.f32 %v3973, %v4046
        %v4072 = vsub.f32 %v3974, %v4047
        %v4073 = vsub.f32 %v3975, %v4047
        %v4074 = vsub.f32 %v3976, %v4048
        %v4075 = vsub.f32 %v3977, %v4048
        %v4076 = vsub.f32 %v3978, %v4049
        %v4077 = vsub.f32 %v3979, %v4049
        %v4078 = vsub.f32 %v3980, %v4050
        %v4079 = vsub.f32 %v3981, %v4050
        %v4080 = vsub.f32 %v3982, %v4051
        %v4081 = vsub.f32 %v3983, %v4051
        %v4082 = vsub.f32 %v3984, %v4052
        %v4083 = vsub.f32 %v3985, %v4052
        %v4084 = vsub.f32 %v3986, %v4053
        %v4085 = vsub.f32 %v3987, %v4053
        %v4086 = vmul.f32 %v4054, %v4054
        %v4087 = vmul.f32 %v4055, %v4055
        %v4088 = vmul.f32 %v4056, %v4056
        %v4089 = vmul.f32 %v4057, %v4057
        %v4090 = vmul.f32 %v4058, %v4058
        %v4091 = vmul.f32 %v4059, %v4059
        %v4092 = vmul.f32 %v4060, %v4060
        %v4093 = vmul.f32 %v4061, %v4061
        %v4094 = vmul.f32 %v4062, %v4062
        %v4095 = vmul.f32 %v4063, %v4063
        %v4096 = vmul.f32 %v4064, %v4064
        %v4097 = vmul.f32 %v4065, %v4065
        %v4098 = vmul.f32 %v4066, %v4066
        %v4099 = vmul.f32 %v4067, %v4067
        %v4100 = vmul.f32 %v4068, %v4068
        %v4101 = vmul.f32 %v4069, %v4069
        %v4102 = vmul.f32 %v4070, %v4070
        %v4103 = vmul.f32 %v4071, %v4071
        %v4104 = vmul.f32 %v4072, %v4072
        %v4105 = vmul.f32 %v4073, %v4073
        %v4106 = vmul.f32 %v4074, %v4074
        %v4107 = vmul.f32 %v4075, %v4075
        %v4108 = vmul.f32 %v4076, %v4076
        %v4109 = vmul.f32 %v4077, %v4077
        %v4110 = vmul.f32 %v4078, %v4078
        %v4111 = vmul.f32 %v4079, %v4079
        %v4112 = vmul.f32 %v4080, %v4080
        %v4113 = vmul.f32 %v4081, %v4081
        %v4114 = vmul.f32 %v4082, %v4082
        %v4115 = vmul.f32 %v4083, %v4083
        %v4116 = vmul.f32 %v4084, %v4084
        %v4117 = vmul.f32 %v4085, %v4085
        %v4118 = vadd.f32 %v4086, %v4087
        %4119 = vadd.xlane.f32.xlu0 %v4118
        %v4120 = vpop.xlane.xlu0 %4119
        %v4121 = vadd.f32 %v4088, %v4089
        %4122 = vadd.xlane.f32.xlu0 %v4121
        %v4123 = vpop.xlane.xlu0 %4122
        %v4124 = vadd.f32 %v4090, %v4091
        %4125 = vadd.xlane.f32.xlu0 %v4124
        %v4126 = vpop.xlane.xlu0 %4125
        %v4127 = vadd.f32 %v4092, %v4093
        %4128 = vadd.xlane.f32.xlu0 %v4127
        %v4129 = vpop.xlane.xlu0 %4128
        %v4130 = vadd.f32 %v4094, %v4095
        %4131 = vadd.xlane.f32.xlu0 %v4130
        %v4132 = vpop.xlane.xlu0 %4131
        %v4133 = vadd.f32 %v4096, %v4097
        %4134 = vadd.xlane.f32.xlu0 %v4133
        %v4135 = vpop.xlane.xlu0 %4134
        %v4136 = vadd.f32 %v4098, %v4099
        %4137 = vadd.xlane.f32.xlu0 %v4136
        %v4138 = vpop.xlane.xlu0 %4137
        %v4139 = vadd.f32 %v4100, %v4101
        %4140 = vadd.xlane.f32.xlu0 %v4139
        %v4141 = vpop.xlane.xlu0 %4140
        %v4142 = vadd.f32 %v4102, %v4103
        %4143 = vadd.xlane.f32.xlu0 %v4142
        %v4144 = vpop.xlane.xlu0 %4143
        %v4145 = vadd.f32 %v4104, %v4105
        %4146 = vadd.xlane.f32.xlu0 %v4145
        %v4147 = vpop.xlane.xlu0 %4146
        %v4148 = vadd.f32 %v4106, %v4107
        %4149 = vadd.xlane.f32.xlu0 %v4148
        %v4150 = vpop.xlane.xlu0 %4149
        %v4151 = vadd.f32 %v4108, %v4109
        %4152 = vadd.xlane.f32.xlu0 %v4151
        %v4153 = vpop.xlane.xlu0 %4152
        %v4154 = vadd.f32 %v4110, %v4111
        %4155 = vadd.xlane.f32.xlu0 %v4154
        %v4156 = vpop.xlane.xlu0 %4155
        %v4157 = vadd.f32 %v4112, %v4113
        %4158 = vadd.xlane.f32.xlu0 %v4157
        %v4159 = vpop.xlane.xlu0 %4158
        %v4160 = vadd.f32 %v4114, %v4115
        %4161 = vadd.xlane.f32.xlu0 %v4160
        %v4162 = vpop.xlane.xlu0 %4161
        %v4163 = vadd.f32 %v4116, %v4117
        %4164 = vadd.xlane.f32.xlu0 %v4163
        %v4165 = vpop.xlane.xlu0 %4164
        %v4166 = vmul.f32 %v4120, %v959
        %v4167 = vmul.f32 %v4123, %v959
        %v4168 = vmul.f32 %v4126, %v959
        %v4169 = vmul.f32 %v4129, %v959
        %v4170 = vmul.f32 %v4132, %v959
        %v4171 = vmul.f32 %v4135, %v959
        %v4172 = vmul.f32 %v4138, %v959
        %v4173 = vmul.f32 %v4141, %v959
        %v4174 = vmul.f32 %v4144, %v959
        %v4175 = vmul.f32 %v4147, %v959
        %v4176 = vmul.f32 %v4150, %v959
        %v4177 = vmul.f32 %v4153, %v959
        %v4178 = vmul.f32 %v4156, %v959
        %v4179 = vmul.f32 %v4159, %v959
        %v4180 = vmul.f32 %v4162, %v959
        %v4181 = vmul.f32 %v4165, %v959
        %v4182 = vadd.f32 %v4166, 1e-05
        %v4183 = vadd.f32 %v4167, 1e-05
        %v4184 = vadd.f32 %v4168, 1e-05
        %v4185 = vadd.f32 %v4169, 1e-05
        %v4186 = vadd.f32 %v4170, 1e-05
        %v4187 = vadd.f32 %v4171, 1e-05
        %v4188 = vadd.f32 %v4172, 1e-05
        %v4189 = vadd.f32 %v4173, 1e-05
        %v4190 = vadd.f32 %v4174, 1e-05
        %v4191 = vadd.f32 %v4175, 1e-05
        %v4192 = vadd.f32 %v4176, 1e-05
        %v4193 = vadd.f32 %v4177, 1e-05
        %v4194 = vadd.f32 %v4178, 1e-05
        %v4195 = vadd.f32 %v4179, 1e-05
        %v4196 = vadd.f32 %v4180, 1e-05
        %v4197 = vadd.f32 %v4181, 1e-05
        %v4198 = vrsqrt.pop %v4182
        %v4199 = vrsqrt.pop %v4183
        %v4200 = vrsqrt.pop %v4184
        %v4201 = vrsqrt.pop %v4185
        %v4202 = vrsqrt.pop %v4186
        %v4203 = vrsqrt.pop %v4187
        %v4204 = vrsqrt.pop %v4188
        %v4205 = vrsqrt.pop %v4189
        %v4206 = vrsqrt.pop %v4190
        %v4207 = vrsqrt.pop %v4191
        %v4208 = vrsqrt.pop %v4192
        %v4209 = vrsqrt.pop %v4193
        %v4210 = vrsqrt.pop %v4194
        %v4211 = vrsqrt.pop %v4195
        %v4212 = vrsqrt.pop %v4196
        %v4213 = vrsqrt.pop %v4197
        %v4214 = vmul.f32 %v4054, %v4198
        %v4215 = vmul.f32 %v4055, %v4198
        %v4216 = vmul.f32 %v4056, %v4199
        %v4217 = vmul.f32 %v4057, %v4199
        %v4218 = vmul.f32 %v4058, %v4200
        %v4219 = vmul.f32 %v4059, %v4200
        %v4220 = vmul.f32 %v4060, %v4201
        %v4221 = vmul.f32 %v4061, %v4201
        %v4222 = vmul.f32 %v4062, %v4202
        %v4223 = vmul.f32 %v4063, %v4202
        %v4224 = vmul.f32 %v4064, %v4203
        %v4225 = vmul.f32 %v4065, %v4203
        %v4226 = vmul.f32 %v4066, %v4204
        %v4227 = vmul.f32 %v4067, %v4204
        %v4228 = vmul.f32 %v4068, %v4205
        %v4229 = vmul.f32 %v4069, %v4205
        %v4230 = vmul.f32 %v4070, %v4206
        %v4231 = vmul.f32 %v4071, %v4206
        %v4232 = vmul.f32 %v4072, %v4207
        %v4233 = vmul.f32 %v4073, %v4207
        %v4234 = vmul.f32 %v4074, %v4208
        %v4235 = vmul.f32 %v4075, %v4208
        %v4236 = vmul.f32 %v4076, %v4209
        %v4237 = vmul.f32 %v4077, %v4209
        %v4238 = vmul.f32 %v4078, %v4210
        %v4239 = vmul.f32 %v4079, %v4210
        %v4240 = vmul.f32 %v4080, %v4211
        %v4241 = vmul.f32 %v4081, %v4211
        %v4242 = vmul.f32 %v4082, %v4212
        %v4243 = vmul.f32 %v4083, %v4212
        %v4244 = vmul.f32 %v4084, %v4213
        %v4245 = vmul.f32 %v4085, %v4213
        %v4247 = vlaneseq
        %v4248 = vshrl.u32 %v4247, 7
        %v4249 = vsub.s32 0, %v4248
        %v4250 = vrot.slane %v3988, %v4249
        %v4251 = vlaneseq
        %v4252 = vshrl.u32 %v4251, 7
        %v4253 = vsub.s32 1, %v4252
        %v4254 = vrot.slane %v3988, %v4253
        %v4257 = vmul.f32 %v4214, %v4250
        %v4258 = vmul.f32 %v4215, %v4254
        %v4259 = vmul.f32 %v4216, %v4250
        %v4260 = vmul.f32 %v4217, %v4254
        %v4261 = vmul.f32 %v4218, %v4250
        %v4262 = vmul.f32 %v4219, %v4254
        %v4263 = vmul.f32 %v4220, %v4250
        %v4264 = vmul.f32 %v4221, %v4254
        %v4265 = vmul.f32 %v4222, %v4250
        %v4266 = vmul.f32 %v4223, %v4254
        %v4267 = vmul.f32 %v4224, %v4250
        %v4268 = vmul.f32 %v4225, %v4254
        %v4269 = vmul.f32 %v4226, %v4250
        %v4270 = vmul.f32 %v4227, %v4254
        %v4271 = vmul.f32 %v4228, %v4250
        %v4272 = vmul.f32 %v4229, %v4254
        %v4273 = vmul.f32 %v4230, %v4250
        %v4274 = vmul.f32 %v4231, %v4254
        %v4275 = vmul.f32 %v4232, %v4250
        %v4276 = vmul.f32 %v4233, %v4254
        %v4277 = vmul.f32 %v4234, %v4250
        %v4278 = vmul.f32 %v4235, %v4254
        %v4279 = vmul.f32 %v4236, %v4250
        %v4280 = vmul.f32 %v4237, %v4254
        %v4281 = vmul.f32 %v4238, %v4250
        %v4282 = vmul.f32 %v4239, %v4254
        %v4283 = vmul.f32 %v4240, %v4250
        %v4284 = vmul.f32 %v4241, %v4254
        %v4285 = vmul.f32 %v4242, %v4250
        %v4286 = vmul.f32 %v4243, %v4254
        %v4287 = vmul.f32 %v4244, %v4250
        %v4288 = vmul.f32 %v4245, %v4254
        %v4290 = vlaneseq
        %v4291 = vshrl.u32 %v4290, 7
        %v4292 = vsub.s32 0, %v4291
        %v4293 = vrot.slane %v3989, %v4292
        %v4294 = vlaneseq
        %v4295 = vshrl.u32 %v4294, 7
        %v4296 = vsub.s32 1, %v4295
        %v4297 = vrot.slane %v3989, %v4296
        %v4300 = vadd.f32 %v4257, %v4293
        %v4301 = vadd.f32 %v4258, %v4297
        %v4302 = vadd.f32 %v4259, %v4293
        %v4303 = vadd.f32 %v4260, %v4297
        %v4304 = vadd.f32 %v4261, %v4293
        %v4305 = vadd.f32 %v4262, %v4297
        %v4306 = vadd.f32 %v4263, %v4293
        %v4307 = vadd.f32 %v4264, %v4297
        %v4308 = vadd.f32 %v4265, %v4293
        %v4309 = vadd.f32 %v4266, %v4297
        %v4310 = vadd.f32 %v4267, %v4293
        %v4311 = vadd.f32 %v4268, %v4297
        %v4312 = vadd.f32 %v4269, %v4293
        %v4313 = vadd.f32 %v4270, %v4297
        %v4314 = vadd.f32 %v4271, %v4293
        %v4315 = vadd.f32 %v4272, %v4297
        %v4316 = vadd.f32 %v4273, %v4293
        %v4317 = vadd.f32 %v4274, %v4297
        %v4318 = vadd.f32 %v4275, %v4293
        %v4319 = vadd.f32 %v4276, %v4297
        %v4320 = vadd.f32 %v4277, %v4293
        %v4321 = vadd.f32 %v4278, %v4297
        %v4322 = vadd.f32 %v4279, %v4293
        %v4323 = vadd.f32 %v4280, %v4297
        %v4324 = vadd.f32 %v4281, %v4293
        %v4325 = vadd.f32 %v4282, %v4297
        %v4326 = vadd.f32 %v4283, %v4293
        %v4327 = vadd.f32 %v4284, %v4297
        %v4328 = vadd.f32 %v4285, %v4293
        %v4329 = vadd.f32 %v4286, %v4297
        %v4330 = vadd.f32 %v4287, %v4293
        %v4331 = vadd.f32 %v4288, %v4297
        %4332 = vst [vmem:[%s421] sm:$0xff] %v4300
        %4333 = vst [vmem:[%s421 + $0x8] sm:$0xff] %v4301
        %4334 = vst [vmem:[%s421 + $0x10] sm:$0xff] %v4302
        %4335 = vst [vmem:[%s421 + $0x18] sm:$0xff] %v4303
        %4336 = vst [vmem:[%s421 + $0x20] sm:$0xff] %v4304
        %4337 = vst [vmem:[%s421 + $0x28] sm:$0xff] %v4305
        %4338 = vst [vmem:[%s421 + $0x30] sm:$0xff] %v4306
        %4339 = vst [vmem:[%s421 + $0x38] sm:$0xff] %v4307
        %4340 = vst [vmem:[%s421 + $0x40] sm:$0xff] %v4308
        %4341 = vst [vmem:[%s421 + $0x48] sm:$0xff] %v4309
        %4342 = vst [vmem:[%s421 + $0x50] sm:$0xff] %v4310
        %4343 = vst [vmem:[%s421 + $0x58] sm:$0xff] %v4311
        %4344 = vst [vmem:[%s421 + $0x60] sm:$0xff] %v4312
        %4345 = vst [vmem:[%s421 + $0x68] sm:$0xff] %v4313
        %4346 = vst [vmem:[%s421 + $0x70] sm:$0xff] %v4314
        %4347 = vst [vmem:[%s421 + $0x78] sm:$0xff] %v4315
        %4348 = vst [vmem:[%s421 + $0x80] sm:$0xff] %v4316
        %4349 = vst [vmem:[%s421 + $0x88] sm:$0xff] %v4317
        %4350 = vst [vmem:[%s421 + $0x90] sm:$0xff] %v4318
        %4351 = vst [vmem:[%s421 + $0x98] sm:$0xff] %v4319
        %4352 = vst [vmem:[%s421 + $0xa0] sm:$0xff] %v4320
        %4353 = vst [vmem:[%s421 + $0xa8] sm:$0xff] %v4321
        %4354 = vst [vmem:[%s421 + $0xb0] sm:$0xff] %v4322
        %4355 = vst [vmem:[%s421 + $0xb8] sm:$0xff] %v4323
        %4356 = vst [vmem:[%s421 + $0xc0] sm:$0xff] %v4324
        %4357 = vst [vmem:[%s421 + $0xc8] sm:$0xff] %v4325
        %4358 = vst [vmem:[%s421 + $0xd0] sm:$0xff] %v4326
        %4359 = vst [vmem:[%s421 + $0xd8] sm:$0xff] %v4327
        %4360 = vst [vmem:[%s421 + $0xe0] sm:$0xff] %v4328
        %4361 = vst [vmem:[%s421 + $0xe8] sm:$0xff] %v4329
        %4362 = vst [vmem:[%s421 + $0xf0] sm:$0xff] %v4330
        %4363 = vst [vmem:[%s421 + $0xf8] sm:$0xff] %v4331
        %s4364 = sand.u32 %s296, 1
        %s4365 = scalar_lea.sflag [#allocation3], %s4364
        %s4366 = sand.u32 %s296, 1
        %s4367 = smul.addr %s4366, 256
        %s4368 = scalar_lea.vmem [#allocation2], %s4367
        // Predicated region
        $region69: #{transformer_decoder_block.3} parent=67 // pred_check
          %p4369 = pneg %p306
        $region70: #{transformer_decoder_block.3} parent=67 // pred_check_branch
          %4371 = sbr.rel (%p4369) target = $region72
        $region71: #{transformer_decoder_block.3} parent=67 // pred_region
          %s4373 = ssub.s32 4096, 4096
          %4374 = vsyncadd %s4365, %s4373
          %s4375 = smul.addr %s26, 32
          %s4376 = smul.addr %s4375, 128
          %s4377 = scalar_lea.hbm %s12, %s4376
          %s4378 = sshll.u32 %s4368, 4
          %s4379 = int_to_ptr.vmem [resolvable:$true] %s4378
          %4384 = dma.vmem_to_hbm [thread:$0]  %s4379, 4096, %s4377, %s4365, 256, 256, 16
        $region72: #{transformer_decoder_block.3} parent=67 // pred_fallthru
          _
      $region68: #{transformer_decoder_block.3} parent=5 // pred_fallthru
        _
      %p4385 = scmp.le.s32.totalorder 2, %s21
      // Predicated region
      $region73: #{transformer_decoder_block.3} parent=5 // pred_check
        %p4386 = pneg %p4385
      $region74: #{transformer_decoder_block.3} parent=5 // pred_check_branch
        %4388 = sbr.rel (%p4386) target = $region76
      $region75: #{transformer_decoder_block.3} parent=5 // pred_region
        %s4389 = ssub.s32 %s21, 2
        // Predicated region
        $region77: #{transformer_decoder_block.3} parent=75 // pred_check
          %p4390 = pneg %p312
        $region78: #{transformer_decoder_block.3} parent=75 // pred_check_branch
          %4392 = sbr.rel (%p4390) target = $region80
        $region79: #{transformer_decoder_block.3} parent=75 // pred_region
          %s4393 = sand.u32 %s297, 1
          %s4394 = scalar_lea.sflag [#allocation3], %s4393
          %s4395 = sand.u32 %s297, 1
          %s4396 = smul.addr %s4395, 256
          %s4397 = scalar_lea.vmem [#allocation2], %s4396
          %4398 = dma.done %s4394, 4096
        $region80: #{transformer_decoder_block.3} parent=75 // pred_fallthru
          _
      $region76: #{transformer_decoder_block.3} parent=5 // pred_fallthru
        _
    $region6: #{transformer_decoder_block.3} parent=1 // loop_footer
      %s25 = sadd.s32 1, %s21
    $region7: #{transformer_decoder_block.3} parent=1 // loop_footer_branch
      %20 = sbr.rel target = $region3
    $region8: #{transformer_decoder_block.3} parent=1 // loop_exit
      _
    %4399 = vsyncpa [#allocation3], 1
    %s4400 = scalar_lea.sflag [#allocation3], 1
    %4401 = vsyncpa %s4400, 1

</llo_original>
